<compile_context>
chip_gen: v6e
topology: v6e:2x2x1
jax: 0.10.0
libtpu: 0.0.40
codegen_flags: <defaults>
</compile_context>

<pallas_src>
import jax
import jax.numpy as jnp
from jax import lax
from jax.experimental import pallas as pl
from jax.experimental.pallas import tpu as pltpu


# ----------------------------- config (small, TPU-friendly) -----------------------------
VOCAB = 256
CONTEXT_LEN = 16
EMB_DIM = 256
N_HEADS = 2
HEAD_DIM = EMB_DIM // N_HEADS          # 128 -> lane-aligned head slices, clean RoPE lane-roll
N_LAYERS = 2
HIDDEN_DIM = 512
EPS = 1e-5


# ----------------------------- in-kernel helpers -----------------------------
def _rmsnorm(x, w):
    # x: (N, D) f32, w: (1, D) f32
    means = jnp.mean(x * x, axis=-1, keepdims=True)
    return x * lax.rsqrt(means + EPS) * w


# ----------------------------- fused transformer + head kernel -----------------------------
def blocks_kernel(x_in_ref, cos_ref, sin_ref, bias_ref,
                  wq_ref, wk_ref, wv_ref, wo_ref,
                  w1_ref, w2_ref, w3_ref, n1_ref, n2_ref,
                  nf_ref, wout_ref,
                  out_ref, logits_ref):
    layer = pl.program_id(0)
    n_layers = pl.num_programs(0)

    # Load the input activation once; out_ref is the layer-resident activation buffer
    # (output block index is constant across the layer grid axis, so it never leaves VMEM).
    @pl.when(layer == 0)
    def _():
        out_ref[...] = x_in_ref[...]

    x = out_ref[...]                              # (B*T, D) f32
    BT, D = x.shape
    T, hd = cos_ref.shape
    B = BT // T
    H = D // hd
    BH = B * H

    # Hoisted broadcasts: shared by the q and k RoPE applications below.
    cos_b = jnp.broadcast_to(cos_ref[...][None], (BH, T, hd))       # (B*H, T, hd) f32
    sin_b = jnp.broadcast_to(sin_ref[...][None], (BH, T, hd))       # sign-folded sin

    # ---------------- attention ----------------
    xn = _rmsnorm(x, n1_ref[...]).astype(jnp.bfloat16)
    # 1/sqrt(hd) is pre-folded into wq at init time (RoPE is linear, so pre-RoPE scaling is exact).
    q = jnp.dot(xn, wq_ref[...], preferred_element_type=jnp.float32)
    k = jnp.dot(xn, wk_ref[...], preferred_element_type=jnp.float32)
    v = jnp.dot(xn, wv_ref[...], preferred_element_type=jnp.float32)

    def split_heads(t2d):
        # (B*T, D) -> (H*B, T, hd); per-head slices are 128-lane aligned (hd == 128).
        t3 = t2d.reshape(B, T, D)
        return jnp.concatenate(
            [t3[:, :, h * hd:(h + 1) * hd] for h in range(H)], axis=0)

    def rope(t):
        # roll by hd/2 == concat(x2, x1); multiplied by the sign-folded sin (== concat(-sin, sin))
        # it reproduces the reference `cat(-x2, x1) * sin`.  Lane rotation runs on the XLU.
        return t * cos_b + pltpu.roll(t, hd // 2, 2) * sin_b

    qh = rope(split_heads(q)).astype(jnp.bfloat16)                   # (H*B, T, hd)
    kh = rope(split_heads(k)).astype(jnp.bfloat16)
    vh = split_heads(v).astype(jnp.bfloat16)

    scores = jnp.einsum("bqd,bkd->bqk", qh, kh,
                        preferred_element_type=jnp.float32)          # (H*B, T, T)
    scores = scores + jnp.broadcast_to(bias_ref[...][None], scores.shape)  # additive causal bias

    m = jnp.max(scores, axis=-1, keepdims=True)
    e = jnp.exp(scores - m)
    p = e * pl.reciprocal(jnp.sum(e, axis=-1, keepdims=True), approx=True)

    ctx = jnp.einsum("bqk,bkd->bqd", p.astype(jnp.bfloat16), vh,
                     preferred_element_type=jnp.float32)             # (H*B, T, hd)

    # (H*B, T, hd) -> (B*T, D); lane concat at 128-aligned offsets.
    ctx2d = jnp.concatenate([ctx[h * B:(h + 1) * B] for h in range(H)],
                            axis=-1).reshape(BT, D)

    attn = jnp.dot(ctx2d.astype(jnp.bfloat16), wo_ref[...],
                   preferred_element_type=jnp.float32)
    x = x + attn

    # ---------------- SwiGLU feed-forward ----------------
    yn = _rmsnorm(x, n2_ref[...]).astype(jnp.bfloat16)
    g = jnp.dot(yn, w1_ref[...], preferred_element_type=jnp.float32)
    u = jnp.dot(yn, w2_ref[...], preferred_element_type=jnp.float32)
    silu = g * pl.reciprocal(1.0 + jnp.exp(-g), approx=True)         # EUP sigmoid
    ff = jnp.dot((silu * u).astype(jnp.bfloat16), w3_ref[...],
                 preferred_element_type=jnp.float32)

    x_new = x + ff
    out_ref[...] = x_new

    # ---------------- fused final RMSNorm + output head (last layer only) ----------------
    @pl.when(layer == n_layers - 1)
    def _():
        xf = _rmsnorm(x_new, nf_ref[...]).astype(jnp.bfloat16)       # (B*T, D)
        logits_ref[...] = jnp.dot(xf, wout_ref[...],
                                  preferred_element_type=jnp.float32)  # (B*T, V), lane-dense


# ----------------------------- wrapper -----------------------------
def run_model(x2d, blk, final_norm, out_head, cos, sin_s, bias):
    BT, D = x2d.shape
    L = blk["wq"].shape[0]
    T, hd = cos.shape
    HID = blk["w1"].shape[-1]
    V = out_head.shape[-1]

    def const(shape):          # fetched once (block index constant across layers)
        return pl.BlockSpec(shape, lambda l: (0, 0))

    def per_layer(shape):      # layer axis squeezed out of the kernel ref
        return pl.BlockSpec((None,) + shape, lambda l: (l, 0, 0))

    _, logits = pl.pallas_call(
        blocks_kernel,
        out_shape=(jax.ShapeDtypeStruct((BT, D), jnp.float32),    # resident activation
                   jax.ShapeDtypeStruct((BT, V), jnp.float32)),   # logits (written on last step)
        grid=(L,),
        in_specs=[
            const((BT, D)), const((T, hd)), const((T, hd)), const((T, T)),
            per_layer((D, D)), per_layer((D, D)), per_layer((D, D)), per_layer((D, D)),
            per_layer((D, HID)), per_layer((D, HID)), per_layer((HID, D)),
            per_layer((1, D)), per_layer((1, D)),
            const((1, D)), const((D, V)),
        ],
        out_specs=[pl.BlockSpec((BT, D), lambda l: (0, 0)),
                   pl.BlockSpec((BT, V), lambda l: (0, 0))],
        compiler_params=pltpu.CompilerParams(
            dimension_semantics=("arbitrary",)),   # layers are sequentially dependent
    )(x2d, cos, sin_s, bias,
      blk["wq"], blk["wk"], blk["wv"], blk["wo"],
      blk["w1"], blk["w2"], blk["w3"], blk["norm1"], blk["norm2"],
      final_norm, out_head)
    return logits


# ----------------------------- parameter / rope / mask setup (glue) -----------------------------
def precompute_rope(head_dim, theta_base=10000.0, context_length=CONTEXT_LEN):
    inv_freq = 1.0 / theta_base ** (jnp.arange(0, head_dim, 2, dtype=jnp.float32) / head_dim)
    positions = jnp.arange(context_length, dtype=jnp.float32)
    angles = positions[:, None] * inv_freq[None, :]
    angles = jnp.concatenate([angles, angles], axis=1)               # (ctx, head_dim)
    sign = jnp.concatenate([-jnp.ones((head_dim // 2,), jnp.float32),
                            jnp.ones((head_dim // 2,), jnp.float32)])
    return jnp.cos(angles), jnp.sin(angles) * sign[None, :]          # cos, sign-folded sin


def causal_bias(T):
    row = jnp.arange(T)[:, None]
    col = jnp.arange(T)[None, :]
    return jnp.where(col > row, jnp.float32(-1e30), jnp.float32(0.0))   # (T, T) additive bias


def init_params(key):
    keys = jax.random.split(key, 2 + 7 * N_LAYERS)
    ki = iter(keys)

    def mat_f32(shape):
        return jax.random.normal(next(ki), shape, dtype=jnp.float32) * 0.02

    def stack(shape, scale=1.0):
        return jnp.stack([(mat_f32(shape) * scale).astype(jnp.bfloat16)
                          for _ in range(N_LAYERS)])                 # (L, ...) bf16

    attn_scale = 1.0 / (HEAD_DIM ** 0.5)
    tok_emb = mat_f32((VOCAB, EMB_DIM))
    blk = dict(
        wq=stack((EMB_DIM, EMB_DIM), scale=attn_scale),   # 1/sqrt(hd) folded into wq (host-side)
        wk=stack((EMB_DIM, EMB_DIM)),
        wv=stack((EMB_DIM, EMB_DIM)),
        wo=stack((EMB_DIM, EMB_DIM)),
        w1=stack((EMB_DIM, HIDDEN_DIM)),
        w2=stack((EMB_DIM, HIDDEN_DIM)),
        w3=stack((HIDDEN_DIM, EMB_DIM)),
        norm1=jnp.ones((N_LAYERS, 1, EMB_DIM), jnp.float32),
        norm2=jnp.ones((N_LAYERS, 1, EMB_DIM), jnp.float32),
    )
    final_norm = jnp.ones((1, EMB_DIM), jnp.float32)
    out_head = mat_f32((EMB_DIM, VOCAB)).astype(jnp.bfloat16)
    return tok_emb, blk, final_norm, out_head


@jax.jit
def llama2_forward(in_idx, tok_emb, blk, final_norm, out_head, cos, sin_s):
    B, T = in_idx.shape
    x = tok_emb[in_idx].reshape(B * T, EMB_DIM)      # embedding gather (glue), f32
    bias = causal_bias(T)
    logits = run_model(x, blk, final_norm, out_head, cos[:T], sin_s[:T], bias)
    return logits.reshape(B, T, VOCAB)


# ----------------------------- main -----------------------------
if __name__ == "__main__":
    key = jax.random.PRNGKey(0)
    k_param, k_idx = jax.random.split(key)

    tok_emb, blk, final_norm, out_head = init_params(k_param)
    cos, sin_s = precompute_rope(HEAD_DIM, context_length=CONTEXT_LEN)

    # BT = 128 -> fills the MXU row dimension; every matmul / store stays lane-dense.
    B, T = 8, 16
    in_idx = jax.random.randint(k_idx, (B, T), 0, VOCAB, dtype=jnp.int32)

    logits = llama2_forward(in_idx, tok_emb, blk, final_norm, out_head, cos, sin_s)
    logits = jax.block_until_ready(logits)

    assert logits.shape == (B, T, VOCAB), logits.shape
    assert logits.dtype == jnp.float32
    assert bool(jnp.all(jnp.isfinite(logits)))
    print("KERNEL_OK")
</pallas_src>

<mosaic_0001>
module attributes {stable_mosaic.version = 11 : i64} {
  func.func @blocks_kernel(%arg0: i32, %arg1: memref<128x256xf32, #tpu.memory_space<vmem>>, %arg2: memref<16x128xf32, #tpu.memory_space<vmem>>, %arg3: memref<16x128xf32, #tpu.memory_space<vmem>>, %arg4: memref<16x16xf32, #tpu.memory_space<vmem>>, %arg5: memref<1x256x256xbf16, #tpu.memory_space<vmem>>, %arg6: memref<1x256x256xbf16, #tpu.memory_space<vmem>>, %arg7: memref<1x256x256xbf16, #tpu.memory_space<vmem>>, %arg8: memref<1x256x256xbf16, #tpu.memory_space<vmem>>, %arg9: memref<1x256x512xbf16, #tpu.memory_space<vmem>>, %arg10: memref<1x256x512xbf16, #tpu.memory_space<vmem>>, %arg11: memref<1x512x256xbf16, #tpu.memory_space<vmem>>, %arg12: memref<1x1x256xf32, #tpu.memory_space<vmem>>, %arg13: memref<1x1x256xf32, #tpu.memory_space<vmem>>, %arg14: memref<1x256xf32, #tpu.memory_space<vmem>>, %arg15: memref<256x256xbf16, #tpu.memory_space<vmem>>, %arg16: memref<128x256xf32, #tpu.memory_space<vmem>>, %arg17: memref<128x256xf32, #tpu.memory_space<vmem>>) attributes {dimension_semantics = [#tpu.dimension_semantics<arbitrary>], iteration_bounds = array<i64: 2>, scalar_prefetch = 0 : i64, scratch_operands = 0 : i64, tpu.core_type = #tpu.core_type<tc>, window_params = [{pipeline_mode = #tpu.pipeline_mode<synchronous>, transform_indices = @transform_0, window_bounds = array<i64: 128, 256>}, {pipeline_mode = #tpu.pipeline_mode<synchronous>, transform_indices = @transform_1, window_bounds = array<i64: 16, 128>}, {pipeline_mode = #tpu.pipeline_mode<synchronous>, transform_indices = @transform_2, window_bounds = array<i64: 16, 128>}, {pipeline_mode = #tpu.pipeline_mode<synchronous>, transform_indices = @transform_3, window_bounds = array<i64: 16, 16>}, {transform_indices = @transform_4, window_bounds = array<i64: 1, 256, 256>}, {transform_indices = @transform_5, window_bounds = array<i64: 1, 256, 256>}, {transform_indices = @transform_6, window_bounds = array<i64: 1, 256, 256>}, {transform_indices = @transform_7, window_bounds = array<i64: 1, 256, 256>}, {transform_indices = @transform_8, window_bounds = array<i64: 1, 256, 512>}, {transform_indices = @transform_9, window_bounds = array<i64: 1, 256, 512>}, {transform_indices = @transform_10, window_bounds = array<i64: 1, 512, 256>}, {transform_indices = @transform_11, window_bounds = array<i64: 1, 1, 256>}, {transform_indices = @transform_12, window_bounds = array<i64: 1, 1, 256>}, {pipeline_mode = #tpu.pipeline_mode<synchronous>, transform_indices = @transform_13, window_bounds = array<i64: 1, 256>}, {pipeline_mode = #tpu.pipeline_mode<synchronous>, transform_indices = @transform_14, window_bounds = array<i64: 256, 256>}, {pipeline_mode = #tpu.pipeline_mode<synchronous>, transform_indices = @transform_15, window_bounds = array<i64: 128, 256>}, {pipeline_mode = #tpu.pipeline_mode<synchronous>, transform_indices = @transform_16, window_bounds = array<i64: 128, 256>}]} {
    %c0_i32 = arith.constant 0 : i32
    %0 = arith.cmpi eq, %arg0, %c0_i32 : i32
    %1 = arith.extui %0 : i1 to i32
    %c0_i32_0 = arith.constant 0 : i32
    %2 = arith.cmpi ne, %1, %c0_i32_0 : i32
    scf.if %2 {
      %c0_57 = arith.constant 0 : index
      %c0_58 = arith.constant 0 : index
      %124 = vector.load %arg1[%c0_57, %c0_58] : memref<128x256xf32, #tpu.memory_space<vmem>>, vector<128x256xf32>
      %c0_59 = arith.constant 0 : index
      %c0_60 = arith.constant 0 : index
      %125 = vector.load %arg16[%c0_59, %c0_60] : memref<128x256xf32, #tpu.memory_space<vmem>>, vector<128x256xf32>
      tpu.vector_store %arg16[%c0_59, %c0_60], %124 {strides = array<i32>} : memref<128x256xf32, #tpu.memory_space<vmem>>, vector<128x256xf32>,
    } else {
    }
    %c0 = arith.constant 0 : index
    %c0_1 = arith.constant 0 : index
    %3 = vector.load %arg16[%c0, %c0_1] : memref<128x256xf32, #tpu.memory_space<vmem>>, vector<128x256xf32>
    %c0_2 = arith.constant 0 : index
    %c0_3 = arith.constant 0 : index
    %4 = vector.load %arg2[%c0_2, %c0_3] : memref<16x128xf32, #tpu.memory_space<vmem>>, vector<16x128xf32>
    %5 = vector.shape_cast %4 : vector<16x128xf32> to vector<1x16x128xf32>
    %6 = vector.shape_cast %5 : vector<1x16x128xf32> to vector<1x16x128xf32>
    %7 = vector.broadcast %6 : vector<1x16x128xf32> to vector<16x16x128xf32>
    %c0_4 = arith.constant 0 : index
    %c0_5 = arith.constant 0 : index
    %8 = vector.load %arg3[%c0_4, %c0_5] : memref<16x128xf32, #tpu.memory_space<vmem>>, vector<16x128xf32>
    %9 = vector.shape_cast %8 : vector<16x128xf32> to vector<1x16x128xf32>
    %10 = vector.shape_cast %9 : vector<1x16x128xf32> to vector<1x16x128xf32>
    %11 = vector.broadcast %10 : vector<1x16x128xf32> to vector<16x16x128xf32>
    %c0_6 = arith.constant 0 : index
    %c0_7 = arith.constant 0 : index
    %c0_8 = arith.constant 0 : index
    %12 = vector.load %arg12[%c0_6, %c0_7, %c0_8] : memref<1x1x256xf32, #tpu.memory_space<vmem>>, vector<1x1x256xf32>
    %13 = vector.shape_cast %12 : vector<1x1x256xf32> to vector<1x256xf32>
    %14 = arith.mulf %3, %3 : vector<128x256xf32>
    %cst = arith.constant dense<0.000000e+00> : vector<128xf32>
    %15 = vector.multi_reduction <add>, %14, %cst [1] : vector<128x256xf32> to vector<128xf32>
    %16 = vector.shape_cast %15 : vector<128xf32> to vector<128x1xf32>
    %cst_9 = arith.constant 2.560000e+02 : f32
    %17 = vector.broadcast %cst_9 : f32 to vector<128x1xf32>
    %18 = arith.divf %16, %17 : vector<128x1xf32>
    %cst_10 = arith.constant 9.99999974E-6 : f32
    %19 = vector.broadcast %cst_10 : f32 to vector<128x1xf32>
    %20 = arith.addf %18, %19 : vector<128x1xf32>
    %21 = math.rsqrt %20 : vector<128x1xf32>
    %22 = vector.broadcast %21 : vector<128x1xf32> to vector<128x256xf32>
    %23 = arith.mulf %3, %22 : vector<128x256xf32>
    %24 = vector.broadcast %13 : vector<1x256xf32> to vector<128x256xf32>
    %25 = arith.mulf %23, %24 : vector<128x256xf32>
    %26 = arith.truncf %25 : vector<128x256xf32> to vector<128x256xbf16>
    %c0_11 = arith.constant 0 : index
    %c0_12 = arith.constant 0 : index
    %c0_13 = arith.constant 0 : index
    %27 = vector.load %arg5[%c0_11, %c0_12, %c0_13] : memref<1x256x256xbf16, #tpu.memory_space<vmem>>, vector<1x256x256xbf16>
    %28 = vector.shape_cast %27 : vector<1x256x256xbf16> to vector<256x256xbf16>
    %cst_14 = arith.constant dense<0.000000e+00> : vector<128x256xf32>
    %29 = tpu.matmul %26, %28, %cst_14 {dimension_numbers = #tpu.dot_dimension_numbers<[1], [0], [0], [1], [0, 0, 1, 1], [], []>} : vector<128x256xbf16>, vector<256x256xbf16>, vector<128x256xf32> -> vector<128x256xf32>
    %c0_15 = arith.constant 0 : index
    %c0_16 = arith.constant 0 : index
    %c0_17 = arith.constant 0 : index
    %30 = vector.load %arg6[%c0_15, %c0_16, %c0_17] : memref<1x256x256xbf16, #tpu.memory_space<vmem>>, vector<1x256x256xbf16>
    %31 = vector.shape_cast %30 : vector<1x256x256xbf16> to vector<256x256xbf16>
    %cst_18 = arith.constant dense<0.000000e+00> : vector<128x256xf32>
    %32 = tpu.matmul %26, %31, %cst_18 {dimension_numbers = #tpu.dot_dimension_numbers<[1], [0], [0], [1], [0, 0, 1, 1], [], []>} : vector<128x256xbf16>, vector<256x256xbf16>, vector<128x256xf32> -> vector<128x256xf32>
    %c0_19 = arith.constant 0 : index
    %c0_20 = arith.constant 0 : index
    %c0_21 = arith.constant 0 : index
    %33 = vector.load %arg7[%c0_19, %c0_20, %c0_21] : memref<1x256x256xbf16, #tpu.memory_space<vmem>>, vector<1x256x256xbf16>
    %34 = vector.shape_cast %33 : vector<1x256x256xbf16> to vector<256x256xbf16>
    %cst_22 = arith.constant dense<0.000000e+00> : vector<128x256xf32>
    %35 = tpu.matmul %26, %34, %cst_22 {dimension_numbers = #tpu.dot_dimension_numbers<[1], [0], [0], [1], [0, 0, 1, 1], [], []>} : vector<128x256xbf16>, vector<256x256xbf16>, vector<128x256xf32> -> vector<128x256xf32>
    %36 = vector.shape_cast %29 : vector<128x256xf32> to vector<8x16x256xf32>
    %37 = vector.extract_strided_slice %36 {offsets = [0, 0, 0], sizes = [8, 16, 128], strides = [1, 1, 1]} : vector<8x16x256xf32> to vector<8x16x128xf32>
    %38 = vector.extract_strided_slice %36 {offsets = [0, 0, 128], sizes = [8, 16, 128], strides = [1, 1, 1]} : vector<8x16x256xf32> to vector<8x16x128xf32>
    %39 = tpu.concatenate %37, %38 in 0 : vector<8x16x128xf32>, vector<8x16x128xf32> -> vector<16x16x128xf32>
    %40 = arith.mulf %39, %7 : vector<16x16x128xf32>
    %c64_i32 = arith.constant 64 : i32
    %41 = tpu.dynamic_rotate %39 by %c64_i32 dim 2 : vector<16x16x128xf32>, i32 -> vector<16x16x128xf32>
    %42 = arith.mulf %41, %11 : vector<16x16x128xf32>
    %43 = arith.addf %40, %42 : vector<16x16x128xf32>
    %44 = arith.truncf %43 : vector<16x16x128xf32> to vector<16x16x128xbf16>
    %45 = vector.shape_cast %32 : vector<128x256xf32> to vector<8x16x256xf32>
    %46 = vector.extract_strided_slice %45 {offsets = [0, 0, 0], sizes = [8, 16, 128], strides = [1, 1, 1]} : vector<8x16x256xf32> to vector<8x16x128xf32>
    %47 = vector.extract_strided_slice %45 {offsets = [0, 0, 128], sizes = [8, 16, 128], strides = [1, 1, 1]} : vector<8x16x256xf32> to vector<8x16x128xf32>
    %48 = tpu.concatenate %46, %47 in 0 : vector<8x16x128xf32>, vector<8x16x128xf32> -> vector<16x16x128xf32>
    %49 = arith.mulf %48, %7 : vector<16x16x128xf32>
    %c64_i32_23 = arith.constant 64 : i32
    %50 = tpu.dynamic_rotate %48 by %c64_i32_23 dim 2 : vector<16x16x128xf32>, i32 -> vector<16x16x128xf32>
    %51 = arith.mulf %50, %11 : vector<16x16x128xf32>
    %52 = arith.addf %49, %51 : vector<16x16x128xf32>
    %53 = arith.truncf %52 : vector<16x16x128xf32> to vector<16x16x128xbf16>
    %54 = vector.shape_cast %35 : vector<128x256xf32> to vector<8x16x256xf32>
    %55 = vector.extract_strided_slice %54 {offsets = [0, 0, 0], sizes = [8, 16, 128], strides = [1, 1, 1]} : vector<8x16x256xf32> to vector<8x16x128xf32>
    %56 = vector.extract_strided_slice %54 {offsets = [0, 0, 128], sizes = [8, 16, 128], strides = [1, 1, 1]} : vector<8x16x256xf32> to vector<8x16x128xf32>
    %57 = tpu.concatenate %55, %56 in 0 : vector<8x16x128xf32>, vector<8x16x128xf32> -> vector<16x16x128xf32>
    %58 = arith.truncf %57 : vector<16x16x128xf32> to vector<16x16x128xbf16>
    "tpu.trace_start"() <{level = 10 : i32, message = "bqd,bkd->bqk"}> : () -> ()
    %cst_24 = arith.constant dense<0.000000e+00> : vector<16x16x16xf32>
    %59 = tpu.matmul %44, %53, %cst_24 {dimension_numbers = #tpu.dot_dimension_numbers<[2], [2], [1], [1], [0, 0, 0, 1, 1, 1], [0], [0]>} : vector<16x16x128xbf16>, vector<16x16x128xbf16>, vector<16x16x16xf32> -> vector<16x16x16xf32>
    "tpu.trace_stop"() : () -> ()
    %c0_25 = arith.constant 0 : index
    %c0_26 = arith.constant 0 : index
    %60 = vector.load %arg4[%c0_25, %c0_26] : memref<16x16xf32, #tpu.memory_space<vmem>>, vector<16x16xf32>
    %61 = vector.shape_cast %60 : vector<16x16xf32> to vector<1x16x16xf32>
    %62 = vector.shape_cast %61 : vector<1x16x16xf32> to vector<1x16x16xf32>
    %63 = vector.broadcast %62 : vector<1x16x16xf32> to vector<16x16x16xf32>
    %64 = arith.addf %59, %63 : vector<16x16x16xf32>
    %cst_27 = arith.constant dense<0xFF800000> : vector<16x16xf32>
    %65 = vector.multi_reduction <maximumf>, %64, %cst_27 [2] : vector<16x16x16xf32> to vector<16x16xf32>
    %66 = vector.shape_cast %65 : vector<16x16xf32> to vector<16x16x1xf32>
    %67 = vector.broadcast %66 : vector<16x16x1xf32> to vector<16x16x16xf32>
    %68 = arith.subf %64, %67 : vector<16x16x16xf32>
    %69 = math.exp %68 : vector<16x16x16xf32>
    %cst_28 = arith.constant dense<0.000000e+00> : vector<16x16xf32>
    %70 = vector.multi_reduction <add>, %69, %cst_28 [2] : vector<16x16x16xf32> to vector<16x16xf32>
    %71 = vector.shape_cast %70 : vector<16x16xf32> to vector<16x16x1xf32>
    %72 = tpu.reciprocal %71 {approx = true} : vector<16x16x1xf32> -> vector<16x16x1xf32>
    %73 = vector.broadcast %72 : vector<16x16x1xf32> to vector<16x16x16xf32>
    %74 = arith.mulf %69, %73 : vector<16x16x16xf32>
    %75 = arith.truncf %74 : vector<16x16x16xf32> to vector<16x16x16xbf16>
    "tpu.trace_start"() <{level = 10 : i32, message = "bqk,bkd->bqd"}> : () -> ()
    %cst_29 = arith.constant dense<0.000000e+00> : vector<16x16x128xf32>
    %76 = tpu.matmul %75, %58, %cst_29 {dimension_numbers = #tpu.dot_dimension_numbers<[2], [1], [1], [2], [0, 0, 0, 1, 1, 2], [0], [0]>} : vector<16x16x16xbf16>, vector<16x16x128xbf16>, vector<16x16x128xf32> -> vector<16x16x128xf32>
    "tpu.trace_stop"() : () -> ()
    %77 = vector.extract_strided_slice %76 {offsets = [0, 0, 0], sizes = [8, 16, 128], strides = [1, 1, 1]} : vector<16x16x128xf32> to vector<8x16x128xf32>
    %78 = vector.extract_strided_slice %76 {offsets = [8, 0, 0], sizes = [8, 16, 128], strides = [1, 1, 1]} : vector<16x16x128xf32> to vector<8x16x128xf32>
    %79 = tpu.concatenate %77, %78 in 2 : vector<8x16x128xf32>, vector<8x16x128xf32> -> vector<8x16x256xf32>
    %80 = vector.shape_cast %79 : vector<8x16x256xf32> to vector<128x256xf32>
    %81 = arith.truncf %80 : vector<128x256xf32> to vector<128x256xbf16>
    %c0_30 = arith.constant 0 : index
    %c0_31 = arith.constant 0 : index
    %c0_32 = arith.constant 0 : index
    %82 = vector.load %arg8[%c0_30, %c0_31, %c0_32] : memref<1x256x256xbf16, #tpu.memory_space<vmem>>, vector<1x256x256xbf16>
    %83 = vector.shape_cast %82 : vector<1x256x256xbf16> to vector<256x256xbf16>
    %cst_33 = arith.constant dense<0.000000e+00> : vector<128x256xf32>
    %84 = tpu.matmul %81, %83, %cst_33 {dimension_numbers = #tpu.dot_dimension_numbers<[1], [0], [0], [1], [0, 0, 1, 1], [], []>} : vector<128x256xbf16>, vector<256x256xbf16>, vector<128x256xf32> -> vector<128x256xf32>
    %85 = arith.addf %3, %84 : vector<128x256xf32>
    %c0_34 = arith.constant 0 : index
    %c0_35 = arith.constant 0 : index
    %c0_36 = arith.constant 0 : index
    %86 = vector.load %arg13[%c0_34, %c0_35, %c0_36] : memref<1x1x256xf32, #tpu.memory_space<vmem>>, vector<1x1x256xf32>
    %87 = vector.shape_cast %86 : vector<1x1x256xf32> to vector<1x256xf32>
    %88 = arith.mulf %85, %85 : vector<128x256xf32>
    %cst_37 = arith.constant dense<0.000000e+00> : vector<128xf32>
    %89 = vector.multi_reduction <add>, %88, %cst_37 [1] : vector<128x256xf32> to vector<128xf32>
    %90 = vector.shape_cast %89 : vector<128xf32> to vector<128x1xf32>
    %cst_38 = arith.constant 2.560000e+02 : f32
    %91 = vector.broadcast %cst_38 : f32 to vector<128x1xf32>
    %92 = arith.divf %90, %91 : vector<128x1xf32>
    %cst_39 = arith.constant 9.99999974E-6 : f32
    %93 = vector.broadcast %cst_39 : f32 to vector<128x1xf32>
    %94 = arith.addf %92, %93 : vector<128x1xf32>
    %95 = math.rsqrt %94 : vector<128x1xf32>
    %96 = vector.broadcast %95 : vector<128x1xf32> to vector<128x256xf32>
    %97 = arith.mulf %85, %96 : vector<128x256xf32>
    %98 = vector.broadcast %87 : vector<1x256xf32> to vector<128x256xf32>
    %99 = arith.mulf %97, %98 : vector<128x256xf32>
    %100 = arith.truncf %99 : vector<128x256xf32> to vector<128x256xbf16>
    %c0_40 = arith.constant 0 : index
    %c0_41 = arith.constant 0 : index
    %c0_42 = arith.constant 0 : index
    %101 = vector.load %arg9[%c0_40, %c0_41, %c0_42] : memref<1x256x512xbf16, #tpu.memory_space<vmem>>, vector<1x256x512xbf16>
    %102 = vector.shape_cast %101 : vector<1x256x512xbf16> to vector<256x512xbf16>
    %cst_43 = arith.constant dense<0.000000e+00> : vector<128x512xf32>
    %103 = tpu.matmul %100, %102, %cst_43 {dimension_numbers = #tpu.dot_dimension_numbers<[1], [0], [0], [1], [0, 0, 1, 1], [], []>} : vector<128x256xbf16>, vector<256x512xbf16>, vector<128x512xf32> -> vector<128x512xf32>
    %c0_44 = arith.constant 0 : index
    %c0_45 = arith.constant 0 : index
    %c0_46 = arith.constant 0 : index
    %104 = vector.load %arg10[%c0_44, %c0_45, %c0_46] : memref<1x256x512xbf16, #tpu.memory_space<vmem>>, vector<1x256x512xbf16>
    %105 = vector.shape_cast %104 : vector<1x256x512xbf16> to vector<256x512xbf16>
    %cst_47 = arith.constant dense<0.000000e+00> : vector<128x512xf32>
    %106 = tpu.matmul %100, %105, %cst_47 {dimension_numbers = #tpu.dot_dimension_numbers<[1], [0], [0], [1], [0, 0, 1, 1], [], []>} : vector<128x256xbf16>, vector<256x512xbf16>, vector<128x512xf32> -> vector<128x512xf32>
    %cst_48 = arith.constant 0.000000e+00 : f32
    %107 = vector.broadcast %cst_48 : f32 to vector<128x512xf32>
    %108 = arith.subf %107, %103 : vector<128x512xf32>
    %109 = math.exp %108 : vector<128x512xf32>
    %cst_49 = arith.constant 1.000000e+00 : f32
    %110 = vector.broadcast %cst_49 : f32 to vector<128x512xf32>
    %111 = arith.addf %110, %109 : vector<128x512xf32>
    %112 = tpu.reciprocal %111 {approx = true} : vector<128x512xf32> -> vector<128x512xf32>
    %113 = arith.mulf %103, %112 : vector<128x512xf32>
    %114 = arith.mulf %113, %106 : vector<128x512xf32>
    %115 = arith.truncf %114 : vector<128x512xf32> to vector<128x512xbf16>
    %c0_50 = arith.constant 0 : index
    %c0_51 = arith.constant 0 : index
    %c0_52 = arith.constant 0 : index
    %116 = vector.load %arg11[%c0_50, %c0_51, %c0_52] : memref<1x512x256xbf16, #tpu.memory_space<vmem>>, vector<1x512x256xbf16>
    %117 = vector.shape_cast %116 : vector<1x512x256xbf16> to vector<512x256xbf16>
    %cst_53 = arith.constant dense<0.000000e+00> : vector<128x256xf32>
    %118 = tpu.matmul %115, %117, %cst_53 {dimension_numbers = #tpu.dot_dimension_numbers<[1], [0], [0], [1], [0, 0, 1, 1], [], []>} : vector<128x512xbf16>, vector<512x256xbf16>, vector<128x256xf32> -> vector<128x256xf32>
    %119 = arith.addf %85, %118 : vector<128x256xf32>
    %c0_54 = arith.constant 0 : index
    %c0_55 = arith.constant 0 : index
    %120 = vector.load %arg16[%c0_54, %c0_55] : memref<128x256xf32, #tpu.memory_space<vmem>>, vector<128x256xf32>
    tpu.vector_store %arg16[%c0_54, %c0_55], %119 {strides = array<i32>} : memref<128x256xf32, #tpu.memory_space<vmem>>, vector<128x256xf32>,
    %c1_i32 = arith.constant 1 : i32
    %121 = arith.cmpi eq, %arg0, %c1_i32 : i32
    %122 = arith.extui %121 : i1 to i32
    %c0_i32_56 = arith.constant 0 : i32
    %123 = arith.cmpi ne, %122, %c0_i32_56 : i32
    scf.if %123 {
      %c0_57 = arith.constant 0 : index
      %c0_58 = arith.constant 0 : index
      %124 = vector.load %arg14[%c0_57, %c0_58] : memref<1x256xf32, #tpu.memory_space<vmem>>, vector<1x256xf32>
      %125 = arith.mulf %119, %119 : vector<128x256xf32>
      %cst_59 = arith.constant dense<0.000000e+00> : vector<128xf32>
      %126 = vector.multi_reduction <add>, %125, %cst_59 [1] : vector<128x256xf32> to vector<128xf32>
      %127 = vector.shape_cast %126 : vector<128xf32> to vector<128x1xf32>
      %cst_60 = arith.constant 2.560000e+02 : f32
      %128 = vector.broadcast %cst_60 : f32 to vector<128x1xf32>
      %129 = arith.divf %127, %128 : vector<128x1xf32>
      %cst_61 = arith.constant 9.99999974E-6 : f32
      %130 = vector.broadcast %cst_61 : f32 to vector<128x1xf32>
      %131 = arith.addf %129, %130 : vector<128x1xf32>
      %132 = math.rsqrt %131 : vector<128x1xf32>
      %133 = vector.broadcast %132 : vector<128x1xf32> to vector<128x256xf32>
      %134 = arith.mulf %119, %133 : vector<128x256xf32>
      %135 = vector.broadcast %124 : vector<1x256xf32> to vector<128x256xf32>
      %136 = arith.mulf %134, %135 : vector<128x256xf32>
      %137 = arith.truncf %136 : vector<128x256xf32> to vector<128x256xbf16>
      %c0_62 = arith.constant 0 : index
      %c0_63 = arith.constant 0 : index
      %138 = vector.load %arg15[%c0_62, %c0_63] : memref<256x256xbf16, #tpu.memory_space<vmem>>, vector<256x256xbf16>
      %cst_64 = arith.constant dense<0.000000e+00> : vector<128x256xf32>
      %139 = tpu.matmul %137, %138, %cst_64 {dimension_numbers = #tpu.dot_dimension_numbers<[1], [0], [0], [1], [0, 0, 1, 1], [], []>} : vector<128x256xbf16>, vector<256x256xbf16>, vector<128x256xf32> -> vector<128x256xf32>
      %c0_65 = arith.constant 0 : index
      %c0_66 = arith.constant 0 : index
      %140 = vector.load %arg17[%c0_65, %c0_66] : memref<128x256xf32, #tpu.memory_space<vmem>>, vector<128x256xf32>
      tpu.vector_store %arg17[%c0_65, %c0_66], %139 {strides = array<i32>} : memref<128x256xf32, #tpu.memory_space<vmem>>, vector<128x256xf32>,
    } else {
    }
    return
  }
  func.func @transform_0(%arg0: i32) -> (i32, i32) {
    %c0_i32 = arith.constant 0 : i32
    %c0_i32_0 = arith.constant 0 : i32
    %c0_i32_1 = arith.constant 0 : i32
    return %c0_i32, %c0_i32_0 : i32, i32
  }
  func.func @transform_1(%arg0: i32) -> (i32, i32) {
    %c0_i32 = arith.constant 0 : i32
    %c0_i32_0 = arith.constant 0 : i32
    %c0_i32_1 = arith.constant 0 : i32
    return %c0_i32, %c0_i32_0 : i32, i32
  }
  func.func @transform_2(%arg0: i32) -> (i32, i32) {
    %c0_i32 = arith.constant 0 : i32
    %c0_i32_0 = arith.constant 0 : i32
    %c0_i32_1 = arith.constant 0 : i32
    return %c0_i32, %c0_i32_0 : i32, i32
  }
  func.func @transform_3(%arg0: i32) -> (i32, i32) {
    %c0_i32 = arith.constant 0 : i32
    %c0_i32_0 = arith.constant 0 : i32
    %c0_i32_1 = arith.constant 0 : i32
    return %c0_i32, %c0_i32_0 : i32, i32
  }
  func.func @transform_4(%arg0: i32) -> (i32, i32, i32) {
    %c0_i32 = arith.constant 0 : i32
    %c0_i32_0 = arith.constant 0 : i32
    %c0_i32_1 = arith.constant 0 : i32
    return %arg0, %c0_i32, %c0_i32_0 : i32, i32, i32
  }
  func.func @transform_5(%arg0: i32) -> (i32, i32, i32) {
    %c0_i32 = arith.constant 0 : i32
    %c0_i32_0 = arith.constant 0 : i32
    %c0_i32_1 = arith.constant 0 : i32
    return %arg0, %c0_i32, %c0_i32_0 : i32, i32, i32
  }
  func.func @transform_6(%arg0: i32) -> (i32, i32, i32) {
    %c0_i32 = arith.constant 0 : i32
    %c0_i32_0 = arith.constant 0 : i32
    %c0_i32_1 = arith.constant 0 : i32
    return %arg0, %c0_i32, %c0_i32_0 : i32, i32, i32
  }
  func.func @transform_7(%arg0: i32) -> (i32, i32, i32) {
    %c0_i32 = arith.constant 0 : i32
    %c0_i32_0 = arith.constant 0 : i32
    %c0_i32_1 = arith.constant 0 : i32
    return %arg0, %c0_i32, %c0_i32_0 : i32, i32, i32
  }
  func.func @transform_8(%arg0: i32) -> (i32, i32, i32) {
    %c0_i32 = arith.constant 0 : i32
    %c0_i32_0 = arith.constant 0 : i32
    %c0_i32_1 = arith.constant 0 : i32
    return %arg0, %c0_i32, %c0_i32_0 : i32, i32, i32
  }
  func.func @transform_9(%arg0: i32) -> (i32, i32, i32) {
    %c0_i32 = arith.constant 0 : i32
    %c0_i32_0 = arith.constant 0 : i32
    %c0_i32_1 = arith.constant 0 : i32
    return %arg0, %c0_i32, %c0_i32_0 : i32, i32, i32
  }
  func.func @transform_10(%arg0: i32) -> (i32, i32, i32) {
    %c0_i32 = arith.constant 0 : i32
    %c0_i32_0 = arith.constant 0 : i32
    %c0_i32_1 = arith.constant 0 : i32
    return %arg0, %c0_i32, %c0_i32_0 : i32, i32, i32
  }
  func.func @transform_11(%arg0: i32) -> (i32, i32, i32) {
    %c0_i32 = arith.constant 0 : i32
    %c0_i32_0 = arith.constant 0 : i32
    %c0_i32_1 = arith.constant 0 : i32
    return %arg0, %c0_i32, %c0_i32_0 : i32, i32, i32
  }
  func.func @transform_12(%arg0: i32) -> (i32, i32, i32) {
    %c0_i32 = arith.constant 0 : i32
    %c0_i32_0 = arith.constant 0 : i32
    %c0_i32_1 = arith.constant 0 : i32
    return %arg0, %c0_i32, %c0_i32_0 : i32, i32, i32
  }
  func.func @transform_13(%arg0: i32) -> (i32, i32) {
    %c0_i32 = arith.constant 0 : i32
    %c0_i32_0 = arith.constant 0 : i32
    %c0_i32_1 = arith.constant 0 : i32
    return %c0_i32, %c0_i32_0 : i32, i32
  }
  func.func @transform_14(%arg0: i32) -> (i32, i32) {
    %c0_i32 = arith.constant 0 : i32
    %c0_i32_0 = arith.constant 0 : i32
    %c0_i32_1 = arith.constant 0 : i32
    return %c0_i32, %c0_i32_0 : i32, i32
  }
  func.func @transform_15(%arg0: i32) -> (i32, i32) {
    %c0_i32 = arith.constant 0 : i32
    %c0_i32_0 = arith.constant 0 : i32
    %c0_i32_1 = arith.constant 0 : i32
    return %c0_i32, %c0_i32_0 : i32, i32
  }
  func.func @transform_16(%arg0: i32) -> (i32, i32) {
    %c0_i32 = arith.constant 0 : i32
    %c0_i32_0 = arith.constant 0 : i32
    %c0_i32_1 = arith.constant 0 : i32
    return %c0_i32, %c0_i32_0 : i32, i32
  }
}

</mosaic_0001>

<llo_original>
// kernel: llama2_forward.1
$region0: #{llama2_forward.1}
  #allocation0 [shape = 'u32[]', space=smem, size = 0x4, offset = 0x4, fixed_abs, tag = 'smem constant byte address 0x4 - core index']
  #allocation1 [shape = 'u32[144,128]{1,0:T(1,128)}', space=vmem, size = 0x12000, scoped, tag = 'internal scratch']
  %s0 = inlined_call_operand.vmem [shape: f32[128,256], index: 0, kind: input, shape index: {}]
  %s1 = inlined_call_operand.vmem [shape: f32[16,128], index: 1, kind: input, shape index: {}]
  %s2 = inlined_call_operand.vmem [shape: f32[16,128], index: 2, kind: input, shape index: {}]
  %s3 = inlined_call_operand.vmem [shape: f32[16,16], index: 3, kind: input, shape index: {}]
  %s4 = inlined_call_operand.hbm [shape: bf16[2,256,256], index: 4, kind: input, shape index: {}]
  %s5 = inlined_call_operand.hbm [shape: bf16[2,256,256], index: 5, kind: input, shape index: {}]
  %s6 = inlined_call_operand.hbm [shape: bf16[2,256,256], index: 6, kind: input, shape index: {}]
  %s7 = inlined_call_operand.hbm [shape: bf16[2,256,256], index: 7, kind: input, shape index: {}]
  %s8 = inlined_call_operand.vmem [shape: bf16[2,256,512], index: 8, kind: input, shape index: {}]
  %s9 = inlined_call_operand.vmem [shape: bf16[2,256,512], index: 9, kind: input, shape index: {}]
  %s10 = inlined_call_operand.hbm [shape: bf16[2,512,256], index: 10, kind: input, shape index: {}]
  %s11 = inlined_call_operand.vmem [shape: f32[2,1,256], index: 11, kind: input, shape index: {}]
  %s12 = inlined_call_operand.vmem [shape: f32[2,1,256], index: 12, kind: input, shape index: {}]
  %s13 = inlined_call_operand.vmem [shape: f32[1,256], index: 13, kind: input, shape index: {}]
  %s14 = inlined_call_operand.vmem [shape: bf16[256,256], index: 14, kind: input, shape index: {}]
  %s15 = inlined_call_operand.hbm [shape: f32[128,256], index: 15, kind: output, shape index: {0}]
  %s16 = inlined_call_operand.hbm [shape: f32[128,256], index: 16, kind: output, shape index: {1}]
  %17 = xla_tuple %s15, %s16
  %s18 = sld [smem:[#allocation0]]
  $region129: #{llama2_forward.1} parent=0
    _
  %s20 = ssub.s32 1, %s18
  %s21 = scalar_select 0, %s20, %s18
  $region1: #{llama2_forward.1} parent=0
    #allocation2 [shape = 'u8[262144]{0}', space=vmem, size = 0x40000, scoped, tag = 'input window, operand 4']
    #allocation3 [shape = 's32[2]{0}', space=sflag, size = 0x8, scoped, tag = 'scoped memory for llama2_forward.1']
    #allocation4 [shape = 's32[2]{0}', space=sflag, size = 0x8, scoped, tag = 'scoped memory for llama2_forward.1']
    #allocation5 [shape = 'u8[262144]{0}', space=vmem, size = 0x40000, scoped, tag = 'input window, operand 5']
    #allocation6 [shape = 's32[2]{0}', space=sflag, size = 0x8, scoped, tag = 'scoped memory for llama2_forward.1']
    #allocation7 [shape = 'u8[262144]{0}', space=vmem, size = 0x40000, scoped, tag = 'input window, operand 6']
    #allocation8 [shape = 'u8[262144]{0}', space=vmem, size = 0x40000, scoped, tag = 'input window, operand 7']
    #allocation9 [shape = 's32[2]{0}', space=sflag, size = 0x8, scoped, tag = 'scoped memory for llama2_forward.1']
    #allocation10 [shape = 'u8[524288]{0}', space=vmem, size = 0x80000, scoped, tag = 'input window, operand 10']
    #allocation11 [shape = 'u8[131072]{0}', space=vmem, size = 0x20000, scoped, tag = 'output window, operand 0, single buffered']
    #allocation12 [shape = 'u8[131072]{0}', space=vmem, size = 0x20000, scoped, tag = 'output window, operand 1, single buffered']
    #allocation13 [shape = 's32[1]{0}', space=sflag, size = 0x4, scoped, tag = 'scoped memory for llama2_forward.1']
    %22 = vsyncpa [#allocation3], 0
    %s23 = scalar_lea.sflag [#allocation3], 1
    %24 = vsyncpa %s23, 0
    %25 = vsyncpa [#allocation6], 0
    %s26 = scalar_lea.sflag [#allocation6], 1
    %27 = vsyncpa %s26, 0
    %28 = vsyncpa [#allocation9], 0
    %s29 = scalar_lea.sflag [#allocation9], 1
    %30 = vsyncpa %s29, 0
    %31 = vsyncpa [#allocation4], 0
    %32 = vsyncpa [#allocation13], 0
    loop: start=0, step=1, limit=4
    $region2: #{llama2_forward.1} parent=1 // loop_pre_header
      _
    $region3: #{llama2_forward.1} parent=1 // loop_header
      %s34 = sphi 0, %s38
      %p35 = scmp.ge.s32.totalorder %s34, 4
      %s42 = sphi 0, %s42
      %s44 = sphi 0, %s42
      %s45 = sphi 0, %s44
      %s59 = sphi 0, %s45
      %s63 = sphi 0, %s63
      %s65 = sphi 0, %s63
      %s66 = sphi 0, %s65
      %s80 = sphi 0, %s66
      %s84 = sphi 0, %s84
      %s86 = sphi 0, %s84
      %s87 = sphi 0, %s86
      %s101 = sphi 0, %s87
      %s105 = sphi 0, %s105
      %s107 = sphi 0, %s105
      %s108 = sphi 0, %s107
      %s122 = sphi 0, %s108
      %s128 = sphi 0, %s130
      %s131 = sphi 0, %s128
      %s132 = sphi 0, %s131
      %s148 = sphi 0, %s132
      %s154 = sphi 0, %s156
      %s157 = sphi 0, %s154
      %s158 = sphi 0, %s157
      %s174 = sphi 0, %s158
      %s180 = sphi 0, %s182
      %s183 = sphi 0, %s180
      %s184 = sphi 0, %s183
      %s200 = sphi 0, %s184
      %s206 = sphi 0, %s208
      %s209 = sphi 0, %s206
      %s210 = sphi 0, %s209
      %s226 = sphi 0, %s210
      %s232 = sphi 0, %s234
      %s235 = sphi 0, %s232
      %s236 = sphi 0, %s235
      %s252 = sphi 0, %s236
      %s258 = sphi 0, %s260
      %s261 = sphi 0, %s258
      %s262 = sphi 0, %s261
      %s278 = sphi 0, %s262
      %s284 = sphi 0, %s286
      %s287 = sphi 0, %s284
      %s288 = sphi 0, %s287
      %s304 = sphi 0, %s288
      %s310 = sphi 0, %s312
      %s313 = sphi 0, %s310
      %s314 = sphi 0, %s313
      %s330 = sphi 0, %s314
      %s336 = sphi 0, %s338
      %s339 = sphi 0, %s336
      %s340 = sphi 0, %s339
      %s356 = sphi 0, %s340
      %s360 = sphi 0, %s360
      %s362 = sphi 0, %s360
      %s363 = sphi 0, %s362
      %s377 = sphi 0, %s363
      %s381 = sphi 0, %s381
      %s383 = sphi 0, %s381
      %s384 = sphi 0, %s383
      %s398 = sphi 0, %s384
      %s402 = sphi 0, %s402
      %s404 = sphi 0, %s402
      %s405 = sphi 0, %s404
      %s419 = sphi 0, %s405
      %s423 = sphi 0, %s423
      %s425 = sphi 0, %s423
      %s426 = sphi 0, %s425
      %s440 = sphi 0, %s426
    $region4: #{llama2_forward.1} parent=1 // loop_header_branch
      %37 = sbr.rel (%p35) target = $region8
    $region5: #{llama2_forward.1} parent=1 // loop_body
      %s39 = ssub.s32 %s34, 1
      %s40 = ssub.s32 %s34, 2
      %s41 = sadd.s32 %s34, 1
      %s43 = sadd.s32 %s42, 1
      %p46 = scmp.eq.s32.totalorder %s34, 1
      %p47 = scmp.ne.s32.totalorder %s42, %s44
      %p48 = scmp.eq.s32.totalorder %s34, 0
      %p49 = por %p47, %p48
      %p50 = scmp.ne.s32.totalorder %s42, %s44
      %p51 = scmp.eq.s32.totalorder %s39, 1
      %p52 = por %p50, %p51
      %p53 = scmp.ne.s32.totalorder %s44, %s45
      %p54 = scmp.eq.s32.totalorder %s39, 0
      %p55 = por %p53, %p54
      %p56 = scmp.ne.s32.totalorder %s44, %s45
      %p57 = scmp.eq.s32.totalorder %s40, 1
      %p58 = por %p56, %p57
      %p60 = scmp.ne.s32.totalorder %s45, %s59
      %p61 = scmp.eq.s32.totalorder %s40, 0
      %p62 = por %p60, %p61
      %s64 = sadd.s32 %s63, 1
      %p67 = scmp.eq.s32.totalorder %s34, 1
      %p68 = scmp.ne.s32.totalorder %s63, %s65
      %p69 = scmp.eq.s32.totalorder %s34, 0
      %p70 = por %p68, %p69
      %p71 = scmp.ne.s32.totalorder %s63, %s65
      %p72 = scmp.eq.s32.totalorder %s39, 1
      %p73 = por %p71, %p72
      %p74 = scmp.ne.s32.totalorder %s65, %s66
      %p75 = scmp.eq.s32.totalorder %s39, 0
      %p76 = por %p74, %p75
      %p77 = scmp.ne.s32.totalorder %s65, %s66
      %p78 = scmp.eq.s32.totalorder %s40, 1
      %p79 = por %p77, %p78
      %p81 = scmp.ne.s32.totalorder %s66, %s80
      %p82 = scmp.eq.s32.totalorder %s40, 0
      %p83 = por %p81, %p82
      %s85 = sadd.s32 %s84, 1
      %p88 = scmp.eq.s32.totalorder %s34, 1
      %p89 = scmp.ne.s32.totalorder %s84, %s86
      %p90 = scmp.eq.s32.totalorder %s34, 0
      %p91 = por %p89, %p90
      %p92 = scmp.ne.s32.totalorder %s84, %s86
      %p93 = scmp.eq.s32.totalorder %s39, 1
      %p94 = por %p92, %p93
      %p95 = scmp.ne.s32.totalorder %s86, %s87
      %p96 = scmp.eq.s32.totalorder %s39, 0
      %p97 = por %p95, %p96
      %p98 = scmp.ne.s32.totalorder %s86, %s87
      %p99 = scmp.eq.s32.totalorder %s40, 1
      %p100 = por %p98, %p99
      %p102 = scmp.ne.s32.totalorder %s87, %s101
      %p103 = scmp.eq.s32.totalorder %s40, 0
      %p104 = por %p102, %p103
      %s106 = sadd.s32 %s105, 1
      %p109 = scmp.eq.s32.totalorder %s34, 1
      %p110 = scmp.ne.s32.totalorder %s105, %s107
      %p111 = scmp.eq.s32.totalorder %s34, 0
      %p112 = por %p110, %p111
      %p113 = scmp.ne.s32.totalorder %s105, %s107
      %p114 = scmp.eq.s32.totalorder %s39, 1
      %p115 = por %p113, %p114
      %p116 = scmp.ne.s32.totalorder %s107, %s108
      %p117 = scmp.eq.s32.totalorder %s39, 0
      %p118 = por %p116, %p117
      %p119 = scmp.ne.s32.totalorder %s107, %s108
      %p120 = scmp.eq.s32.totalorder %s40, 1
      %p121 = por %p119, %p120
      %p123 = scmp.ne.s32.totalorder %s108, %s122
      %p124 = scmp.eq.s32.totalorder %s40, 0
      %p125 = por %p123, %p124
      %s126 = ssub.s32 %s34, %s41
      %p127 = scmp.eq.s32.totalorder %s126, 0
      %s129 = sadd.s32 %s128, 1
      %s130 = scalar_select %p127, %s128, %s129
      %p133 = pneg %p127
      %p134 = scmp.eq.s32.totalorder %s34, 1
      %p135 = por %p133, %p134
      %p136 = scmp.ne.s32.totalorder %s128, %s131
      %p137 = scmp.eq.s32.totalorder %s34, 0
      %p138 = por %p136, %p137
      %p139 = scmp.ne.s32.totalorder %s128, %s131
      %p140 = scmp.eq.s32.totalorder %s39, 1
      %p141 = por %p139, %p140
      %p142 = scmp.ne.s32.totalorder %s131, %s132
      %p143 = scmp.eq.s32.totalorder %s39, 0
      %p144 = por %p142, %p143
      %p145 = scmp.ne.s32.totalorder %s131, %s132
      %p146 = scmp.eq.s32.totalorder %s40, 1
      %p147 = por %p145, %p146
      %p149 = scmp.ne.s32.totalorder %s132, %s148
      %p150 = scmp.eq.s32.totalorder %s40, 0
      %p151 = por %p149, %p150
      %s152 = ssub.s32 %s34, %s41
      %p153 = scmp.eq.s32.totalorder %s152, 0
      %s155 = sadd.s32 %s154, 1
      %s156 = scalar_select %p153, %s154, %s155
      %p159 = pneg %p153
      %p160 = scmp.eq.s32.totalorder %s34, 1
      %p161 = por %p159, %p160
      %p162 = scmp.ne.s32.totalorder %s154, %s157
      %p163 = scmp.eq.s32.totalorder %s34, 0
      %p164 = por %p162, %p163
      %p165 = scmp.ne.s32.totalorder %s154, %s157
      %p166 = scmp.eq.s32.totalorder %s39, 1
      %p167 = por %p165, %p166
      %p168 = scmp.ne.s32.totalorder %s157, %s158
      %p169 = scmp.eq.s32.totalorder %s39, 0
      %p170 = por %p168, %p169
      %p171 = scmp.ne.s32.totalorder %s157, %s158
      %p172 = scmp.eq.s32.totalorder %s40, 1
      %p173 = por %p171, %p172
      %p175 = scmp.ne.s32.totalorder %s158, %s174
      %p176 = scmp.eq.s32.totalorder %s40, 0
      %p177 = por %p175, %p176
      %s178 = ssub.s32 %s34, %s41
      %p179 = scmp.eq.s32.totalorder %s178, 0
      %s181 = sadd.s32 %s180, 1
      %s182 = scalar_select %p179, %s180, %s181
      %p185 = pneg %p179
      %p186 = scmp.eq.s32.totalorder %s34, 1
      %p187 = por %p185, %p186
      %p188 = scmp.ne.s32.totalorder %s180, %s183
      %p189 = scmp.eq.s32.totalorder %s34, 0
      %p190 = por %p188, %p189
      %p191 = scmp.ne.s32.totalorder %s180, %s183
      %p192 = scmp.eq.s32.totalorder %s39, 1
      %p193 = por %p191, %p192
      %p194 = scmp.ne.s32.totalorder %s183, %s184
      %p195 = scmp.eq.s32.totalorder %s39, 0
      %p196 = por %p194, %p195
      %p197 = scmp.ne.s32.totalorder %s183, %s184
      %p198 = scmp.eq.s32.totalorder %s40, 1
      %p199 = por %p197, %p198
      %p201 = scmp.ne.s32.totalorder %s184, %s200
      %p202 = scmp.eq.s32.totalorder %s40, 0
      %p203 = por %p201, %p202
      %s204 = ssub.s32 %s34, %s41
      %p205 = scmp.eq.s32.totalorder %s204, 0
      %s207 = sadd.s32 %s206, 1
      %s208 = scalar_select %p205, %s206, %s207
      %p211 = pneg %p205
      %p212 = scmp.eq.s32.totalorder %s34, 1
      %p213 = por %p211, %p212
      %p214 = scmp.ne.s32.totalorder %s206, %s209
      %p215 = scmp.eq.s32.totalorder %s34, 0
      %p216 = por %p214, %p215
      %p217 = scmp.ne.s32.totalorder %s206, %s209
      %p218 = scmp.eq.s32.totalorder %s39, 1
      %p219 = por %p217, %p218
      %p220 = scmp.ne.s32.totalorder %s209, %s210
      %p221 = scmp.eq.s32.totalorder %s39, 0
      %p222 = por %p220, %p221
      %p223 = scmp.ne.s32.totalorder %s209, %s210
      %p224 = scmp.eq.s32.totalorder %s40, 1
      %p225 = por %p223, %p224
      %p227 = scmp.ne.s32.totalorder %s210, %s226
      %p228 = scmp.eq.s32.totalorder %s40, 0
      %p229 = por %p227, %p228
      %s230 = ssub.s32 %s34, %s41
      %p231 = scmp.eq.s32.totalorder %s230, 0
      %s233 = sadd.s32 %s232, 1
      %s234 = scalar_select %p231, %s232, %s233
      %p237 = pneg %p231
      %p238 = scmp.eq.s32.totalorder %s34, 1
      %p239 = por %p237, %p238
      %p240 = scmp.ne.s32.totalorder %s232, %s235
      %p241 = scmp.eq.s32.totalorder %s34, 0
      %p242 = por %p240, %p241
      %p243 = scmp.ne.s32.totalorder %s232, %s235
      %p244 = scmp.eq.s32.totalorder %s39, 1
      %p245 = por %p243, %p244
      %p246 = scmp.ne.s32.totalorder %s235, %s236
      %p247 = scmp.eq.s32.totalorder %s39, 0
      %p248 = por %p246, %p247
      %p249 = scmp.ne.s32.totalorder %s235, %s236
      %p250 = scmp.eq.s32.totalorder %s40, 1
      %p251 = por %p249, %p250
      %p253 = scmp.ne.s32.totalorder %s236, %s252
      %p254 = scmp.eq.s32.totalorder %s40, 0
      %p255 = por %p253, %p254
      %s256 = ssub.s32 %s34, %s41
      %p257 = scmp.eq.s32.totalorder %s256, 0
      %s259 = sadd.s32 %s258, 1
      %s260 = scalar_select %p257, %s258, %s259
      %p263 = pneg %p257
      %p264 = scmp.eq.s32.totalorder %s34, 1
      %p265 = por %p263, %p264
      %p266 = scmp.ne.s32.totalorder %s258, %s261
      %p267 = scmp.eq.s32.totalorder %s34, 0
      %p268 = por %p266, %p267
      %p269 = scmp.ne.s32.totalorder %s258, %s261
      %p270 = scmp.eq.s32.totalorder %s39, 1
      %p271 = por %p269, %p270
      %p272 = scmp.ne.s32.totalorder %s261, %s262
      %p273 = scmp.eq.s32.totalorder %s39, 0
      %p274 = por %p272, %p273
      %p275 = scmp.ne.s32.totalorder %s261, %s262
      %p276 = scmp.eq.s32.totalorder %s40, 1
      %p277 = por %p275, %p276
      %p279 = scmp.ne.s32.totalorder %s262, %s278
      %p280 = scmp.eq.s32.totalorder %s40, 0
      %p281 = por %p279, %p280
      %s282 = ssub.s32 %s34, %s41
      %p283 = scmp.eq.s32.totalorder %s282, 0
      %s285 = sadd.s32 %s284, 1
      %s286 = scalar_select %p283, %s284, %s285
      %p289 = pneg %p283
      %p290 = scmp.eq.s32.totalorder %s34, 1
      %p291 = por %p289, %p290
      %p292 = scmp.ne.s32.totalorder %s284, %s287
      %p293 = scmp.eq.s32.totalorder %s34, 0
      %p294 = por %p292, %p293
      %p295 = scmp.ne.s32.totalorder %s284, %s287
      %p296 = scmp.eq.s32.totalorder %s39, 1
      %p297 = por %p295, %p296
      %p298 = scmp.ne.s32.totalorder %s287, %s288
      %p299 = scmp.eq.s32.totalorder %s39, 0
      %p300 = por %p298, %p299
      %p301 = scmp.ne.s32.totalorder %s287, %s288
      %p302 = scmp.eq.s32.totalorder %s40, 1
      %p303 = por %p301, %p302
      %p305 = scmp.ne.s32.totalorder %s288, %s304
      %p306 = scmp.eq.s32.totalorder %s40, 0
      %p307 = por %p305, %p306
      %s308 = ssub.s32 %s34, %s41
      %p309 = scmp.eq.s32.totalorder %s308, 0
      %s311 = sadd.s32 %s310, 1
      %s312 = scalar_select %p309, %s310, %s311
      %p315 = pneg %p309
      %p316 = scmp.eq.s32.totalorder %s34, 1
      %p317 = por %p315, %p316
      %p318 = scmp.ne.s32.totalorder %s310, %s313
      %p319 = scmp.eq.s32.totalorder %s34, 0
      %p320 = por %p318, %p319
      %p321 = scmp.ne.s32.totalorder %s310, %s313
      %p322 = scmp.eq.s32.totalorder %s39, 1
      %p323 = por %p321, %p322
      %p324 = scmp.ne.s32.totalorder %s313, %s314
      %p325 = scmp.eq.s32.totalorder %s39, 0
      %p326 = por %p324, %p325
      %p327 = scmp.ne.s32.totalorder %s313, %s314
      %p328 = scmp.eq.s32.totalorder %s40, 1
      %p329 = por %p327, %p328
      %p331 = scmp.ne.s32.totalorder %s314, %s330
      %p332 = scmp.eq.s32.totalorder %s40, 0
      %p333 = por %p331, %p332
      %s334 = ssub.s32 %s34, %s41
      %p335 = scmp.eq.s32.totalorder %s334, 0
      %s337 = sadd.s32 %s336, 1
      %s338 = scalar_select %p335, %s336, %s337
      %p341 = pneg %p335
      %p342 = scmp.eq.s32.totalorder %s34, 1
      %p343 = por %p341, %p342
      %p344 = scmp.ne.s32.totalorder %s336, %s339
      %p345 = scmp.eq.s32.totalorder %s34, 0
      %p346 = por %p344, %p345
      %p347 = scmp.ne.s32.totalorder %s336, %s339
      %p348 = scmp.eq.s32.totalorder %s39, 1
      %p349 = por %p347, %p348
      %p350 = scmp.ne.s32.totalorder %s339, %s340
      %p351 = scmp.eq.s32.totalorder %s39, 0
      %p352 = por %p350, %p351
      %p353 = scmp.ne.s32.totalorder %s339, %s340
      %p354 = scmp.eq.s32.totalorder %s40, 1
      %p355 = por %p353, %p354
      %p357 = scmp.ne.s32.totalorder %s340, %s356
      %p358 = scmp.eq.s32.totalorder %s40, 0
      %p359 = por %p357, %p358
      %s361 = sadd.s32 %s360, 1
      %p364 = scmp.eq.s32.totalorder %s34, 1
      %p365 = scmp.ne.s32.totalorder %s360, %s362
      %p366 = scmp.eq.s32.totalorder %s34, 0
      %p367 = por %p365, %p366
      %p368 = scmp.ne.s32.totalorder %s360, %s362
      %p369 = scmp.eq.s32.totalorder %s39, 1
      %p370 = por %p368, %p369
      %p371 = scmp.ne.s32.totalorder %s362, %s363
      %p372 = scmp.eq.s32.totalorder %s39, 0
      %p373 = por %p371, %p372
      %p374 = scmp.ne.s32.totalorder %s362, %s363
      %p375 = scmp.eq.s32.totalorder %s40, 1
      %p376 = por %p374, %p375
      %p378 = scmp.ne.s32.totalorder %s363, %s377
      %p379 = scmp.eq.s32.totalorder %s40, 0
      %p380 = por %p378, %p379
      %s382 = sadd.s32 %s381, 1
      %p385 = scmp.eq.s32.totalorder %s34, 1
      %p386 = scmp.ne.s32.totalorder %s381, %s383
      %p387 = scmp.eq.s32.totalorder %s34, 0
      %p388 = por %p386, %p387
      %p389 = scmp.ne.s32.totalorder %s381, %s383
      %p390 = scmp.eq.s32.totalorder %s39, 1
      %p391 = por %p389, %p390
      %p392 = scmp.ne.s32.totalorder %s383, %s384
      %p393 = scmp.eq.s32.totalorder %s39, 0
      %p394 = por %p392, %p393
      %p395 = scmp.ne.s32.totalorder %s383, %s384
      %p396 = scmp.eq.s32.totalorder %s40, 1
      %p397 = por %p395, %p396
      %p399 = scmp.ne.s32.totalorder %s384, %s398
      %p400 = scmp.eq.s32.totalorder %s40, 0
      %p401 = por %p399, %p400
      %s403 = sadd.s32 %s402, 1
      %p406 = scmp.eq.s32.totalorder %s34, 1
      %p407 = scmp.ne.s32.totalorder %s402, %s404
      %p408 = scmp.eq.s32.totalorder %s34, 0
      %p409 = por %p407, %p408
      %p410 = scmp.ne.s32.totalorder %s402, %s404
      %p411 = scmp.eq.s32.totalorder %s39, 1
      %p412 = por %p410, %p411
      %p413 = scmp.ne.s32.totalorder %s404, %s405
      %p414 = scmp.eq.s32.totalorder %s39, 0
      %p415 = por %p413, %p414
      %p416 = scmp.ne.s32.totalorder %s404, %s405
      %p417 = scmp.eq.s32.totalorder %s40, 1
      %p418 = por %p416, %p417
      %p420 = scmp.ne.s32.totalorder %s405, %s419
      %p421 = scmp.eq.s32.totalorder %s40, 0
      %p422 = por %p420, %p421
      %s424 = sadd.s32 %s423, 1
      %p427 = scmp.eq.s32.totalorder %s34, 1
      %p428 = scmp.ne.s32.totalorder %s423, %s425
      %p429 = scmp.eq.s32.totalorder %s34, 0
      %p430 = por %p428, %p429
      %p431 = scmp.ne.s32.totalorder %s423, %s425
      %p432 = scmp.eq.s32.totalorder %s39, 1
      %p433 = por %p431, %p432
      %p434 = scmp.ne.s32.totalorder %s425, %s426
      %p435 = scmp.eq.s32.totalorder %s39, 0
      %p436 = por %p434, %p435
      %p437 = scmp.ne.s32.totalorder %s425, %s426
      %p438 = scmp.eq.s32.totalorder %s40, 1
      %p439 = por %p437, %p438
      %p441 = scmp.ne.s32.totalorder %s426, %s440
      %p442 = scmp.eq.s32.totalorder %s40, 0
      %p443 = por %p441, %p442
      %p444 = scmp.le.s32.totalorder 1, %s34
      %p445 = scmp.lt.s32.totalorder %s34, 3
      %p446 = pnand %p444, %p445
      %p447 = pneg %p446
      // Predicated region
      $region9: #{llama2_forward.1} parent=5 // pred_check
        _
      $region10: #{llama2_forward.1} parent=5 // pred_check_branch
        %449 = sbr.rel (%p446) target = $region12
      $region11: #{llama2_forward.1} parent=5 // pred_region
        %s450 = ssub.s32 %s34, 1
        // Predicated region
        $region13: #{llama2_forward.1} parent=11 // pred_check
          %p451 = pneg %p55
        $region14: #{llama2_forward.1} parent=11 // pred_check_branch
          %453 = sbr.rel (%p451) target = $region16
        $region15: #{llama2_forward.1} parent=11 // pred_region
          _
        $region16: #{llama2_forward.1} parent=11 // pred_fallthru
          _
        // Predicated region
        $region17: #{llama2_forward.1} parent=11 // pred_check
          %p454 = pneg %p76
        $region18: #{llama2_forward.1} parent=11 // pred_check_branch
          %456 = sbr.rel (%p454) target = $region20
        $region19: #{llama2_forward.1} parent=11 // pred_region
          _
        $region20: #{llama2_forward.1} parent=11 // pred_fallthru
          _
        // Predicated region
        $region21: #{llama2_forward.1} parent=11 // pred_check
          %p457 = pneg %p97
        $region22: #{llama2_forward.1} parent=11 // pred_check_branch
          %459 = sbr.rel (%p457) target = $region24
        $region23: #{llama2_forward.1} parent=11 // pred_region
          _
        $region24: #{llama2_forward.1} parent=11 // pred_fallthru
          _
        // Predicated region
        $region25: #{llama2_forward.1} parent=11 // pred_check
          %p460 = pneg %p118
        $region26: #{llama2_forward.1} parent=11 // pred_check_branch
          %462 = sbr.rel (%p460) target = $region28
        $region27: #{llama2_forward.1} parent=11 // pred_region
          _
        $region28: #{llama2_forward.1} parent=11 // pred_fallthru
          _
        // Predicated region
        $region29: #{llama2_forward.1} parent=11 // pred_check
          %p463 = pneg %p373
        $region30: #{llama2_forward.1} parent=11 // pred_check_branch
          %465 = sbr.rel (%p463) target = $region32
        $region31: #{llama2_forward.1} parent=11 // pred_region
          _
        $region32: #{llama2_forward.1} parent=11 // pred_fallthru
          _
        // Predicated region
        $region33: #{llama2_forward.1} parent=11 // pred_check
          %p466 = pneg %p394
        $region34: #{llama2_forward.1} parent=11 // pred_check_branch
          %468 = sbr.rel (%p466) target = $region36
        $region35: #{llama2_forward.1} parent=11 // pred_region
          _
        $region36: #{llama2_forward.1} parent=11 // pred_fallthru
          _
      $region12: #{llama2_forward.1} parent=5 // pred_fallthru
        _
      %p469 = scmp.lt.s32.totalorder %s34, 2
      // Predicated region
      $region37: #{llama2_forward.1} parent=5 // pred_check
        %p470 = pneg %p469
      $region38: #{llama2_forward.1} parent=5 // pred_check_branch
        %472 = sbr.rel (%p470) target = $region40
      $region39: #{llama2_forward.1} parent=5 // pred_region
        // Predicated region
        $region41: #{llama2_forward.1} parent=39 // pred_check
          %p473 = pneg %p138
        $region42: #{llama2_forward.1} parent=39 // pred_check_branch
          %475 = sbr.rel (%p473) target = $region44
        $region43: #{llama2_forward.1} parent=39 // pred_region
          %s476 = sand.u32 %s128, 1
          %s477 = scalar_lea.sflag [#allocation3], %s476
          %s478 = sand.u32 %s128, 1
          %s479 = smul.addr %s478, 256
          %s480 = scalar_lea.vmem [#allocation2], %s479
          %s482 = ssub.s32 4096, 4096
          %483 = vsyncadd %s477, %s482
          %s484 = smul.addr %s34, 64
          %s485 = smul.addr %s484, 64
          %s486 = scalar_lea.hbm %s4, %s485
          %s487 = sshll.u32 %s480, 4
          %s488 = int_to_ptr.vmem [resolvable:$true] %s487
          %493 = dma.hbm_to_vmem [thread:$0]  %s486, 4096, %s488, %s477, 128, 128, 8
        $region44: #{llama2_forward.1} parent=39 // pred_fallthru
          _
        // Predicated region
        $region45: #{llama2_forward.1} parent=39 // pred_check
          %p494 = pneg %p164
        $region46: #{llama2_forward.1} parent=39 // pred_check_branch
          %496 = sbr.rel (%p494) target = $region48
        $region47: #{llama2_forward.1} parent=39 // pred_region
          %s497 = sand.u32 %s34, 1
          %s498 = scalar_lea.sflag [#allocation6], %s497
          %s499 = sand.u32 %s154, 1
          %s500 = smul.addr %s499, 256
          %s501 = scalar_lea.vmem [#allocation5], %s500
          %s503 = ssub.s32 4096, 4096
          %504 = vsyncadd %s498, %s503
          %s505 = smul.addr %s34, 64
          %s506 = smul.addr %s505, 64
          %s507 = scalar_lea.hbm %s5, %s506
          %s508 = sshll.u32 %s501, 4
          %s509 = int_to_ptr.vmem [resolvable:$true] %s508
          %514 = dma.hbm_to_vmem [thread:$0]  %s507, 4096, %s509, %s498, 128, 128, 8
        $region48: #{llama2_forward.1} parent=39 // pred_fallthru
          _
        // Predicated region
        $region49: #{llama2_forward.1} parent=39 // pred_check
          %p515 = pneg %p190
        $region50: #{llama2_forward.1} parent=39 // pred_check_branch
          %517 = sbr.rel (%p515) target = $region52
        $region51: #{llama2_forward.1} parent=39 // pred_region
          %s518 = sand.u32 %s34, 1
          %s519 = scalar_lea.sflag [#allocation6], %s518
          %s520 = sand.u32 %s180, 1
          %s521 = smul.addr %s520, 256
          %s522 = scalar_lea.vmem [#allocation7], %s521
          %s524 = ssub.s32 4096, 4096
          %525 = vsyncadd %s519, %s524
          %s526 = smul.addr %s34, 64
          %s527 = smul.addr %s526, 64
          %s528 = scalar_lea.hbm %s6, %s527
          %s529 = sshll.u32 %s522, 4
          %s530 = int_to_ptr.vmem [resolvable:$true] %s529
          %535 = dma.hbm_to_vmem [thread:$0]  %s528, 4096, %s530, %s519, 128, 128, 8
        $region52: #{llama2_forward.1} parent=39 // pred_fallthru
          _
        // Predicated region
        $region53: #{llama2_forward.1} parent=39 // pred_check
          %p536 = pneg %p216
        $region54: #{llama2_forward.1} parent=39 // pred_check_branch
          %538 = sbr.rel (%p536) target = $region56
        $region55: #{llama2_forward.1} parent=39 // pred_region
          %s539 = sand.u32 %s34, 1
          %s540 = scalar_lea.sflag [#allocation9], %s539
          %s541 = sand.u32 %s206, 1
          %s542 = smul.addr %s541, 256
          %s543 = scalar_lea.vmem [#allocation8], %s542
          %s545 = ssub.s32 4096, 4096
          %546 = vsyncadd %s540, %s545
          %s547 = smul.addr %s34, 64
          %s548 = smul.addr %s547, 64
          %s549 = scalar_lea.hbm %s7, %s548
          %s550 = sshll.u32 %s543, 4
          %s551 = int_to_ptr.vmem [resolvable:$true] %s550
          %556 = dma.hbm_to_vmem [thread:$0]  %s549, 4096, %s551, %s540, 128, 128, 8
        $region56: #{llama2_forward.1} parent=39 // pred_fallthru
          _
        // Predicated region
        $region57: #{llama2_forward.1} parent=39 // pred_check
          %p557 = pneg %p242
        $region58: #{llama2_forward.1} parent=39 // pred_check_branch
          %559 = sbr.rel (%p557) target = $region60
        $region59: #{llama2_forward.1} parent=39 // pred_region
          %p560 = scmp.lt.s32.totalorder %s34, 1
          %s561 = scalar_select %p560, %s34, 1
          %s562 = smul.addr %s561, 128
          %s563 = smul.addr %s562, 4
          %s564 = scalar_lea.vmem %s8, %s563
        $region60: #{llama2_forward.1} parent=39 // pred_fallthru
          _
        // Predicated region
        $region61: #{llama2_forward.1} parent=39 // pred_check
          %p565 = pneg %p268
        $region62: #{llama2_forward.1} parent=39 // pred_check_branch
          %567 = sbr.rel (%p565) target = $region64
        $region63: #{llama2_forward.1} parent=39 // pred_region
          %p568 = scmp.lt.s32.totalorder %s34, 1
          %s569 = scalar_select %p568, %s34, 1
          %s570 = smul.addr %s569, 128
          %s571 = smul.addr %s570, 4
          %s572 = scalar_lea.vmem %s9, %s571
        $region64: #{llama2_forward.1} parent=39 // pred_fallthru
          _
        // Predicated region
        $region65: #{llama2_forward.1} parent=39 // pred_check
          %p573 = pneg %p294
        $region66: #{llama2_forward.1} parent=39 // pred_check_branch
          %575 = sbr.rel (%p573) target = $region68
        $region67: #{llama2_forward.1} parent=39 // pred_region
          %s576 = sand.u32 %s34, 1
          %s577 = scalar_lea.sflag [#allocation9], %s576
          %s578 = sand.u32 %s284, 1
          %s579 = smul.addr %s578, 512
          %s580 = scalar_lea.vmem [#allocation10], %s579
          %s582 = ssub.s32 8192, 8192
          %583 = vsyncadd %s577, %s582
          %s584 = smul.addr %s34, 128
          %s585 = smul.addr %s584, 64
          %s586 = scalar_lea.hbm %s10, %s585
          %s587 = sshll.u32 %s580, 4
          %s588 = int_to_ptr.vmem [resolvable:$true] %s587
          %593 = dma.hbm_to_vmem [thread:$0]  %s586, 8192, %s588, %s577, 128, 128, 8
        $region68: #{llama2_forward.1} parent=39 // pred_fallthru
          _
        // Predicated region
        $region69: #{llama2_forward.1} parent=39 // pred_check
          %p594 = pneg %p320
        $region70: #{llama2_forward.1} parent=39 // pred_check_branch
          %596 = sbr.rel (%p594) target = $region72
        $region71: #{llama2_forward.1} parent=39 // pred_region
          %p597 = scmp.lt.s32.totalorder %s34, 1
          %s598 = scalar_select %p597, %s34, 1
          %s599 = smul.addr %s598, 2
          %s600 = scalar_lea.vmem %s11, %s599
        $region72: #{llama2_forward.1} parent=39 // pred_fallthru
          _
        // Predicated region
        $region73: #{llama2_forward.1} parent=39 // pred_check
          %p601 = pneg %p346
        $region74: #{llama2_forward.1} parent=39 // pred_check_branch
          %603 = sbr.rel (%p601) target = $region76
        $region75: #{llama2_forward.1} parent=39 // pred_region
          %p604 = scmp.lt.s32.totalorder %s34, 1
          %s605 = scalar_select %p604, %s34, 1
          %s606 = smul.addr %s605, 2
          %s607 = scalar_lea.vmem %s12, %s606
        $region76: #{llama2_forward.1} parent=39 // pred_fallthru
          _
      $region40: #{llama2_forward.1} parent=5 // pred_fallthru
        _
      %p608 = scmp.le.s32.totalorder 1, %s34
      %p609 = scmp.lt.s32.totalorder %s34, 3
      %p610 = pnand %p608, %p609
      %p611 = pneg %p610
      // Predicated region
      $region77: #{llama2_forward.1} parent=5 // pred_check
        _
      $region78: #{llama2_forward.1} parent=5 // pred_check_branch
        %613 = sbr.rel (%p610) target = $region80
      $region79: #{llama2_forward.1} parent=5 // pred_region
        %s614 = ssub.s32 %s34, 1
        %s615 = sand.u32 %s131, 1
        %s616 = scalar_lea.sflag [#allocation3], %s615
        %s617 = sand.u32 %s131, 1
        %s618 = smul.addr %s617, 256
        %s619 = scalar_lea.vmem [#allocation2], %s618
        // Predicated region
        $region81: #{llama2_forward.1} parent=79 // pred_check
          %p620 = pneg %p144
        $region82: #{llama2_forward.1} parent=79 // pred_check_branch
          %622 = sbr.rel (%p620) target = $region84
        $region83: #{llama2_forward.1} parent=79 // pred_region
          %623 = dma.done %s616, 4096
        $region84: #{llama2_forward.1} parent=79 // pred_fallthru
          _
        %s624 = sand.u32 %s39, 1
        %s625 = scalar_lea.sflag [#allocation6], %s624
        %s626 = sand.u32 %s157, 1
        %s627 = smul.addr %s626, 256
        %s628 = scalar_lea.vmem [#allocation5], %s627
        // Predicated region
        $region85: #{llama2_forward.1} parent=79 // pred_check
          %p629 = pneg %p170
        $region86: #{llama2_forward.1} parent=79 // pred_check_branch
          %631 = sbr.rel (%p629) target = $region88
        $region87: #{llama2_forward.1} parent=79 // pred_region
          %632 = dma.done %s625, 4096
        $region88: #{llama2_forward.1} parent=79 // pred_fallthru
          _
        %s633 = sand.u32 %s39, 1
        %s634 = scalar_lea.sflag [#allocation6], %s633
        %s635 = sand.u32 %s183, 1
        %s636 = smul.addr %s635, 256
        %s637 = scalar_lea.vmem [#allocation7], %s636
        // Predicated region
        $region89: #{llama2_forward.1} parent=79 // pred_check
          %p638 = pneg %p196
        $region90: #{llama2_forward.1} parent=79 // pred_check_branch
          %640 = sbr.rel (%p638) target = $region92
        $region91: #{llama2_forward.1} parent=79 // pred_region
          %641 = dma.done %s634, 4096
        $region92: #{llama2_forward.1} parent=79 // pred_fallthru
          _
        %s642 = sand.u32 %s39, 1
        %s643 = scalar_lea.sflag [#allocation9], %s642
        %s644 = sand.u32 %s209, 1
        %s645 = smul.addr %s644, 256
        %s646 = scalar_lea.vmem [#allocation8], %s645
        // Predicated region
        $region93: #{llama2_forward.1} parent=79 // pred_check
          %p647 = pneg %p222
        $region94: #{llama2_forward.1} parent=79 // pred_check_branch
          %649 = sbr.rel (%p647) target = $region96
        $region95: #{llama2_forward.1} parent=79 // pred_region
          %650 = dma.done %s643, 4096
        $region96: #{llama2_forward.1} parent=79 // pred_fallthru
          _
        %s651 = sand.u32 %s39, 1
        %s652 = scalar_lea.sflag [#allocation9], %s651
        %s653 = sand.u32 %s287, 1
        %s654 = smul.addr %s653, 512
        %s655 = scalar_lea.vmem [#allocation10], %s654
        // Predicated region
        $region97: #{llama2_forward.1} parent=79 // pred_check
          %p656 = pneg %p300
        $region98: #{llama2_forward.1} parent=79 // pred_check_branch
          %658 = sbr.rel (%p656) target = $region100
        $region99: #{llama2_forward.1} parent=79 // pred_region
          %659 = dma.done %s652, 8192
        $region100: #{llama2_forward.1} parent=79 // pred_fallthru
          _
        %p660 = pneg %p55
        %p661 = pneg %p52
        %p662 = pneg %p76
        %p663 = pneg %p73
        %p664 = pneg %p97
        %p665 = pneg %p94
        %p666 = pneg %p118
        %p667 = pneg %p115
        %s668 = sand.u32 %s131, 1
        %s669 = scalar_lea.sflag [#allocation3], %s668
        %s670 = sand.u32 %s131, 1
        %s671 = smul.addr %s670, 256
        %s672 = scalar_lea.vmem [#allocation2], %s671
        %p673 = pneg %p144
        %p674 = pneg %p141
        %s675 = sand.u32 %s39, 1
        %s676 = scalar_lea.sflag [#allocation6], %s675
        %s677 = sand.u32 %s157, 1
        %s678 = smul.addr %s677, 256
        %s679 = scalar_lea.vmem [#allocation5], %s678
        %p680 = pneg %p170
        %p681 = pneg %p167
        %s682 = sand.u32 %s39, 1
        %s683 = scalar_lea.sflag [#allocation6], %s682
        %s684 = sand.u32 %s183, 1
        %s685 = smul.addr %s684, 256
        %s686 = scalar_lea.vmem [#allocation7], %s685
        %p687 = pneg %p196
        %p688 = pneg %p193
        %s689 = sand.u32 %s39, 1
        %s690 = scalar_lea.sflag [#allocation9], %s689
        %s691 = sand.u32 %s209, 1
        %s692 = smul.addr %s691, 256
        %s693 = scalar_lea.vmem [#allocation8], %s692
        %p694 = pneg %p222
        %p695 = pneg %p219
        %p696 = scmp.lt.s32.totalorder %s39, 1
        %s697 = scalar_select %p696, %s39, 1
        %s698 = smul.addr %s697, 128
        %s699 = smul.addr %s698, 4
        %s700 = scalar_lea.vmem %s8, %s699
        %p701 = pneg %p248
        %p702 = pneg %p245
        %p703 = scmp.lt.s32.totalorder %s39, 1
        %s704 = scalar_select %p703, %s39, 1
        %s705 = smul.addr %s704, 128
        %s706 = smul.addr %s705, 4
        %s707 = scalar_lea.vmem %s9, %s706
        %p708 = pneg %p274
        %p709 = pneg %p271
        %s710 = sand.u32 %s39, 1
        %s711 = scalar_lea.sflag [#allocation9], %s710
        %s712 = sand.u32 %s287, 1
        %s713 = smul.addr %s712, 512
        %s714 = scalar_lea.vmem [#allocation10], %s713
        %p715 = pneg %p300
        %p716 = pneg %p297
        %p717 = scmp.lt.s32.totalorder %s39, 1
        %s718 = scalar_select %p717, %s39, 1
        %s719 = smul.addr %s718, 2
        %s720 = scalar_lea.vmem %s11, %s719
        %p721 = pneg %p326
        %p722 = pneg %p323
        %p723 = scmp.lt.s32.totalorder %s39, 1
        %s724 = scalar_select %p723, %s39, 1
        %s725 = smul.addr %s724, 2
        %s726 = scalar_lea.vmem %s12, %s725
        %p727 = pneg %p352
        %p728 = pneg %p349
        %p729 = pneg %p373
        %p730 = pneg %p370
        %p731 = pneg %p394
        %p732 = pneg %p391
        %p733 = pneg %p415
        %p734 = pneg %p412
        %p735 = pneg %p436
        %p736 = pneg %p433
        %p737 = scmp.lt.s32.totalorder %s39, 1
        %s738 = scalar_select %p737, %s39, 1
        %s739 = smul.addr %s738, 128
        %s740 = smul.addr %s739, 4
        %s741 = scalar_lea.vmem %s8, %s740
        %p742 = scmp.lt.s32.totalorder %s39, 1
        %s743 = scalar_select %p742, %s39, 1
        %s744 = smul.addr %s743, 128
        %s745 = smul.addr %s744, 4
        %s746 = scalar_lea.vmem %s9, %s745
        %p747 = scmp.lt.s32.totalorder %s39, 1
        %s748 = scalar_select %p747, %s39, 1
        %s749 = smul.addr %s748, 2
        %s750 = scalar_lea.vmem %s11, %s749
        %p751 = scmp.lt.s32.totalorder %s39, 1
        %s752 = scalar_select %p751, %s39, 1
        %s753 = smul.addr %s752, 2
        %s754 = scalar_lea.vmem %s12, %s753
        %p756 = scmp.eq.s32.totalorder %s39, 0
        // Predicated region
        $region101: #{llama2_forward.1} parent=79 // pred_check
          %p757 = pneg %p756
        $region102: #{llama2_forward.1} parent=79 // pred_check_branch
          %759 = sbr.rel (%p757) target = $region104
        $region103: #{llama2_forward.1} parent=79 // pred_region
          %v760 = vld [vmem:[%s0] sm:$0xff]
          %v761 = vld [vmem:[%s0 + $0x8] sm:$0xff]
          %v762 = vld [vmem:[%s0 + $0x10] sm:$0xff]
          %v763 = vld [vmem:[%s0 + $0x18] sm:$0xff]
          %v764 = vld [vmem:[%s0 + $0x20] sm:$0xff]
          %v765 = vld [vmem:[%s0 + $0x28] sm:$0xff]
          %v766 = vld [vmem:[%s0 + $0x30] sm:$0xff]
          %v767 = vld [vmem:[%s0 + $0x38] sm:$0xff]
          %v768 = vld [vmem:[%s0 + $0x40] sm:$0xff]
          %v769 = vld [vmem:[%s0 + $0x48] sm:$0xff]
          %v770 = vld [vmem:[%s0 + $0x50] sm:$0xff]
          %v771 = vld [vmem:[%s0 + $0x58] sm:$0xff]
          %v772 = vld [vmem:[%s0 + $0x60] sm:$0xff]
          %v773 = vld [vmem:[%s0 + $0x68] sm:$0xff]
          %v774 = vld [vmem:[%s0 + $0x70] sm:$0xff]
          %v775 = vld [vmem:[%s0 + $0x78] sm:$0xff]
          %v776 = vld [vmem:[%s0 + $0x80] sm:$0xff]
          %v777 = vld [vmem:[%s0 + $0x88] sm:$0xff]
          %v778 = vld [vmem:[%s0 + $0x90] sm:$0xff]
          %v779 = vld [vmem:[%s0 + $0x98] sm:$0xff]
          %v780 = vld [vmem:[%s0 + $0xa0] sm:$0xff]
          %v781 = vld [vmem:[%s0 + $0xa8] sm:$0xff]
          %v782 = vld [vmem:[%s0 + $0xb0] sm:$0xff]
          %v783 = vld [vmem:[%s0 + $0xb8] sm:$0xff]
          %v784 = vld [vmem:[%s0 + $0xc0] sm:$0xff]
          %v785 = vld [vmem:[%s0 + $0xc8] sm:$0xff]
          %v786 = vld [vmem:[%s0 + $0xd0] sm:$0xff]
          %v787 = vld [vmem:[%s0 + $0xd8] sm:$0xff]
          %v788 = vld [vmem:[%s0 + $0xe0] sm:$0xff]
          %v789 = vld [vmem:[%s0 + $0xe8] sm:$0xff]
          %v790 = vld [vmem:[%s0 + $0xf0] sm:$0xff]
          %v791 = vld [vmem:[%s0 + $0xf8] sm:$0xff]
          %792 = vst [vmem:[#allocation11] sm:$0xff] %v760
          %793 = vst [vmem:[#allocation11 + $0x8] sm:$0xff] %v761
          %794 = vst [vmem:[#allocation11 + $0x10] sm:$0xff] %v762
          %795 = vst [vmem:[#allocation11 + $0x18] sm:$0xff] %v763
          %796 = vst [vmem:[#allocation11 + $0x20] sm:$0xff] %v764
          %797 = vst [vmem:[#allocation11 + $0x28] sm:$0xff] %v765
          %798 = vst [vmem:[#allocation11 + $0x30] sm:$0xff] %v766
          %799 = vst [vmem:[#allocation11 + $0x38] sm:$0xff] %v767
          %800 = vst [vmem:[#allocation11 + $0x40] sm:$0xff] %v768
          %801 = vst [vmem:[#allocation11 + $0x48] sm:$0xff] %v769
          %802 = vst [vmem:[#allocation11 + $0x50] sm:$0xff] %v770
          %803 = vst [vmem:[#allocation11 + $0x58] sm:$0xff] %v771
          %804 = vst [vmem:[#allocation11 + $0x60] sm:$0xff] %v772
          %805 = vst [vmem:[#allocation11 + $0x68] sm:$0xff] %v773
          %806 = vst [vmem:[#allocation11 + $0x70] sm:$0xff] %v774
          %807 = vst [vmem:[#allocation11 + $0x78] sm:$0xff] %v775
          %808 = vst [vmem:[#allocation11 + $0x80] sm:$0xff] %v776
          %809 = vst [vmem:[#allocation11 + $0x88] sm:$0xff] %v777
          %810 = vst [vmem:[#allocation11 + $0x90] sm:$0xff] %v778
          %811 = vst [vmem:[#allocation11 + $0x98] sm:$0xff] %v779
          %812 = vst [vmem:[#allocation11 + $0xa0] sm:$0xff] %v780
          %813 = vst [vmem:[#allocation11 + $0xa8] sm:$0xff] %v781
          %814 = vst [vmem:[#allocation11 + $0xb0] sm:$0xff] %v782
          %815 = vst [vmem:[#allocation11 + $0xb8] sm:$0xff] %v783
          %816 = vst [vmem:[#allocation11 + $0xc0] sm:$0xff] %v784
          %817 = vst [vmem:[#allocation11 + $0xc8] sm:$0xff] %v785
          %818 = vst [vmem:[#allocation11 + $0xd0] sm:$0xff] %v786
          %819 = vst [vmem:[#allocation11 + $0xd8] sm:$0xff] %v787
          %820 = vst [vmem:[#allocation11 + $0xe0] sm:$0xff] %v788
          %821 = vst [vmem:[#allocation11 + $0xe8] sm:$0xff] %v789
          %822 = vst [vmem:[#allocation11 + $0xf0] sm:$0xff] %v790
          %823 = vst [vmem:[#allocation11 + $0xf8] sm:$0xff] %v791
        $region104: #{llama2_forward.1} parent=79 // pred_fallthru
          _
        %v824 = vld [vmem:[#allocation11] sm:$0xff]
        %v825 = vld [vmem:[#allocation11 + $0x8] sm:$0xff]
        %v826 = vld [vmem:[#allocation11 + $0x10] sm:$0xff]
        %v827 = vld [vmem:[#allocation11 + $0x18] sm:$0xff]
        %v828 = vld [vmem:[#allocation11 + $0x20] sm:$0xff]
        %v829 = vld [vmem:[#allocation11 + $0x28] sm:$0xff]
        %v830 = vld [vmem:[#allocation11 + $0x30] sm:$0xff]
        %v831 = vld [vmem:[#allocation11 + $0x38] sm:$0xff]
        %v832 = vld [vmem:[#allocation11 + $0x40] sm:$0xff]
        %v833 = vld [vmem:[#allocation11 + $0x48] sm:$0xff]
        %v834 = vld [vmem:[#allocation11 + $0x50] sm:$0xff]
        %v835 = vld [vmem:[#allocation11 + $0x58] sm:$0xff]
        %v836 = vld [vmem:[#allocation11 + $0x60] sm:$0xff]
        %v837 = vld [vmem:[#allocation11 + $0x68] sm:$0xff]
        %v838 = vld [vmem:[#allocation11 + $0x70] sm:$0xff]
        %v839 = vld [vmem:[#allocation11 + $0x78] sm:$0xff]
        %v840 = vld [vmem:[#allocation11 + $0x80] sm:$0xff]
        %v841 = vld [vmem:[#allocation11 + $0x88] sm:$0xff]
        %v842 = vld [vmem:[#allocation11 + $0x90] sm:$0xff]
        %v843 = vld [vmem:[#allocation11 + $0x98] sm:$0xff]
        %v844 = vld [vmem:[#allocation11 + $0xa0] sm:$0xff]
        %v845 = vld [vmem:[#allocation11 + $0xa8] sm:$0xff]
        %v846 = vld [vmem:[#allocation11 + $0xb0] sm:$0xff]
        %v847 = vld [vmem:[#allocation11 + $0xb8] sm:$0xff]
        %v848 = vld [vmem:[#allocation11 + $0xc0] sm:$0xff]
        %v849 = vld [vmem:[#allocation11 + $0xc8] sm:$0xff]
        %v850 = vld [vmem:[#allocation11 + $0xd0] sm:$0xff]
        %v851 = vld [vmem:[#allocation11 + $0xd8] sm:$0xff]
        %v852 = vld [vmem:[#allocation11 + $0xe0] sm:$0xff]
        %v853 = vld [vmem:[#allocation11 + $0xe8] sm:$0xff]
        %v854 = vld [vmem:[#allocation11 + $0xf0] sm:$0xff]
        %v855 = vld [vmem:[#allocation11 + $0xf8] sm:$0xff]
        %v856 = vld [vmem:[%s1] sm:$0xff]
        %v857 = vld [vmem:[%s1 + $0x8] sm:$0xff]
        %v858 = vld [vmem:[%s2] sm:$0xff]
        %v859 = vld [vmem:[%s2 + $0x8] sm:$0xff]
        %v860 = vld [vmem:[%s750] sm:$0x3]
        %v861 = vmul.f32 %v824, %v824
        %v862 = vmul.f32 %v825, %v825
        %v863 = vmul.f32 %v826, %v826
        %v864 = vmul.f32 %v827, %v827
        %v865 = vmul.f32 %v828, %v828
        %v866 = vmul.f32 %v829, %v829
        %v867 = vmul.f32 %v830, %v830
        %v868 = vmul.f32 %v831, %v831
        %v869 = vmul.f32 %v832, %v832
        %v870 = vmul.f32 %v833, %v833
        %v871 = vmul.f32 %v834, %v834
        %v872 = vmul.f32 %v835, %v835
        %v873 = vmul.f32 %v836, %v836
        %v874 = vmul.f32 %v837, %v837
        %v875 = vmul.f32 %v838, %v838
        %v876 = vmul.f32 %v839, %v839
        %v877 = vmul.f32 %v840, %v840
        %v878 = vmul.f32 %v841, %v841
        %v879 = vmul.f32 %v842, %v842
        %v880 = vmul.f32 %v843, %v843
        %v881 = vmul.f32 %v844, %v844
        %v882 = vmul.f32 %v845, %v845
        %v883 = vmul.f32 %v846, %v846
        %v884 = vmul.f32 %v847, %v847
        %v885 = vmul.f32 %v848, %v848
        %v886 = vmul.f32 %v849, %v849
        %v887 = vmul.f32 %v850, %v850
        %v888 = vmul.f32 %v851, %v851
        %v889 = vmul.f32 %v852, %v852
        %v890 = vmul.f32 %v853, %v853
        %v891 = vmul.f32 %v854, %v854
        %v892 = vmul.f32 %v855, %v855
        %v893 = vadd.f32 %v861, %v862
        %894 = vadd.xlane.f32.xlu0 %v893
        %v895 = vpop.xlane.xlu0 %894
        %v896 = vadd.f32 %v863, %v864
        %897 = vadd.xlane.f32.xlu0 %v896
        %v898 = vpop.xlane.xlu0 %897
        %v899 = vadd.f32 %v865, %v866
        %900 = vadd.xlane.f32.xlu0 %v899
        %v901 = vpop.xlane.xlu0 %900
        %v902 = vadd.f32 %v867, %v868
        %903 = vadd.xlane.f32.xlu0 %v902
        %v904 = vpop.xlane.xlu0 %903
        %v905 = vadd.f32 %v869, %v870
        %906 = vadd.xlane.f32.xlu0 %v905
        %v907 = vpop.xlane.xlu0 %906
        %v908 = vadd.f32 %v871, %v872
        %909 = vadd.xlane.f32.xlu0 %v908
        %v910 = vpop.xlane.xlu0 %909
        %v911 = vadd.f32 %v873, %v874
        %912 = vadd.xlane.f32.xlu0 %v911
        %v913 = vpop.xlane.xlu0 %912
        %v914 = vadd.f32 %v875, %v876
        %915 = vadd.xlane.f32.xlu0 %v914
        %v916 = vpop.xlane.xlu0 %915
        %v917 = vadd.f32 %v877, %v878
        %918 = vadd.xlane.f32.xlu0 %v917
        %v919 = vpop.xlane.xlu0 %918
        %v920 = vadd.f32 %v879, %v880
        %921 = vadd.xlane.f32.xlu0 %v920
        %v922 = vpop.xlane.xlu0 %921
        %v923 = vadd.f32 %v881, %v882
        %924 = vadd.xlane.f32.xlu0 %v923
        %v925 = vpop.xlane.xlu0 %924
        %v926 = vadd.f32 %v883, %v884
        %927 = vadd.xlane.f32.xlu0 %v926
        %v928 = vpop.xlane.xlu0 %927
        %v929 = vadd.f32 %v885, %v886
        %930 = vadd.xlane.f32.xlu0 %v929
        %v931 = vpop.xlane.xlu0 %930
        %v932 = vadd.f32 %v887, %v888
        %933 = vadd.xlane.f32.xlu0 %v932
        %v934 = vpop.xlane.xlu0 %933
        %v935 = vadd.f32 %v889, %v890
        %936 = vadd.xlane.f32.xlu0 %v935
        %v937 = vpop.xlane.xlu0 %936
        %v938 = vadd.f32 %v891, %v892
        %939 = vadd.xlane.f32.xlu0 %v938
        %v940 = vpop.xlane.xlu0 %939
        %v941 = vrcp.pop 256.0
        %v942 = vmul.f32 %v895, %v941
        %v943 = vmul.f32 %v898, %v941
        %v944 = vmul.f32 %v901, %v941
        %v945 = vmul.f32 %v904, %v941
        %v946 = vmul.f32 %v907, %v941
        %v947 = vmul.f32 %v910, %v941
        %v948 = vmul.f32 %v913, %v941
        %v949 = vmul.f32 %v916, %v941
        %v950 = vmul.f32 %v919, %v941
        %v951 = vmul.f32 %v922, %v941
        %v952 = vmul.f32 %v925, %v941
        %v953 = vmul.f32 %v928, %v941
        %v954 = vmul.f32 %v931, %v941
        %v955 = vmul.f32 %v934, %v941
        %v956 = vmul.f32 %v937, %v941
        %v957 = vmul.f32 %v940, %v941
        %v958 = vadd.f32 %v942, 1e-05
        %v959 = vadd.f32 %v943, 1e-05
        %v960 = vadd.f32 %v944, 1e-05
        %v961 = vadd.f32 %v945, 1e-05
        %v962 = vadd.f32 %v946, 1e-05
        %v963 = vadd.f32 %v947, 1e-05
        %v964 = vadd.f32 %v948, 1e-05
        %v965 = vadd.f32 %v949, 1e-05
        %v966 = vadd.f32 %v950, 1e-05
        %v967 = vadd.f32 %v951, 1e-05
        %v968 = vadd.f32 %v952, 1e-05
        %v969 = vadd.f32 %v953, 1e-05
        %v970 = vadd.f32 %v954, 1e-05
        %v971 = vadd.f32 %v955, 1e-05
        %v972 = vadd.f32 %v956, 1e-05
        %v973 = vadd.f32 %v957, 1e-05
        %v974 = vrsqrt.pop %v958
        %v975 = vrsqrt.pop %v959
        %v976 = vrsqrt.pop %v960
        %v977 = vrsqrt.pop %v961
        %v978 = vrsqrt.pop %v962
        %v979 = vrsqrt.pop %v963
        %v980 = vrsqrt.pop %v964
        %v981 = vrsqrt.pop %v965
        %v982 = vrsqrt.pop %v966
        %v983 = vrsqrt.pop %v967
        %v984 = vrsqrt.pop %v968
        %v985 = vrsqrt.pop %v969
        %v986 = vrsqrt.pop %v970
        %v987 = vrsqrt.pop %v971
        %v988 = vrsqrt.pop %v972
        %v989 = vrsqrt.pop %v973
        %v990 = vmul.f32 %v824, %v974
        %v991 = vmul.f32 %v825, %v974
        %v992 = vmul.f32 %v826, %v975
        %v993 = vmul.f32 %v827, %v975
        %v994 = vmul.f32 %v828, %v976
        %v995 = vmul.f32 %v829, %v976
        %v996 = vmul.f32 %v830, %v977
        %v997 = vmul.f32 %v831, %v977
        %v998 = vmul.f32 %v832, %v978
        %v999 = vmul.f32 %v833, %v978
        %v1000 = vmul.f32 %v834, %v979
        %v1001 = vmul.f32 %v835, %v979
        %v1002 = vmul.f32 %v836, %v980
        %v1003 = vmul.f32 %v837, %v980
        %v1004 = vmul.f32 %v838, %v981
        %v1005 = vmul.f32 %v839, %v981
        %v1006 = vmul.f32 %v840, %v982
        %v1007 = vmul.f32 %v841, %v982
        %v1008 = vmul.f32 %v842, %v983
        %v1009 = vmul.f32 %v843, %v983
        %v1010 = vmul.f32 %v844, %v984
        %v1011 = vmul.f32 %v845, %v984
        %v1012 = vmul.f32 %v846, %v985
        %v1013 = vmul.f32 %v847, %v985
        %v1014 = vmul.f32 %v848, %v986
        %v1015 = vmul.f32 %v849, %v986
        %v1016 = vmul.f32 %v850, %v987
        %v1017 = vmul.f32 %v851, %v987
        %v1018 = vmul.f32 %v852, %v988
        %v1019 = vmul.f32 %v853, %v988
        %v1020 = vmul.f32 %v854, %v989
        %v1021 = vmul.f32 %v855, %v989
        %v1023 = vlaneseq
        %v1024 = vshrl.u32 %v1023, 7
        %v1025 = vsub.s32 0, %v1024
        %v1026 = vrot.slane %v860, %v1025
        %v1027 = vlaneseq
        %v1028 = vshrl.u32 %v1027, 7
        %v1029 = vsub.s32 1, %v1028
        %v1030 = vrot.slane %v860, %v1029
        %v1033 = vmul.f32 %v990, %v1026
        %v1034 = vmul.f32 %v991, %v1030
        %v1035 = vmul.f32 %v992, %v1026
        %v1036 = vmul.f32 %v993, %v1030
        %v1037 = vmul.f32 %v994, %v1026
        %v1038 = vmul.f32 %v995, %v1030
        %v1039 = vmul.f32 %v996, %v1026
        %v1040 = vmul.f32 %v997, %v1030
        %v1041 = vmul.f32 %v998, %v1026
        %v1042 = vmul.f32 %v999, %v1030
        %v1043 = vmul.f32 %v1000, %v1026
        %v1044 = vmul.f32 %v1001, %v1030
        %v1045 = vmul.f32 %v1002, %v1026
        %v1046 = vmul.f32 %v1003, %v1030
        %v1047 = vmul.f32 %v1004, %v1026
        %v1048 = vmul.f32 %v1005, %v1030
        %v1049 = vmul.f32 %v1006, %v1026
        %v1050 = vmul.f32 %v1007, %v1030
        %v1051 = vmul.f32 %v1008, %v1026
        %v1052 = vmul.f32 %v1009, %v1030
        %v1053 = vmul.f32 %v1010, %v1026
        %v1054 = vmul.f32 %v1011, %v1030
        %v1055 = vmul.f32 %v1012, %v1026
        %v1056 = vmul.f32 %v1013, %v1030
        %v1057 = vmul.f32 %v1014, %v1026
        %v1058 = vmul.f32 %v1015, %v1030
        %v1059 = vmul.f32 %v1016, %v1026
        %v1060 = vmul.f32 %v1017, %v1030
        %v1061 = vmul.f32 %v1018, %v1026
        %v1062 = vmul.f32 %v1019, %v1030
        %v1063 = vmul.f32 %v1020, %v1026
        %v1064 = vmul.f32 %v1021, %v1030
        %v1065 = vpack.c.bf16 %v1035, %v1033
        %v1066 = vpack.c.bf16 %v1036, %v1034
        %v1067 = vpack.c.bf16 %v1039, %v1037
        %v1068 = vpack.c.bf16 %v1040, %v1038
        %v1069 = vpack.c.bf16 %v1043, %v1041
        %v1070 = vpack.c.bf16 %v1044, %v1042
        %v1071 = vpack.c.bf16 %v1047, %v1045
        %v1072 = vpack.c.bf16 %v1048, %v1046
        %v1073 = vpack.c.bf16 %v1051, %v1049
        %v1074 = vpack.c.bf16 %v1052, %v1050
        %v1075 = vpack.c.bf16 %v1055, %v1053
        %v1076 = vpack.c.bf16 %v1056, %v1054
        %v1077 = vpack.c.bf16 %v1059, %v1057
        %v1078 = vpack.c.bf16 %v1060, %v1058
        %v1079 = vpack.c.bf16 %v1063, %v1061
        %v1080 = vpack.c.bf16 %v1064, %v1062
        %v1081 = vld [vmem:[%s619] sm:$0xff]
        %v1082 = vld [vmem:[%s619 + $0x8] sm:$0xff]
        %v1083 = vld [vmem:[%s619 + $0x10] sm:$0xff]
        %v1084 = vld [vmem:[%s619 + $0x18] sm:$0xff]
        %v1085 = vld [vmem:[%s619 + $0x20] sm:$0xff]
        %v1086 = vld [vmem:[%s619 + $0x28] sm:$0xff]
        %v1087 = vld [vmem:[%s619 + $0x30] sm:$0xff]
        %v1088 = vld [vmem:[%s619 + $0x38] sm:$0xff]
        %v1089 = vld [vmem:[%s619 + $0x40] sm:$0xff]
        %v1090 = vld [vmem:[%s619 + $0x48] sm:$0xff]
        %v1091 = vld [vmem:[%s619 + $0x50] sm:$0xff]
        %v1092 = vld [vmem:[%s619 + $0x58] sm:$0xff]
        %v1093 = vld [vmem:[%s619 + $0x60] sm:$0xff]
        %v1094 = vld [vmem:[%s619 + $0x68] sm:$0xff]
        %v1095 = vld [vmem:[%s619 + $0x70] sm:$0xff]
        %v1096 = vld [vmem:[%s619 + $0x78] sm:$0xff]
        %v1097 = vld [vmem:[%s619 + $0x80] sm:$0xff]
        %v1098 = vld [vmem:[%s619 + $0x88] sm:$0xff]
        %v1099 = vld [vmem:[%s619 + $0x90] sm:$0xff]
        %v1100 = vld [vmem:[%s619 + $0x98] sm:$0xff]
        %v1101 = vld [vmem:[%s619 + $0xa0] sm:$0xff]
        %v1102 = vld [vmem:[%s619 + $0xa8] sm:$0xff]
        %v1103 = vld [vmem:[%s619 + $0xb0] sm:$0xff]
        %v1104 = vld [vmem:[%s619 + $0xb8] sm:$0xff]
        %v1105 = vld [vmem:[%s619 + $0xc0] sm:$0xff]
        %v1106 = vld [vmem:[%s619 + $0xc8] sm:$0xff]
        %v1107 = vld [vmem:[%s619 + $0xd0] sm:$0xff]
        %v1108 = vld [vmem:[%s619 + $0xd8] sm:$0xff]
        %v1109 = vld [vmem:[%s619 + $0xe0] sm:$0xff]
        %v1110 = vld [vmem:[%s619 + $0xe8] sm:$0xff]
        %v1111 = vld [vmem:[%s619 + $0xf0] sm:$0xff]
        %v1112 = vld [vmem:[%s619 + $0xf8] sm:$0xff]
        %v1145 = vunpack.c.l.b16 %v1081
        %v1146 = vunpack.c.h.b16 %v1081
        %v1147 = vunpack.c.l.b16 %v1082
        %v1148 = vunpack.c.h.b16 %v1082
        %v1149 = vunpack.c.l.b16 %v1083
        %v1150 = vunpack.c.h.b16 %v1083
        %v1151 = vunpack.c.l.b16 %v1084
        %v1152 = vunpack.c.h.b16 %v1084
        %v1153 = vunpack.c.l.b16 %v1085
        %v1154 = vunpack.c.h.b16 %v1085
        %v1155 = vunpack.c.l.b16 %v1086
        %v1156 = vunpack.c.h.b16 %v1086
        %v1157 = vunpack.c.l.b16 %v1087
        %v1158 = vunpack.c.h.b16 %v1087
        %v1159 = vunpack.c.l.b16 %v1088
        %v1160 = vunpack.c.h.b16 %v1088
        %v1161 = vunpack.c.l.b16 %v1089
        %v1162 = vunpack.c.h.b16 %v1089
        %v1163 = vunpack.c.l.b16 %v1090
        %v1164 = vunpack.c.h.b16 %v1090
        %v1165 = vunpack.c.l.b16 %v1091
        %v1166 = vunpack.c.h.b16 %v1091
        %v1167 = vunpack.c.l.b16 %v1092
        %v1168 = vunpack.c.h.b16 %v1092
        %v1169 = vunpack.c.l.b16 %v1093
        %v1170 = vunpack.c.h.b16 %v1093
        %v1171 = vunpack.c.l.b16 %v1094
        %v1172 = vunpack.c.h.b16 %v1094
        %v1173 = vunpack.c.l.b16 %v1095
        %v1174 = vunpack.c.h.b16 %v1095
        %v1175 = vunpack.c.l.b16 %v1096
        %v1176 = vunpack.c.h.b16 %v1096
        %v1177 = vunpack.c.l.b16 %v1097
        %v1178 = vunpack.c.h.b16 %v1097
        %v1179 = vunpack.c.l.b16 %v1098
        %v1180 = vunpack.c.h.b16 %v1098
        %v1181 = vunpack.c.l.b16 %v1099
        %v1182 = vunpack.c.h.b16 %v1099
        %v1183 = vunpack.c.l.b16 %v1100
        %v1184 = vunpack.c.h.b16 %v1100
        %v1185 = vunpack.c.l.b16 %v1101
        %v1186 = vunpack.c.h.b16 %v1101
        %v1187 = vunpack.c.l.b16 %v1102
        %v1188 = vunpack.c.h.b16 %v1102
        %v1189 = vunpack.c.l.b16 %v1103
        %v1190 = vunpack.c.h.b16 %v1103
        %v1191 = vunpack.c.l.b16 %v1104
        %v1192 = vunpack.c.h.b16 %v1104
        %v1193 = vunpack.c.l.b16 %v1105
        %v1194 = vunpack.c.h.b16 %v1105
        %v1195 = vunpack.c.l.b16 %v1106
        %v1196 = vunpack.c.h.b16 %v1106
        %v1197 = vunpack.c.l.b16 %v1107
        %v1198 = vunpack.c.h.b16 %v1107
        %v1199 = vunpack.c.l.b16 %v1108
        %v1200 = vunpack.c.h.b16 %v1108
        %v1201 = vunpack.c.l.b16 %v1109
        %v1202 = vunpack.c.h.b16 %v1109
        %v1203 = vunpack.c.l.b16 %v1110
        %v1204 = vunpack.c.h.b16 %v1110
        %v1205 = vunpack.c.l.b16 %v1111
        %v1206 = vunpack.c.h.b16 %v1111
        %v1207 = vunpack.c.l.b16 %v1112
        %v1208 = vunpack.c.h.b16 %v1112
        %v1209 = vpack.c.b16 %v1147, %v1145
        %v1210 = vpack.c.b16 %v1148, %v1146
        %v1211 = vpack.c.b16 %v1151, %v1149
        %v1212 = vpack.c.b16 %v1152, %v1150
        %v1213 = vpack.c.b16 %v1155, %v1153
        %v1214 = vpack.c.b16 %v1156, %v1154
        %v1215 = vpack.c.b16 %v1159, %v1157
        %v1216 = vpack.c.b16 %v1160, %v1158
        %v1217 = vpack.c.b16 %v1163, %v1161
        %v1218 = vpack.c.b16 %v1164, %v1162
        %v1219 = vpack.c.b16 %v1167, %v1165
        %v1220 = vpack.c.b16 %v1168, %v1166
        %v1221 = vpack.c.b16 %v1171, %v1169
        %v1222 = vpack.c.b16 %v1172, %v1170
        %v1223 = vpack.c.b16 %v1175, %v1173
        %v1224 = vpack.c.b16 %v1176, %v1174
        %v1225 = vpack.c.b16 %v1179, %v1177
        %v1226 = vpack.c.b16 %v1180, %v1178
        %v1227 = vpack.c.b16 %v1183, %v1181
        %v1228 = vpack.c.b16 %v1184, %v1182
        %v1229 = vpack.c.b16 %v1187, %v1185
        %v1230 = vpack.c.b16 %v1188, %v1186
        %v1231 = vpack.c.b16 %v1191, %v1189
        %v1232 = vpack.c.b16 %v1192, %v1190
        %v1233 = vpack.c.b16 %v1195, %v1193
        %v1234 = vpack.c.b16 %v1196, %v1194
        %v1235 = vpack.c.b16 %v1199, %v1197
        %v1236 = vpack.c.b16 %v1200, %v1198
        %v1237 = vpack.c.b16 %v1203, %v1201
        %v1238 = vpack.c.b16 %v1204, %v1202
        %v1239 = vpack.c.b16 %v1207, %v1205
        %v1240 = vpack.c.b16 %v1208, %v1206
        %1273 = vmatprep.subr.bf16.mxu0 %v1224
        %1274 = vmatpush1.bf16.msra.mxu0 %v1223
        %1275 = vmatprep.subr.bf16.mxu0 %v1222
        %1276 = vmatpush1.bf16.msra.mxu0 %v1221
        %1277 = vmatprep.subr.bf16.mxu0 %v1220
        %1278 = vmatpush1.bf16.msra.mxu0 %v1219
        %1279 = vmatprep.subr.bf16.mxu0 %v1218
        %1280 = vmatpush1.bf16.msra.mxu0 %v1217
        %1281 = vmatprep.subr.bf16.mxu0 %v1216
        %1282 = vmatpush1.bf16.msra.mxu0 %v1215
        %1283 = vmatprep.subr.bf16.mxu0 %v1214
        %1284 = vmatpush1.bf16.msra.mxu0 %v1213
        %1285 = vmatprep.subr.bf16.mxu0 %v1212
        %1286 = vmatpush1.bf16.msra.mxu0 %v1211
        %1287 = vmatprep.subr.bf16.mxu0 %v1210
        %1288 = vmatpush1.bf16.msra.mxu0 %v1209
        %1289 = vmatprep.subr.bf16.mxu0 %v1240
        %1290 = vmatpush2.bf16.msra.mxu0 %v1239
        %1291 = vmatprep.subr.bf16.mxu0 %v1238
        %1292 = vmatpush2.bf16.msra.mxu0 %v1237
        %1293 = vmatprep.subr.bf16.mxu0 %v1236
        %1294 = vmatpush2.bf16.msra.mxu0 %v1235
        %1295 = vmatprep.subr.bf16.mxu0 %v1234
        %1296 = vmatpush2.bf16.msra.mxu0 %v1233
        %1297 = vmatprep.subr.bf16.mxu0 %v1232
        %1298 = vmatpush2.bf16.msra.mxu0 %v1231
        %1299 = vmatprep.subr.bf16.mxu0 %v1230
        %1300 = vmatpush2.bf16.msra.mxu0 %v1229
        %1301 = vmatprep.subr.bf16.mxu0 %v1228
        %1302 = vmatpush2.bf16.msra.mxu0 %v1227
        %1303 = vmatprep.subr.bf16.mxu0 %v1226
        %1304 = vmatpush2.bf16.msra.mxu0 %v1225
        %1305 = vmatprep.mubr.bf16.mxu0 %v1066
        %1306 = vmatmul.mubr.bf16.gmra.mxu0 %v1065
        %v1307 = vpop.f32.mrf.mxu0
        %v1308 = vadd.f32 0.0, %v1307
        %v1309 = vpop.f32.mrf.mxu0
        %v1310 = vadd.f32 0.0, %v1309
        %v1311 = vpop.f32.mrf.mxu0
        %v1312 = vadd.f32 0.0, %v1311
        %v1313 = vpop.f32.mrf.mxu0
        %v1314 = vadd.f32 0.0, %v1313
        %1315 = vmatprep.mubr.bf16.mxu0 %v1068
        %1316 = vmatmul.mubr.bf16.gmra.mxu0 %v1067
        %v1317 = vpop.f32.mrf.mxu0
        %v1318 = vadd.f32 0.0, %v1317
        %v1319 = vpop.f32.mrf.mxu0
        %v1320 = vadd.f32 0.0, %v1319
        %v1321 = vpop.f32.mrf.mxu0
        %v1322 = vadd.f32 0.0, %v1321
        %v1323 = vpop.f32.mrf.mxu0
        %v1324 = vadd.f32 0.0, %v1323
        %1325 = vmatprep.mubr.bf16.mxu0 %v1070
        %1326 = vmatmul.mubr.bf16.gmra.mxu0 %v1069
        %v1327 = vpop.f32.mrf.mxu0
        %v1328 = vadd.f32 0.0, %v1327
        %v1329 = vpop.f32.mrf.mxu0
        %v1330 = vadd.f32 0.0, %v1329
        %v1331 = vpop.f32.mrf.mxu0
        %v1332 = vadd.f32 0.0, %v1331
        %v1333 = vpop.f32.mrf.mxu0
        %v1334 = vadd.f32 0.0, %v1333
        %1335 = vmatprep.mubr.bf16.mxu0 %v1072
        %1336 = vmatmul.mubr.bf16.gmra.mxu0 %v1071
        %v1337 = vpop.f32.mrf.mxu0
        %v1338 = vadd.f32 0.0, %v1337
        %v1339 = vpop.f32.mrf.mxu0
        %v1340 = vadd.f32 0.0, %v1339
        %v1341 = vpop.f32.mrf.mxu0
        %v1342 = vadd.f32 0.0, %v1341
        %v1343 = vpop.f32.mrf.mxu0
        %v1344 = vadd.f32 0.0, %v1343
        %1345 = vmatprep.mubr.bf16.mxu0 %v1074
        %1346 = vmatmul.mubr.bf16.gmra.mxu0 %v1073
        %v1347 = vpop.f32.mrf.mxu0
        %v1348 = vadd.f32 0.0, %v1347
        %v1349 = vpop.f32.mrf.mxu0
        %v1350 = vadd.f32 0.0, %v1349
        %v1351 = vpop.f32.mrf.mxu0
        %v1352 = vadd.f32 0.0, %v1351
        %v1353 = vpop.f32.mrf.mxu0
        %v1354 = vadd.f32 0.0, %v1353
        %1355 = vmatprep.mubr.bf16.mxu0 %v1076
        %1356 = vmatmul.mubr.bf16.gmra.mxu0 %v1075
        %v1357 = vpop.f32.mrf.mxu0
        %v1358 = vadd.f32 0.0, %v1357
        %v1359 = vpop.f32.mrf.mxu0
        %v1360 = vadd.f32 0.0, %v1359
        %v1361 = vpop.f32.mrf.mxu0
        %v1362 = vadd.f32 0.0, %v1361
        %v1363 = vpop.f32.mrf.mxu0
        %v1364 = vadd.f32 0.0, %v1363
        %1365 = vmatprep.mubr.bf16.mxu0 %v1078
        %1366 = vmatmul.mubr.bf16.gmra.mxu0 %v1077
        %v1367 = vpop.f32.mrf.mxu0
        %v1368 = vadd.f32 0.0, %v1367
        %v1369 = vpop.f32.mrf.mxu0
        %v1370 = vadd.f32 0.0, %v1369
        %v1371 = vpop.f32.mrf.mxu0
        %v1372 = vadd.f32 0.0, %v1371
        %v1373 = vpop.f32.mrf.mxu0
        %v1374 = vadd.f32 0.0, %v1373
        %1375 = vmatprep.mubr.bf16.mxu0 %v1080
        %1376 = vmatmul.mubr.bf16.gmra.mxu0 %v1079
        %v1377 = vpop.f32.mrf.mxu0
        %v1378 = vadd.f32 0.0, %v1377
        %v1379 = vpop.f32.mrf.mxu0
        %v1380 = vadd.f32 0.0, %v1379
        %v1381 = vpop.f32.mrf.mxu0
        %v1382 = vadd.f32 0.0, %v1381
        %v1383 = vpop.f32.mrf.mxu0
        %v1384 = vadd.f32 0.0, %v1383
        %1385 = vdwg.mxu0
        %v1386 = vld [vmem:[%s628] sm:$0xff]
        %v1387 = vld [vmem:[%s628 + $0x8] sm:$0xff]
        %v1388 = vld [vmem:[%s628 + $0x10] sm:$0xff]
        %v1389 = vld [vmem:[%s628 + $0x18] sm:$0xff]
        %v1390 = vld [vmem:[%s628 + $0x20] sm:$0xff]
        %v1391 = vld [vmem:[%s628 + $0x28] sm:$0xff]
        %v1392 = vld [vmem:[%s628 + $0x30] sm:$0xff]
        %v1393 = vld [vmem:[%s628 + $0x38] sm:$0xff]
        %v1394 = vld [vmem:[%s628 + $0x40] sm:$0xff]
        %v1395 = vld [vmem:[%s628 + $0x48] sm:$0xff]
        %v1396 = vld [vmem:[%s628 + $0x50] sm:$0xff]
        %v1397 = vld [vmem:[%s628 + $0x58] sm:$0xff]
        %v1398 = vld [vmem:[%s628 + $0x60] sm:$0xff]
        %v1399 = vld [vmem:[%s628 + $0x68] sm:$0xff]
        %v1400 = vld [vmem:[%s628 + $0x70] sm:$0xff]
        %v1401 = vld [vmem:[%s628 + $0x78] sm:$0xff]
        %v1402 = vld [vmem:[%s628 + $0x80] sm:$0xff]
        %v1403 = vld [vmem:[%s628 + $0x88] sm:$0xff]
        %v1404 = vld [vmem:[%s628 + $0x90] sm:$0xff]
        %v1405 = vld [vmem:[%s628 + $0x98] sm:$0xff]
        %v1406 = vld [vmem:[%s628 + $0xa0] sm:$0xff]
        %v1407 = vld [vmem:[%s628 + $0xa8] sm:$0xff]
        %v1408 = vld [vmem:[%s628 + $0xb0] sm:$0xff]
        %v1409 = vld [vmem:[%s628 + $0xb8] sm:$0xff]
        %v1410 = vld [vmem:[%s628 + $0xc0] sm:$0xff]
        %v1411 = vld [vmem:[%s628 + $0xc8] sm:$0xff]
        %v1412 = vld [vmem:[%s628 + $0xd0] sm:$0xff]
        %v1413 = vld [vmem:[%s628 + $0xd8] sm:$0xff]
        %v1414 = vld [vmem:[%s628 + $0xe0] sm:$0xff]
        %v1415 = vld [vmem:[%s628 + $0xe8] sm:$0xff]
        %v1416 = vld [vmem:[%s628 + $0xf0] sm:$0xff]
        %v1417 = vld [vmem:[%s628 + $0xf8] sm:$0xff]
        %v1450 = vunpack.c.l.b16 %v1386
        %v1451 = vunpack.c.h.b16 %v1386
        %v1452 = vunpack.c.l.b16 %v1387
        %v1453 = vunpack.c.h.b16 %v1387
        %v1454 = vunpack.c.l.b16 %v1388
        %v1455 = vunpack.c.h.b16 %v1388
        %v1456 = vunpack.c.l.b16 %v1389
        %v1457 = vunpack.c.h.b16 %v1389
        %v1458 = vunpack.c.l.b16 %v1390
        %v1459 = vunpack.c.h.b16 %v1390
        %v1460 = vunpack.c.l.b16 %v1391
        %v1461 = vunpack.c.h.b16 %v1391
        %v1462 = vunpack.c.l.b16 %v1392
        %v1463 = vunpack.c.h.b16 %v1392
        %v1464 = vunpack.c.l.b16 %v1393
        %v1465 = vunpack.c.h.b16 %v1393
        %v1466 = vunpack.c.l.b16 %v1394
        %v1467 = vunpack.c.h.b16 %v1394
        %v1468 = vunpack.c.l.b16 %v1395
        %v1469 = vunpack.c.h.b16 %v1395
        %v1470 = vunpack.c.l.b16 %v1396
        %v1471 = vunpack.c.h.b16 %v1396
        %v1472 = vunpack.c.l.b16 %v1397
        %v1473 = vunpack.c.h.b16 %v1397
        %v1474 = vunpack.c.l.b16 %v1398
        %v1475 = vunpack.c.h.b16 %v1398
        %v1476 = vunpack.c.l.b16 %v1399
        %v1477 = vunpack.c.h.b16 %v1399
        %v1478 = vunpack.c.l.b16 %v1400
        %v1479 = vunpack.c.h.b16 %v1400
        %v1480 = vunpack.c.l.b16 %v1401
        %v1481 = vunpack.c.h.b16 %v1401
        %v1482 = vunpack.c.l.b16 %v1402
        %v1483 = vunpack.c.h.b16 %v1402
        %v1484 = vunpack.c.l.b16 %v1403
        %v1485 = vunpack.c.h.b16 %v1403
        %v1486 = vunpack.c.l.b16 %v1404
        %v1487 = vunpack.c.h.b16 %v1404
        %v1488 = vunpack.c.l.b16 %v1405
        %v1489 = vunpack.c.h.b16 %v1405
        %v1490 = vunpack.c.l.b16 %v1406
        %v1491 = vunpack.c.h.b16 %v1406
        %v1492 = vunpack.c.l.b16 %v1407
        %v1493 = vunpack.c.h.b16 %v1407
        %v1494 = vunpack.c.l.b16 %v1408
        %v1495 = vunpack.c.h.b16 %v1408
        %v1496 = vunpack.c.l.b16 %v1409
        %v1497 = vunpack.c.h.b16 %v1409
        %v1498 = vunpack.c.l.b16 %v1410
        %v1499 = vunpack.c.h.b16 %v1410
        %v1500 = vunpack.c.l.b16 %v1411
        %v1501 = vunpack.c.h.b16 %v1411
        %v1502 = vunpack.c.l.b16 %v1412
        %v1503 = vunpack.c.h.b16 %v1412
        %v1504 = vunpack.c.l.b16 %v1413
        %v1505 = vunpack.c.h.b16 %v1413
        %v1506 = vunpack.c.l.b16 %v1414
        %v1507 = vunpack.c.h.b16 %v1414
        %v1508 = vunpack.c.l.b16 %v1415
        %v1509 = vunpack.c.h.b16 %v1415
        %v1510 = vunpack.c.l.b16 %v1416
        %v1511 = vunpack.c.h.b16 %v1416
        %v1512 = vunpack.c.l.b16 %v1417
        %v1513 = vunpack.c.h.b16 %v1417
        %v1514 = vpack.c.b16 %v1452, %v1450
        %v1515 = vpack.c.b16 %v1453, %v1451
        %v1516 = vpack.c.b16 %v1456, %v1454
        %v1517 = vpack.c.b16 %v1457, %v1455
        %v1518 = vpack.c.b16 %v1460, %v1458
        %v1519 = vpack.c.b16 %v1461, %v1459
        %v1520 = vpack.c.b16 %v1464, %v1462
        %v1521 = vpack.c.b16 %v1465, %v1463
        %v1522 = vpack.c.b16 %v1468, %v1466
        %v1523 = vpack.c.b16 %v1469, %v1467
        %v1524 = vpack.c.b16 %v1472, %v1470
        %v1525 = vpack.c.b16 %v1473, %v1471
        %v1526 = vpack.c.b16 %v1476, %v1474
        %v1527 = vpack.c.b16 %v1477, %v1475
        %v1528 = vpack.c.b16 %v1480, %v1478
        %v1529 = vpack.c.b16 %v1481, %v1479
        %v1530 = vpack.c.b16 %v1484, %v1482
        %v1531 = vpack.c.b16 %v1485, %v1483
        %v1532 = vpack.c.b16 %v1488, %v1486
        %v1533 = vpack.c.b16 %v1489, %v1487
        %v1534 = vpack.c.b16 %v1492, %v1490
        %v1535 = vpack.c.b16 %v1493, %v1491
        %v1536 = vpack.c.b16 %v1496, %v1494
        %v1537 = vpack.c.b16 %v1497, %v1495
        %v1538 = vpack.c.b16 %v1500, %v1498
        %v1539 = vpack.c.b16 %v1501, %v1499
        %v1540 = vpack.c.b16 %v1504, %v1502
        %v1541 = vpack.c.b16 %v1505, %v1503
        %v1542 = vpack.c.b16 %v1508, %v1506
        %v1543 = vpack.c.b16 %v1509, %v1507
        %v1544 = vpack.c.b16 %v1512, %v1510
        %v1545 = vpack.c.b16 %v1513, %v1511
        %1578 = vmatprep.subr.bf16.mxu0 %v1529
        %1579 = vmatpush1.bf16.msra.mxu0 %v1528
        %1580 = vmatprep.subr.bf16.mxu0 %v1527
        %1581 = vmatpush1.bf16.msra.mxu0 %v1526
        %1582 = vmatprep.subr.bf16.mxu0 %v1525
        %1583 = vmatpush1.bf16.msra.mxu0 %v1524
        %1584 = vmatprep.subr.bf16.mxu0 %v1523
        %1585 = vmatpush1.bf16.msra.mxu0 %v1522
        %1586 = vmatprep.subr.bf16.mxu0 %v1521
        %1587 = vmatpush1.bf16.msra.mxu0 %v1520
        %1588 = vmatprep.subr.bf16.mxu0 %v1519
        %1589 = vmatpush1.bf16.msra.mxu0 %v1518
        %1590 = vmatprep.subr.bf16.mxu0 %v1517
        %1591 = vmatpush1.bf16.msra.mxu0 %v1516
        %1592 = vmatprep.subr.bf16.mxu0 %v1515
        %1593 = vmatpush1.bf16.msra.mxu0 %v1514
        %1594 = vmatprep.subr.bf16.mxu0 %v1545
        %1595 = vmatpush2.bf16.msra.mxu0 %v1544
        %1596 = vmatprep.subr.bf16.mxu0 %v1543
        %1597 = vmatpush2.bf16.msra.mxu0 %v1542
        %1598 = vmatprep.subr.bf16.mxu0 %v1541
        %1599 = vmatpush2.bf16.msra.mxu0 %v1540
        %1600 = vmatprep.subr.bf16.mxu0 %v1539
        %1601 = vmatpush2.bf16.msra.mxu0 %v1538
        %1602 = vmatprep.subr.bf16.mxu0 %v1537
        %1603 = vmatpush2.bf16.msra.mxu0 %v1536
        %1604 = vmatprep.subr.bf16.mxu0 %v1535
        %1605 = vmatpush2.bf16.msra.mxu0 %v1534
        %1606 = vmatprep.subr.bf16.mxu0 %v1533
        %1607 = vmatpush2.bf16.msra.mxu0 %v1532
        %1608 = vmatprep.subr.bf16.mxu0 %v1531
        %1609 = vmatpush2.bf16.msra.mxu0 %v1530
        %1610 = vmatprep.mubr.bf16.mxu0 %v1066
        %1611 = vmatmul.mubr.bf16.gmra.mxu0 %v1065
        %v1612 = vpop.f32.mrf.mxu0
        %v1613 = vadd.f32 0.0, %v1612
        %v1614 = vpop.f32.mrf.mxu0
        %v1615 = vadd.f32 0.0, %v1614
        %v1616 = vpop.f32.mrf.mxu0
        %v1617 = vadd.f32 0.0, %v1616
        %v1618 = vpop.f32.mrf.mxu0
        %v1619 = vadd.f32 0.0, %v1618
        %1620 = vmatprep.mubr.bf16.mxu0 %v1068
        %1621 = vmatmul.mubr.bf16.gmra.mxu0 %v1067
        %v1622 = vpop.f32.mrf.mxu0
        %v1623 = vadd.f32 0.0, %v1622
        %v1624 = vpop.f32.mrf.mxu0
        %v1625 = vadd.f32 0.0, %v1624
        %v1626 = vpop.f32.mrf.mxu0
        %v1627 = vadd.f32 0.0, %v1626
        %v1628 = vpop.f32.mrf.mxu0
        %v1629 = vadd.f32 0.0, %v1628
        %1630 = vmatprep.mubr.bf16.mxu0 %v1070
        %1631 = vmatmul.mubr.bf16.gmra.mxu0 %v1069
        %v1632 = vpop.f32.mrf.mxu0
        %v1633 = vadd.f32 0.0, %v1632
        %v1634 = vpop.f32.mrf.mxu0
        %v1635 = vadd.f32 0.0, %v1634
        %v1636 = vpop.f32.mrf.mxu0
        %v1637 = vadd.f32 0.0, %v1636
        %v1638 = vpop.f32.mrf.mxu0
        %v1639 = vadd.f32 0.0, %v1638
        %1640 = vmatprep.mubr.bf16.mxu0 %v1072
        %1641 = vmatmul.mubr.bf16.gmra.mxu0 %v1071
        %v1642 = vpop.f32.mrf.mxu0
        %v1643 = vadd.f32 0.0, %v1642
        %v1644 = vpop.f32.mrf.mxu0
        %v1645 = vadd.f32 0.0, %v1644
        %v1646 = vpop.f32.mrf.mxu0
        %v1647 = vadd.f32 0.0, %v1646
        %v1648 = vpop.f32.mrf.mxu0
        %v1649 = vadd.f32 0.0, %v1648
        %1650 = vmatprep.mubr.bf16.mxu0 %v1074
        %1651 = vmatmul.mubr.bf16.gmra.mxu0 %v1073
        %v1652 = vpop.f32.mrf.mxu0
        %v1653 = vadd.f32 0.0, %v1652
        %v1654 = vpop.f32.mrf.mxu0
        %v1655 = vadd.f32 0.0, %v1654
        %v1656 = vpop.f32.mrf.mxu0
        %v1657 = vadd.f32 0.0, %v1656
        %v1658 = vpop.f32.mrf.mxu0
        %v1659 = vadd.f32 0.0, %v1658
        %1660 = vmatprep.mubr.bf16.mxu0 %v1076
        %1661 = vmatmul.mubr.bf16.gmra.mxu0 %v1075
        %v1662 = vpop.f32.mrf.mxu0
        %v1663 = vadd.f32 0.0, %v1662
        %v1664 = vpop.f32.mrf.mxu0
        %v1665 = vadd.f32 0.0, %v1664
        %v1666 = vpop.f32.mrf.mxu0
        %v1667 = vadd.f32 0.0, %v1666
        %v1668 = vpop.f32.mrf.mxu0
        %v1669 = vadd.f32 0.0, %v1668
        %1670 = vmatprep.mubr.bf16.mxu0 %v1078
        %1671 = vmatmul.mubr.bf16.gmra.mxu0 %v1077
        %v1672 = vpop.f32.mrf.mxu0
        %v1673 = vadd.f32 0.0, %v1672
        %v1674 = vpop.f32.mrf.mxu0
        %v1675 = vadd.f32 0.0, %v1674
        %v1676 = vpop.f32.mrf.mxu0
        %v1677 = vadd.f32 0.0, %v1676
        %v1678 = vpop.f32.mrf.mxu0
        %v1679 = vadd.f32 0.0, %v1678
        %1680 = vmatprep.mubr.bf16.mxu0 %v1080
        %1681 = vmatmul.mubr.bf16.gmra.mxu0 %v1079
        %v1682 = vpop.f32.mrf.mxu0
        %v1683 = vadd.f32 0.0, %v1682
        %v1684 = vpop.f32.mrf.mxu0
        %v1685 = vadd.f32 0.0, %v1684
        %v1686 = vpop.f32.mrf.mxu0
        %v1687 = vadd.f32 0.0, %v1686
        %v1688 = vpop.f32.mrf.mxu0
        %v1689 = vadd.f32 0.0, %v1688
        %1690 = vdwg.mxu0
        %v1691 = vld [vmem:[%s637] sm:$0xff]
        %v1692 = vld [vmem:[%s637 + $0x8] sm:$0xff]
        %v1693 = vld [vmem:[%s637 + $0x10] sm:$0xff]
        %v1694 = vld [vmem:[%s637 + $0x18] sm:$0xff]
        %v1695 = vld [vmem:[%s637 + $0x20] sm:$0xff]
        %v1696 = vld [vmem:[%s637 + $0x28] sm:$0xff]
        %v1697 = vld [vmem:[%s637 + $0x30] sm:$0xff]
        %v1698 = vld [vmem:[%s637 + $0x38] sm:$0xff]
        %v1699 = vld [vmem:[%s637 + $0x40] sm:$0xff]
        %v1700 = vld [vmem:[%s637 + $0x48] sm:$0xff]
        %v1701 = vld [vmem:[%s637 + $0x50] sm:$0xff]
        %v1702 = vld [vmem:[%s637 + $0x58] sm:$0xff]
        %v1703 = vld [vmem:[%s637 + $0x60] sm:$0xff]
        %v1704 = vld [vmem:[%s637 + $0x68] sm:$0xff]
        %v1705 = vld [vmem:[%s637 + $0x70] sm:$0xff]
        %v1706 = vld [vmem:[%s637 + $0x78] sm:$0xff]
        %v1707 = vld [vmem:[%s637 + $0x80] sm:$0xff]
        %v1708 = vld [vmem:[%s637 + $0x88] sm:$0xff]
        %v1709 = vld [vmem:[%s637 + $0x90] sm:$0xff]
        %v1710 = vld [vmem:[%s637 + $0x98] sm:$0xff]
        %v1711 = vld [vmem:[%s637 + $0xa0] sm:$0xff]
        %v1712 = vld [vmem:[%s637 + $0xa8] sm:$0xff]
        %v1713 = vld [vmem:[%s637 + $0xb0] sm:$0xff]
        %v1714 = vld [vmem:[%s637 + $0xb8] sm:$0xff]
        %v1715 = vld [vmem:[%s637 + $0xc0] sm:$0xff]
        %v1716 = vld [vmem:[%s637 + $0xc8] sm:$0xff]
        %v1717 = vld [vmem:[%s637 + $0xd0] sm:$0xff]
        %v1718 = vld [vmem:[%s637 + $0xd8] sm:$0xff]
        %v1719 = vld [vmem:[%s637 + $0xe0] sm:$0xff]
        %v1720 = vld [vmem:[%s637 + $0xe8] sm:$0xff]
        %v1721 = vld [vmem:[%s637 + $0xf0] sm:$0xff]
        %v1722 = vld [vmem:[%s637 + $0xf8] sm:$0xff]
        %v1755 = vunpack.c.l.b16 %v1691
        %v1756 = vunpack.c.h.b16 %v1691
        %v1757 = vunpack.c.l.b16 %v1692
        %v1758 = vunpack.c.h.b16 %v1692
        %v1759 = vunpack.c.l.b16 %v1693
        %v1760 = vunpack.c.h.b16 %v1693
        %v1761 = vunpack.c.l.b16 %v1694
        %v1762 = vunpack.c.h.b16 %v1694
        %v1763 = vunpack.c.l.b16 %v1695
        %v1764 = vunpack.c.h.b16 %v1695
        %v1765 = vunpack.c.l.b16 %v1696
        %v1766 = vunpack.c.h.b16 %v1696
        %v1767 = vunpack.c.l.b16 %v1697
        %v1768 = vunpack.c.h.b16 %v1697
        %v1769 = vunpack.c.l.b16 %v1698
        %v1770 = vunpack.c.h.b16 %v1698
        %v1771 = vunpack.c.l.b16 %v1699
        %v1772 = vunpack.c.h.b16 %v1699
        %v1773 = vunpack.c.l.b16 %v1700
        %v1774 = vunpack.c.h.b16 %v1700
        %v1775 = vunpack.c.l.b16 %v1701
        %v1776 = vunpack.c.h.b16 %v1701
        %v1777 = vunpack.c.l.b16 %v1702
        %v1778 = vunpack.c.h.b16 %v1702
        %v1779 = vunpack.c.l.b16 %v1703
        %v1780 = vunpack.c.h.b16 %v1703
        %v1781 = vunpack.c.l.b16 %v1704
        %v1782 = vunpack.c.h.b16 %v1704
        %v1783 = vunpack.c.l.b16 %v1705
        %v1784 = vunpack.c.h.b16 %v1705
        %v1785 = vunpack.c.l.b16 %v1706
        %v1786 = vunpack.c.h.b16 %v1706
        %v1787 = vunpack.c.l.b16 %v1707
        %v1788 = vunpack.c.h.b16 %v1707
        %v1789 = vunpack.c.l.b16 %v1708
        %v1790 = vunpack.c.h.b16 %v1708
        %v1791 = vunpack.c.l.b16 %v1709
        %v1792 = vunpack.c.h.b16 %v1709
        %v1793 = vunpack.c.l.b16 %v1710
        %v1794 = vunpack.c.h.b16 %v1710
        %v1795 = vunpack.c.l.b16 %v1711
        %v1796 = vunpack.c.h.b16 %v1711
        %v1797 = vunpack.c.l.b16 %v1712
        %v1798 = vunpack.c.h.b16 %v1712
        %v1799 = vunpack.c.l.b16 %v1713
        %v1800 = vunpack.c.h.b16 %v1713
        %v1801 = vunpack.c.l.b16 %v1714
        %v1802 = vunpack.c.h.b16 %v1714
        %v1803 = vunpack.c.l.b16 %v1715
        %v1804 = vunpack.c.h.b16 %v1715
        %v1805 = vunpack.c.l.b16 %v1716
        %v1806 = vunpack.c.h.b16 %v1716
        %v1807 = vunpack.c.l.b16 %v1717
        %v1808 = vunpack.c.h.b16 %v1717
        %v1809 = vunpack.c.l.b16 %v1718
        %v1810 = vunpack.c.h.b16 %v1718
        %v1811 = vunpack.c.l.b16 %v1719
        %v1812 = vunpack.c.h.b16 %v1719
        %v1813 = vunpack.c.l.b16 %v1720
        %v1814 = vunpack.c.h.b16 %v1720
        %v1815 = vunpack.c.l.b16 %v1721
        %v1816 = vunpack.c.h.b16 %v1721
        %v1817 = vunpack.c.l.b16 %v1722
        %v1818 = vunpack.c.h.b16 %v1722
        %v1819 = vpack.c.b16 %v1757, %v1755
        %v1820 = vpack.c.b16 %v1758, %v1756
        %v1821 = vpack.c.b16 %v1761, %v1759
        %v1822 = vpack.c.b16 %v1762, %v1760
        %v1823 = vpack.c.b16 %v1765, %v1763
        %v1824 = vpack.c.b16 %v1766, %v1764
        %v1825 = vpack.c.b16 %v1769, %v1767
        %v1826 = vpack.c.b16 %v1770, %v1768
        %v1827 = vpack.c.b16 %v1773, %v1771
        %v1828 = vpack.c.b16 %v1774, %v1772
        %v1829 = vpack.c.b16 %v1777, %v1775
        %v1830 = vpack.c.b16 %v1778, %v1776
        %v1831 = vpack.c.b16 %v1781, %v1779
        %v1832 = vpack.c.b16 %v1782, %v1780
        %v1833 = vpack.c.b16 %v1785, %v1783
        %v1834 = vpack.c.b16 %v1786, %v1784
        %v1835 = vpack.c.b16 %v1789, %v1787
        %v1836 = vpack.c.b16 %v1790, %v1788
        %v1837 = vpack.c.b16 %v1793, %v1791
        %v1838 = vpack.c.b16 %v1794, %v1792
        %v1839 = vpack.c.b16 %v1797, %v1795
        %v1840 = vpack.c.b16 %v1798, %v1796
        %v1841 = vpack.c.b16 %v1801, %v1799
        %v1842 = vpack.c.b16 %v1802, %v1800
        %v1843 = vpack.c.b16 %v1805, %v1803
        %v1844 = vpack.c.b16 %v1806, %v1804
        %v1845 = vpack.c.b16 %v1809, %v1807
        %v1846 = vpack.c.b16 %v1810, %v1808
        %v1847 = vpack.c.b16 %v1813, %v1811
        %v1848 = vpack.c.b16 %v1814, %v1812
        %v1849 = vpack.c.b16 %v1817, %v1815
        %v1850 = vpack.c.b16 %v1818, %v1816
        %1883 = vmatprep.subr.bf16.mxu0 %v1834
        %1884 = vmatpush1.bf16.msra.mxu0 %v1833
        %1885 = vmatprep.subr.bf16.mxu0 %v1832
        %1886 = vmatpush1.bf16.msra.mxu0 %v1831
        %1887 = vmatprep.subr.bf16.mxu0 %v1830
        %1888 = vmatpush1.bf16.msra.mxu0 %v1829
        %1889 = vmatprep.subr.bf16.mxu0 %v1828
        %1890 = vmatpush1.bf16.msra.mxu0 %v1827
        %1891 = vmatprep.subr.bf16.mxu0 %v1826
        %1892 = vmatpush1.bf16.msra.mxu0 %v1825
        %1893 = vmatprep.subr.bf16.mxu0 %v1824
        %1894 = vmatpush1.bf16.msra.mxu0 %v1823
        %1895 = vmatprep.subr.bf16.mxu0 %v1822
        %1896 = vmatpush1.bf16.msra.mxu0 %v1821
        %1897 = vmatprep.subr.bf16.mxu0 %v1820
        %1898 = vmatpush1.bf16.msra.mxu0 %v1819
        %1899 = vmatprep.subr.bf16.mxu0 %v1850
        %1900 = vmatpush2.bf16.msra.mxu0 %v1849
        %1901 = vmatprep.subr.bf16.mxu0 %v1848
        %1902 = vmatpush2.bf16.msra.mxu0 %v1847
        %1903 = vmatprep.subr.bf16.mxu0 %v1846
        %1904 = vmatpush2.bf16.msra.mxu0 %v1845
        %1905 = vmatprep.subr.bf16.mxu0 %v1844
        %1906 = vmatpush2.bf16.msra.mxu0 %v1843
        %1907 = vmatprep.subr.bf16.mxu0 %v1842
        %1908 = vmatpush2.bf16.msra.mxu0 %v1841
        %1909 = vmatprep.subr.bf16.mxu0 %v1840
        %1910 = vmatpush2.bf16.msra.mxu0 %v1839
        %1911 = vmatprep.subr.bf16.mxu0 %v1838
        %1912 = vmatpush2.bf16.msra.mxu0 %v1837
        %1913 = vmatprep.subr.bf16.mxu0 %v1836
        %1914 = vmatpush2.bf16.msra.mxu0 %v1835
        %1915 = vmatprep.mubr.bf16.mxu0 %v1066
        %1916 = vmatmul.mubr.bf16.gmra.mxu0 %v1065
        %v1917 = vpop.f32.mrf.mxu0
        %v1918 = vadd.f32 0.0, %v1917
        %v1919 = vpop.f32.mrf.mxu0
        %v1920 = vadd.f32 0.0, %v1919
        %v1921 = vpop.f32.mrf.mxu0
        %v1922 = vadd.f32 0.0, %v1921
        %v1923 = vpop.f32.mrf.mxu0
        %v1924 = vadd.f32 0.0, %v1923
        %1925 = vmatprep.mubr.bf16.mxu0 %v1068
        %1926 = vmatmul.mubr.bf16.gmra.mxu0 %v1067
        %v1927 = vpop.f32.mrf.mxu0
        %v1928 = vadd.f32 0.0, %v1927
        %v1929 = vpop.f32.mrf.mxu0
        %v1930 = vadd.f32 0.0, %v1929
        %v1931 = vpop.f32.mrf.mxu0
        %v1932 = vadd.f32 0.0, %v1931
        %v1933 = vpop.f32.mrf.mxu0
        %v1934 = vadd.f32 0.0, %v1933
        %1935 = vmatprep.mubr.bf16.mxu0 %v1070
        %1936 = vmatmul.mubr.bf16.gmra.mxu0 %v1069
        %v1937 = vpop.f32.mrf.mxu0
        %v1938 = vadd.f32 0.0, %v1937
        %v1939 = vpop.f32.mrf.mxu0
        %v1940 = vadd.f32 0.0, %v1939
        %v1941 = vpop.f32.mrf.mxu0
        %v1942 = vadd.f32 0.0, %v1941
        %v1943 = vpop.f32.mrf.mxu0
        %v1944 = vadd.f32 0.0, %v1943
        %1945 = vmatprep.mubr.bf16.mxu0 %v1072
        %1946 = vmatmul.mubr.bf16.gmra.mxu0 %v1071
        %v1947 = vpop.f32.mrf.mxu0
        %v1948 = vadd.f32 0.0, %v1947
        %v1949 = vpop.f32.mrf.mxu0
        %v1950 = vadd.f32 0.0, %v1949
        %v1951 = vpop.f32.mrf.mxu0
        %v1952 = vadd.f32 0.0, %v1951
        %v1953 = vpop.f32.mrf.mxu0
        %v1954 = vadd.f32 0.0, %v1953
        %1955 = vmatprep.mubr.bf16.mxu0 %v1074
        %1956 = vmatmul.mubr.bf16.gmra.mxu0 %v1073
        %v1957 = vpop.f32.mrf.mxu0
        %v1958 = vadd.f32 0.0, %v1957
        %v1959 = vpop.f32.mrf.mxu0
        %v1960 = vadd.f32 0.0, %v1959
        %v1961 = vpop.f32.mrf.mxu0
        %v1962 = vadd.f32 0.0, %v1961
        %v1963 = vpop.f32.mrf.mxu0
        %v1964 = vadd.f32 0.0, %v1963
        %1965 = vmatprep.mubr.bf16.mxu0 %v1076
        %1966 = vmatmul.mubr.bf16.gmra.mxu0 %v1075
        %v1967 = vpop.f32.mrf.mxu0
        %v1968 = vadd.f32 0.0, %v1967
        %v1969 = vpop.f32.mrf.mxu0
        %v1970 = vadd.f32 0.0, %v1969
        %v1971 = vpop.f32.mrf.mxu0
        %v1972 = vadd.f32 0.0, %v1971
        %v1973 = vpop.f32.mrf.mxu0
        %v1974 = vadd.f32 0.0, %v1973
        %1975 = vmatprep.mubr.bf16.mxu0 %v1078
        %1976 = vmatmul.mubr.bf16.gmra.mxu0 %v1077
        %v1977 = vpop.f32.mrf.mxu0
        %v1978 = vadd.f32 0.0, %v1977
        %v1979 = vpop.f32.mrf.mxu0
        %v1980 = vadd.f32 0.0, %v1979
        %v1981 = vpop.f32.mrf.mxu0
        %v1982 = vadd.f32 0.0, %v1981
        %v1983 = vpop.f32.mrf.mxu0
        %v1984 = vadd.f32 0.0, %v1983
        %1985 = vmatprep.mubr.bf16.mxu0 %v1080
        %1986 = vmatmul.mubr.bf16.gmra.mxu0 %v1079
        %v1987 = vpop.f32.mrf.mxu0
        %v1988 = vadd.f32 0.0, %v1987
        %v1989 = vpop.f32.mrf.mxu0
        %v1990 = vadd.f32 0.0, %v1989
        %v1991 = vpop.f32.mrf.mxu0
        %v1992 = vadd.f32 0.0, %v1991
        %v1993 = vpop.f32.mrf.mxu0
        %v1994 = vadd.f32 0.0, %v1993
        %1995 = vdwg.mxu0
        %v1996 = vmul.f32 %v1308, %v856
        %v1997 = vmul.f32 %v1312, %v857
        %v1998 = vmul.f32 %v1318, %v856
        %v1999 = vmul.f32 %v1322, %v857
        %v2000 = vmul.f32 %v1328, %v856
        %v2001 = vmul.f32 %v1332, %v857
        %v2002 = vmul.f32 %v1338, %v856
        %v2003 = vmul.f32 %v1342, %v857
        %v2004 = vmul.f32 %v1348, %v856
        %v2005 = vmul.f32 %v1352, %v857
        %v2006 = vmul.f32 %v1358, %v856
        %v2007 = vmul.f32 %v1362, %v857
        %v2008 = vmul.f32 %v1368, %v856
        %v2009 = vmul.f32 %v1372, %v857
        %v2010 = vmul.f32 %v1378, %v856
        %v2011 = vmul.f32 %v1382, %v857
        %v2012 = vmul.f32 %v1310, %v856
        %v2013 = vmul.f32 %v1314, %v857
        %v2014 = vmul.f32 %v1320, %v856
        %v2015 = vmul.f32 %v1324, %v857
        %v2016 = vmul.f32 %v1330, %v856
        %v2017 = vmul.f32 %v1334, %v857
        %v2018 = vmul.f32 %v1340, %v856
        %v2019 = vmul.f32 %v1344, %v857
        %v2020 = vmul.f32 %v1350, %v856
        %v2021 = vmul.f32 %v1354, %v857
        %v2022 = vmul.f32 %v1360, %v856
        %v2023 = vmul.f32 %v1364, %v857
        %v2024 = vmul.f32 %v1370, %v856
        %v2025 = vmul.f32 %v1374, %v857
        %v2026 = vmul.f32 %v1380, %v856
        %v2027 = vmul.f32 %v1384, %v857
        %2028 = vrot.lane.b32.xlu0 %v1308, 64
        %v2029 = vpop.permute.xlu0 %2028
        %2030 = vrot.lane.b32.xlu0 %v1312, 64
        %v2031 = vpop.permute.xlu0 %2030
        %2032 = vrot.lane.b32.xlu0 %v1318, 64
        %v2033 = vpop.permute.xlu0 %2032
        %2034 = vrot.lane.b32.xlu0 %v1322, 64
        %v2035 = vpop.permute.xlu0 %2034
        %2036 = vrot.lane.b32.xlu0 %v1328, 64
        %v2037 = vpop.permute.xlu0 %2036
        %2038 = vrot.lane.b32.xlu0 %v1332, 64
        %v2039 = vpop.permute.xlu0 %2038
        %2040 = vrot.lane.b32.xlu0 %v1338, 64
        %v2041 = vpop.permute.xlu0 %2040
        %2042 = vrot.lane.b32.xlu0 %v1342, 64
        %v2043 = vpop.permute.xlu0 %2042
        %2044 = vrot.lane.b32.xlu0 %v1348, 64
        %v2045 = vpop.permute.xlu0 %2044
        %2046 = vrot.lane.b32.xlu0 %v1352, 64
        %v2047 = vpop.permute.xlu0 %2046
        %2048 = vrot.lane.b32.xlu0 %v1358, 64
        %v2049 = vpop.permute.xlu0 %2048
        %2050 = vrot.lane.b32.xlu0 %v1362, 64
        %v2051 = vpop.permute.xlu0 %2050
        %2052 = vrot.lane.b32.xlu0 %v1368, 64
        %v2053 = vpop.permute.xlu0 %2052
        %2054 = vrot.lane.b32.xlu0 %v1372, 64
        %v2055 = vpop.permute.xlu0 %2054
        %2056 = vrot.lane.b32.xlu0 %v1378, 64
        %v2057 = vpop.permute.xlu0 %2056
        %2058 = vrot.lane.b32.xlu0 %v1382, 64
        %v2059 = vpop.permute.xlu0 %2058
        %2060 = vrot.lane.b32.xlu0 %v1310, 64
        %v2061 = vpop.permute.xlu0 %2060
        %2062 = vrot.lane.b32.xlu0 %v1314, 64
        %v2063 = vpop.permute.xlu0 %2062
        %2064 = vrot.lane.b32.xlu0 %v1320, 64
        %v2065 = vpop.permute.xlu0 %2064
        %2066 = vrot.lane.b32.xlu0 %v1324, 64
        %v2067 = vpop.permute.xlu0 %2066
        %2068 = vrot.lane.b32.xlu0 %v1330, 64
        %v2069 = vpop.permute.xlu0 %2068
        %2070 = vrot.lane.b32.xlu0 %v1334, 64
        %v2071 = vpop.permute.xlu0 %2070
        %2072 = vrot.lane.b32.xlu0 %v1340, 64
        %v2073 = vpop.permute.xlu0 %2072
        %2074 = vrot.lane.b32.xlu0 %v1344, 64
        %v2075 = vpop.permute.xlu0 %2074
        %2076 = vrot.lane.b32.xlu0 %v1350, 64
        %v2077 = vpop.permute.xlu0 %2076
        %2078 = vrot.lane.b32.xlu0 %v1354, 64
        %v2079 = vpop.permute.xlu0 %2078
        %2080 = vrot.lane.b32.xlu0 %v1360, 64
        %v2081 = vpop.permute.xlu0 %2080
        %2082 = vrot.lane.b32.xlu0 %v1364, 64
        %v2083 = vpop.permute.xlu0 %2082
        %2084 = vrot.lane.b32.xlu0 %v1370, 64
        %v2085 = vpop.permute.xlu0 %2084
        %2086 = vrot.lane.b32.xlu0 %v1374, 64
        %v2087 = vpop.permute.xlu0 %2086
        %2088 = vrot.lane.b32.xlu0 %v1380, 64
        %v2089 = vpop.permute.xlu0 %2088
        %2090 = vrot.lane.b32.xlu0 %v1384, 64
        %v2091 = vpop.permute.xlu0 %2090
        %v2092 = vmul.f32 %v2029, %v858
        %v2093 = vmul.f32 %v2031, %v859
        %v2094 = vmul.f32 %v2033, %v858
        %v2095 = vmul.f32 %v2035, %v859
        %v2096 = vmul.f32 %v2037, %v858
        %v2097 = vmul.f32 %v2039, %v859
        %v2098 = vmul.f32 %v2041, %v858
        %v2099 = vmul.f32 %v2043, %v859
        %v2100 = vmul.f32 %v2045, %v858
        %v2101 = vmul.f32 %v2047, %v859
        %v2102 = vmul.f32 %v2049, %v858
        %v2103 = vmul.f32 %v2051, %v859
        %v2104 = vmul.f32 %v2053, %v858
        %v2105 = vmul.f32 %v2055, %v859
        %v2106 = vmul.f32 %v2057, %v858
        %v2107 = vmul.f32 %v2059, %v859
        %v2108 = vmul.f32 %v2061, %v858
        %v2109 = vmul.f32 %v2063, %v859
        %v2110 = vmul.f32 %v2065, %v858
        %v2111 = vmul.f32 %v2067, %v859
        %v2112 = vmul.f32 %v2069, %v858
        %v2113 = vmul.f32 %v2071, %v859
        %v2114 = vmul.f32 %v2073, %v858
        %v2115 = vmul.f32 %v2075, %v859
        %v2116 = vmul.f32 %v2077, %v858
        %v2117 = vmul.f32 %v2079, %v859
        %v2118 = vmul.f32 %v2081, %v858
        %v2119 = vmul.f32 %v2083, %v859
        %v2120 = vmul.f32 %v2085, %v858
        %v2121 = vmul.f32 %v2087, %v859
        %v2122 = vmul.f32 %v2089, %v858
        %v2123 = vmul.f32 %v2091, %v859
        %v2124 = vadd.f32 %v1996, %v2092
        %v2125 = vadd.f32 %v1997, %v2093
        %v2126 = vadd.f32 %v1998, %v2094
        %v2127 = vadd.f32 %v1999, %v2095
        %v2128 = vadd.f32 %v2000, %v2096
        %v2129 = vadd.f32 %v2001, %v2097
        %v2130 = vadd.f32 %v2002, %v2098
        %v2131 = vadd.f32 %v2003, %v2099
        %v2132 = vadd.f32 %v2004, %v2100
        %v2133 = vadd.f32 %v2005, %v2101
        %v2134 = vadd.f32 %v2006, %v2102
        %v2135 = vadd.f32 %v2007, %v2103
        %v2136 = vadd.f32 %v2008, %v2104
        %v2137 = vadd.f32 %v2009, %v2105
        %v2138 = vadd.f32 %v2010, %v2106
        %v2139 = vadd.f32 %v2011, %v2107
        %v2140 = vadd.f32 %v2012, %v2108
        %v2141 = vadd.f32 %v2013, %v2109
        %v2142 = vadd.f32 %v2014, %v2110
        %v2143 = vadd.f32 %v2015, %v2111
        %v2144 = vadd.f32 %v2016, %v2112
        %v2145 = vadd.f32 %v2017, %v2113
        %v2146 = vadd.f32 %v2018, %v2114
        %v2147 = vadd.f32 %v2019, %v2115
        %v2148 = vadd.f32 %v2020, %v2116
        %v2149 = vadd.f32 %v2021, %v2117
        %v2150 = vadd.f32 %v2022, %v2118
        %v2151 = vadd.f32 %v2023, %v2119
        %v2152 = vadd.f32 %v2024, %v2120
        %v2153 = vadd.f32 %v2025, %v2121
        %v2154 = vadd.f32 %v2026, %v2122
        %v2155 = vadd.f32 %v2027, %v2123
        %v2156 = vpack.c.bf16 %v2125, %v2124
        %v2157 = vpack.c.bf16 %v2127, %v2126
        %v2158 = vpack.c.bf16 %v2129, %v2128
        %v2159 = vpack.c.bf16 %v2131, %v2130
        %v2160 = vpack.c.bf16 %v2133, %v2132
        %v2161 = vpack.c.bf16 %v2135, %v2134
        %v2162 = vpack.c.bf16 %v2137, %v2136
        %v2163 = vpack.c.bf16 %v2139, %v2138
        %v2164 = vpack.c.bf16 %v2141, %v2140
        %v2165 = vpack.c.bf16 %v2143, %v2142
        %v2166 = vpack.c.bf16 %v2145, %v2144
        %v2167 = vpack.c.bf16 %v2147, %v2146
        %v2168 = vpack.c.bf16 %v2149, %v2148
        %v2169 = vpack.c.bf16 %v2151, %v2150
        %v2170 = vpack.c.bf16 %v2153, %v2152
        %v2171 = vpack.c.bf16 %v2155, %v2154
        %v2172 = vmul.f32 %v1613, %v856
        %v2173 = vmul.f32 %v1617, %v857
        %v2174 = vmul.f32 %v1623, %v856
        %v2175 = vmul.f32 %v1627, %v857
        %v2176 = vmul.f32 %v1633, %v856
        %v2177 = vmul.f32 %v1637, %v857
        %v2178 = vmul.f32 %v1643, %v856
        %v2179 = vmul.f32 %v1647, %v857
        %v2180 = vmul.f32 %v1653, %v856
        %v2181 = vmul.f32 %v1657, %v857
        %v2182 = vmul.f32 %v1663, %v856
        %v2183 = vmul.f32 %v1667, %v857
        %v2184 = vmul.f32 %v1673, %v856
        %v2185 = vmul.f32 %v1677, %v857
        %v2186 = vmul.f32 %v1683, %v856
        %v2187 = vmul.f32 %v1687, %v857
        %v2188 = vmul.f32 %v1615, %v856
        %v2189 = vmul.f32 %v1619, %v857
        %v2190 = vmul.f32 %v1625, %v856
        %v2191 = vmul.f32 %v1629, %v857
        %v2192 = vmul.f32 %v1635, %v856
        %v2193 = vmul.f32 %v1639, %v857
        %v2194 = vmul.f32 %v1645, %v856
        %v2195 = vmul.f32 %v1649, %v857
        %v2196 = vmul.f32 %v1655, %v856
        %v2197 = vmul.f32 %v1659, %v857
        %v2198 = vmul.f32 %v1665, %v856
        %v2199 = vmul.f32 %v1669, %v857
        %v2200 = vmul.f32 %v1675, %v856
        %v2201 = vmul.f32 %v1679, %v857
        %v2202 = vmul.f32 %v1685, %v856
        %v2203 = vmul.f32 %v1689, %v857
        %2204 = vrot.lane.b32.xlu0 %v1613, 64
        %v2205 = vpop.permute.xlu0 %2204
        %2206 = vrot.lane.b32.xlu0 %v1617, 64
        %v2207 = vpop.permute.xlu0 %2206
        %2208 = vrot.lane.b32.xlu0 %v1623, 64
        %v2209 = vpop.permute.xlu0 %2208
        %2210 = vrot.lane.b32.xlu0 %v1627, 64
        %v2211 = vpop.permute.xlu0 %2210
        %2212 = vrot.lane.b32.xlu0 %v1633, 64
        %v2213 = vpop.permute.xlu0 %2212
        %2214 = vrot.lane.b32.xlu0 %v1637, 64
        %v2215 = vpop.permute.xlu0 %2214
        %2216 = vrot.lane.b32.xlu0 %v1643, 64
        %v2217 = vpop.permute.xlu0 %2216
        %2218 = vrot.lane.b32.xlu0 %v1647, 64
        %v2219 = vpop.permute.xlu0 %2218
        %2220 = vrot.lane.b32.xlu0 %v1653, 64
        %v2221 = vpop.permute.xlu0 %2220
        %2222 = vrot.lane.b32.xlu0 %v1657, 64
        %v2223 = vpop.permute.xlu0 %2222
        %2224 = vrot.lane.b32.xlu0 %v1663, 64
        %v2225 = vpop.permute.xlu0 %2224
        %2226 = vrot.lane.b32.xlu0 %v1667, 64
        %v2227 = vpop.permute.xlu0 %2226
        %2228 = vrot.lane.b32.xlu0 %v1673, 64
        %v2229 = vpop.permute.xlu0 %2228
        %2230 = vrot.lane.b32.xlu0 %v1677, 64
        %v2231 = vpop.permute.xlu0 %2230
        %2232 = vrot.lane.b32.xlu0 %v1683, 64
        %v2233 = vpop.permute.xlu0 %2232
        %2234 = vrot.lane.b32.xlu0 %v1687, 64
        %v2235 = vpop.permute.xlu0 %2234
        %2236 = vrot.lane.b32.xlu0 %v1615, 64
        %v2237 = vpop.permute.xlu0 %2236
        %2238 = vrot.lane.b32.xlu0 %v1619, 64
        %v2239 = vpop.permute.xlu0 %2238
        %2240 = vrot.lane.b32.xlu0 %v1625, 64
        %v2241 = vpop.permute.xlu0 %2240
        %2242 = vrot.lane.b32.xlu0 %v1629, 64
        %v2243 = vpop.permute.xlu0 %2242
        %2244 = vrot.lane.b32.xlu0 %v1635, 64
        %v2245 = vpop.permute.xlu0 %2244
        %2246 = vrot.lane.b32.xlu0 %v1639, 64
        %v2247 = vpop.permute.xlu0 %2246
        %2248 = vrot.lane.b32.xlu0 %v1645, 64
        %v2249 = vpop.permute.xlu0 %2248
        %2250 = vrot.lane.b32.xlu0 %v1649, 64
        %v2251 = vpop.permute.xlu0 %2250
        %2252 = vrot.lane.b32.xlu0 %v1655, 64
        %v2253 = vpop.permute.xlu0 %2252
        %2254 = vrot.lane.b32.xlu0 %v1659, 64
        %v2255 = vpop.permute.xlu0 %2254
        %2256 = vrot.lane.b32.xlu0 %v1665, 64
        %v2257 = vpop.permute.xlu0 %2256
        %2258 = vrot.lane.b32.xlu0 %v1669, 64
        %v2259 = vpop.permute.xlu0 %2258
        %2260 = vrot.lane.b32.xlu0 %v1675, 64
        %v2261 = vpop.permute.xlu0 %2260
        %2262 = vrot.lane.b32.xlu0 %v1679, 64
        %v2263 = vpop.permute.xlu0 %2262
        %2264 = vrot.lane.b32.xlu0 %v1685, 64
        %v2265 = vpop.permute.xlu0 %2264
        %2266 = vrot.lane.b32.xlu0 %v1689, 64
        %v2267 = vpop.permute.xlu0 %2266
        %v2268 = vmul.f32 %v2205, %v858
        %v2269 = vmul.f32 %v2207, %v859
        %v2270 = vmul.f32 %v2209, %v858
        %v2271 = vmul.f32 %v2211, %v859
        %v2272 = vmul.f32 %v2213, %v858
        %v2273 = vmul.f32 %v2215, %v859
        %v2274 = vmul.f32 %v2217, %v858
        %v2275 = vmul.f32 %v2219, %v859
        %v2276 = vmul.f32 %v2221, %v858
        %v2277 = vmul.f32 %v2223, %v859
        %v2278 = vmul.f32 %v2225, %v858
        %v2279 = vmul.f32 %v2227, %v859
        %v2280 = vmul.f32 %v2229, %v858
        %v2281 = vmul.f32 %v2231, %v859
        %v2282 = vmul.f32 %v2233, %v858
        %v2283 = vmul.f32 %v2235, %v859
        %v2284 = vmul.f32 %v2237, %v858
        %v2285 = vmul.f32 %v2239, %v859
        %v2286 = vmul.f32 %v2241, %v858
        %v2287 = vmul.f32 %v2243, %v859
        %v2288 = vmul.f32 %v2245, %v858
        %v2289 = vmul.f32 %v2247, %v859
        %v2290 = vmul.f32 %v2249, %v858
        %v2291 = vmul.f32 %v2251, %v859
        %v2292 = vmul.f32 %v2253, %v858
        %v2293 = vmul.f32 %v2255, %v859
        %v2294 = vmul.f32 %v2257, %v858
        %v2295 = vmul.f32 %v2259, %v859
        %v2296 = vmul.f32 %v2261, %v858
        %v2297 = vmul.f32 %v2263, %v859
        %v2298 = vmul.f32 %v2265, %v858
        %v2299 = vmul.f32 %v2267, %v859
        %v2300 = vadd.f32 %v2172, %v2268
        %v2301 = vadd.f32 %v2173, %v2269
        %v2302 = vadd.f32 %v2174, %v2270
        %v2303 = vadd.f32 %v2175, %v2271
        %v2304 = vadd.f32 %v2176, %v2272
        %v2305 = vadd.f32 %v2177, %v2273
        %v2306 = vadd.f32 %v2178, %v2274
        %v2307 = vadd.f32 %v2179, %v2275
        %v2308 = vadd.f32 %v2180, %v2276
        %v2309 = vadd.f32 %v2181, %v2277
        %v2310 = vadd.f32 %v2182, %v2278
        %v2311 = vadd.f32 %v2183, %v2279
        %v2312 = vadd.f32 %v2184, %v2280
        %v2313 = vadd.f32 %v2185, %v2281
        %v2314 = vadd.f32 %v2186, %v2282
        %v2315 = vadd.f32 %v2187, %v2283
        %v2316 = vadd.f32 %v2188, %v2284
        %v2317 = vadd.f32 %v2189, %v2285
        %v2318 = vadd.f32 %v2190, %v2286
        %v2319 = vadd.f32 %v2191, %v2287
        %v2320 = vadd.f32 %v2192, %v2288
        %v2321 = vadd.f32 %v2193, %v2289
        %v2322 = vadd.f32 %v2194, %v2290
        %v2323 = vadd.f32 %v2195, %v2291
        %v2324 = vadd.f32 %v2196, %v2292
        %v2325 = vadd.f32 %v2197, %v2293
        %v2326 = vadd.f32 %v2198, %v2294
        %v2327 = vadd.f32 %v2199, %v2295
        %v2328 = vadd.f32 %v2200, %v2296
        %v2329 = vadd.f32 %v2201, %v2297
        %v2330 = vadd.f32 %v2202, %v2298
        %v2331 = vadd.f32 %v2203, %v2299
        %v2332 = vpack.c.bf16 %v2301, %v2300
        %v2333 = vpack.c.bf16 %v2303, %v2302
        %v2334 = vpack.c.bf16 %v2305, %v2304
        %v2335 = vpack.c.bf16 %v2307, %v2306
        %v2336 = vpack.c.bf16 %v2309, %v2308
        %v2337 = vpack.c.bf16 %v2311, %v2310
        %v2338 = vpack.c.bf16 %v2313, %v2312
        %v2339 = vpack.c.bf16 %v2315, %v2314
        %v2340 = vpack.c.bf16 %v2317, %v2316
        %v2341 = vpack.c.bf16 %v2319, %v2318
        %v2342 = vpack.c.bf16 %v2321, %v2320
        %v2343 = vpack.c.bf16 %v2323, %v2322
        %v2344 = vpack.c.bf16 %v2325, %v2324
        %v2345 = vpack.c.bf16 %v2327, %v2326
        %v2346 = vpack.c.bf16 %v2329, %v2328
        %v2347 = vpack.c.bf16 %v2331, %v2330
        %v2348 = vpack.c.bf16 %v1922, %v1918
        %v2349 = vpack.c.bf16 %v1932, %v1928
        %v2350 = vpack.c.bf16 %v1942, %v1938
        %v2351 = vpack.c.bf16 %v1952, %v1948
        %v2352 = vpack.c.bf16 %v1962, %v1958
        %v2353 = vpack.c.bf16 %v1972, %v1968
        %v2354 = vpack.c.bf16 %v1982, %v1978
        %v2355 = vpack.c.bf16 %v1992, %v1988
        %v2356 = vpack.c.bf16 %v1924, %v1920
        %v2357 = vpack.c.bf16 %v1934, %v1930
        %v2358 = vpack.c.bf16 %v1944, %v1940
        %v2359 = vpack.c.bf16 %v1954, %v1950
        %v2360 = vpack.c.bf16 %v1964, %v1960
        %v2361 = vpack.c.bf16 %v1974, %v1970
        %v2362 = vpack.c.bf16 %v1984, %v1980
        %v2363 = vpack.c.bf16 %v1994, %v1990
        %v2364 = vld [vmem:[%s3] sm:$0xff]
        %v2365 = vld [vmem:[%s3 + $0x8] sm:$0xff]
        %2366 = vmatprep.subr.bf16.mxu0 0
        %2367 = vmatpush1.bf16.xpose.msra.mxu0 0
        %2368 = vmatprep.subr.bf16.mxu0 0
        %2369 = vmatpush1.bf16.xpose.msra.mxu0 0
        %2370 = vmatprep.subr.bf16.mxu0 0
        %2371 = vmatpush1.bf16.xpose.msra.mxu0 0
        %2372 = vmatprep.subr.bf16.mxu0 0
        %2373 = vmatpush1.bf16.xpose.msra.mxu0 0
        %2374 = vmatprep.subr.bf16.mxu0 0
        %2375 = vmatpush1.bf16.xpose.msra.mxu0 0
        %2376 = vmatprep.subr.bf16.mxu0 0
        %2377 = vmatpush1.bf16.xpose.msra.mxu0 0
        %2378 = vmatprep.subr.bf16.mxu0 0
        %2379 = vmatpush1.bf16.xpose.msra.mxu0 0
        %2380 = vmatprep.subr.bf16.mxu0 0
        %2381 = vmatpush1.bf16.xpose.msra.mxu0 %v2332
        %2382 = vmatprep.subr.bf16.mxu0 0
        %2383 = vmatpush2.bf16.xpose.msra.mxu0 0
        %2384 = vmatprep.subr.bf16.mxu0 0
        %2385 = vmatpush2.bf16.xpose.msra.mxu0 0
        %2386 = vmatprep.subr.bf16.mxu0 0
        %2387 = vmatpush2.bf16.xpose.msra.mxu0 0
        %2388 = vmatprep.subr.bf16.mxu0 0
        %2389 = vmatpush2.bf16.xpose.msra.mxu0 0
        %2390 = vmatprep.subr.bf16.mxu0 0
        %2391 = vmatpush2.bf16.xpose.msra.mxu0 0
        %2392 = vmatprep.subr.bf16.mxu0 0
        %2393 = vmatpush2.bf16.xpose.msra.mxu0 0
        %2394 = vmatprep.subr.bf16.mxu0 0
        %2395 = vmatpush2.bf16.xpose.msra.mxu0 0
        %2396 = vmatprep.subr.bf16.mxu0 0
        %2397 = vmatpush2.bf16.xpose.msra.mxu0 0
        %2398 = vmatprep.mubr.bf16.mxu0 0
        %2399 = vmatmul.mubr.bf16.gmra.mxu0 %v2156
        %v2400 = vpop.f32.mrf.mxu0
        %v2401 = vadd.f32 %v2364, %v2400
        %v2402 = vpop.f32.mrf.mxu0
        %v2403 = vpop.f32.mrf.mxu0
        %v2404 = vadd.f32 %v2365, %v2403
        %v2405 = vpop.f32.mrf.mxu0
        %2406 = vdwg.mxu0
        %2407 = vmatprep.subr.bf16.mxu0 0
        %2408 = vmatpush1.bf16.xpose.msra.mxu0 0
        %2409 = vmatprep.subr.bf16.mxu0 0
        %2410 = vmatpush1.bf16.xpose.msra.mxu0 0
        %2411 = vmatprep.subr.bf16.mxu0 0
        %2412 = vmatpush1.bf16.xpose.msra.mxu0 0
        %2413 = vmatprep.subr.bf16.mxu0 0
        %2414 = vmatpush1.bf16.xpose.msra.mxu0 0
        %2415 = vmatprep.subr.bf16.mxu0 0
        %2416 = vmatpush1.bf16.xpose.msra.mxu0 0
        %2417 = vmatprep.subr.bf16.mxu0 0
        %2418 = vmatpush1.bf16.xpose.msra.mxu0 0
        %2419 = vmatprep.subr.bf16.mxu0 0
        %2420 = vmatpush1.bf16.xpose.msra.mxu0 0
        %2421 = vmatprep.subr.bf16.mxu0 0
        %2422 = vmatpush1.bf16.xpose.msra.mxu0 %v2333
        %2423 = vmatprep.subr.bf16.mxu0 0
        %2424 = vmatpush2.bf16.xpose.msra.mxu0 0
        %2425 = vmatprep.subr.bf16.mxu0 0
        %2426 = vmatpush2.bf16.xpose.msra.mxu0 0
        %2427 = vmatprep.subr.bf16.mxu0 0
        %2428 = vmatpush2.bf16.xpose.msra.mxu0 0
        %2429 = vmatprep.subr.bf16.mxu0 0
        %2430 = vmatpush2.bf16.xpose.msra.mxu0 0
        %2431 = vmatprep.subr.bf16.mxu0 0
        %2432 = vmatpush2.bf16.xpose.msra.mxu0 0
        %2433 = vmatprep.subr.bf16.mxu0 0
        %2434 = vmatpush2.bf16.xpose.msra.mxu0 0
        %2435 = vmatprep.subr.bf16.mxu0 0
        %2436 = vmatpush2.bf16.xpose.msra.mxu0 0
        %2437 = vmatprep.subr.bf16.mxu0 0
        %2438 = vmatpush2.bf16.xpose.msra.mxu0 0
        %2439 = vmatprep.mubr.bf16.mxu0 0
        %2440 = vmatmul.mubr.bf16.gmra.mxu0 %v2157
        %v2441 = vpop.f32.mrf.mxu0
        %v2442 = vadd.f32 %v2364, %v2441
        %v2443 = vpop.f32.mrf.mxu0
        %v2444 = vpop.f32.mrf.mxu0
        %v2445 = vadd.f32 %v2365, %v2444
        %v2446 = vpop.f32.mrf.mxu0
        %2447 = vdwg.mxu0
        %2448 = vmatprep.subr.bf16.mxu0 0
        %2449 = vmatpush1.bf16.xpose.msra.mxu0 0
        %2450 = vmatprep.subr.bf16.mxu0 0
        %2451 = vmatpush1.bf16.xpose.msra.mxu0 0
        %2452 = vmatprep.subr.bf16.mxu0 0
        %2453 = vmatpush1.bf16.xpose.msra.mxu0 0
        %2454 = vmatprep.subr.bf16.mxu0 0
        %2455 = vmatpush1.bf16.xpose.msra.mxu0 0
        %2456 = vmatprep.subr.bf16.mxu0 0
        %2457 = vmatpush1.bf16.xpose.msra.mxu0 0
        %2458 = vmatprep.subr.bf16.mxu0 0
        %2459 = vmatpush1.bf16.xpose.msra.mxu0 0
        %2460 = vmatprep.subr.bf16.mxu0 0
        %2461 = vmatpush1.bf16.xpose.msra.mxu0 0
        %2462 = vmatprep.subr.bf16.mxu0 0
        %2463 = vmatpush1.bf16.xpose.msra.mxu0 %v2334
        %2464 = vmatprep.subr.bf16.mxu0 0
        %2465 = vmatpush2.bf16.xpose.msra.mxu0 0
        %2466 = vmatprep.subr.bf16.mxu0 0
        %2467 = vmatpush2.bf16.xpose.msra.mxu0 0
        %2468 = vmatprep.subr.bf16.mxu0 0
        %2469 = vmatpush2.bf16.xpose.msra.mxu0 0
        %2470 = vmatprep.subr.bf16.mxu0 0
        %2471 = vmatpush2.bf16.xpose.msra.mxu0 0
        %2472 = vmatprep.subr.bf16.mxu0 0
        %2473 = vmatpush2.bf16.xpose.msra.mxu0 0
        %2474 = vmatprep.subr.bf16.mxu0 0
        %2475 = vmatpush2.bf16.xpose.msra.mxu0 0
        %2476 = vmatprep.subr.bf16.mxu0 0
        %2477 = vmatpush2.bf16.xpose.msra.mxu0 0
        %2478 = vmatprep.subr.bf16.mxu0 0
        %2479 = vmatpush2.bf16.xpose.msra.mxu0 0
        %2480 = vmatprep.mubr.bf16.mxu0 0
        %2481 = vmatmul.mubr.bf16.gmra.mxu0 %v2158
        %v2482 = vpop.f32.mrf.mxu0
        %v2483 = vadd.f32 %v2364, %v2482
        %v2484 = vpop.f32.mrf.mxu0
        %v2485 = vpop.f32.mrf.mxu0
        %v2486 = vadd.f32 %v2365, %v2485
        %v2487 = vpop.f32.mrf.mxu0
        %2488 = vdwg.mxu0
        %2489 = vmatprep.subr.bf16.mxu0 0
        %2490 = vmatpush1.bf16.xpose.msra.mxu0 0
        %2491 = vmatprep.subr.bf16.mxu0 0
        %2492 = vmatpush1.bf16.xpose.msra.mxu0 0
        %2493 = vmatprep.subr.bf16.mxu0 0
        %2494 = vmatpush1.bf16.xpose.msra.mxu0 0
        %2495 = vmatprep.subr.bf16.mxu0 0
        %2496 = vmatpush1.bf16.xpose.msra.mxu0 0
        %2497 = vmatprep.subr.bf16.mxu0 0
        %2498 = vmatpush1.bf16.xpose.msra.mxu0 0
        %2499 = vmatprep.subr.bf16.mxu0 0
        %2500 = vmatpush1.bf16.xpose.msra.mxu0 0
        %2501 = vmatprep.subr.bf16.mxu0 0
        %2502 = vmatpush1.bf16.xpose.msra.mxu0 0
        %2503 = vmatprep.subr.bf16.mxu0 0
        %2504 = vmatpush1.bf16.xpose.msra.mxu0 %v2335
        %2505 = vmatprep.subr.bf16.mxu0 0
        %2506 = vmatpush2.bf16.xpose.msra.mxu0 0
        %2507 = vmatprep.subr.bf16.mxu0 0
        %2508 = vmatpush2.bf16.xpose.msra.mxu0 0
        %2509 = vmatprep.subr.bf16.mxu0 0
        %2510 = vmatpush2.bf16.xpose.msra.mxu0 0
        %2511 = vmatprep.subr.bf16.mxu0 0
        %2512 = vmatpush2.bf16.xpose.msra.mxu0 0
        %2513 = vmatprep.subr.bf16.mxu0 0
        %2514 = vmatpush2.bf16.xpose.msra.mxu0 0
        %2515 = vmatprep.subr.bf16.mxu0 0
        %2516 = vmatpush2.bf16.xpose.msra.mxu0 0
        %2517 = vmatprep.subr.bf16.mxu0 0
        %2518 = vmatpush2.bf16.xpose.msra.mxu0 0
        %2519 = vmatprep.subr.bf16.mxu0 0
        %2520 = vmatpush2.bf16.xpose.msra.mxu0 0
        %2521 = vmatprep.mubr.bf16.mxu0 0
        %2522 = vmatmul.mubr.bf16.gmra.mxu0 %v2159
        %v2523 = vpop.f32.mrf.mxu0
        %v2524 = vadd.f32 %v2364, %v2523
        %v2525 = vpop.f32.mrf.mxu0
        %v2526 = vpop.f32.mrf.mxu0
        %v2527 = vadd.f32 %v2365, %v2526
        %v2528 = vpop.f32.mrf.mxu0
        %2529 = vdwg.mxu0
        %2530 = vmatprep.subr.bf16.mxu0 0
        %2531 = vmatpush1.bf16.xpose.msra.mxu0 0
        %2532 = vmatprep.subr.bf16.mxu0 0
        %2533 = vmatpush1.bf16.xpose.msra.mxu0 0
        %2534 = vmatprep.subr.bf16.mxu0 0
        %2535 = vmatpush1.bf16.xpose.msra.mxu0 0
        %2536 = vmatprep.subr.bf16.mxu0 0
        %2537 = vmatpush1.bf16.xpose.msra.mxu0 0
        %2538 = vmatprep.subr.bf16.mxu0 0
        %2539 = vmatpush1.bf16.xpose.msra.mxu0 0
        %2540 = vmatprep.subr.bf16.mxu0 0
        %2541 = vmatpush1.bf16.xpose.msra.mxu0 0
        %2542 = vmatprep.subr.bf16.mxu0 0
        %2543 = vmatpush1.bf16.xpose.msra.mxu0 0
        %2544 = vmatprep.subr.bf16.mxu0 0
        %2545 = vmatpush1.bf16.xpose.msra.mxu0 %v2336
        %2546 = vmatprep.subr.bf16.mxu0 0
        %2547 = vmatpush2.bf16.xpose.msra.mxu0 0
        %2548 = vmatprep.subr.bf16.mxu0 0
        %2549 = vmatpush2.bf16.xpose.msra.mxu0 0
        %2550 = vmatprep.subr.bf16.mxu0 0
        %2551 = vmatpush2.bf16.xpose.msra.mxu0 0
        %2552 = vmatprep.subr.bf16.mxu0 0
        %2553 = vmatpush2.bf16.xpose.msra.mxu0 0
        %2554 = vmatprep.subr.bf16.mxu0 0
        %2555 = vmatpush2.bf16.xpose.msra.mxu0 0
        %2556 = vmatprep.subr.bf16.mxu0 0
        %2557 = vmatpush2.bf16.xpose.msra.mxu0 0
        %2558 = vmatprep.subr.bf16.mxu0 0
        %2559 = vmatpush2.bf16.xpose.msra.mxu0 0
        %2560 = vmatprep.subr.bf16.mxu0 0
        %2561 = vmatpush2.bf16.xpose.msra.mxu0 0
        %2562 = vmatprep.mubr.bf16.mxu0 0
        %2563 = vmatmul.mubr.bf16.gmra.mxu0 %v2160
        %v2564 = vpop.f32.mrf.mxu0
        %v2565 = vadd.f32 %v2364, %v2564
        %v2566 = vpop.f32.mrf.mxu0
        %v2567 = vpop.f32.mrf.mxu0
        %v2568 = vadd.f32 %v2365, %v2567
        %v2569 = vpop.f32.mrf.mxu0
        %2570 = vdwg.mxu0
        %2571 = vmatprep.subr.bf16.mxu0 0
        %2572 = vmatpush1.bf16.xpose.msra.mxu0 0
        %2573 = vmatprep.subr.bf16.mxu0 0
        %2574 = vmatpush1.bf16.xpose.msra.mxu0 0
        %2575 = vmatprep.subr.bf16.mxu0 0
        %2576 = vmatpush1.bf16.xpose.msra.mxu0 0
        %2577 = vmatprep.subr.bf16.mxu0 0
        %2578 = vmatpush1.bf16.xpose.msra.mxu0 0
        %2579 = vmatprep.subr.bf16.mxu0 0
        %2580 = vmatpush1.bf16.xpose.msra.mxu0 0
        %2581 = vmatprep.subr.bf16.mxu0 0
        %2582 = vmatpush1.bf16.xpose.msra.mxu0 0
        %2583 = vmatprep.subr.bf16.mxu0 0
        %2584 = vmatpush1.bf16.xpose.msra.mxu0 0
        %2585 = vmatprep.subr.bf16.mxu0 0
        %2586 = vmatpush1.bf16.xpose.msra.mxu0 %v2337
        %2587 = vmatprep.subr.bf16.mxu0 0
        %2588 = vmatpush2.bf16.xpose.msra.mxu0 0
        %2589 = vmatprep.subr.bf16.mxu0 0
        %2590 = vmatpush2.bf16.xpose.msra.mxu0 0
        %2591 = vmatprep.subr.bf16.mxu0 0
        %2592 = vmatpush2.bf16.xpose.msra.mxu0 0
        %2593 = vmatprep.subr.bf16.mxu0 0
        %2594 = vmatpush2.bf16.xpose.msra.mxu0 0
        %2595 = vmatprep.subr.bf16.mxu0 0
        %2596 = vmatpush2.bf16.xpose.msra.mxu0 0
        %2597 = vmatprep.subr.bf16.mxu0 0
        %2598 = vmatpush2.bf16.xpose.msra.mxu0 0
        %2599 = vmatprep.subr.bf16.mxu0 0
        %2600 = vmatpush2.bf16.xpose.msra.mxu0 0
        %2601 = vmatprep.subr.bf16.mxu0 0
        %2602 = vmatpush2.bf16.xpose.msra.mxu0 0
        %2603 = vmatprep.mubr.bf16.mxu0 0
        %2604 = vmatmul.mubr.bf16.gmra.mxu0 %v2161
        %v2605 = vpop.f32.mrf.mxu0
        %v2606 = vadd.f32 %v2364, %v2605
        %v2607 = vpop.f32.mrf.mxu0
        %v2608 = vpop.f32.mrf.mxu0
        %v2609 = vadd.f32 %v2365, %v2608
        %v2610 = vpop.f32.mrf.mxu0
        %2611 = vdwg.mxu0
        %2612 = vmatprep.subr.bf16.mxu0 0
        %2613 = vmatpush1.bf16.xpose.msra.mxu0 0
        %2614 = vmatprep.subr.bf16.mxu0 0
        %2615 = vmatpush1.bf16.xpose.msra.mxu0 0
        %2616 = vmatprep.subr.bf16.mxu0 0
        %2617 = vmatpush1.bf16.xpose.msra.mxu0 0
        %2618 = vmatprep.subr.bf16.mxu0 0
        %2619 = vmatpush1.bf16.xpose.msra.mxu0 0
        %2620 = vmatprep.subr.bf16.mxu0 0
        %2621 = vmatpush1.bf16.xpose.msra.mxu0 0
        %2622 = vmatprep.subr.bf16.mxu0 0
        %2623 = vmatpush1.bf16.xpose.msra.mxu0 0
        %2624 = vmatprep.subr.bf16.mxu0 0
        %2625 = vmatpush1.bf16.xpose.msra.mxu0 0
        %2626 = vmatprep.subr.bf16.mxu0 0
        %2627 = vmatpush1.bf16.xpose.msra.mxu0 %v2338
        %2628 = vmatprep.subr.bf16.mxu0 0
        %2629 = vmatpush2.bf16.xpose.msra.mxu0 0
        %2630 = vmatprep.subr.bf16.mxu0 0
        %2631 = vmatpush2.bf16.xpose.msra.mxu0 0
        %2632 = vmatprep.subr.bf16.mxu0 0
        %2633 = vmatpush2.bf16.xpose.msra.mxu0 0
        %2634 = vmatprep.subr.bf16.mxu0 0
        %2635 = vmatpush2.bf16.xpose.msra.mxu0 0
        %2636 = vmatprep.subr.bf16.mxu0 0
        %2637 = vmatpush2.bf16.xpose.msra.mxu0 0
        %2638 = vmatprep.subr.bf16.mxu0 0
        %2639 = vmatpush2.bf16.xpose.msra.mxu0 0
        %2640 = vmatprep.subr.bf16.mxu0 0
        %2641 = vmatpush2.bf16.xpose.msra.mxu0 0
        %2642 = vmatprep.subr.bf16.mxu0 0
        %2643 = vmatpush2.bf16.xpose.msra.mxu0 0
        %2644 = vmatprep.mubr.bf16.mxu0 0
        %2645 = vmatmul.mubr.bf16.gmra.mxu0 %v2162
        %v2646 = vpop.f32.mrf.mxu0
        %v2647 = vadd.f32 %v2364, %v2646
        %v2648 = vpop.f32.mrf.mxu0
        %v2649 = vpop.f32.mrf.mxu0
        %v2650 = vadd.f32 %v2365, %v2649
        %v2651 = vpop.f32.mrf.mxu0
        %2652 = vdwg.mxu0
        %2653 = vmatprep.subr.bf16.mxu0 0
        %2654 = vmatpush1.bf16.xpose.msra.mxu0 0
        %2655 = vmatprep.subr.bf16.mxu0 0
        %2656 = vmatpush1.bf16.xpose.msra.mxu0 0
        %2657 = vmatprep.subr.bf16.mxu0 0
        %2658 = vmatpush1.bf16.xpose.msra.mxu0 0
        %2659 = vmatprep.subr.bf16.mxu0 0
        %2660 = vmatpush1.bf16.xpose.msra.mxu0 0
        %2661 = vmatprep.subr.bf16.mxu0 0
        %2662 = vmatpush1.bf16.xpose.msra.mxu0 0
        %2663 = vmatprep.subr.bf16.mxu0 0
        %2664 = vmatpush1.bf16.xpose.msra.mxu0 0
        %2665 = vmatprep.subr.bf16.mxu0 0
        %2666 = vmatpush1.bf16.xpose.msra.mxu0 0
        %2667 = vmatprep.subr.bf16.mxu0 0
        %2668 = vmatpush1.bf16.xpose.msra.mxu0 %v2339
        %2669 = vmatprep.subr.bf16.mxu0 0
        %2670 = vmatpush2.bf16.xpose.msra.mxu0 0
        %2671 = vmatprep.subr.bf16.mxu0 0
        %2672 = vmatpush2.bf16.xpose.msra.mxu0 0
        %2673 = vmatprep.subr.bf16.mxu0 0
        %2674 = vmatpush2.bf16.xpose.msra.mxu0 0
        %2675 = vmatprep.subr.bf16.mxu0 0
        %2676 = vmatpush2.bf16.xpose.msra.mxu0 0
        %2677 = vmatprep.subr.bf16.mxu0 0
        %2678 = vmatpush2.bf16.xpose.msra.mxu0 0
        %2679 = vmatprep.subr.bf16.mxu0 0
        %2680 = vmatpush2.bf16.xpose.msra.mxu0 0
        %2681 = vmatprep.subr.bf16.mxu0 0
        %2682 = vmatpush2.bf16.xpose.msra.mxu0 0
        %2683 = vmatprep.subr.bf16.mxu0 0
        %2684 = vmatpush2.bf16.xpose.msra.mxu0 0
        %2685 = vmatprep.mubr.bf16.mxu0 0
        %2686 = vmatmul.mubr.bf16.gmra.mxu0 %v2163
        %v2687 = vpop.f32.mrf.mxu0
        %v2688 = vadd.f32 %v2364, %v2687
        %v2689 = vpop.f32.mrf.mxu0
        %v2690 = vpop.f32.mrf.mxu0
        %v2691 = vadd.f32 %v2365, %v2690
        %v2692 = vpop.f32.mrf.mxu0
        %2693 = vdwg.mxu0
        %2694 = vmatprep.subr.bf16.mxu0 0
        %2695 = vmatpush1.bf16.xpose.msra.mxu0 0
        %2696 = vmatprep.subr.bf16.mxu0 0
        %2697 = vmatpush1.bf16.xpose.msra.mxu0 0
        %2698 = vmatprep.subr.bf16.mxu0 0
        %2699 = vmatpush1.bf16.xpose.msra.mxu0 0
        %2700 = vmatprep.subr.bf16.mxu0 0
        %2701 = vmatpush1.bf16.xpose.msra.mxu0 0
        %2702 = vmatprep.subr.bf16.mxu0 0
        %2703 = vmatpush1.bf16.xpose.msra.mxu0 0
        %2704 = vmatprep.subr.bf16.mxu0 0
        %2705 = vmatpush1.bf16.xpose.msra.mxu0 0
        %2706 = vmatprep.subr.bf16.mxu0 0
        %2707 = vmatpush1.bf16.xpose.msra.mxu0 0
        %2708 = vmatprep.subr.bf16.mxu0 0
        %2709 = vmatpush1.bf16.xpose.msra.mxu0 %v2340
        %2710 = vmatprep.subr.bf16.mxu0 0
        %2711 = vmatpush2.bf16.xpose.msra.mxu0 0
        %2712 = vmatprep.subr.bf16.mxu0 0
        %2713 = vmatpush2.bf16.xpose.msra.mxu0 0
        %2714 = vmatprep.subr.bf16.mxu0 0
        %2715 = vmatpush2.bf16.xpose.msra.mxu0 0
        %2716 = vmatprep.subr.bf16.mxu0 0
        %2717 = vmatpush2.bf16.xpose.msra.mxu0 0
        %2718 = vmatprep.subr.bf16.mxu0 0
        %2719 = vmatpush2.bf16.xpose.msra.mxu0 0
        %2720 = vmatprep.subr.bf16.mxu0 0
        %2721 = vmatpush2.bf16.xpose.msra.mxu0 0
        %2722 = vmatprep.subr.bf16.mxu0 0
        %2723 = vmatpush2.bf16.xpose.msra.mxu0 0
        %2724 = vmatprep.subr.bf16.mxu0 0
        %2725 = vmatpush2.bf16.xpose.msra.mxu0 0
        %2726 = vmatprep.mubr.bf16.mxu0 0
        %2727 = vmatmul.mubr.bf16.gmra.mxu0 %v2164
        %v2728 = vpop.f32.mrf.mxu0
        %v2729 = vadd.f32 %v2364, %v2728
        %v2730 = vpop.f32.mrf.mxu0
        %v2731 = vpop.f32.mrf.mxu0
        %v2732 = vadd.f32 %v2365, %v2731
        %v2733 = vpop.f32.mrf.mxu0
        %2734 = vdwg.mxu0
        %2735 = vmatprep.subr.bf16.mxu0 0
        %2736 = vmatpush1.bf16.xpose.msra.mxu0 0
        %2737 = vmatprep.subr.bf16.mxu0 0
        %2738 = vmatpush1.bf16.xpose.msra.mxu0 0
        %2739 = vmatprep.subr.bf16.mxu0 0
        %2740 = vmatpush1.bf16.xpose.msra.mxu0 0
        %2741 = vmatprep.subr.bf16.mxu0 0
        %2742 = vmatpush1.bf16.xpose.msra.mxu0 0
        %2743 = vmatprep.subr.bf16.mxu0 0
        %2744 = vmatpush1.bf16.xpose.msra.mxu0 0
        %2745 = vmatprep.subr.bf16.mxu0 0
        %2746 = vmatpush1.bf16.xpose.msra.mxu0 0
        %2747 = vmatprep.subr.bf16.mxu0 0
        %2748 = vmatpush1.bf16.xpose.msra.mxu0 0
        %2749 = vmatprep.subr.bf16.mxu0 0
        %2750 = vmatpush1.bf16.xpose.msra.mxu0 %v2341
        %2751 = vmatprep.subr.bf16.mxu0 0
        %2752 = vmatpush2.bf16.xpose.msra.mxu0 0
        %2753 = vmatprep.subr.bf16.mxu0 0
        %2754 = vmatpush2.bf16.xpose.msra.mxu0 0
        %2755 = vmatprep.subr.bf16.mxu0 0
        %2756 = vmatpush2.bf16.xpose.msra.mxu0 0
        %2757 = vmatprep.subr.bf16.mxu0 0
        %2758 = vmatpush2.bf16.xpose.msra.mxu0 0
        %2759 = vmatprep.subr.bf16.mxu0 0
        %2760 = vmatpush2.bf16.xpose.msra.mxu0 0
        %2761 = vmatprep.subr.bf16.mxu0 0
        %2762 = vmatpush2.bf16.xpose.msra.mxu0 0
        %2763 = vmatprep.subr.bf16.mxu0 0
        %2764 = vmatpush2.bf16.xpose.msra.mxu0 0
        %2765 = vmatprep.subr.bf16.mxu0 0
        %2766 = vmatpush2.bf16.xpose.msra.mxu0 0
        %2767 = vmatprep.mubr.bf16.mxu0 0
        %2768 = vmatmul.mubr.bf16.gmra.mxu0 %v2165
        %v2769 = vpop.f32.mrf.mxu0
        %v2770 = vadd.f32 %v2364, %v2769
        %v2771 = vpop.f32.mrf.mxu0
        %v2772 = vpop.f32.mrf.mxu0
        %v2773 = vadd.f32 %v2365, %v2772
        %v2774 = vpop.f32.mrf.mxu0
        %2775 = vdwg.mxu0
        %2776 = vmatprep.subr.bf16.mxu0 0
        %2777 = vmatpush1.bf16.xpose.msra.mxu0 0
        %2778 = vmatprep.subr.bf16.mxu0 0
        %2779 = vmatpush1.bf16.xpose.msra.mxu0 0
        %2780 = vmatprep.subr.bf16.mxu0 0
        %2781 = vmatpush1.bf16.xpose.msra.mxu0 0
        %2782 = vmatprep.subr.bf16.mxu0 0
        %2783 = vmatpush1.bf16.xpose.msra.mxu0 0
        %2784 = vmatprep.subr.bf16.mxu0 0
        %2785 = vmatpush1.bf16.xpose.msra.mxu0 0
        %2786 = vmatprep.subr.bf16.mxu0 0
        %2787 = vmatpush1.bf16.xpose.msra.mxu0 0
        %2788 = vmatprep.subr.bf16.mxu0 0
        %2789 = vmatpush1.bf16.xpose.msra.mxu0 0
        %2790 = vmatprep.subr.bf16.mxu0 0
        %2791 = vmatpush1.bf16.xpose.msra.mxu0 %v2342
        %2792 = vmatprep.subr.bf16.mxu0 0
        %2793 = vmatpush2.bf16.xpose.msra.mxu0 0
        %2794 = vmatprep.subr.bf16.mxu0 0
        %2795 = vmatpush2.bf16.xpose.msra.mxu0 0
        %2796 = vmatprep.subr.bf16.mxu0 0
        %2797 = vmatpush2.bf16.xpose.msra.mxu0 0
        %2798 = vmatprep.subr.bf16.mxu0 0
        %2799 = vmatpush2.bf16.xpose.msra.mxu0 0
        %2800 = vmatprep.subr.bf16.mxu0 0
        %2801 = vmatpush2.bf16.xpose.msra.mxu0 0
        %2802 = vmatprep.subr.bf16.mxu0 0
        %2803 = vmatpush2.bf16.xpose.msra.mxu0 0
        %2804 = vmatprep.subr.bf16.mxu0 0
        %2805 = vmatpush2.bf16.xpose.msra.mxu0 0
        %2806 = vmatprep.subr.bf16.mxu0 0
        %2807 = vmatpush2.bf16.xpose.msra.mxu0 0
        %2808 = vmatprep.mubr.bf16.mxu0 0
        %2809 = vmatmul.mubr.bf16.gmra.mxu0 %v2166
        %v2810 = vpop.f32.mrf.mxu0
        %v2811 = vadd.f32 %v2364, %v2810
        %v2812 = vpop.f32.mrf.mxu0
        %v2813 = vpop.f32.mrf.mxu0
        %v2814 = vadd.f32 %v2365, %v2813
        %v2815 = vpop.f32.mrf.mxu0
        %2816 = vdwg.mxu0
        %2817 = vmatprep.subr.bf16.mxu0 0
        %2818 = vmatpush1.bf16.xpose.msra.mxu0 0
        %2819 = vmatprep.subr.bf16.mxu0 0
        %2820 = vmatpush1.bf16.xpose.msra.mxu0 0
        %2821 = vmatprep.subr.bf16.mxu0 0
        %2822 = vmatpush1.bf16.xpose.msra.mxu0 0
        %2823 = vmatprep.subr.bf16.mxu0 0
        %2824 = vmatpush1.bf16.xpose.msra.mxu0 0
        %2825 = vmatprep.subr.bf16.mxu0 0
        %2826 = vmatpush1.bf16.xpose.msra.mxu0 0
        %2827 = vmatprep.subr.bf16.mxu0 0
        %2828 = vmatpush1.bf16.xpose.msra.mxu0 0
        %2829 = vmatprep.subr.bf16.mxu0 0
        %2830 = vmatpush1.bf16.xpose.msra.mxu0 0
        %2831 = vmatprep.subr.bf16.mxu0 0
        %2832 = vmatpush1.bf16.xpose.msra.mxu0 %v2343
        %2833 = vmatprep.subr.bf16.mxu0 0
        %2834 = vmatpush2.bf16.xpose.msra.mxu0 0
        %2835 = vmatprep.subr.bf16.mxu0 0
        %2836 = vmatpush2.bf16.xpose.msra.mxu0 0
        %2837 = vmatprep.subr.bf16.mxu0 0
        %2838 = vmatpush2.bf16.xpose.msra.mxu0 0
        %2839 = vmatprep.subr.bf16.mxu0 0
        %2840 = vmatpush2.bf16.xpose.msra.mxu0 0
        %2841 = vmatprep.subr.bf16.mxu0 0
        %2842 = vmatpush2.bf16.xpose.msra.mxu0 0
        %2843 = vmatprep.subr.bf16.mxu0 0
        %2844 = vmatpush2.bf16.xpose.msra.mxu0 0
        %2845 = vmatprep.subr.bf16.mxu0 0
        %2846 = vmatpush2.bf16.xpose.msra.mxu0 0
        %2847 = vmatprep.subr.bf16.mxu0 0
        %2848 = vmatpush2.bf16.xpose.msra.mxu0 0
        %2849 = vmatprep.mubr.bf16.mxu0 0
        %2850 = vmatmul.mubr.bf16.gmra.mxu0 %v2167
        %v2851 = vpop.f32.mrf.mxu0
        %v2852 = vadd.f32 %v2364, %v2851
        %v2853 = vpop.f32.mrf.mxu0
        %v2854 = vpop.f32.mrf.mxu0
        %v2855 = vadd.f32 %v2365, %v2854
        %v2856 = vpop.f32.mrf.mxu0
        %2857 = vdwg.mxu0
        %2858 = vmatprep.subr.bf16.mxu0 0
        %2859 = vmatpush1.bf16.xpose.msra.mxu0 0
        %2860 = vmatprep.subr.bf16.mxu0 0
        %2861 = vmatpush1.bf16.xpose.msra.mxu0 0
        %2862 = vmatprep.subr.bf16.mxu0 0
        %2863 = vmatpush1.bf16.xpose.msra.mxu0 0
        %2864 = vmatprep.subr.bf16.mxu0 0
        %2865 = vmatpush1.bf16.xpose.msra.mxu0 0
        %2866 = vmatprep.subr.bf16.mxu0 0
        %2867 = vmatpush1.bf16.xpose.msra.mxu0 0
        %2868 = vmatprep.subr.bf16.mxu0 0
        %2869 = vmatpush1.bf16.xpose.msra.mxu0 0
        %2870 = vmatprep.subr.bf16.mxu0 0
        %2871 = vmatpush1.bf16.xpose.msra.mxu0 0
        %2872 = vmatprep.subr.bf16.mxu0 0
        %2873 = vmatpush1.bf16.xpose.msra.mxu0 %v2344
        %2874 = vmatprep.subr.bf16.mxu0 0
        %2875 = vmatpush2.bf16.xpose.msra.mxu0 0
        %2876 = vmatprep.subr.bf16.mxu0 0
        %2877 = vmatpush2.bf16.xpose.msra.mxu0 0
        %2878 = vmatprep.subr.bf16.mxu0 0
        %2879 = vmatpush2.bf16.xpose.msra.mxu0 0
        %2880 = vmatprep.subr.bf16.mxu0 0
        %2881 = vmatpush2.bf16.xpose.msra.mxu0 0
        %2882 = vmatprep.subr.bf16.mxu0 0
        %2883 = vmatpush2.bf16.xpose.msra.mxu0 0
        %2884 = vmatprep.subr.bf16.mxu0 0
        %2885 = vmatpush2.bf16.xpose.msra.mxu0 0
        %2886 = vmatprep.subr.bf16.mxu0 0
        %2887 = vmatpush2.bf16.xpose.msra.mxu0 0
        %2888 = vmatprep.subr.bf16.mxu0 0
        %2889 = vmatpush2.bf16.xpose.msra.mxu0 0
        %2890 = vmatprep.mubr.bf16.mxu0 0
        %2891 = vmatmul.mubr.bf16.gmra.mxu0 %v2168
        %v2892 = vpop.f32.mrf.mxu0
        %v2893 = vadd.f32 %v2364, %v2892
        %v2894 = vpop.f32.mrf.mxu0
        %v2895 = vpop.f32.mrf.mxu0
        %v2896 = vadd.f32 %v2365, %v2895
        %v2897 = vpop.f32.mrf.mxu0
        %2898 = vdwg.mxu0
        %2899 = vmatprep.subr.bf16.mxu0 0
        %2900 = vmatpush1.bf16.xpose.msra.mxu0 0
        %2901 = vmatprep.subr.bf16.mxu0 0
        %2902 = vmatpush1.bf16.xpose.msra.mxu0 0
        %2903 = vmatprep.subr.bf16.mxu0 0
        %2904 = vmatpush1.bf16.xpose.msra.mxu0 0
        %2905 = vmatprep.subr.bf16.mxu0 0
        %2906 = vmatpush1.bf16.xpose.msra.mxu0 0
        %2907 = vmatprep.subr.bf16.mxu0 0
        %2908 = vmatpush1.bf16.xpose.msra.mxu0 0
        %2909 = vmatprep.subr.bf16.mxu0 0
        %2910 = vmatpush1.bf16.xpose.msra.mxu0 0
        %2911 = vmatprep.subr.bf16.mxu0 0
        %2912 = vmatpush1.bf16.xpose.msra.mxu0 0
        %2913 = vmatprep.subr.bf16.mxu0 0
        %2914 = vmatpush1.bf16.xpose.msra.mxu0 %v2345
        %2915 = vmatprep.subr.bf16.mxu0 0
        %2916 = vmatpush2.bf16.xpose.msra.mxu0 0
        %2917 = vmatprep.subr.bf16.mxu0 0
        %2918 = vmatpush2.bf16.xpose.msra.mxu0 0
        %2919 = vmatprep.subr.bf16.mxu0 0
        %2920 = vmatpush2.bf16.xpose.msra.mxu0 0
        %2921 = vmatprep.subr.bf16.mxu0 0
        %2922 = vmatpush2.bf16.xpose.msra.mxu0 0
        %2923 = vmatprep.subr.bf16.mxu0 0
        %2924 = vmatpush2.bf16.xpose.msra.mxu0 0
        %2925 = vmatprep.subr.bf16.mxu0 0
        %2926 = vmatpush2.bf16.xpose.msra.mxu0 0
        %2927 = vmatprep.subr.bf16.mxu0 0
        %2928 = vmatpush2.bf16.xpose.msra.mxu0 0
        %2929 = vmatprep.subr.bf16.mxu0 0
        %2930 = vmatpush2.bf16.xpose.msra.mxu0 0
        %2931 = vmatprep.mubr.bf16.mxu0 0
        %2932 = vmatmul.mubr.bf16.gmra.mxu0 %v2169
        %v2933 = vpop.f32.mrf.mxu0
        %v2934 = vadd.f32 %v2364, %v2933
        %v2935 = vpop.f32.mrf.mxu0
        %v2936 = vpop.f32.mrf.mxu0
        %v2937 = vadd.f32 %v2365, %v2936
        %v2938 = vpop.f32.mrf.mxu0
        %2939 = vdwg.mxu0
        %2940 = vmatprep.subr.bf16.mxu0 0
        %2941 = vmatpush1.bf16.xpose.msra.mxu0 0
        %2942 = vmatprep.subr.bf16.mxu0 0
        %2943 = vmatpush1.bf16.xpose.msra.mxu0 0
        %2944 = vmatprep.subr.bf16.mxu0 0
        %2945 = vmatpush1.bf16.xpose.msra.mxu0 0
        %2946 = vmatprep.subr.bf16.mxu0 0
        %2947 = vmatpush1.bf16.xpose.msra.mxu0 0
        %2948 = vmatprep.subr.bf16.mxu0 0
        %2949 = vmatpush1.bf16.xpose.msra.mxu0 0
        %2950 = vmatprep.subr.bf16.mxu0 0
        %2951 = vmatpush1.bf16.xpose.msra.mxu0 0
        %2952 = vmatprep.subr.bf16.mxu0 0
        %2953 = vmatpush1.bf16.xpose.msra.mxu0 0
        %2954 = vmatprep.subr.bf16.mxu0 0
        %2955 = vmatpush1.bf16.xpose.msra.mxu0 %v2346
        %2956 = vmatprep.subr.bf16.mxu0 0
        %2957 = vmatpush2.bf16.xpose.msra.mxu0 0
        %2958 = vmatprep.subr.bf16.mxu0 0
        %2959 = vmatpush2.bf16.xpose.msra.mxu0 0
        %2960 = vmatprep.subr.bf16.mxu0 0
        %2961 = vmatpush2.bf16.xpose.msra.mxu0 0
        %2962 = vmatprep.subr.bf16.mxu0 0
        %2963 = vmatpush2.bf16.xpose.msra.mxu0 0
        %2964 = vmatprep.subr.bf16.mxu0 0
        %2965 = vmatpush2.bf16.xpose.msra.mxu0 0
        %2966 = vmatprep.subr.bf16.mxu0 0
        %2967 = vmatpush2.bf16.xpose.msra.mxu0 0
        %2968 = vmatprep.subr.bf16.mxu0 0
        %2969 = vmatpush2.bf16.xpose.msra.mxu0 0
        %2970 = vmatprep.subr.bf16.mxu0 0
        %2971 = vmatpush2.bf16.xpose.msra.mxu0 0
        %2972 = vmatprep.mubr.bf16.mxu0 0
        %2973 = vmatmul.mubr.bf16.gmra.mxu0 %v2170
        %v2974 = vpop.f32.mrf.mxu0
        %v2975 = vadd.f32 %v2364, %v2974
        %v2976 = vpop.f32.mrf.mxu0
        %v2977 = vpop.f32.mrf.mxu0
        %v2978 = vadd.f32 %v2365, %v2977
        %v2979 = vpop.f32.mrf.mxu0
        %2980 = vdwg.mxu0
        %2981 = vmatprep.subr.bf16.mxu0 0
        %2982 = vmatpush1.bf16.xpose.msra.mxu0 0
        %2983 = vmatprep.subr.bf16.mxu0 0
        %2984 = vmatpush1.bf16.xpose.msra.mxu0 0
        %2985 = vmatprep.subr.bf16.mxu0 0
        %2986 = vmatpush1.bf16.xpose.msra.mxu0 0
        %2987 = vmatprep.subr.bf16.mxu0 0
        %2988 = vmatpush1.bf16.xpose.msra.mxu0 0
        %2989 = vmatprep.subr.bf16.mxu0 0
        %2990 = vmatpush1.bf16.xpose.msra.mxu0 0
        %2991 = vmatprep.subr.bf16.mxu0 0
        %2992 = vmatpush1.bf16.xpose.msra.mxu0 0
        %2993 = vmatprep.subr.bf16.mxu0 0
        %2994 = vmatpush1.bf16.xpose.msra.mxu0 0
        %2995 = vmatprep.subr.bf16.mxu0 0
        %2996 = vmatpush1.bf16.xpose.msra.mxu0 %v2347
        %2997 = vmatprep.subr.bf16.mxu0 0
        %2998 = vmatpush2.bf16.xpose.msra.mxu0 0
        %2999 = vmatprep.subr.bf16.mxu0 0
        %3000 = vmatpush2.bf16.xpose.msra.mxu0 0
        %3001 = vmatprep.subr.bf16.mxu0 0
        %3002 = vmatpush2.bf16.xpose.msra.mxu0 0
        %3003 = vmatprep.subr.bf16.mxu0 0
        %3004 = vmatpush2.bf16.xpose.msra.mxu0 0
        %3005 = vmatprep.subr.bf16.mxu0 0
        %3006 = vmatpush2.bf16.xpose.msra.mxu0 0
        %3007 = vmatprep.subr.bf16.mxu0 0
        %3008 = vmatpush2.bf16.xpose.msra.mxu0 0
        %3009 = vmatprep.subr.bf16.mxu0 0
        %3010 = vmatpush2.bf16.xpose.msra.mxu0 0
        %3011 = vmatprep.subr.bf16.mxu0 0
        %3012 = vmatpush2.bf16.xpose.msra.mxu0 0
        %3013 = vmatprep.mubr.bf16.mxu0 0
        %3014 = vmatmul.mubr.bf16.gmra.mxu0 %v2171
        %v3015 = vpop.f32.mrf.mxu0
        %v3016 = vadd.f32 %v2364, %v3015
        %v3017 = vpop.f32.mrf.mxu0
        %v3018 = vpop.f32.mrf.mxu0
        %v3019 = vadd.f32 %v2365, %v3018
        %v3020 = vpop.f32.mrf.mxu0
        %3021 = vdwg.mxu0
        %vm3022 = vcmask 130048
        %v3023 = vsel %vm3022, %v2401, -inf
        %3024 = vmax.xlane.f32.xlu0 %v3023
        %v3025 = vpop.xlane.xlu0 %3024
        %v3026 = vsel %vm3022, %v2404, -inf
        %3027 = vmax.xlane.f32.xlu0 %v3026
        %v3028 = vpop.xlane.xlu0 %3027
        %v3029 = vsel %vm3022, %v2442, -inf
        %3030 = vmax.xlane.f32.xlu0 %v3029
        %v3031 = vpop.xlane.xlu0 %3030
        %v3032 = vsel %vm3022, %v2445, -inf
        %3033 = vmax.xlane.f32.xlu0 %v3032
        %v3034 = vpop.xlane.xlu0 %3033
        %v3035 = vsel %vm3022, %v2483, -inf
        %3036 = vmax.xlane.f32.xlu0 %v3035
        %v3037 = vpop.xlane.xlu0 %3036
        %v3038 = vsel %vm3022, %v2486, -inf
        %3039 = vmax.xlane.f32.xlu0 %v3038
        %v3040 = vpop.xlane.xlu0 %3039
        %v3041 = vsel %vm3022, %v2524, -inf
        %3042 = vmax.xlane.f32.xlu0 %v3041
        %v3043 = vpop.xlane.xlu0 %3042
        %v3044 = vsel %vm3022, %v2527, -inf
        %3045 = vmax.xlane.f32.xlu0 %v3044
        %v3046 = vpop.xlane.xlu0 %3045
        %v3047 = vsel %vm3022, %v2565, -inf
        %3048 = vmax.xlane.f32.xlu0 %v3047
        %v3049 = vpop.xlane.xlu0 %3048
        %v3050 = vsel %vm3022, %v2568, -inf
        %3051 = vmax.xlane.f32.xlu0 %v3050
        %v3052 = vpop.xlane.xlu0 %3051
        %v3053 = vsel %vm3022, %v2606, -inf
        %3054 = vmax.xlane.f32.xlu0 %v3053
        %v3055 = vpop.xlane.xlu0 %3054
        %v3056 = vsel %vm3022, %v2609, -inf
        %3057 = vmax.xlane.f32.xlu0 %v3056
        %v3058 = vpop.xlane.xlu0 %3057
        %v3059 = vsel %vm3022, %v2647, -inf
        %3060 = vmax.xlane.f32.xlu0 %v3059
        %v3061 = vpop.xlane.xlu0 %3060
        %v3062 = vsel %vm3022, %v2650, -inf
        %3063 = vmax.xlane.f32.xlu0 %v3062
        %v3064 = vpop.xlane.xlu0 %3063
        %v3065 = vsel %vm3022, %v2688, -inf
        %3066 = vmax.xlane.f32.xlu0 %v3065
        %v3067 = vpop.xlane.xlu0 %3066
        %v3068 = vsel %vm3022, %v2691, -inf
        %3069 = vmax.xlane.f32.xlu0 %v3068
        %v3070 = vpop.xlane.xlu0 %3069
        %v3071 = vsel %vm3022, %v2729, -inf
        %3072 = vmax.xlane.f32.xlu0 %v3071
        %v3073 = vpop.xlane.xlu0 %3072
        %v3074 = vsel %vm3022, %v2732, -inf
        %3075 = vmax.xlane.f32.xlu0 %v3074
        %v3076 = vpop.xlane.xlu0 %3075
        %v3077 = vsel %vm3022, %v2770, -inf
        %3078 = vmax.xlane.f32.xlu0 %v3077
        %v3079 = vpop.xlane.xlu0 %3078
        %v3080 = vsel %vm3022, %v2773, -inf
        %3081 = vmax.xlane.f32.xlu0 %v3080
        %v3082 = vpop.xlane.xlu0 %3081
        %v3083 = vsel %vm3022, %v2811, -inf
        %3084 = vmax.xlane.f32.xlu0 %v3083
        %v3085 = vpop.xlane.xlu0 %3084
        %v3086 = vsel %vm3022, %v2814, -inf
        %3087 = vmax.xlane.f32.xlu0 %v3086
        %v3088 = vpop.xlane.xlu0 %3087
        %v3089 = vsel %vm3022, %v2852, -inf
        %3090 = vmax.xlane.f32.xlu0 %v3089
        %v3091 = vpop.xlane.xlu0 %3090
        %v3092 = vsel %vm3022, %v2855, -inf
        %3093 = vmax.xlane.f32.xlu0 %v3092
        %v3094 = vpop.xlane.xlu0 %3093
        %v3095 = vsel %vm3022, %v2893, -inf
        %3096 = vmax.xlane.f32.xlu0 %v3095
        %v3097 = vpop.xlane.xlu0 %3096
        %v3098 = vsel %vm3022, %v2896, -inf
        %3099 = vmax.xlane.f32.xlu0 %v3098
        %v3100 = vpop.xlane.xlu0 %3099
        %v3101 = vsel %vm3022, %v2934, -inf
        %3102 = vmax.xlane.f32.xlu0 %v3101
        %v3103 = vpop.xlane.xlu0 %3102
        %v3104 = vsel %vm3022, %v2937, -inf
        %3105 = vmax.xlane.f32.xlu0 %v3104
        %v3106 = vpop.xlane.xlu0 %3105
        %v3107 = vsel %vm3022, %v2975, -inf
        %3108 = vmax.xlane.f32.xlu0 %v3107
        %v3109 = vpop.xlane.xlu0 %3108
        %v3110 = vsel %vm3022, %v2978, -inf
        %3111 = vmax.xlane.f32.xlu0 %v3110
        %v3112 = vpop.xlane.xlu0 %3111
        %v3113 = vsel %vm3022, %v3016, -inf
        %3114 = vmax.xlane.f32.xlu0 %v3113
        %v3115 = vpop.xlane.xlu0 %3114
        %v3116 = vsel %vm3022, %v3019, -inf
        %3117 = vmax.xlane.f32.xlu0 %v3116
        %v3118 = vpop.xlane.xlu0 %3117
        %v3119 = vsub.f32 %v2401, %v3025
        %v3120 = vsub.f32 %v2404, %v3028
        %v3121 = vsub.f32 %v2442, %v3031
        %v3122 = vsub.f32 %v2445, %v3034
        %v3123 = vsub.f32 %v2483, %v3037
        %v3124 = vsub.f32 %v2486, %v3040
        %v3125 = vsub.f32 %v2524, %v3043
        %v3126 = vsub.f32 %v2527, %v3046
        %v3127 = vsub.f32 %v2565, %v3049
        %v3128 = vsub.f32 %v2568, %v3052
        %v3129 = vsub.f32 %v2606, %v3055
        %v3130 = vsub.f32 %v2609, %v3058
        %v3131 = vsub.f32 %v2647, %v3061
        %v3132 = vsub.f32 %v2650, %v3064
        %v3133 = vsub.f32 %v2688, %v3067
        %v3134 = vsub.f32 %v2691, %v3070
        %v3135 = vsub.f32 %v2729, %v3073
        %v3136 = vsub.f32 %v2732, %v3076
        %v3137 = vsub.f32 %v2770, %v3079
        %v3138 = vsub.f32 %v2773, %v3082
        %v3139 = vsub.f32 %v2811, %v3085
        %v3140 = vsub.f32 %v2814, %v3088
        %v3141 = vsub.f32 %v2852, %v3091
        %v3142 = vsub.f32 %v2855, %v3094
        %v3143 = vsub.f32 %v2893, %v3097
        %v3144 = vsub.f32 %v2896, %v3100
        %v3145 = vsub.f32 %v2934, %v3103
        %v3146 = vsub.f32 %v2937, %v3106
        %v3147 = vsub.f32 %v2975, %v3109
        %v3148 = vsub.f32 %v2978, %v3112
        %v3149 = vsub.f32 %v3016, %v3115
        %v3150 = vsub.f32 %v3019, %v3118
        %v3151 = vmul.f32 %v3119, 1.442695
        %v3152 = vpow.pop %v3151
        %v3153 = vmul.f32 %v3120, 1.442695
        %v3154 = vpow.pop %v3153
        %v3155 = vmul.f32 %v3121, 1.442695
        %v3156 = vpow.pop %v3155
        %v3157 = vmul.f32 %v3122, 1.442695
        %v3158 = vpow.pop %v3157
        %v3159 = vmul.f32 %v3123, 1.442695
        %v3160 = vpow.pop %v3159
        %v3161 = vmul.f32 %v3124, 1.442695
        %v3162 = vpow.pop %v3161
        %v3163 = vmul.f32 %v3125, 1.442695
        %v3164 = vpow.pop %v3163
        %v3165 = vmul.f32 %v3126, 1.442695
        %v3166 = vpow.pop %v3165
        %v3167 = vmul.f32 %v3127, 1.442695
        %v3168 = vpow.pop %v3167
        %v3169 = vmul.f32 %v3128, 1.442695
        %v3170 = vpow.pop %v3169
        %v3171 = vmul.f32 %v3129, 1.442695
        %v3172 = vpow.pop %v3171
        %v3173 = vmul.f32 %v3130, 1.442695
        %v3174 = vpow.pop %v3173
        %v3175 = vmul.f32 %v3131, 1.442695
        %v3176 = vpow.pop %v3175
        %v3177 = vmul.f32 %v3132, 1.442695
        %v3178 = vpow.pop %v3177
        %v3179 = vmul.f32 %v3133, 1.442695
        %v3180 = vpow.pop %v3179
        %v3181 = vmul.f32 %v3134, 1.442695
        %v3182 = vpow.pop %v3181
        %v3183 = vmul.f32 %v3135, 1.442695
        %v3184 = vpow.pop %v3183
        %v3185 = vmul.f32 %v3136, 1.442695
        %v3186 = vpow.pop %v3185
        %v3187 = vmul.f32 %v3137, 1.442695
        %v3188 = vpow.pop %v3187
        %v3189 = vmul.f32 %v3138, 1.442695
        %v3190 = vpow.pop %v3189
        %v3191 = vmul.f32 %v3139, 1.442695
        %v3192 = vpow.pop %v3191
        %v3193 = vmul.f32 %v3140, 1.442695
        %v3194 = vpow.pop %v3193
        %v3195 = vmul.f32 %v3141, 1.442695
        %v3196 = vpow.pop %v3195
        %v3197 = vmul.f32 %v3142, 1.442695
        %v3198 = vpow.pop %v3197
        %v3199 = vmul.f32 %v3143, 1.442695
        %v3200 = vpow.pop %v3199
        %v3201 = vmul.f32 %v3144, 1.442695
        %v3202 = vpow.pop %v3201
        %v3203 = vmul.f32 %v3145, 1.442695
        %v3204 = vpow.pop %v3203
        %v3205 = vmul.f32 %v3146, 1.442695
        %v3206 = vpow.pop %v3205
        %v3207 = vmul.f32 %v3147, 1.442695
        %v3208 = vpow.pop %v3207
        %v3209 = vmul.f32 %v3148, 1.442695
        %v3210 = vpow.pop %v3209
        %v3211 = vmul.f32 %v3149, 1.442695
        %v3212 = vpow.pop %v3211
        %v3213 = vmul.f32 %v3150, 1.442695
        %v3214 = vpow.pop %v3213
        %v3215 = vsel %vm3022, %v3152, 0.0
        %3216 = vadd.xlane.f32.xlu0 %v3215
        %v3217 = vpop.xlane.xlu0 %3216
        %v3218 = vsel %vm3022, %v3154, 0.0
        %3219 = vadd.xlane.f32.xlu0 %v3218
        %v3220 = vpop.xlane.xlu0 %3219
        %v3221 = vsel %vm3022, %v3156, 0.0
        %3222 = vadd.xlane.f32.xlu0 %v3221
        %v3223 = vpop.xlane.xlu0 %3222
        %v3224 = vsel %vm3022, %v3158, 0.0
        %3225 = vadd.xlane.f32.xlu0 %v3224
        %v3226 = vpop.xlane.xlu0 %3225
        %v3227 = vsel %vm3022, %v3160, 0.0
        %3228 = vadd.xlane.f32.xlu0 %v3227
        %v3229 = vpop.xlane.xlu0 %3228
        %v3230 = vsel %vm3022, %v3162, 0.0
        %3231 = vadd.xlane.f32.xlu0 %v3230
        %v3232 = vpop.xlane.xlu0 %3231
        %v3233 = vsel %vm3022, %v3164, 0.0
        %3234 = vadd.xlane.f32.xlu0 %v3233
        %v3235 = vpop.xlane.xlu0 %3234
        %v3236 = vsel %vm3022, %v3166, 0.0
        %3237 = vadd.xlane.f32.xlu0 %v3236
        %v3238 = vpop.xlane.xlu0 %3237
        %v3239 = vsel %vm3022, %v3168, 0.0
        %3240 = vadd.xlane.f32.xlu0 %v3239
        %v3241 = vpop.xlane.xlu0 %3240
        %v3242 = vsel %vm3022, %v3170, 0.0
        %3243 = vadd.xlane.f32.xlu0 %v3242
        %v3244 = vpop.xlane.xlu0 %3243
        %v3245 = vsel %vm3022, %v3172, 0.0
        %3246 = vadd.xlane.f32.xlu0 %v3245
        %v3247 = vpop.xlane.xlu0 %3246
        %v3248 = vsel %vm3022, %v3174, 0.0
        %3249 = vadd.xlane.f32.xlu0 %v3248
        %v3250 = vpop.xlane.xlu0 %3249
        %v3251 = vsel %vm3022, %v3176, 0.0
        %3252 = vadd.xlane.f32.xlu0 %v3251
        %v3253 = vpop.xlane.xlu0 %3252
        %v3254 = vsel %vm3022, %v3178, 0.0
        %3255 = vadd.xlane.f32.xlu0 %v3254
        %v3256 = vpop.xlane.xlu0 %3255
        %v3257 = vsel %vm3022, %v3180, 0.0
        %3258 = vadd.xlane.f32.xlu0 %v3257
        %v3259 = vpop.xlane.xlu0 %3258
        %v3260 = vsel %vm3022, %v3182, 0.0
        %3261 = vadd.xlane.f32.xlu0 %v3260
        %v3262 = vpop.xlane.xlu0 %3261
        %v3263 = vsel %vm3022, %v3184, 0.0
        %3264 = vadd.xlane.f32.xlu0 %v3263
        %v3265 = vpop.xlane.xlu0 %3264
        %v3266 = vsel %vm3022, %v3186, 0.0
        %3267 = vadd.xlane.f32.xlu0 %v3266
        %v3268 = vpop.xlane.xlu0 %3267
        %v3269 = vsel %vm3022, %v3188, 0.0
        %3270 = vadd.xlane.f32.xlu0 %v3269
        %v3271 = vpop.xlane.xlu0 %3270
        %v3272 = vsel %vm3022, %v3190, 0.0
        %3273 = vadd.xlane.f32.xlu0 %v3272
        %v3274 = vpop.xlane.xlu0 %3273
        %v3275 = vsel %vm3022, %v3192, 0.0
        %3276 = vadd.xlane.f32.xlu0 %v3275
        %v3277 = vpop.xlane.xlu0 %3276
        %v3278 = vsel %vm3022, %v3194, 0.0
        %3279 = vadd.xlane.f32.xlu0 %v3278
        %v3280 = vpop.xlane.xlu0 %3279
        %v3281 = vsel %vm3022, %v3196, 0.0
        %3282 = vadd.xlane.f32.xlu0 %v3281
        %v3283 = vpop.xlane.xlu0 %3282
        %v3284 = vsel %vm3022, %v3198, 0.0
        %3285 = vadd.xlane.f32.xlu0 %v3284
        %v3286 = vpop.xlane.xlu0 %3285
        %v3287 = vsel %vm3022, %v3200, 0.0
        %3288 = vadd.xlane.f32.xlu0 %v3287
        %v3289 = vpop.xlane.xlu0 %3288
        %v3290 = vsel %vm3022, %v3202, 0.0
        %3291 = vadd.xlane.f32.xlu0 %v3290
        %v3292 = vpop.xlane.xlu0 %3291
        %v3293 = vsel %vm3022, %v3204, 0.0
        %3294 = vadd.xlane.f32.xlu0 %v3293
        %v3295 = vpop.xlane.xlu0 %3294
        %v3296 = vsel %vm3022, %v3206, 0.0
        %3297 = vadd.xlane.f32.xlu0 %v3296
        %v3298 = vpop.xlane.xlu0 %3297
        %v3299 = vsel %vm3022, %v3208, 0.0
        %3300 = vadd.xlane.f32.xlu0 %v3299
        %v3301 = vpop.xlane.xlu0 %3300
        %v3302 = vsel %vm3022, %v3210, 0.0
        %3303 = vadd.xlane.f32.xlu0 %v3302
        %v3304 = vpop.xlane.xlu0 %3303
        %v3305 = vsel %vm3022, %v3212, 0.0
        %3306 = vadd.xlane.f32.xlu0 %v3305
        %v3307 = vpop.xlane.xlu0 %3306
        %v3308 = vsel %vm3022, %v3214, 0.0
        %3309 = vadd.xlane.f32.xlu0 %v3308
        %v3310 = vpop.xlane.xlu0 %3309
        %v3311 = vrcp.pop %v3217
        %v3312 = vrcp.pop %v3220
        %v3313 = vrcp.pop %v3223
        %v3314 = vrcp.pop %v3226
        %v3315 = vrcp.pop %v3229
        %v3316 = vrcp.pop %v3232
        %v3317 = vrcp.pop %v3235
        %v3318 = vrcp.pop %v3238
        %v3319 = vrcp.pop %v3241
        %v3320 = vrcp.pop %v3244
        %v3321 = vrcp.pop %v3247
        %v3322 = vrcp.pop %v3250
        %v3323 = vrcp.pop %v3253
        %v3324 = vrcp.pop %v3256
        %v3325 = vrcp.pop %v3259
        %v3326 = vrcp.pop %v3262
        %v3327 = vrcp.pop %v3265
        %v3328 = vrcp.pop %v3268
        %v3329 = vrcp.pop %v3271
        %v3330 = vrcp.pop %v3274
        %v3331 = vrcp.pop %v3277
        %v3332 = vrcp.pop %v3280
        %v3333 = vrcp.pop %v3283
        %v3334 = vrcp.pop %v3286
        %v3335 = vrcp.pop %v3289
        %v3336 = vrcp.pop %v3292
        %v3337 = vrcp.pop %v3295
        %v3338 = vrcp.pop %v3298
        %v3339 = vrcp.pop %v3301
        %v3340 = vrcp.pop %v3304
        %v3341 = vrcp.pop %v3307
        %v3342 = vrcp.pop %v3310
        %v3343 = vmul.f32 %v3152, %v3311
        %v3344 = vmul.f32 %v3154, %v3312
        %v3345 = vmul.f32 %v3156, %v3313
        %v3346 = vmul.f32 %v3158, %v3314
        %v3347 = vmul.f32 %v3160, %v3315
        %v3348 = vmul.f32 %v3162, %v3316
        %v3349 = vmul.f32 %v3164, %v3317
        %v3350 = vmul.f32 %v3166, %v3318
        %v3351 = vmul.f32 %v3168, %v3319
        %v3352 = vmul.f32 %v3170, %v3320
        %v3353 = vmul.f32 %v3172, %v3321
        %v3354 = vmul.f32 %v3174, %v3322
        %v3355 = vmul.f32 %v3176, %v3323
        %v3356 = vmul.f32 %v3178, %v3324
        %v3357 = vmul.f32 %v3180, %v3325
        %v3358 = vmul.f32 %v3182, %v3326
        %v3359 = vmul.f32 %v3184, %v3327
        %v3360 = vmul.f32 %v3186, %v3328
        %v3361 = vmul.f32 %v3188, %v3329
        %v3362 = vmul.f32 %v3190, %v3330
        %v3363 = vmul.f32 %v3192, %v3331
        %v3364 = vmul.f32 %v3194, %v3332
        %v3365 = vmul.f32 %v3196, %v3333
        %v3366 = vmul.f32 %v3198, %v3334
        %v3367 = vmul.f32 %v3200, %v3335
        %v3368 = vmul.f32 %v3202, %v3336
        %v3369 = vmul.f32 %v3204, %v3337
        %v3370 = vmul.f32 %v3206, %v3338
        %v3371 = vmul.f32 %v3208, %v3339
        %v3372 = vmul.f32 %v3210, %v3340
        %v3373 = vmul.f32 %v3212, %v3341
        %v3374 = vmul.f32 %v3214, %v3342
        %v3375 = vpack.c.bf16 %v3344, %v3343
        %v3376 = vpack.c.bf16 %v3346, %v3345
        %v3377 = vpack.c.bf16 %v3348, %v3347
        %v3378 = vpack.c.bf16 %v3350, %v3349
        %v3379 = vpack.c.bf16 %v3352, %v3351
        %v3380 = vpack.c.bf16 %v3354, %v3353
        %v3381 = vpack.c.bf16 %v3356, %v3355
        %v3382 = vpack.c.bf16 %v3358, %v3357
        %v3383 = vpack.c.bf16 %v3360, %v3359
        %v3384 = vpack.c.bf16 %v3362, %v3361
        %v3385 = vpack.c.bf16 %v3364, %v3363
        %v3386 = vpack.c.bf16 %v3366, %v3365
        %v3387 = vpack.c.bf16 %v3368, %v3367
        %v3388 = vpack.c.bf16 %v3370, %v3369
        %v3389 = vpack.c.bf16 %v3372, %v3371
        %v3390 = vpack.c.bf16 %v3374, %v3373
        %v3392 = vsel %vm3022, %v3375, 0
        %3394 = vmatprep.subr.bf16.mxu0 0
        %3395 = vmatpush1.bf16.msra.mxu0 0
        %3396 = vmatprep.subr.bf16.mxu0 0
        %3397 = vmatpush1.bf16.msra.mxu0 0
        %3398 = vmatprep.subr.bf16.mxu0 0
        %3399 = vmatpush1.bf16.msra.mxu0 0
        %3400 = vmatprep.subr.bf16.mxu0 0
        %3401 = vmatpush1.bf16.msra.mxu0 0
        %3402 = vmatprep.subr.bf16.mxu0 0
        %3403 = vmatpush1.bf16.msra.mxu0 0
        %3404 = vmatprep.subr.bf16.mxu0 0
        %3405 = vmatpush1.bf16.msra.mxu0 0
        %3406 = vmatprep.subr.bf16.mxu0 0
        %3407 = vmatpush1.bf16.msra.mxu0 0
        %3408 = vmatprep.subr.bf16.mxu0 0
        %3409 = vmatpush1.bf16.msra.mxu0 %v2348
        %3410 = vmatprep.subr.bf16.mxu0 0
        %3411 = vmatpush2.bf16.msra.mxu0 0
        %3412 = vmatprep.subr.bf16.mxu0 0
        %3413 = vmatpush2.bf16.msra.mxu0 0
        %3414 = vmatprep.subr.bf16.mxu0 0
        %3415 = vmatpush2.bf16.msra.mxu0 0
        %3416 = vmatprep.subr.bf16.mxu0 0
        %3417 = vmatpush2.bf16.msra.mxu0 0
        %3418 = vmatprep.subr.bf16.mxu0 0
        %3419 = vmatpush2.bf16.msra.mxu0 0
        %3420 = vmatprep.subr.bf16.mxu0 0
        %3421 = vmatpush2.bf16.msra.mxu0 0
        %3422 = vmatprep.subr.bf16.mxu0 0
        %3423 = vmatpush2.bf16.msra.mxu0 0
        %3424 = vmatprep.subr.bf16.mxu0 0
        %3425 = vmatpush2.bf16.msra.mxu0 0
        %3426 = vmatprep.mubr.bf16.mxu0 0
        %3427 = vmatmul.mubr.bf16.gmra.mxu0 %v3392
        %v3428 = vpop.f32.mrf.mxu0
        %v3429 = vadd.f32 0.0, %v3428
        %v3430 = vpop.f32.mrf.mxu0
        %v3431 = vpop.f32.mrf.mxu0
        %v3432 = vadd.f32 0.0, %v3431
        %v3433 = vpop.f32.mrf.mxu0
        %3434 = vdwg.mxu0
        %v3436 = vsel %vm3022, %v3376, 0
        %3438 = vmatprep.subr.bf16.mxu0 0
        %3439 = vmatpush1.bf16.msra.mxu0 0
        %3440 = vmatprep.subr.bf16.mxu0 0
        %3441 = vmatpush1.bf16.msra.mxu0 0
        %3442 = vmatprep.subr.bf16.mxu0 0
        %3443 = vmatpush1.bf16.msra.mxu0 0
        %3444 = vmatprep.subr.bf16.mxu0 0
        %3445 = vmatpush1.bf16.msra.mxu0 0
        %3446 = vmatprep.subr.bf16.mxu0 0
        %3447 = vmatpush1.bf16.msra.mxu0 0
        %3448 = vmatprep.subr.bf16.mxu0 0
        %3449 = vmatpush1.bf16.msra.mxu0 0
        %3450 = vmatprep.subr.bf16.mxu0 0
        %3451 = vmatpush1.bf16.msra.mxu0 0
        %3452 = vmatprep.subr.bf16.mxu0 0
        %3453 = vmatpush1.bf16.msra.mxu0 %v2349
        %3454 = vmatprep.subr.bf16.mxu0 0
        %3455 = vmatpush2.bf16.msra.mxu0 0
        %3456 = vmatprep.subr.bf16.mxu0 0
        %3457 = vmatpush2.bf16.msra.mxu0 0
        %3458 = vmatprep.subr.bf16.mxu0 0
        %3459 = vmatpush2.bf16.msra.mxu0 0
        %3460 = vmatprep.subr.bf16.mxu0 0
        %3461 = vmatpush2.bf16.msra.mxu0 0
        %3462 = vmatprep.subr.bf16.mxu0 0
        %3463 = vmatpush2.bf16.msra.mxu0 0
        %3464 = vmatprep.subr.bf16.mxu0 0
        %3465 = vmatpush2.bf16.msra.mxu0 0
        %3466 = vmatprep.subr.bf16.mxu0 0
        %3467 = vmatpush2.bf16.msra.mxu0 0
        %3468 = vmatprep.subr.bf16.mxu0 0
        %3469 = vmatpush2.bf16.msra.mxu0 0
        %3470 = vmatprep.mubr.bf16.mxu0 0
        %3471 = vmatmul.mubr.bf16.gmra.mxu0 %v3436
        %v3472 = vpop.f32.mrf.mxu0
        %v3473 = vadd.f32 0.0, %v3472
        %v3474 = vpop.f32.mrf.mxu0
        %v3475 = vpop.f32.mrf.mxu0
        %v3476 = vadd.f32 0.0, %v3475
        %v3477 = vpop.f32.mrf.mxu0
        %3478 = vdwg.mxu0
        %v3480 = vsel %vm3022, %v3377, 0
        %3482 = vmatprep.subr.bf16.mxu0 0
        %3483 = vmatpush1.bf16.msra.mxu0 0
        %3484 = vmatprep.subr.bf16.mxu0 0
        %3485 = vmatpush1.bf16.msra.mxu0 0
        %3486 = vmatprep.subr.bf16.mxu0 0
        %3487 = vmatpush1.bf16.msra.mxu0 0
        %3488 = vmatprep.subr.bf16.mxu0 0
        %3489 = vmatpush1.bf16.msra.mxu0 0
        %3490 = vmatprep.subr.bf16.mxu0 0
        %3491 = vmatpush1.bf16.msra.mxu0 0
        %3492 = vmatprep.subr.bf16.mxu0 0
        %3493 = vmatpush1.bf16.msra.mxu0 0
        %3494 = vmatprep.subr.bf16.mxu0 0
        %3495 = vmatpush1.bf16.msra.mxu0 0
        %3496 = vmatprep.subr.bf16.mxu0 0
        %3497 = vmatpush1.bf16.msra.mxu0 %v2350
        %3498 = vmatprep.subr.bf16.mxu0 0
        %3499 = vmatpush2.bf16.msra.mxu0 0
        %3500 = vmatprep.subr.bf16.mxu0 0
        %3501 = vmatpush2.bf16.msra.mxu0 0
        %3502 = vmatprep.subr.bf16.mxu0 0
        %3503 = vmatpush2.bf16.msra.mxu0 0
        %3504 = vmatprep.subr.bf16.mxu0 0
        %3505 = vmatpush2.bf16.msra.mxu0 0
        %3506 = vmatprep.subr.bf16.mxu0 0
        %3507 = vmatpush2.bf16.msra.mxu0 0
        %3508 = vmatprep.subr.bf16.mxu0 0
        %3509 = vmatpush2.bf16.msra.mxu0 0
        %3510 = vmatprep.subr.bf16.mxu0 0
        %3511 = vmatpush2.bf16.msra.mxu0 0
        %3512 = vmatprep.subr.bf16.mxu0 0
        %3513 = vmatpush2.bf16.msra.mxu0 0
        %3514 = vmatprep.mubr.bf16.mxu0 0
        %3515 = vmatmul.mubr.bf16.gmra.mxu0 %v3480
        %v3516 = vpop.f32.mrf.mxu0
        %v3517 = vadd.f32 0.0, %v3516
        %v3518 = vpop.f32.mrf.mxu0
        %v3519 = vpop.f32.mrf.mxu0
        %v3520 = vadd.f32 0.0, %v3519
        %v3521 = vpop.f32.mrf.mxu0
        %3522 = vdwg.mxu0
        %v3524 = vsel %vm3022, %v3378, 0
        %3526 = vmatprep.subr.bf16.mxu0 0
        %3527 = vmatpush1.bf16.msra.mxu0 0
        %3528 = vmatprep.subr.bf16.mxu0 0
        %3529 = vmatpush1.bf16.msra.mxu0 0
        %3530 = vmatprep.subr.bf16.mxu0 0
        %3531 = vmatpush1.bf16.msra.mxu0 0
        %3532 = vmatprep.subr.bf16.mxu0 0
        %3533 = vmatpush1.bf16.msra.mxu0 0
        %3534 = vmatprep.subr.bf16.mxu0 0
        %3535 = vmatpush1.bf16.msra.mxu0 0
        %3536 = vmatprep.subr.bf16.mxu0 0
        %3537 = vmatpush1.bf16.msra.mxu0 0
        %3538 = vmatprep.subr.bf16.mxu0 0
        %3539 = vmatpush1.bf16.msra.mxu0 0
        %3540 = vmatprep.subr.bf16.mxu0 0
        %3541 = vmatpush1.bf16.msra.mxu0 %v2351
        %3542 = vmatprep.subr.bf16.mxu0 0
        %3543 = vmatpush2.bf16.msra.mxu0 0
        %3544 = vmatprep.subr.bf16.mxu0 0
        %3545 = vmatpush2.bf16.msra.mxu0 0
        %3546 = vmatprep.subr.bf16.mxu0 0
        %3547 = vmatpush2.bf16.msra.mxu0 0
        %3548 = vmatprep.subr.bf16.mxu0 0
        %3549 = vmatpush2.bf16.msra.mxu0 0
        %3550 = vmatprep.subr.bf16.mxu0 0
        %3551 = vmatpush2.bf16.msra.mxu0 0
        %3552 = vmatprep.subr.bf16.mxu0 0
        %3553 = vmatpush2.bf16.msra.mxu0 0
        %3554 = vmatprep.subr.bf16.mxu0 0
        %3555 = vmatpush2.bf16.msra.mxu0 0
        %3556 = vmatprep.subr.bf16.mxu0 0
        %3557 = vmatpush2.bf16.msra.mxu0 0
        %3558 = vmatprep.mubr.bf16.mxu0 0
        %3559 = vmatmul.mubr.bf16.gmra.mxu0 %v3524
        %v3560 = vpop.f32.mrf.mxu0
        %v3561 = vadd.f32 0.0, %v3560
        %v3562 = vpop.f32.mrf.mxu0
        %v3563 = vpop.f32.mrf.mxu0
        %v3564 = vadd.f32 0.0, %v3563
        %v3565 = vpop.f32.mrf.mxu0
        %3566 = vdwg.mxu0
        %v3568 = vsel %vm3022, %v3379, 0
        %3570 = vmatprep.subr.bf16.mxu0 0
        %3571 = vmatpush1.bf16.msra.mxu0 0
        %3572 = vmatprep.subr.bf16.mxu0 0
        %3573 = vmatpush1.bf16.msra.mxu0 0
        %3574 = vmatprep.subr.bf16.mxu0 0
        %3575 = vmatpush1.bf16.msra.mxu0 0
        %3576 = vmatprep.subr.bf16.mxu0 0
        %3577 = vmatpush1.bf16.msra.mxu0 0
        %3578 = vmatprep.subr.bf16.mxu0 0
        %3579 = vmatpush1.bf16.msra.mxu0 0
        %3580 = vmatprep.subr.bf16.mxu0 0
        %3581 = vmatpush1.bf16.msra.mxu0 0
        %3582 = vmatprep.subr.bf16.mxu0 0
        %3583 = vmatpush1.bf16.msra.mxu0 0
        %3584 = vmatprep.subr.bf16.mxu0 0
        %3585 = vmatpush1.bf16.msra.mxu0 %v2352
        %3586 = vmatprep.subr.bf16.mxu0 0
        %3587 = vmatpush2.bf16.msra.mxu0 0
        %3588 = vmatprep.subr.bf16.mxu0 0
        %3589 = vmatpush2.bf16.msra.mxu0 0
        %3590 = vmatprep.subr.bf16.mxu0 0
        %3591 = vmatpush2.bf16.msra.mxu0 0
        %3592 = vmatprep.subr.bf16.mxu0 0
        %3593 = vmatpush2.bf16.msra.mxu0 0
        %3594 = vmatprep.subr.bf16.mxu0 0
        %3595 = vmatpush2.bf16.msra.mxu0 0
        %3596 = vmatprep.subr.bf16.mxu0 0
        %3597 = vmatpush2.bf16.msra.mxu0 0
        %3598 = vmatprep.subr.bf16.mxu0 0
        %3599 = vmatpush2.bf16.msra.mxu0 0
        %3600 = vmatprep.subr.bf16.mxu0 0
        %3601 = vmatpush2.bf16.msra.mxu0 0
        %3602 = vmatprep.mubr.bf16.mxu0 0
        %3603 = vmatmul.mubr.bf16.gmra.mxu0 %v3568
        %v3604 = vpop.f32.mrf.mxu0
        %v3605 = vadd.f32 0.0, %v3604
        %v3606 = vpop.f32.mrf.mxu0
        %v3607 = vpop.f32.mrf.mxu0
        %v3608 = vadd.f32 0.0, %v3607
        %v3609 = vpop.f32.mrf.mxu0
        %3610 = vdwg.mxu0
        %v3612 = vsel %vm3022, %v3380, 0
        %3614 = vmatprep.subr.bf16.mxu0 0
        %3615 = vmatpush1.bf16.msra.mxu0 0
        %3616 = vmatprep.subr.bf16.mxu0 0
        %3617 = vmatpush1.bf16.msra.mxu0 0
        %3618 = vmatprep.subr.bf16.mxu0 0
        %3619 = vmatpush1.bf16.msra.mxu0 0
        %3620 = vmatprep.subr.bf16.mxu0 0
        %3621 = vmatpush1.bf16.msra.mxu0 0
        %3622 = vmatprep.subr.bf16.mxu0 0
        %3623 = vmatpush1.bf16.msra.mxu0 0
        %3624 = vmatprep.subr.bf16.mxu0 0
        %3625 = vmatpush1.bf16.msra.mxu0 0
        %3626 = vmatprep.subr.bf16.mxu0 0
        %3627 = vmatpush1.bf16.msra.mxu0 0
        %3628 = vmatprep.subr.bf16.mxu0 0
        %3629 = vmatpush1.bf16.msra.mxu0 %v2353
        %3630 = vmatprep.subr.bf16.mxu0 0
        %3631 = vmatpush2.bf16.msra.mxu0 0
        %3632 = vmatprep.subr.bf16.mxu0 0
        %3633 = vmatpush2.bf16.msra.mxu0 0
        %3634 = vmatprep.subr.bf16.mxu0 0
        %3635 = vmatpush2.bf16.msra.mxu0 0
        %3636 = vmatprep.subr.bf16.mxu0 0
        %3637 = vmatpush2.bf16.msra.mxu0 0
        %3638 = vmatprep.subr.bf16.mxu0 0
        %3639 = vmatpush2.bf16.msra.mxu0 0
        %3640 = vmatprep.subr.bf16.mxu0 0
        %3641 = vmatpush2.bf16.msra.mxu0 0
        %3642 = vmatprep.subr.bf16.mxu0 0
        %3643 = vmatpush2.bf16.msra.mxu0 0
        %3644 = vmatprep.subr.bf16.mxu0 0
        %3645 = vmatpush2.bf16.msra.mxu0 0
        %3646 = vmatprep.mubr.bf16.mxu0 0
        %3647 = vmatmul.mubr.bf16.gmra.mxu0 %v3612
        %v3648 = vpop.f32.mrf.mxu0
        %v3649 = vadd.f32 0.0, %v3648
        %v3650 = vpop.f32.mrf.mxu0
        %v3651 = vpop.f32.mrf.mxu0
        %v3652 = vadd.f32 0.0, %v3651
        %v3653 = vpop.f32.mrf.mxu0
        %3654 = vdwg.mxu0
        %v3656 = vsel %vm3022, %v3381, 0
        %3658 = vmatprep.subr.bf16.mxu0 0
        %3659 = vmatpush1.bf16.msra.mxu0 0
        %3660 = vmatprep.subr.bf16.mxu0 0
        %3661 = vmatpush1.bf16.msra.mxu0 0
        %3662 = vmatprep.subr.bf16.mxu0 0
        %3663 = vmatpush1.bf16.msra.mxu0 0
        %3664 = vmatprep.subr.bf16.mxu0 0
        %3665 = vmatpush1.bf16.msra.mxu0 0
        %3666 = vmatprep.subr.bf16.mxu0 0
        %3667 = vmatpush1.bf16.msra.mxu0 0
        %3668 = vmatprep.subr.bf16.mxu0 0
        %3669 = vmatpush1.bf16.msra.mxu0 0
        %3670 = vmatprep.subr.bf16.mxu0 0
        %3671 = vmatpush1.bf16.msra.mxu0 0
        %3672 = vmatprep.subr.bf16.mxu0 0
        %3673 = vmatpush1.bf16.msra.mxu0 %v2354
        %3674 = vmatprep.subr.bf16.mxu0 0
        %3675 = vmatpush2.bf16.msra.mxu0 0
        %3676 = vmatprep.subr.bf16.mxu0 0
        %3677 = vmatpush2.bf16.msra.mxu0 0
        %3678 = vmatprep.subr.bf16.mxu0 0
        %3679 = vmatpush2.bf16.msra.mxu0 0
        %3680 = vmatprep.subr.bf16.mxu0 0
        %3681 = vmatpush2.bf16.msra.mxu0 0
        %3682 = vmatprep.subr.bf16.mxu0 0
        %3683 = vmatpush2.bf16.msra.mxu0 0
        %3684 = vmatprep.subr.bf16.mxu0 0
        %3685 = vmatpush2.bf16.msra.mxu0 0
        %3686 = vmatprep.subr.bf16.mxu0 0
        %3687 = vmatpush2.bf16.msra.mxu0 0
        %3688 = vmatprep.subr.bf16.mxu0 0
        %3689 = vmatpush2.bf16.msra.mxu0 0
        %3690 = vmatprep.mubr.bf16.mxu0 0
        %3691 = vmatmul.mubr.bf16.gmra.mxu0 %v3656
        %v3692 = vpop.f32.mrf.mxu0
        %v3693 = vadd.f32 0.0, %v3692
        %v3694 = vpop.f32.mrf.mxu0
        %v3695 = vpop.f32.mrf.mxu0
        %v3696 = vadd.f32 0.0, %v3695
        %v3697 = vpop.f32.mrf.mxu0
        %3698 = vdwg.mxu0
        %v3700 = vsel %vm3022, %v3382, 0
        %3702 = vmatprep.subr.bf16.mxu0 0
        %3703 = vmatpush1.bf16.msra.mxu0 0
        %3704 = vmatprep.subr.bf16.mxu0 0
        %3705 = vmatpush1.bf16.msra.mxu0 0
        %3706 = vmatprep.subr.bf16.mxu0 0
        %3707 = vmatpush1.bf16.msra.mxu0 0
        %3708 = vmatprep.subr.bf16.mxu0 0
        %3709 = vmatpush1.bf16.msra.mxu0 0
        %3710 = vmatprep.subr.bf16.mxu0 0
        %3711 = vmatpush1.bf16.msra.mxu0 0
        %3712 = vmatprep.subr.bf16.mxu0 0
        %3713 = vmatpush1.bf16.msra.mxu0 0
        %3714 = vmatprep.subr.bf16.mxu0 0
        %3715 = vmatpush1.bf16.msra.mxu0 0
        %3716 = vmatprep.subr.bf16.mxu0 0
        %3717 = vmatpush1.bf16.msra.mxu0 %v2355
        %3718 = vmatprep.subr.bf16.mxu0 0
        %3719 = vmatpush2.bf16.msra.mxu0 0
        %3720 = vmatprep.subr.bf16.mxu0 0
        %3721 = vmatpush2.bf16.msra.mxu0 0
        %3722 = vmatprep.subr.bf16.mxu0 0
        %3723 = vmatpush2.bf16.msra.mxu0 0
        %3724 = vmatprep.subr.bf16.mxu0 0
        %3725 = vmatpush2.bf16.msra.mxu0 0
        %3726 = vmatprep.subr.bf16.mxu0 0
        %3727 = vmatpush2.bf16.msra.mxu0 0
        %3728 = vmatprep.subr.bf16.mxu0 0
        %3729 = vmatpush2.bf16.msra.mxu0 0
        %3730 = vmatprep.subr.bf16.mxu0 0
        %3731 = vmatpush2.bf16.msra.mxu0 0
        %3732 = vmatprep.subr.bf16.mxu0 0
        %3733 = vmatpush2.bf16.msra.mxu0 0
        %3734 = vmatprep.mubr.bf16.mxu0 0
        %3735 = vmatmul.mubr.bf16.gmra.mxu0 %v3700
        %v3736 = vpop.f32.mrf.mxu0
        %v3737 = vadd.f32 0.0, %v3736
        %v3738 = vpop.f32.mrf.mxu0
        %v3739 = vpop.f32.mrf.mxu0
        %v3740 = vadd.f32 0.0, %v3739
        %v3741 = vpop.f32.mrf.mxu0
        %3742 = vdwg.mxu0
        %v3744 = vsel %vm3022, %v3383, 0
        %3746 = vmatprep.subr.bf16.mxu0 0
        %3747 = vmatpush1.bf16.msra.mxu0 0
        %3748 = vmatprep.subr.bf16.mxu0 0
        %3749 = vmatpush1.bf16.msra.mxu0 0
        %3750 = vmatprep.subr.bf16.mxu0 0
        %3751 = vmatpush1.bf16.msra.mxu0 0
        %3752 = vmatprep.subr.bf16.mxu0 0
        %3753 = vmatpush1.bf16.msra.mxu0 0
        %3754 = vmatprep.subr.bf16.mxu0 0
        %3755 = vmatpush1.bf16.msra.mxu0 0
        %3756 = vmatprep.subr.bf16.mxu0 0
        %3757 = vmatpush1.bf16.msra.mxu0 0
        %3758 = vmatprep.subr.bf16.mxu0 0
        %3759 = vmatpush1.bf16.msra.mxu0 0
        %3760 = vmatprep.subr.bf16.mxu0 0
        %3761 = vmatpush1.bf16.msra.mxu0 %v2356
        %3762 = vmatprep.subr.bf16.mxu0 0
        %3763 = vmatpush2.bf16.msra.mxu0 0
        %3764 = vmatprep.subr.bf16.mxu0 0
        %3765 = vmatpush2.bf16.msra.mxu0 0
        %3766 = vmatprep.subr.bf16.mxu0 0
        %3767 = vmatpush2.bf16.msra.mxu0 0
        %3768 = vmatprep.subr.bf16.mxu0 0
        %3769 = vmatpush2.bf16.msra.mxu0 0
        %3770 = vmatprep.subr.bf16.mxu0 0
        %3771 = vmatpush2.bf16.msra.mxu0 0
        %3772 = vmatprep.subr.bf16.mxu0 0
        %3773 = vmatpush2.bf16.msra.mxu0 0
        %3774 = vmatprep.subr.bf16.mxu0 0
        %3775 = vmatpush2.bf16.msra.mxu0 0
        %3776 = vmatprep.subr.bf16.mxu0 0
        %3777 = vmatpush2.bf16.msra.mxu0 0
        %3778 = vmatprep.mubr.bf16.mxu0 0
        %3779 = vmatmul.mubr.bf16.gmra.mxu0 %v3744
        %v3780 = vpop.f32.mrf.mxu0
        %v3781 = vadd.f32 0.0, %v3780
        %v3782 = vpop.f32.mrf.mxu0
        %v3783 = vpop.f32.mrf.mxu0
        %v3784 = vadd.f32 0.0, %v3783
        %v3785 = vpop.f32.mrf.mxu0
        %3786 = vdwg.mxu0
        %v3788 = vsel %vm3022, %v3384, 0
        %3790 = vmatprep.subr.bf16.mxu0 0
        %3791 = vmatpush1.bf16.msra.mxu0 0
        %3792 = vmatprep.subr.bf16.mxu0 0
        %3793 = vmatpush1.bf16.msra.mxu0 0
        %3794 = vmatprep.subr.bf16.mxu0 0
        %3795 = vmatpush1.bf16.msra.mxu0 0
        %3796 = vmatprep.subr.bf16.mxu0 0
        %3797 = vmatpush1.bf16.msra.mxu0 0
        %3798 = vmatprep.subr.bf16.mxu0 0
        %3799 = vmatpush1.bf16.msra.mxu0 0
        %3800 = vmatprep.subr.bf16.mxu0 0
        %3801 = vmatpush1.bf16.msra.mxu0 0
        %3802 = vmatprep.subr.bf16.mxu0 0
        %3803 = vmatpush1.bf16.msra.mxu0 0
        %3804 = vmatprep.subr.bf16.mxu0 0
        %3805 = vmatpush1.bf16.msra.mxu0 %v2357
        %3806 = vmatprep.subr.bf16.mxu0 0
        %3807 = vmatpush2.bf16.msra.mxu0 0
        %3808 = vmatprep.subr.bf16.mxu0 0
        %3809 = vmatpush2.bf16.msra.mxu0 0
        %3810 = vmatprep.subr.bf16.mxu0 0
        %3811 = vmatpush2.bf16.msra.mxu0 0
        %3812 = vmatprep.subr.bf16.mxu0 0
        %3813 = vmatpush2.bf16.msra.mxu0 0
        %3814 = vmatprep.subr.bf16.mxu0 0
        %3815 = vmatpush2.bf16.msra.mxu0 0
        %3816 = vmatprep.subr.bf16.mxu0 0
        %3817 = vmatpush2.bf16.msra.mxu0 0
        %3818 = vmatprep.subr.bf16.mxu0 0
        %3819 = vmatpush2.bf16.msra.mxu0 0
        %3820 = vmatprep.subr.bf16.mxu0 0
        %3821 = vmatpush2.bf16.msra.mxu0 0
        %3822 = vmatprep.mubr.bf16.mxu0 0
        %3823 = vmatmul.mubr.bf16.gmra.mxu0 %v3788
        %v3824 = vpop.f32.mrf.mxu0
        %v3825 = vadd.f32 0.0, %v3824
        %v3826 = vpop.f32.mrf.mxu0
        %v3827 = vpop.f32.mrf.mxu0
        %v3828 = vadd.f32 0.0, %v3827
        %v3829 = vpop.f32.mrf.mxu0
        %3830 = vdwg.mxu0
        %v3832 = vsel %vm3022, %v3385, 0
        %3834 = vmatprep.subr.bf16.mxu0 0
        %3835 = vmatpush1.bf16.msra.mxu0 0
        %3836 = vmatprep.subr.bf16.mxu0 0
        %3837 = vmatpush1.bf16.msra.mxu0 0
        %3838 = vmatprep.subr.bf16.mxu0 0
        %3839 = vmatpush1.bf16.msra.mxu0 0
        %3840 = vmatprep.subr.bf16.mxu0 0
        %3841 = vmatpush1.bf16.msra.mxu0 0
        %3842 = vmatprep.subr.bf16.mxu0 0
        %3843 = vmatpush1.bf16.msra.mxu0 0
        %3844 = vmatprep.subr.bf16.mxu0 0
        %3845 = vmatpush1.bf16.msra.mxu0 0
        %3846 = vmatprep.subr.bf16.mxu0 0
        %3847 = vmatpush1.bf16.msra.mxu0 0
        %3848 = vmatprep.subr.bf16.mxu0 0
        %3849 = vmatpush1.bf16.msra.mxu0 %v2358
        %3850 = vmatprep.subr.bf16.mxu0 0
        %3851 = vmatpush2.bf16.msra.mxu0 0
        %3852 = vmatprep.subr.bf16.mxu0 0
        %3853 = vmatpush2.bf16.msra.mxu0 0
        %3854 = vmatprep.subr.bf16.mxu0 0
        %3855 = vmatpush2.bf16.msra.mxu0 0
        %3856 = vmatprep.subr.bf16.mxu0 0
        %3857 = vmatpush2.bf16.msra.mxu0 0
        %3858 = vmatprep.subr.bf16.mxu0 0
        %3859 = vmatpush2.bf16.msra.mxu0 0
        %3860 = vmatprep.subr.bf16.mxu0 0
        %3861 = vmatpush2.bf16.msra.mxu0 0
        %3862 = vmatprep.subr.bf16.mxu0 0
        %3863 = vmatpush2.bf16.msra.mxu0 0
        %3864 = vmatprep.subr.bf16.mxu0 0
        %3865 = vmatpush2.bf16.msra.mxu0 0
        %3866 = vmatprep.mubr.bf16.mxu0 0
        %3867 = vmatmul.mubr.bf16.gmra.mxu0 %v3832
        %v3868 = vpop.f32.mrf.mxu0
        %v3869 = vadd.f32 0.0, %v3868
        %v3870 = vpop.f32.mrf.mxu0
        %v3871 = vpop.f32.mrf.mxu0
        %v3872 = vadd.f32 0.0, %v3871
        %v3873 = vpop.f32.mrf.mxu0
        %3874 = vdwg.mxu0
        %v3876 = vsel %vm3022, %v3386, 0
        %3878 = vmatprep.subr.bf16.mxu0 0
        %3879 = vmatpush1.bf16.msra.mxu0 0
        %3880 = vmatprep.subr.bf16.mxu0 0
        %3881 = vmatpush1.bf16.msra.mxu0 0
        %3882 = vmatprep.subr.bf16.mxu0 0
        %3883 = vmatpush1.bf16.msra.mxu0 0
        %3884 = vmatprep.subr.bf16.mxu0 0
        %3885 = vmatpush1.bf16.msra.mxu0 0
        %3886 = vmatprep.subr.bf16.mxu0 0
        %3887 = vmatpush1.bf16.msra.mxu0 0
        %3888 = vmatprep.subr.bf16.mxu0 0
        %3889 = vmatpush1.bf16.msra.mxu0 0
        %3890 = vmatprep.subr.bf16.mxu0 0
        %3891 = vmatpush1.bf16.msra.mxu0 0
        %3892 = vmatprep.subr.bf16.mxu0 0
        %3893 = vmatpush1.bf16.msra.mxu0 %v2359
        %3894 = vmatprep.subr.bf16.mxu0 0
        %3895 = vmatpush2.bf16.msra.mxu0 0
        %3896 = vmatprep.subr.bf16.mxu0 0
        %3897 = vmatpush2.bf16.msra.mxu0 0
        %3898 = vmatprep.subr.bf16.mxu0 0
        %3899 = vmatpush2.bf16.msra.mxu0 0
        %3900 = vmatprep.subr.bf16.mxu0 0
        %3901 = vmatpush2.bf16.msra.mxu0 0
        %3902 = vmatprep.subr.bf16.mxu0 0
        %3903 = vmatpush2.bf16.msra.mxu0 0
        %3904 = vmatprep.subr.bf16.mxu0 0
        %3905 = vmatpush2.bf16.msra.mxu0 0
        %3906 = vmatprep.subr.bf16.mxu0 0
        %3907 = vmatpush2.bf16.msra.mxu0 0
        %3908 = vmatprep.subr.bf16.mxu0 0
        %3909 = vmatpush2.bf16.msra.mxu0 0
        %3910 = vmatprep.mubr.bf16.mxu0 0
        %3911 = vmatmul.mubr.bf16.gmra.mxu0 %v3876
        %v3912 = vpop.f32.mrf.mxu0
        %v3913 = vadd.f32 0.0, %v3912
        %v3914 = vpop.f32.mrf.mxu0
        %v3915 = vpop.f32.mrf.mxu0
        %v3916 = vadd.f32 0.0, %v3915
        %v3917 = vpop.f32.mrf.mxu0
        %3918 = vdwg.mxu0
        %v3920 = vsel %vm3022, %v3387, 0
        %3922 = vmatprep.subr.bf16.mxu0 0
        %3923 = vmatpush1.bf16.msra.mxu0 0
        %3924 = vmatprep.subr.bf16.mxu0 0
        %3925 = vmatpush1.bf16.msra.mxu0 0
        %3926 = vmatprep.subr.bf16.mxu0 0
        %3927 = vmatpush1.bf16.msra.mxu0 0
        %3928 = vmatprep.subr.bf16.mxu0 0
        %3929 = vmatpush1.bf16.msra.mxu0 0
        %3930 = vmatprep.subr.bf16.mxu0 0
        %3931 = vmatpush1.bf16.msra.mxu0 0
        %3932 = vmatprep.subr.bf16.mxu0 0
        %3933 = vmatpush1.bf16.msra.mxu0 0
        %3934 = vmatprep.subr.bf16.mxu0 0
        %3935 = vmatpush1.bf16.msra.mxu0 0
        %3936 = vmatprep.subr.bf16.mxu0 0
        %3937 = vmatpush1.bf16.msra.mxu0 %v2360
        %3938 = vmatprep.subr.bf16.mxu0 0
        %3939 = vmatpush2.bf16.msra.mxu0 0
        %3940 = vmatprep.subr.bf16.mxu0 0
        %3941 = vmatpush2.bf16.msra.mxu0 0
        %3942 = vmatprep.subr.bf16.mxu0 0
        %3943 = vmatpush2.bf16.msra.mxu0 0
        %3944 = vmatprep.subr.bf16.mxu0 0
        %3945 = vmatpush2.bf16.msra.mxu0 0
        %3946 = vmatprep.subr.bf16.mxu0 0
        %3947 = vmatpush2.bf16.msra.mxu0 0
        %3948 = vmatprep.subr.bf16.mxu0 0
        %3949 = vmatpush2.bf16.msra.mxu0 0
        %3950 = vmatprep.subr.bf16.mxu0 0
        %3951 = vmatpush2.bf16.msra.mxu0 0
        %3952 = vmatprep.subr.bf16.mxu0 0
        %3953 = vmatpush2.bf16.msra.mxu0 0
        %3954 = vmatprep.mubr.bf16.mxu0 0
        %3955 = vmatmul.mubr.bf16.gmra.mxu0 %v3920
        %v3956 = vpop.f32.mrf.mxu0
        %v3957 = vadd.f32 0.0, %v3956
        %v3958 = vpop.f32.mrf.mxu0
        %v3959 = vpop.f32.mrf.mxu0
        %v3960 = vadd.f32 0.0, %v3959
        %v3961 = vpop.f32.mrf.mxu0
        %3962 = vdwg.mxu0
        %v3964 = vsel %vm3022, %v3388, 0
        %3966 = vmatprep.subr.bf16.mxu0 0
        %3967 = vmatpush1.bf16.msra.mxu0 0
        %3968 = vmatprep.subr.bf16.mxu0 0
        %3969 = vmatpush1.bf16.msra.mxu0 0
        %3970 = vmatprep.subr.bf16.mxu0 0
        %3971 = vmatpush1.bf16.msra.mxu0 0
        %3972 = vmatprep.subr.bf16.mxu0 0
        %3973 = vmatpush1.bf16.msra.mxu0 0
        %3974 = vmatprep.subr.bf16.mxu0 0
        %3975 = vmatpush1.bf16.msra.mxu0 0
        %3976 = vmatprep.subr.bf16.mxu0 0
        %3977 = vmatpush1.bf16.msra.mxu0 0
        %3978 = vmatprep.subr.bf16.mxu0 0
        %3979 = vmatpush1.bf16.msra.mxu0 0
        %3980 = vmatprep.subr.bf16.mxu0 0
        %3981 = vmatpush1.bf16.msra.mxu0 %v2361
        %3982 = vmatprep.subr.bf16.mxu0 0
        %3983 = vmatpush2.bf16.msra.mxu0 0
        %3984 = vmatprep.subr.bf16.mxu0 0
        %3985 = vmatpush2.bf16.msra.mxu0 0
        %3986 = vmatprep.subr.bf16.mxu0 0
        %3987 = vmatpush2.bf16.msra.mxu0 0
        %3988 = vmatprep.subr.bf16.mxu0 0
        %3989 = vmatpush2.bf16.msra.mxu0 0
        %3990 = vmatprep.subr.bf16.mxu0 0
        %3991 = vmatpush2.bf16.msra.mxu0 0
        %3992 = vmatprep.subr.bf16.mxu0 0
        %3993 = vmatpush2.bf16.msra.mxu0 0
        %3994 = vmatprep.subr.bf16.mxu0 0
        %3995 = vmatpush2.bf16.msra.mxu0 0
        %3996 = vmatprep.subr.bf16.mxu0 0
        %3997 = vmatpush2.bf16.msra.mxu0 0
        %3998 = vmatprep.mubr.bf16.mxu0 0
        %3999 = vmatmul.mubr.bf16.gmra.mxu0 %v3964
        %v4000 = vpop.f32.mrf.mxu0
        %v4001 = vadd.f32 0.0, %v4000
        %v4002 = vpop.f32.mrf.mxu0
        %v4003 = vpop.f32.mrf.mxu0
        %v4004 = vadd.f32 0.0, %v4003
        %v4005 = vpop.f32.mrf.mxu0
        %4006 = vdwg.mxu0
        %v4008 = vsel %vm3022, %v3389, 0
        %4010 = vmatprep.subr.bf16.mxu0 0
        %4011 = vmatpush1.bf16.msra.mxu0 0
        %4012 = vmatprep.subr.bf16.mxu0 0
        %4013 = vmatpush1.bf16.msra.mxu0 0
        %4014 = vmatprep.subr.bf16.mxu0 0
        %4015 = vmatpush1.bf16.msra.mxu0 0
        %4016 = vmatprep.subr.bf16.mxu0 0
        %4017 = vmatpush1.bf16.msra.mxu0 0
        %4018 = vmatprep.subr.bf16.mxu0 0
        %4019 = vmatpush1.bf16.msra.mxu0 0
        %4020 = vmatprep.subr.bf16.mxu0 0
        %4021 = vmatpush1.bf16.msra.mxu0 0
        %4022 = vmatprep.subr.bf16.mxu0 0
        %4023 = vmatpush1.bf16.msra.mxu0 0
        %4024 = vmatprep.subr.bf16.mxu0 0
        %4025 = vmatpush1.bf16.msra.mxu0 %v2362
        %4026 = vmatprep.subr.bf16.mxu0 0
        %4027 = vmatpush2.bf16.msra.mxu0 0
        %4028 = vmatprep.subr.bf16.mxu0 0
        %4029 = vmatpush2.bf16.msra.mxu0 0
        %4030 = vmatprep.subr.bf16.mxu0 0
        %4031 = vmatpush2.bf16.msra.mxu0 0
        %4032 = vmatprep.subr.bf16.mxu0 0
        %4033 = vmatpush2.bf16.msra.mxu0 0
        %4034 = vmatprep.subr.bf16.mxu0 0
        %4035 = vmatpush2.bf16.msra.mxu0 0
        %4036 = vmatprep.subr.bf16.mxu0 0
        %4037 = vmatpush2.bf16.msra.mxu0 0
        %4038 = vmatprep.subr.bf16.mxu0 0
        %4039 = vmatpush2.bf16.msra.mxu0 0
        %4040 = vmatprep.subr.bf16.mxu0 0
        %4041 = vmatpush2.bf16.msra.mxu0 0
        %4042 = vmatprep.mubr.bf16.mxu0 0
        %4043 = vmatmul.mubr.bf16.gmra.mxu0 %v4008
        %v4044 = vpop.f32.mrf.mxu0
        %v4045 = vadd.f32 0.0, %v4044
        %v4046 = vpop.f32.mrf.mxu0
        %v4047 = vpop.f32.mrf.mxu0
        %v4048 = vadd.f32 0.0, %v4047
        %v4049 = vpop.f32.mrf.mxu0
        %4050 = vdwg.mxu0
        %v4052 = vsel %vm3022, %v3390, 0
        %4054 = vmatprep.subr.bf16.mxu0 0
        %4055 = vmatpush1.bf16.msra.mxu0 0
        %4056 = vmatprep.subr.bf16.mxu0 0
        %4057 = vmatpush1.bf16.msra.mxu0 0
        %4058 = vmatprep.subr.bf16.mxu0 0
        %4059 = vmatpush1.bf16.msra.mxu0 0
        %4060 = vmatprep.subr.bf16.mxu0 0
        %4061 = vmatpush1.bf16.msra.mxu0 0
        %4062 = vmatprep.subr.bf16.mxu0 0
        %4063 = vmatpush1.bf16.msra.mxu0 0
        %4064 = vmatprep.subr.bf16.mxu0 0
        %4065 = vmatpush1.bf16.msra.mxu0 0
        %4066 = vmatprep.subr.bf16.mxu0 0
        %4067 = vmatpush1.bf16.msra.mxu0 0
        %4068 = vmatprep.subr.bf16.mxu0 0
        %4069 = vmatpush1.bf16.msra.mxu0 %v2363
        %4070 = vmatprep.subr.bf16.mxu0 0
        %4071 = vmatpush2.bf16.msra.mxu0 0
        %4072 = vmatprep.subr.bf16.mxu0 0
        %4073 = vmatpush2.bf16.msra.mxu0 0
        %4074 = vmatprep.subr.bf16.mxu0 0
        %4075 = vmatpush2.bf16.msra.mxu0 0
        %4076 = vmatprep.subr.bf16.mxu0 0
        %4077 = vmatpush2.bf16.msra.mxu0 0
        %4078 = vmatprep.subr.bf16.mxu0 0
        %4079 = vmatpush2.bf16.msra.mxu0 0
        %4080 = vmatprep.subr.bf16.mxu0 0
        %4081 = vmatpush2.bf16.msra.mxu0 0
        %4082 = vmatprep.subr.bf16.mxu0 0
        %4083 = vmatpush2.bf16.msra.mxu0 0
        %4084 = vmatprep.subr.bf16.mxu0 0
        %4085 = vmatpush2.bf16.msra.mxu0 0
        %4086 = vmatprep.mubr.bf16.mxu0 0
        %4087 = vmatmul.mubr.bf16.gmra.mxu0 %v4052
        %v4088 = vpop.f32.mrf.mxu0
        %v4089 = vadd.f32 0.0, %v4088
        %v4090 = vpop.f32.mrf.mxu0
        %v4091 = vpop.f32.mrf.mxu0
        %v4092 = vadd.f32 0.0, %v4091
        %v4093 = vpop.f32.mrf.mxu0
        %4094 = vdwg.mxu0
        %v4095 = vpack.c.bf16 %v3432, %v3429
        %v4096 = vpack.c.bf16 %v3784, %v3781
        %v4097 = vpack.c.bf16 %v3476, %v3473
        %v4098 = vpack.c.bf16 %v3828, %v3825
        %v4099 = vpack.c.bf16 %v3520, %v3517
        %v4100 = vpack.c.bf16 %v3872, %v3869
        %v4101 = vpack.c.bf16 %v3564, %v3561
        %v4102 = vpack.c.bf16 %v3916, %v3913
        %v4103 = vpack.c.bf16 %v3608, %v3605
        %v4104 = vpack.c.bf16 %v3960, %v3957
        %v4105 = vpack.c.bf16 %v3652, %v3649
        %v4106 = vpack.c.bf16 %v4004, %v4001
        %v4107 = vpack.c.bf16 %v3696, %v3693
        %v4108 = vpack.c.bf16 %v4048, %v4045
        %v4109 = vpack.c.bf16 %v3740, %v3737
        %v4110 = vpack.c.bf16 %v4092, %v4089
        %v4111 = vld [vmem:[%s646] sm:$0xff]
        %v4112 = vld [vmem:[%s646 + $0x8] sm:$0xff]
        %v4113 = vld [vmem:[%s646 + $0x10] sm:$0xff]
        %v4114 = vld [vmem:[%s646 + $0x18] sm:$0xff]
        %v4115 = vld [vmem:[%s646 + $0x20] sm:$0xff]
        %v4116 = vld [vmem:[%s646 + $0x28] sm:$0xff]
        %v4117 = vld [vmem:[%s646 + $0x30] sm:$0xff]
        %v4118 = vld [vmem:[%s646 + $0x38] sm:$0xff]
        %v4119 = vld [vmem:[%s646 + $0x40] sm:$0xff]
        %v4120 = vld [vmem:[%s646 + $0x48] sm:$0xff]
        %v4121 = vld [vmem:[%s646 + $0x50] sm:$0xff]
        %v4122 = vld [vmem:[%s646 + $0x58] sm:$0xff]
        %v4123 = vld [vmem:[%s646 + $0x60] sm:$0xff]
        %v4124 = vld [vmem:[%s646 + $0x68] sm:$0xff]
        %v4125 = vld [vmem:[%s646 + $0x70] sm:$0xff]
        %v4126 = vld [vmem:[%s646 + $0x78] sm:$0xff]
        %v4127 = vld [vmem:[%s646 + $0x80] sm:$0xff]
        %v4128 = vld [vmem:[%s646 + $0x88] sm:$0xff]
        %v4129 = vld [vmem:[%s646 + $0x90] sm:$0xff]
        %v4130 = vld [vmem:[%s646 + $0x98] sm:$0xff]
        %v4131 = vld [vmem:[%s646 + $0xa0] sm:$0xff]
        %v4132 = vld [vmem:[%s646 + $0xa8] sm:$0xff]
        %v4133 = vld [vmem:[%s646 + $0xb0] sm:$0xff]
        %v4134 = vld [vmem:[%s646 + $0xb8] sm:$0xff]
        %v4135 = vld [vmem:[%s646 + $0xc0] sm:$0xff]
        %v4136 = vld [vmem:[%s646 + $0xc8] sm:$0xff]
        %v4137 = vld [vmem:[%s646 + $0xd0] sm:$0xff]
        %v4138 = vld [vmem:[%s646 + $0xd8] sm:$0xff]
        %v4139 = vld [vmem:[%s646 + $0xe0] sm:$0xff]
        %v4140 = vld [vmem:[%s646 + $0xe8] sm:$0xff]
        %v4141 = vld [vmem:[%s646 + $0xf0] sm:$0xff]
        %v4142 = vld [vmem:[%s646 + $0xf8] sm:$0xff]
        %v4175 = vunpack.c.l.b16 %v4111
        %v4176 = vunpack.c.h.b16 %v4111
        %v4177 = vunpack.c.l.b16 %v4112
        %v4178 = vunpack.c.h.b16 %v4112
        %v4179 = vunpack.c.l.b16 %v4113
        %v4180 = vunpack.c.h.b16 %v4113
        %v4181 = vunpack.c.l.b16 %v4114
        %v4182 = vunpack.c.h.b16 %v4114
        %v4183 = vunpack.c.l.b16 %v4115
        %v4184 = vunpack.c.h.b16 %v4115
        %v4185 = vunpack.c.l.b16 %v4116
        %v4186 = vunpack.c.h.b16 %v4116
        %v4187 = vunpack.c.l.b16 %v4117
        %v4188 = vunpack.c.h.b16 %v4117
        %v4189 = vunpack.c.l.b16 %v4118
        %v4190 = vunpack.c.h.b16 %v4118
        %v4191 = vunpack.c.l.b16 %v4119
        %v4192 = vunpack.c.h.b16 %v4119
        %v4193 = vunpack.c.l.b16 %v4120
        %v4194 = vunpack.c.h.b16 %v4120
        %v4195 = vunpack.c.l.b16 %v4121
        %v4196 = vunpack.c.h.b16 %v4121
        %v4197 = vunpack.c.l.b16 %v4122
        %v4198 = vunpack.c.h.b16 %v4122
        %v4199 = vunpack.c.l.b16 %v4123
        %v4200 = vunpack.c.h.b16 %v4123
        %v4201 = vunpack.c.l.b16 %v4124
        %v4202 = vunpack.c.h.b16 %v4124
        %v4203 = vunpack.c.l.b16 %v4125
        %v4204 = vunpack.c.h.b16 %v4125
        %v4205 = vunpack.c.l.b16 %v4126
        %v4206 = vunpack.c.h.b16 %v4126
        %v4207 = vunpack.c.l.b16 %v4127
        %v4208 = vunpack.c.h.b16 %v4127
        %v4209 = vunpack.c.l.b16 %v4128
        %v4210 = vunpack.c.h.b16 %v4128
        %v4211 = vunpack.c.l.b16 %v4129
        %v4212 = vunpack.c.h.b16 %v4129
        %v4213 = vunpack.c.l.b16 %v4130
        %v4214 = vunpack.c.h.b16 %v4130
        %v4215 = vunpack.c.l.b16 %v4131
        %v4216 = vunpack.c.h.b16 %v4131
        %v4217 = vunpack.c.l.b16 %v4132
        %v4218 = vunpack.c.h.b16 %v4132
        %v4219 = vunpack.c.l.b16 %v4133
        %v4220 = vunpack.c.h.b16 %v4133
        %v4221 = vunpack.c.l.b16 %v4134
        %v4222 = vunpack.c.h.b16 %v4134
        %v4223 = vunpack.c.l.b16 %v4135
        %v4224 = vunpack.c.h.b16 %v4135
        %v4225 = vunpack.c.l.b16 %v4136
        %v4226 = vunpack.c.h.b16 %v4136
        %v4227 = vunpack.c.l.b16 %v4137
        %v4228 = vunpack.c.h.b16 %v4137
        %v4229 = vunpack.c.l.b16 %v4138
        %v4230 = vunpack.c.h.b16 %v4138
        %v4231 = vunpack.c.l.b16 %v4139
        %v4232 = vunpack.c.h.b16 %v4139
        %v4233 = vunpack.c.l.b16 %v4140
        %v4234 = vunpack.c.h.b16 %v4140
        %v4235 = vunpack.c.l.b16 %v4141
        %v4236 = vunpack.c.h.b16 %v4141
        %v4237 = vunpack.c.l.b16 %v4142
        %v4238 = vunpack.c.h.b16 %v4142
        %v4239 = vpack.c.b16 %v4177, %v4175
        %v4240 = vpack.c.b16 %v4178, %v4176
        %v4241 = vpack.c.b16 %v4181, %v4179
        %v4242 = vpack.c.b16 %v4182, %v4180
        %v4243 = vpack.c.b16 %v4185, %v4183
        %v4244 = vpack.c.b16 %v4186, %v4184
        %v4245 = vpack.c.b16 %v4189, %v4187
        %v4246 = vpack.c.b16 %v4190, %v4188
        %v4247 = vpack.c.b16 %v4193, %v4191
        %v4248 = vpack.c.b16 %v4194, %v4192
        %v4249 = vpack.c.b16 %v4197, %v4195
        %v4250 = vpack.c.b16 %v4198, %v4196
        %v4251 = vpack.c.b16 %v4201, %v4199
        %v4252 = vpack.c.b16 %v4202, %v4200
        %v4253 = vpack.c.b16 %v4205, %v4203
        %v4254 = vpack.c.b16 %v4206, %v4204
        %v4255 = vpack.c.b16 %v4209, %v4207
        %v4256 = vpack.c.b16 %v4210, %v4208
        %v4257 = vpack.c.b16 %v4213, %v4211
        %v4258 = vpack.c.b16 %v4214, %v4212
        %v4259 = vpack.c.b16 %v4217, %v4215
        %v4260 = vpack.c.b16 %v4218, %v4216
        %v4261 = vpack.c.b16 %v4221, %v4219
        %v4262 = vpack.c.b16 %v4222, %v4220
        %v4263 = vpack.c.b16 %v4225, %v4223
        %v4264 = vpack.c.b16 %v4226, %v4224
        %v4265 = vpack.c.b16 %v4229, %v4227
        %v4266 = vpack.c.b16 %v4230, %v4228
        %v4267 = vpack.c.b16 %v4233, %v4231
        %v4268 = vpack.c.b16 %v4234, %v4232
        %v4269 = vpack.c.b16 %v4237, %v4235
        %v4270 = vpack.c.b16 %v4238, %v4236
        %4303 = vmatprep.subr.bf16.mxu0 %v4254
        %4304 = vmatpush1.bf16.msra.mxu0 %v4253
        %4305 = vmatprep.subr.bf16.mxu0 %v4252
        %4306 = vmatpush1.bf16.msra.mxu0 %v4251
        %4307 = vmatprep.subr.bf16.mxu0 %v4250
        %4308 = vmatpush1.bf16.msra.mxu0 %v4249
        %4309 = vmatprep.subr.bf16.mxu0 %v4248
        %4310 = vmatpush1.bf16.msra.mxu0 %v4247
        %4311 = vmatprep.subr.bf16.mxu0 %v4246
        %4312 = vmatpush1.bf16.msra.mxu0 %v4245
        %4313 = vmatprep.subr.bf16.mxu0 %v4244
        %4314 = vmatpush1.bf16.msra.mxu0 %v4243
        %4315 = vmatprep.subr.bf16.mxu0 %v4242
        %4316 = vmatpush1.bf16.msra.mxu0 %v4241
        %4317 = vmatprep.subr.bf16.mxu0 %v4240
        %4318 = vmatpush1.bf16.msra.mxu0 %v4239
        %4319 = vmatprep.subr.bf16.mxu0 %v4270
        %4320 = vmatpush2.bf16.msra.mxu0 %v4269
        %4321 = vmatprep.subr.bf16.mxu0 %v4268
        %4322 = vmatpush2.bf16.msra.mxu0 %v4267
        %4323 = vmatprep.subr.bf16.mxu0 %v4266
        %4324 = vmatpush2.bf16.msra.mxu0 %v4265
        %4325 = vmatprep.subr.bf16.mxu0 %v4264
        %4326 = vmatpush2.bf16.msra.mxu0 %v4263
        %4327 = vmatprep.subr.bf16.mxu0 %v4262
        %4328 = vmatpush2.bf16.msra.mxu0 %v4261
        %4329 = vmatprep.subr.bf16.mxu0 %v4260
        %4330 = vmatpush2.bf16.msra.mxu0 %v4259
        %4331 = vmatprep.subr.bf16.mxu0 %v4258
        %4332 = vmatpush2.bf16.msra.mxu0 %v4257
        %4333 = vmatprep.subr.bf16.mxu0 %v4256
        %4334 = vmatpush2.bf16.msra.mxu0 %v4255
        %4335 = vmatprep.mubr.bf16.mxu0 %v4096
        %4336 = vmatmul.mubr.bf16.gmra.mxu0 %v4095
        %v4337 = vpop.f32.mrf.mxu0
        %v4338 = vadd.f32 0.0, %v4337
        %v4339 = vpop.f32.mrf.mxu0
        %v4340 = vadd.f32 0.0, %v4339
        %v4341 = vpop.f32.mrf.mxu0
        %v4342 = vadd.f32 0.0, %v4341
        %v4343 = vpop.f32.mrf.mxu0
        %v4344 = vadd.f32 0.0, %v4343
        %4345 = vmatprep.mubr.bf16.mxu0 %v4098
        %4346 = vmatmul.mubr.bf16.gmra.mxu0 %v4097
        %v4347 = vpop.f32.mrf.mxu0
        %v4348 = vadd.f32 0.0, %v4347
        %v4349 = vpop.f32.mrf.mxu0
        %v4350 = vadd.f32 0.0, %v4349
        %v4351 = vpop.f32.mrf.mxu0
        %v4352 = vadd.f32 0.0, %v4351
        %v4353 = vpop.f32.mrf.mxu0
        %v4354 = vadd.f32 0.0, %v4353
        %4355 = vmatprep.mubr.bf16.mxu0 %v4100
        %4356 = vmatmul.mubr.bf16.gmra.mxu0 %v4099
        %v4357 = vpop.f32.mrf.mxu0
        %v4358 = vadd.f32 0.0, %v4357
        %v4359 = vpop.f32.mrf.mxu0
        %v4360 = vadd.f32 0.0, %v4359
        %v4361 = vpop.f32.mrf.mxu0
        %v4362 = vadd.f32 0.0, %v4361
        %v4363 = vpop.f32.mrf.mxu0
        %v4364 = vadd.f32 0.0, %v4363
        %4365 = vmatprep.mubr.bf16.mxu0 %v4102
        %4366 = vmatmul.mubr.bf16.gmra.mxu0 %v4101
        %v4367 = vpop.f32.mrf.mxu0
        %v4368 = vadd.f32 0.0, %v4367
        %v4369 = vpop.f32.mrf.mxu0
        %v4370 = vadd.f32 0.0, %v4369
        %v4371 = vpop.f32.mrf.mxu0
        %v4372 = vadd.f32 0.0, %v4371
        %v4373 = vpop.f32.mrf.mxu0
        %v4374 = vadd.f32 0.0, %v4373
        %4375 = vmatprep.mubr.bf16.mxu0 %v4104
        %4376 = vmatmul.mubr.bf16.gmra.mxu0 %v4103
        %v4377 = vpop.f32.mrf.mxu0
        %v4378 = vadd.f32 0.0, %v4377
        %v4379 = vpop.f32.mrf.mxu0
        %v4380 = vadd.f32 0.0, %v4379
        %v4381 = vpop.f32.mrf.mxu0
        %v4382 = vadd.f32 0.0, %v4381
        %v4383 = vpop.f32.mrf.mxu0
        %v4384 = vadd.f32 0.0, %v4383
        %4385 = vmatprep.mubr.bf16.mxu0 %v4106
        %4386 = vmatmul.mubr.bf16.gmra.mxu0 %v4105
        %v4387 = vpop.f32.mrf.mxu0
        %v4388 = vadd.f32 0.0, %v4387
        %v4389 = vpop.f32.mrf.mxu0
        %v4390 = vadd.f32 0.0, %v4389
        %v4391 = vpop.f32.mrf.mxu0
        %v4392 = vadd.f32 0.0, %v4391
        %v4393 = vpop.f32.mrf.mxu0
        %v4394 = vadd.f32 0.0, %v4393
        %4395 = vmatprep.mubr.bf16.mxu0 %v4108
        %4396 = vmatmul.mubr.bf16.gmra.mxu0 %v4107
        %v4397 = vpop.f32.mrf.mxu0
        %v4398 = vadd.f32 0.0, %v4397
        %v4399 = vpop.f32.mrf.mxu0
        %v4400 = vadd.f32 0.0, %v4399
        %v4401 = vpop.f32.mrf.mxu0
        %v4402 = vadd.f32 0.0, %v4401
        %v4403 = vpop.f32.mrf.mxu0
        %v4404 = vadd.f32 0.0, %v4403
        %4405 = vmatprep.mubr.bf16.mxu0 %v4110
        %4406 = vmatmul.mubr.bf16.gmra.mxu0 %v4109
        %v4407 = vpop.f32.mrf.mxu0
        %v4408 = vadd.f32 0.0, %v4407
        %v4409 = vpop.f32.mrf.mxu0
        %v4410 = vadd.f32 0.0, %v4409
        %v4411 = vpop.f32.mrf.mxu0
        %v4412 = vadd.f32 0.0, %v4411
        %v4413 = vpop.f32.mrf.mxu0
        %v4414 = vadd.f32 0.0, %v4413
        %4415 = vdwg.mxu0
        %v4416 = vadd.f32 %v824, %v4338
        %v4417 = vadd.f32 %v825, %v4340
        %v4418 = vadd.f32 %v826, %v4342
        %v4419 = vadd.f32 %v827, %v4344
        %v4420 = vadd.f32 %v828, %v4348
        %v4421 = vadd.f32 %v829, %v4350
        %v4422 = vadd.f32 %v830, %v4352
        %v4423 = vadd.f32 %v831, %v4354
        %v4424 = vadd.f32 %v832, %v4358
        %v4425 = vadd.f32 %v833, %v4360
        %v4426 = vadd.f32 %v834, %v4362
        %v4427 = vadd.f32 %v835, %v4364
        %v4428 = vadd.f32 %v836, %v4368
        %v4429 = vadd.f32 %v837, %v4370
        %v4430 = vadd.f32 %v838, %v4372
        %v4431 = vadd.f32 %v839, %v4374
        %v4432 = vadd.f32 %v840, %v4378
        %v4433 = vadd.f32 %v841, %v4380
        %v4434 = vadd.f32 %v842, %v4382
        %v4435 = vadd.f32 %v843, %v4384
        %v4436 = vadd.f32 %v844, %v4388
        %v4437 = vadd.f32 %v845, %v4390
        %v4438 = vadd.f32 %v846, %v4392
        %v4439 = vadd.f32 %v847, %v4394
        %v4440 = vadd.f32 %v848, %v4398
        %v4441 = vadd.f32 %v849, %v4400
        %v4442 = vadd.f32 %v850, %v4402
        %v4443 = vadd.f32 %v851, %v4404
        %v4444 = vadd.f32 %v852, %v4408
        %v4445 = vadd.f32 %v853, %v4410
        %v4446 = vadd.f32 %v854, %v4412
        %v4447 = vadd.f32 %v855, %v4414
        %v4448 = vld [vmem:[%s754] sm:$0x3]
        %v4449 = vmul.f32 %v4416, %v4416
        %v4450 = vmul.f32 %v4417, %v4417
        %v4451 = vmul.f32 %v4418, %v4418
        %v4452 = vmul.f32 %v4419, %v4419
        %v4453 = vmul.f32 %v4420, %v4420
        %v4454 = vmul.f32 %v4421, %v4421
        %v4455 = vmul.f32 %v4422, %v4422
        %v4456 = vmul.f32 %v4423, %v4423
        %v4457 = vmul.f32 %v4424, %v4424
        %v4458 = vmul.f32 %v4425, %v4425
        %v4459 = vmul.f32 %v4426, %v4426
        %v4460 = vmul.f32 %v4427, %v4427
        %v4461 = vmul.f32 %v4428, %v4428
        %v4462 = vmul.f32 %v4429, %v4429
        %v4463 = vmul.f32 %v4430, %v4430
        %v4464 = vmul.f32 %v4431, %v4431
        %v4465 = vmul.f32 %v4432, %v4432
        %v4466 = vmul.f32 %v4433, %v4433
        %v4467 = vmul.f32 %v4434, %v4434
        %v4468 = vmul.f32 %v4435, %v4435
        %v4469 = vmul.f32 %v4436, %v4436
        %v4470 = vmul.f32 %v4437, %v4437
        %v4471 = vmul.f32 %v4438, %v4438
        %v4472 = vmul.f32 %v4439, %v4439
        %v4473 = vmul.f32 %v4440, %v4440
        %v4474 = vmul.f32 %v4441, %v4441
        %v4475 = vmul.f32 %v4442, %v4442
        %v4476 = vmul.f32 %v4443, %v4443
        %v4477 = vmul.f32 %v4444, %v4444
        %v4478 = vmul.f32 %v4445, %v4445
        %v4479 = vmul.f32 %v4446, %v4446
        %v4480 = vmul.f32 %v4447, %v4447
        %v4481 = vadd.f32 %v4449, %v4450
        %4482 = vadd.xlane.f32.xlu0 %v4481
        %v4483 = vpop.xlane.xlu0 %4482
        %v4484 = vadd.f32 %v4451, %v4452
        %4485 = vadd.xlane.f32.xlu0 %v4484
        %v4486 = vpop.xlane.xlu0 %4485
        %v4487 = vadd.f32 %v4453, %v4454
        %4488 = vadd.xlane.f32.xlu0 %v4487
        %v4489 = vpop.xlane.xlu0 %4488
        %v4490 = vadd.f32 %v4455, %v4456
        %4491 = vadd.xlane.f32.xlu0 %v4490
        %v4492 = vpop.xlane.xlu0 %4491
        %v4493 = vadd.f32 %v4457, %v4458
        %4494 = vadd.xlane.f32.xlu0 %v4493
        %v4495 = vpop.xlane.xlu0 %4494
        %v4496 = vadd.f32 %v4459, %v4460
        %4497 = vadd.xlane.f32.xlu0 %v4496
        %v4498 = vpop.xlane.xlu0 %4497
        %v4499 = vadd.f32 %v4461, %v4462
        %4500 = vadd.xlane.f32.xlu0 %v4499
        %v4501 = vpop.xlane.xlu0 %4500
        %v4502 = vadd.f32 %v4463, %v4464
        %4503 = vadd.xlane.f32.xlu0 %v4502
        %v4504 = vpop.xlane.xlu0 %4503
        %v4505 = vadd.f32 %v4465, %v4466
        %4506 = vadd.xlane.f32.xlu0 %v4505
        %v4507 = vpop.xlane.xlu0 %4506
        %v4508 = vadd.f32 %v4467, %v4468
        %4509 = vadd.xlane.f32.xlu0 %v4508
        %v4510 = vpop.xlane.xlu0 %4509
        %v4511 = vadd.f32 %v4469, %v4470
        %4512 = vadd.xlane.f32.xlu0 %v4511
        %v4513 = vpop.xlane.xlu0 %4512
        %v4514 = vadd.f32 %v4471, %v4472
        %4515 = vadd.xlane.f32.xlu0 %v4514
        %v4516 = vpop.xlane.xlu0 %4515
        %v4517 = vadd.f32 %v4473, %v4474
        %4518 = vadd.xlane.f32.xlu0 %v4517
        %v4519 = vpop.xlane.xlu0 %4518
        %v4520 = vadd.f32 %v4475, %v4476
        %4521 = vadd.xlane.f32.xlu0 %v4520
        %v4522 = vpop.xlane.xlu0 %4521
        %v4523 = vadd.f32 %v4477, %v4478
        %4524 = vadd.xlane.f32.xlu0 %v4523
        %v4525 = vpop.xlane.xlu0 %4524
        %v4526 = vadd.f32 %v4479, %v4480
        %4527 = vadd.xlane.f32.xlu0 %v4526
        %v4528 = vpop.xlane.xlu0 %4527
        %v4529 = vmul.f32 %v4483, %v941
        %v4530 = vmul.f32 %v4486, %v941
        %v4531 = vmul.f32 %v4489, %v941
        %v4532 = vmul.f32 %v4492, %v941
        %v4533 = vmul.f32 %v4495, %v941
        %v4534 = vmul.f32 %v4498, %v941
        %v4535 = vmul.f32 %v4501, %v941
        %v4536 = vmul.f32 %v4504, %v941
        %v4537 = vmul.f32 %v4507, %v941
        %v4538 = vmul.f32 %v4510, %v941
        %v4539 = vmul.f32 %v4513, %v941
        %v4540 = vmul.f32 %v4516, %v941
        %v4541 = vmul.f32 %v4519, %v941
        %v4542 = vmul.f32 %v4522, %v941
        %v4543 = vmul.f32 %v4525, %v941
        %v4544 = vmul.f32 %v4528, %v941
        %v4545 = vadd.f32 %v4529, 1e-05
        %v4546 = vadd.f32 %v4530, 1e-05
        %v4547 = vadd.f32 %v4531, 1e-05
        %v4548 = vadd.f32 %v4532, 1e-05
        %v4549 = vadd.f32 %v4533, 1e-05
        %v4550 = vadd.f32 %v4534, 1e-05
        %v4551 = vadd.f32 %v4535, 1e-05
        %v4552 = vadd.f32 %v4536, 1e-05
        %v4553 = vadd.f32 %v4537, 1e-05
        %v4554 = vadd.f32 %v4538, 1e-05
        %v4555 = vadd.f32 %v4539, 1e-05
        %v4556 = vadd.f32 %v4540, 1e-05
        %v4557 = vadd.f32 %v4541, 1e-05
        %v4558 = vadd.f32 %v4542, 1e-05
        %v4559 = vadd.f32 %v4543, 1e-05
        %v4560 = vadd.f32 %v4544, 1e-05
        %v4561 = vrsqrt.pop %v4545
        %v4562 = vrsqrt.pop %v4546
        %v4563 = vrsqrt.pop %v4547
        %v4564 = vrsqrt.pop %v4548
        %v4565 = vrsqrt.pop %v4549
        %v4566 = vrsqrt.pop %v4550
        %v4567 = vrsqrt.pop %v4551
        %v4568 = vrsqrt.pop %v4552
        %v4569 = vrsqrt.pop %v4553
        %v4570 = vrsqrt.pop %v4554
        %v4571 = vrsqrt.pop %v4555
        %v4572 = vrsqrt.pop %v4556
        %v4573 = vrsqrt.pop %v4557
        %v4574 = vrsqrt.pop %v4558
        %v4575 = vrsqrt.pop %v4559
        %v4576 = vrsqrt.pop %v4560
        %v4577 = vmul.f32 %v4416, %v4561
        %v4578 = vmul.f32 %v4417, %v4561
        %v4579 = vmul.f32 %v4418, %v4562
        %v4580 = vmul.f32 %v4419, %v4562
        %v4581 = vmul.f32 %v4420, %v4563
        %v4582 = vmul.f32 %v4421, %v4563
        %v4583 = vmul.f32 %v4422, %v4564
        %v4584 = vmul.f32 %v4423, %v4564
        %v4585 = vmul.f32 %v4424, %v4565
        %v4586 = vmul.f32 %v4425, %v4565
        %v4587 = vmul.f32 %v4426, %v4566
        %v4588 = vmul.f32 %v4427, %v4566
        %v4589 = vmul.f32 %v4428, %v4567
        %v4590 = vmul.f32 %v4429, %v4567
        %v4591 = vmul.f32 %v4430, %v4568
        %v4592 = vmul.f32 %v4431, %v4568
        %v4593 = vmul.f32 %v4432, %v4569
        %v4594 = vmul.f32 %v4433, %v4569
        %v4595 = vmul.f32 %v4434, %v4570
        %v4596 = vmul.f32 %v4435, %v4570
        %v4597 = vmul.f32 %v4436, %v4571
        %v4598 = vmul.f32 %v4437, %v4571
        %v4599 = vmul.f32 %v4438, %v4572
        %v4600 = vmul.f32 %v4439, %v4572
        %v4601 = vmul.f32 %v4440, %v4573
        %v4602 = vmul.f32 %v4441, %v4573
        %v4603 = vmul.f32 %v4442, %v4574
        %v4604 = vmul.f32 %v4443, %v4574
        %v4605 = vmul.f32 %v4444, %v4575
        %v4606 = vmul.f32 %v4445, %v4575
        %v4607 = vmul.f32 %v4446, %v4576
        %v4608 = vmul.f32 %v4447, %v4576
        %v4610 = vlaneseq
        %v4611 = vshrl.u32 %v4610, 7
        %v4612 = vsub.s32 0, %v4611
        %v4613 = vrot.slane %v4448, %v4612
        %v4614 = vlaneseq
        %v4615 = vshrl.u32 %v4614, 7
        %v4616 = vsub.s32 1, %v4615
        %v4617 = vrot.slane %v4448, %v4616
        %v4620 = vmul.f32 %v4577, %v4613
        %v4621 = vmul.f32 %v4578, %v4617
        %v4622 = vmul.f32 %v4579, %v4613
        %v4623 = vmul.f32 %v4580, %v4617
        %v4624 = vmul.f32 %v4581, %v4613
        %v4625 = vmul.f32 %v4582, %v4617
        %v4626 = vmul.f32 %v4583, %v4613
        %v4627 = vmul.f32 %v4584, %v4617
        %v4628 = vmul.f32 %v4585, %v4613
        %v4629 = vmul.f32 %v4586, %v4617
        %v4630 = vmul.f32 %v4587, %v4613
        %v4631 = vmul.f32 %v4588, %v4617
        %v4632 = vmul.f32 %v4589, %v4613
        %v4633 = vmul.f32 %v4590, %v4617
        %v4634 = vmul.f32 %v4591, %v4613
        %v4635 = vmul.f32 %v4592, %v4617
        %v4636 = vmul.f32 %v4593, %v4613
        %v4637 = vmul.f32 %v4594, %v4617
        %v4638 = vmul.f32 %v4595, %v4613
        %v4639 = vmul.f32 %v4596, %v4617
        %v4640 = vmul.f32 %v4597, %v4613
        %v4641 = vmul.f32 %v4598, %v4617
        %v4642 = vmul.f32 %v4599, %v4613
        %v4643 = vmul.f32 %v4600, %v4617
        %v4644 = vmul.f32 %v4601, %v4613
        %v4645 = vmul.f32 %v4602, %v4617
        %v4646 = vmul.f32 %v4603, %v4613
        %v4647 = vmul.f32 %v4604, %v4617
        %v4648 = vmul.f32 %v4605, %v4613
        %v4649 = vmul.f32 %v4606, %v4617
        %v4650 = vmul.f32 %v4607, %v4613
        %v4651 = vmul.f32 %v4608, %v4617
        %v4652 = vpack.c.bf16 %v4622, %v4620
        %v4653 = vpack.c.bf16 %v4623, %v4621
        %v4654 = vpack.c.bf16 %v4626, %v4624
        %v4655 = vpack.c.bf16 %v4627, %v4625
        %v4656 = vpack.c.bf16 %v4630, %v4628
        %v4657 = vpack.c.bf16 %v4631, %v4629
        %v4658 = vpack.c.bf16 %v4634, %v4632
        %v4659 = vpack.c.bf16 %v4635, %v4633
        %v4660 = vpack.c.bf16 %v4638, %v4636
        %v4661 = vpack.c.bf16 %v4639, %v4637
        %v4662 = vpack.c.bf16 %v4642, %v4640
        %v4663 = vpack.c.bf16 %v4643, %v4641
        %v4664 = vpack.c.bf16 %v4646, %v4644
        %v4665 = vpack.c.bf16 %v4647, %v4645
        %v4666 = vpack.c.bf16 %v4650, %v4648
        %v4667 = vpack.c.bf16 %v4651, %v4649
        %v4668 = vld [vmem:[%s741] sm:$0xff]
        %v4669 = vld [vmem:[%s741 + $0x8] sm:$0xff]
        %v4670 = vld [vmem:[%s741 + $0x10] sm:$0xff]
        %v4671 = vld [vmem:[%s741 + $0x18] sm:$0xff]
        %v4672 = vld [vmem:[%s741 + $0x20] sm:$0xff]
        %v4673 = vld [vmem:[%s741 + $0x28] sm:$0xff]
        %v4674 = vld [vmem:[%s741 + $0x30] sm:$0xff]
        %v4675 = vld [vmem:[%s741 + $0x38] sm:$0xff]
        %v4676 = vld [vmem:[%s741 + $0x40] sm:$0xff]
        %v4677 = vld [vmem:[%s741 + $0x48] sm:$0xff]
        %v4678 = vld [vmem:[%s741 + $0x50] sm:$0xff]
        %v4679 = vld [vmem:[%s741 + $0x58] sm:$0xff]
        %v4680 = vld [vmem:[%s741 + $0x60] sm:$0xff]
        %v4681 = vld [vmem:[%s741 + $0x68] sm:$0xff]
        %v4682 = vld [vmem:[%s741 + $0x70] sm:$0xff]
        %v4683 = vld [vmem:[%s741 + $0x78] sm:$0xff]
        %v4684 = vld [vmem:[%s741 + $0x80] sm:$0xff]
        %v4685 = vld [vmem:[%s741 + $0x88] sm:$0xff]
        %v4686 = vld [vmem:[%s741 + $0x90] sm:$0xff]
        %v4687 = vld [vmem:[%s741 + $0x98] sm:$0xff]
        %v4688 = vld [vmem:[%s741 + $0xa0] sm:$0xff]
        %v4689 = vld [vmem:[%s741 + $0xa8] sm:$0xff]
        %v4690 = vld [vmem:[%s741 + $0xb0] sm:$0xff]
        %v4691 = vld [vmem:[%s741 + $0xb8] sm:$0xff]
        %v4692 = vld [vmem:[%s741 + $0xc0] sm:$0xff]
        %v4693 = vld [vmem:[%s741 + $0xc8] sm:$0xff]
        %v4694 = vld [vmem:[%s741 + $0xd0] sm:$0xff]
        %v4695 = vld [vmem:[%s741 + $0xd8] sm:$0xff]
        %v4696 = vld [vmem:[%s741 + $0xe0] sm:$0xff]
        %v4697 = vld [vmem:[%s741 + $0xe8] sm:$0xff]
        %v4698 = vld [vmem:[%s741 + $0xf0] sm:$0xff]
        %v4699 = vld [vmem:[%s741 + $0xf8] sm:$0xff]
        %v4700 = vld [vmem:[%s741 + $0x100] sm:$0xff]
        %v4701 = vld [vmem:[%s741 + $0x108] sm:$0xff]
        %v4702 = vld [vmem:[%s741 + $0x110] sm:$0xff]
        %v4703 = vld [vmem:[%s741 + $0x118] sm:$0xff]
        %v4704 = vld [vmem:[%s741 + $0x120] sm:$0xff]
        %v4705 = vld [vmem:[%s741 + $0x128] sm:$0xff]
        %v4706 = vld [vmem:[%s741 + $0x130] sm:$0xff]
        %v4707 = vld [vmem:[%s741 + $0x138] sm:$0xff]
        %v4708 = vld [vmem:[%s741 + $0x140] sm:$0xff]
        %v4709 = vld [vmem:[%s741 + $0x148] sm:$0xff]
        %v4710 = vld [vmem:[%s741 + $0x150] sm:$0xff]
        %v4711 = vld [vmem:[%s741 + $0x158] sm:$0xff]
        %v4712 = vld [vmem:[%s741 + $0x160] sm:$0xff]
        %v4713 = vld [vmem:[%s741 + $0x168] sm:$0xff]
        %v4714 = vld [vmem:[%s741 + $0x170] sm:$0xff]
        %v4715 = vld [vmem:[%s741 + $0x178] sm:$0xff]
        %v4716 = vld [vmem:[%s741 + $0x180] sm:$0xff]
        %v4717 = vld [vmem:[%s741 + $0x188] sm:$0xff]
        %v4718 = vld [vmem:[%s741 + $0x190] sm:$0xff]
        %v4719 = vld [vmem:[%s741 + $0x198] sm:$0xff]
        %v4720 = vld [vmem:[%s741 + $0x1a0] sm:$0xff]
        %v4721 = vld [vmem:[%s741 + $0x1a8] sm:$0xff]
        %v4722 = vld [vmem:[%s741 + $0x1b0] sm:$0xff]
        %v4723 = vld [vmem:[%s741 + $0x1b8] sm:$0xff]
        %v4724 = vld [vmem:[%s741 + $0x1c0] sm:$0xff]
        %v4725 = vld [vmem:[%s741 + $0x1c8] sm:$0xff]
        %v4726 = vld [vmem:[%s741 + $0x1d0] sm:$0xff]
        %v4727 = vld [vmem:[%s741 + $0x1d8] sm:$0xff]
        %v4728 = vld [vmem:[%s741 + $0x1e0] sm:$0xff]
        %v4729 = vld [vmem:[%s741 + $0x1e8] sm:$0xff]
        %v4730 = vld [vmem:[%s741 + $0x1f0] sm:$0xff]
        %v4731 = vld [vmem:[%s741 + $0x1f8] sm:$0xff]
        %v4796 = vunpack.c.l.b16 %v4668
        %v4797 = vunpack.c.h.b16 %v4668
        %v4798 = vunpack.c.l.b16 %v4669
        %v4799 = vunpack.c.h.b16 %v4669
        %v4800 = vunpack.c.l.b16 %v4670
        %v4801 = vunpack.c.h.b16 %v4670
        %v4802 = vunpack.c.l.b16 %v4671
        %v4803 = vunpack.c.h.b16 %v4671
        %v4804 = vunpack.c.l.b16 %v4672
        %v4805 = vunpack.c.h.b16 %v4672
        %v4806 = vunpack.c.l.b16 %v4673
        %v4807 = vunpack.c.h.b16 %v4673
        %v4808 = vunpack.c.l.b16 %v4674
        %v4809 = vunpack.c.h.b16 %v4674
        %v4810 = vunpack.c.l.b16 %v4675
        %v4811 = vunpack.c.h.b16 %v4675
        %v4812 = vunpack.c.l.b16 %v4676
        %v4813 = vunpack.c.h.b16 %v4676
        %v4814 = vunpack.c.l.b16 %v4677
        %v4815 = vunpack.c.h.b16 %v4677
        %v4816 = vunpack.c.l.b16 %v4678
        %v4817 = vunpack.c.h.b16 %v4678
        %v4818 = vunpack.c.l.b16 %v4679
        %v4819 = vunpack.c.h.b16 %v4679
        %v4820 = vunpack.c.l.b16 %v4680
        %v4821 = vunpack.c.h.b16 %v4680
        %v4822 = vunpack.c.l.b16 %v4681
        %v4823 = vunpack.c.h.b16 %v4681
        %v4824 = vunpack.c.l.b16 %v4682
        %v4825 = vunpack.c.h.b16 %v4682
        %v4826 = vunpack.c.l.b16 %v4683
        %v4827 = vunpack.c.h.b16 %v4683
        %v4828 = vunpack.c.l.b16 %v4684
        %v4829 = vunpack.c.h.b16 %v4684
        %v4830 = vunpack.c.l.b16 %v4685
        %v4831 = vunpack.c.h.b16 %v4685
        %v4832 = vunpack.c.l.b16 %v4686
        %v4833 = vunpack.c.h.b16 %v4686
        %v4834 = vunpack.c.l.b16 %v4687
        %v4835 = vunpack.c.h.b16 %v4687
        %v4836 = vunpack.c.l.b16 %v4688
        %v4837 = vunpack.c.h.b16 %v4688
        %v4838 = vunpack.c.l.b16 %v4689
        %v4839 = vunpack.c.h.b16 %v4689
        %v4840 = vunpack.c.l.b16 %v4690
        %v4841 = vunpack.c.h.b16 %v4690
        %v4842 = vunpack.c.l.b16 %v4691
        %v4843 = vunpack.c.h.b16 %v4691
        %v4844 = vunpack.c.l.b16 %v4692
        %v4845 = vunpack.c.h.b16 %v4692
        %v4846 = vunpack.c.l.b16 %v4693
        %v4847 = vunpack.c.h.b16 %v4693
        %v4848 = vunpack.c.l.b16 %v4694
        %v4849 = vunpack.c.h.b16 %v4694
        %v4850 = vunpack.c.l.b16 %v4695
        %v4851 = vunpack.c.h.b16 %v4695
        %v4852 = vunpack.c.l.b16 %v4696
        %v4853 = vunpack.c.h.b16 %v4696
        %v4854 = vunpack.c.l.b16 %v4697
        %v4855 = vunpack.c.h.b16 %v4697
        %v4856 = vunpack.c.l.b16 %v4698
        %v4857 = vunpack.c.h.b16 %v4698
        %v4858 = vunpack.c.l.b16 %v4699
        %v4859 = vunpack.c.h.b16 %v4699
        %v4860 = vunpack.c.l.b16 %v4700
        %v4861 = vunpack.c.h.b16 %v4700
        %v4862 = vunpack.c.l.b16 %v4701
        %v4863 = vunpack.c.h.b16 %v4701
        %v4864 = vunpack.c.l.b16 %v4702
        %v4865 = vunpack.c.h.b16 %v4702
        %v4866 = vunpack.c.l.b16 %v4703
        %v4867 = vunpack.c.h.b16 %v4703
        %v4868 = vunpack.c.l.b16 %v4704
        %v4869 = vunpack.c.h.b16 %v4704
        %v4870 = vunpack.c.l.b16 %v4705
        %v4871 = vunpack.c.h.b16 %v4705
        %v4872 = vunpack.c.l.b16 %v4706
        %v4873 = vunpack.c.h.b16 %v4706
        %v4874 = vunpack.c.l.b16 %v4707
        %v4875 = vunpack.c.h.b16 %v4707
        %v4876 = vunpack.c.l.b16 %v4708
        %v4877 = vunpack.c.h.b16 %v4708
        %v4878 = vunpack.c.l.b16 %v4709
        %v4879 = vunpack.c.h.b16 %v4709
        %v4880 = vunpack.c.l.b16 %v4710
        %v4881 = vunpack.c.h.b16 %v4710
        %v4882 = vunpack.c.l.b16 %v4711
        %v4883 = vunpack.c.h.b16 %v4711
        %v4884 = vunpack.c.l.b16 %v4712
        %v4885 = vunpack.c.h.b16 %v4712
        %v4886 = vunpack.c.l.b16 %v4713
        %v4887 = vunpack.c.h.b16 %v4713
        %v4888 = vunpack.c.l.b16 %v4714
        %v4889 = vunpack.c.h.b16 %v4714
        %v4890 = vunpack.c.l.b16 %v4715
        %v4891 = vunpack.c.h.b16 %v4715
        %v4892 = vunpack.c.l.b16 %v4716
        %v4893 = vunpack.c.h.b16 %v4716
        %v4894 = vunpack.c.l.b16 %v4717
        %v4895 = vunpack.c.h.b16 %v4717
        %v4896 = vunpack.c.l.b16 %v4718
        %v4897 = vunpack.c.h.b16 %v4718
        %v4898 = vunpack.c.l.b16 %v4719
        %v4899 = vunpack.c.h.b16 %v4719
        %v4900 = vunpack.c.l.b16 %v4720
        %v4901 = vunpack.c.h.b16 %v4720
        %v4902 = vunpack.c.l.b16 %v4721
        %v4903 = vunpack.c.h.b16 %v4721
        %v4904 = vunpack.c.l.b16 %v4722
        %v4905 = vunpack.c.h.b16 %v4722
        %v4906 = vunpack.c.l.b16 %v4723
        %v4907 = vunpack.c.h.b16 %v4723
        %v4908 = vunpack.c.l.b16 %v4724
        %v4909 = vunpack.c.h.b16 %v4724
        %v4910 = vunpack.c.l.b16 %v4725
        %v4911 = vunpack.c.h.b16 %v4725
        %v4912 = vunpack.c.l.b16 %v4726
        %v4913 = vunpack.c.h.b16 %v4726
        %v4914 = vunpack.c.l.b16 %v4727
        %v4915 = vunpack.c.h.b16 %v4727
        %v4916 = vunpack.c.l.b16 %v4728
        %v4917 = vunpack.c.h.b16 %v4728
        %v4918 = vunpack.c.l.b16 %v4729
        %v4919 = vunpack.c.h.b16 %v4729
        %v4920 = vunpack.c.l.b16 %v4730
        %v4921 = vunpack.c.h.b16 %v4730
        %v4922 = vunpack.c.l.b16 %v4731
        %v4923 = vunpack.c.h.b16 %v4731
        %v4924 = vpack.c.b16 %v4800, %v4796
        %v4925 = vpack.c.b16 %v4801, %v4797
        %v4926 = vpack.c.b16 %v4802, %v4798
        %v4927 = vpack.c.b16 %v4803, %v4799
        %v4928 = vpack.c.b16 %v4808, %v4804
        %v4929 = vpack.c.b16 %v4809, %v4805
        %v4930 = vpack.c.b16 %v4810, %v4806
        %v4931 = vpack.c.b16 %v4811, %v4807
        %v4932 = vpack.c.b16 %v4816, %v4812
        %v4933 = vpack.c.b16 %v4817, %v4813
        %v4934 = vpack.c.b16 %v4818, %v4814
        %v4935 = vpack.c.b16 %v4819, %v4815
        %v4936 = vpack.c.b16 %v4824, %v4820
        %v4937 = vpack.c.b16 %v4825, %v4821
        %v4938 = vpack.c.b16 %v4826, %v4822
        %v4939 = vpack.c.b16 %v4827, %v4823
        %v4940 = vpack.c.b16 %v4832, %v4828
        %v4941 = vpack.c.b16 %v4833, %v4829
        %v4942 = vpack.c.b16 %v4834, %v4830
        %v4943 = vpack.c.b16 %v4835, %v4831
        %v4944 = vpack.c.b16 %v4840, %v4836
        %v4945 = vpack.c.b16 %v4841, %v4837
        %v4946 = vpack.c.b16 %v4842, %v4838
        %v4947 = vpack.c.b16 %v4843, %v4839
        %v4948 = vpack.c.b16 %v4848, %v4844
        %v4949 = vpack.c.b16 %v4849, %v4845
        %v4950 = vpack.c.b16 %v4850, %v4846
        %v4951 = vpack.c.b16 %v4851, %v4847
        %v4952 = vpack.c.b16 %v4856, %v4852
        %v4953 = vpack.c.b16 %v4857, %v4853
        %v4954 = vpack.c.b16 %v4858, %v4854
        %v4955 = vpack.c.b16 %v4859, %v4855
        %v4956 = vpack.c.b16 %v4864, %v4860
        %v4957 = vpack.c.b16 %v4865, %v4861
        %v4958 = vpack.c.b16 %v4866, %v4862
        %v4959 = vpack.c.b16 %v4867, %v4863
        %v4960 = vpack.c.b16 %v4872, %v4868
        %v4961 = vpack.c.b16 %v4873, %v4869
        %v4962 = vpack.c.b16 %v4874, %v4870
        %v4963 = vpack.c.b16 %v4875, %v4871
        %v4964 = vpack.c.b16 %v4880, %v4876
        %v4965 = vpack.c.b16 %v4881, %v4877
        %v4966 = vpack.c.b16 %v4882, %v4878
        %v4967 = vpack.c.b16 %v4883, %v4879
        %v4968 = vpack.c.b16 %v4888, %v4884
        %v4969 = vpack.c.b16 %v4889, %v4885
        %v4970 = vpack.c.b16 %v4890, %v4886
        %v4971 = vpack.c.b16 %v4891, %v4887
        %v4972 = vpack.c.b16 %v4896, %v4892
        %v4973 = vpack.c.b16 %v4897, %v4893
        %v4974 = vpack.c.b16 %v4898, %v4894
        %v4975 = vpack.c.b16 %v4899, %v4895
        %v4976 = vpack.c.b16 %v4904, %v4900
        %v4977 = vpack.c.b16 %v4905, %v4901
        %v4978 = vpack.c.b16 %v4906, %v4902
        %v4979 = vpack.c.b16 %v4907, %v4903
        %v4980 = vpack.c.b16 %v4912, %v4908
        %v4981 = vpack.c.b16 %v4913, %v4909
        %v4982 = vpack.c.b16 %v4914, %v4910
        %v4983 = vpack.c.b16 %v4915, %v4911
        %v4984 = vpack.c.b16 %v4920, %v4916
        %v4985 = vpack.c.b16 %v4921, %v4917
        %v4986 = vpack.c.b16 %v4922, %v4918
        %v4987 = vpack.c.b16 %v4923, %v4919
        %5052 = vmatprep.subr.bf16.mxu0 %v4953
        %5053 = vmatpush1.bf16.msra.mxu0 %v4952
        %5054 = vmatprep.subr.bf16.mxu0 %v4949
        %5055 = vmatpush1.bf16.msra.mxu0 %v4948
        %5056 = vmatprep.subr.bf16.mxu0 %v4945
        %5057 = vmatpush1.bf16.msra.mxu0 %v4944
        %5058 = vmatprep.subr.bf16.mxu0 %v4941
        %5059 = vmatpush1.bf16.msra.mxu0 %v4940
        %5060 = vmatprep.subr.bf16.mxu0 %v4937
        %5061 = vmatpush1.bf16.msra.mxu0 %v4936
        %5062 = vmatprep.subr.bf16.mxu0 %v4933
        %5063 = vmatpush1.bf16.msra.mxu0 %v4932
        %5064 = vmatprep.subr.bf16.mxu0 %v4929
        %5065 = vmatpush1.bf16.msra.mxu0 %v4928
        %5066 = vmatprep.subr.bf16.mxu0 %v4925
        %5067 = vmatpush1.bf16.msra.mxu0 %v4924
        %5068 = vmatprep.subr.bf16.mxu0 %v4985
        %5069 = vmatpush2.bf16.msra.mxu0 %v4984
        %5070 = vmatprep.subr.bf16.mxu0 %v4981
        %5071 = vmatpush2.bf16.msra.mxu0 %v4980
        %5072 = vmatprep.subr.bf16.mxu0 %v4977
        %5073 = vmatpush2.bf16.msra.mxu0 %v4976
        %5074 = vmatprep.subr.bf16.mxu0 %v4973
        %5075 = vmatpush2.bf16.msra.mxu0 %v4972
        %5076 = vmatprep.subr.bf16.mxu0 %v4969
        %5077 = vmatpush2.bf16.msra.mxu0 %v4968
        %5078 = vmatprep.subr.bf16.mxu0 %v4965
        %5079 = vmatpush2.bf16.msra.mxu0 %v4964
        %5080 = vmatprep.subr.bf16.mxu0 %v4961
        %5081 = vmatpush2.bf16.msra.mxu0 %v4960
        %5082 = vmatprep.subr.bf16.mxu0 %v4957
        %5083 = vmatpush2.bf16.msra.mxu0 %v4956
        %5084 = vmatprep.mubr.bf16.mxu0 %v4653
        %5085 = vmatmul.mubr.bf16.gmra.mxu0 %v4652
        %v5086 = vpop.f32.mrf.mxu0
        %v5087 = vadd.f32 0.0, %v5086
        %v5088 = vpop.f32.mrf.mxu0
        %v5089 = vadd.f32 0.0, %v5088
        %v5090 = vpop.f32.mrf.mxu0
        %v5091 = vadd.f32 0.0, %v5090
        %v5092 = vpop.f32.mrf.mxu0
        %v5093 = vadd.f32 0.0, %v5092
        %5094 = vmatprep.mubr.bf16.mxu0 %v4655
        %5095 = vmatmul.mubr.bf16.gmra.mxu0 %v4654
        %v5096 = vpop.f32.mrf.mxu0
        %v5097 = vadd.f32 0.0, %v5096
        %v5098 = vpop.f32.mrf.mxu0
        %v5099 = vadd.f32 0.0, %v5098
        %v5100 = vpop.f32.mrf.mxu0
        %v5101 = vadd.f32 0.0, %v5100
        %v5102 = vpop.f32.mrf.mxu0
        %v5103 = vadd.f32 0.0, %v5102
        %5104 = vmatprep.mubr.bf16.mxu0 %v4657
        %5105 = vmatmul.mubr.bf16.gmra.mxu0 %v4656
        %v5106 = vpop.f32.mrf.mxu0
        %v5107 = vadd.f32 0.0, %v5106
        %v5108 = vpop.f32.mrf.mxu0
        %v5109 = vadd.f32 0.0, %v5108
        %v5110 = vpop.f32.mrf.mxu0
        %v5111 = vadd.f32 0.0, %v5110
        %v5112 = vpop.f32.mrf.mxu0
        %v5113 = vadd.f32 0.0, %v5112
        %5114 = vmatprep.mubr.bf16.mxu0 %v4659
        %5115 = vmatmul.mubr.bf16.gmra.mxu0 %v4658
        %v5116 = vpop.f32.mrf.mxu0
        %v5117 = vadd.f32 0.0, %v5116
        %v5118 = vpop.f32.mrf.mxu0
        %v5119 = vadd.f32 0.0, %v5118
        %v5120 = vpop.f32.mrf.mxu0
        %v5121 = vadd.f32 0.0, %v5120
        %v5122 = vpop.f32.mrf.mxu0
        %v5123 = vadd.f32 0.0, %v5122
        %5124 = vmatprep.mubr.bf16.mxu0 %v4661
        %5125 = vmatmul.mubr.bf16.gmra.mxu0 %v4660
        %v5126 = vpop.f32.mrf.mxu0
        %v5127 = vadd.f32 0.0, %v5126
        %v5128 = vpop.f32.mrf.mxu0
        %v5129 = vadd.f32 0.0, %v5128
        %v5130 = vpop.f32.mrf.mxu0
        %v5131 = vadd.f32 0.0, %v5130
        %v5132 = vpop.f32.mrf.mxu0
        %v5133 = vadd.f32 0.0, %v5132
        %5134 = vmatprep.mubr.bf16.mxu0 %v4663
        %5135 = vmatmul.mubr.bf16.gmra.mxu0 %v4662
        %v5136 = vpop.f32.mrf.mxu0
        %v5137 = vadd.f32 0.0, %v5136
        %v5138 = vpop.f32.mrf.mxu0
        %v5139 = vadd.f32 0.0, %v5138
        %v5140 = vpop.f32.mrf.mxu0
        %v5141 = vadd.f32 0.0, %v5140
        %v5142 = vpop.f32.mrf.mxu0
        %v5143 = vadd.f32 0.0, %v5142
        %5144 = vmatprep.mubr.bf16.mxu0 %v4665
        %5145 = vmatmul.mubr.bf16.gmra.mxu0 %v4664
        %v5146 = vpop.f32.mrf.mxu0
        %v5147 = vadd.f32 0.0, %v5146
        %v5148 = vpop.f32.mrf.mxu0
        %v5149 = vadd.f32 0.0, %v5148
        %v5150 = vpop.f32.mrf.mxu0
        %v5151 = vadd.f32 0.0, %v5150
        %v5152 = vpop.f32.mrf.mxu0
        %v5153 = vadd.f32 0.0, %v5152
        %5154 = vmatprep.mubr.bf16.mxu0 %v4667
        %5155 = vmatmul.mubr.bf16.gmra.mxu0 %v4666
        %v5156 = vpop.f32.mrf.mxu0
        %v5157 = vadd.f32 0.0, %v5156
        %v5158 = vpop.f32.mrf.mxu0
        %v5159 = vadd.f32 0.0, %v5158
        %v5160 = vpop.f32.mrf.mxu0
        %v5161 = vadd.f32 0.0, %v5160
        %v5162 = vpop.f32.mrf.mxu0
        %v5163 = vadd.f32 0.0, %v5162
        %5164 = vdwg.mxu0
        %5165 = vmatprep.subr.bf16.mxu0 %v4955
        %5166 = vmatpush1.bf16.msra.mxu0 %v4954
        %5167 = vmatprep.subr.bf16.mxu0 %v4951
        %5168 = vmatpush1.bf16.msra.mxu0 %v4950
        %5169 = vmatprep.subr.bf16.mxu0 %v4947
        %5170 = vmatpush1.bf16.msra.mxu0 %v4946
        %5171 = vmatprep.subr.bf16.mxu0 %v4943
        %5172 = vmatpush1.bf16.msra.mxu0 %v4942
        %5173 = vmatprep.subr.bf16.mxu0 %v4939
        %5174 = vmatpush1.bf16.msra.mxu0 %v4938
        %5175 = vmatprep.subr.bf16.mxu0 %v4935
        %5176 = vmatpush1.bf16.msra.mxu0 %v4934
        %5177 = vmatprep.subr.bf16.mxu0 %v4931
        %5178 = vmatpush1.bf16.msra.mxu0 %v4930
        %5179 = vmatprep.subr.bf16.mxu0 %v4927
        %5180 = vmatpush1.bf16.msra.mxu0 %v4926
        %5181 = vmatprep.subr.bf16.mxu0 %v4987
        %5182 = vmatpush2.bf16.msra.mxu0 %v4986
        %5183 = vmatprep.subr.bf16.mxu0 %v4983
        %5184 = vmatpush2.bf16.msra.mxu0 %v4982
        %5185 = vmatprep.subr.bf16.mxu0 %v4979
        %5186 = vmatpush2.bf16.msra.mxu0 %v4978
        %5187 = vmatprep.subr.bf16.mxu0 %v4975
        %5188 = vmatpush2.bf16.msra.mxu0 %v4974
        %5189 = vmatprep.subr.bf16.mxu0 %v4971
        %5190 = vmatpush2.bf16.msra.mxu0 %v4970
        %5191 = vmatprep.subr.bf16.mxu0 %v4967
        %5192 = vmatpush2.bf16.msra.mxu0 %v4966
        %5193 = vmatprep.subr.bf16.mxu0 %v4963
        %5194 = vmatpush2.bf16.msra.mxu0 %v4962
        %5195 = vmatprep.subr.bf16.mxu0 %v4959
        %5196 = vmatpush2.bf16.msra.mxu0 %v4958
        %5197 = vmatprep.mubr.bf16.mxu0 %v4653
        %5198 = vmatmul.mubr.bf16.gmra.mxu0 %v4652
        %v5199 = vpop.f32.mrf.mxu0
        %v5200 = vadd.f32 0.0, %v5199
        %v5201 = vpop.f32.mrf.mxu0
        %v5202 = vadd.f32 0.0, %v5201
        %v5203 = vpop.f32.mrf.mxu0
        %v5204 = vadd.f32 0.0, %v5203
        %v5205 = vpop.f32.mrf.mxu0
        %v5206 = vadd.f32 0.0, %v5205
        %5207 = vmatprep.mubr.bf16.mxu0 %v4655
        %5208 = vmatmul.mubr.bf16.gmra.mxu0 %v4654
        %v5209 = vpop.f32.mrf.mxu0
        %v5210 = vadd.f32 0.0, %v5209
        %v5211 = vpop.f32.mrf.mxu0
        %v5212 = vadd.f32 0.0, %v5211
        %v5213 = vpop.f32.mrf.mxu0
        %v5214 = vadd.f32 0.0, %v5213
        %v5215 = vpop.f32.mrf.mxu0
        %v5216 = vadd.f32 0.0, %v5215
        %5217 = vmatprep.mubr.bf16.mxu0 %v4657
        %5218 = vmatmul.mubr.bf16.gmra.mxu0 %v4656
        %v5219 = vpop.f32.mrf.mxu0
        %v5220 = vadd.f32 0.0, %v5219
        %v5221 = vpop.f32.mrf.mxu0
        %v5222 = vadd.f32 0.0, %v5221
        %v5223 = vpop.f32.mrf.mxu0
        %v5224 = vadd.f32 0.0, %v5223
        %v5225 = vpop.f32.mrf.mxu0
        %v5226 = vadd.f32 0.0, %v5225
        %5227 = vmatprep.mubr.bf16.mxu0 %v4659
        %5228 = vmatmul.mubr.bf16.gmra.mxu0 %v4658
        %v5229 = vpop.f32.mrf.mxu0
        %v5230 = vadd.f32 0.0, %v5229
        %v5231 = vpop.f32.mrf.mxu0
        %v5232 = vadd.f32 0.0, %v5231
        %v5233 = vpop.f32.mrf.mxu0
        %v5234 = vadd.f32 0.0, %v5233
        %v5235 = vpop.f32.mrf.mxu0
        %v5236 = vadd.f32 0.0, %v5235
        %5237 = vmatprep.mubr.bf16.mxu0 %v4661
        %5238 = vmatmul.mubr.bf16.gmra.mxu0 %v4660
        %v5239 = vpop.f32.mrf.mxu0
        %v5240 = vadd.f32 0.0, %v5239
        %v5241 = vpop.f32.mrf.mxu0
        %v5242 = vadd.f32 0.0, %v5241
        %v5243 = vpop.f32.mrf.mxu0
        %v5244 = vadd.f32 0.0, %v5243
        %v5245 = vpop.f32.mrf.mxu0
        %v5246 = vadd.f32 0.0, %v5245
        %5247 = vmatprep.mubr.bf16.mxu0 %v4663
        %5248 = vmatmul.mubr.bf16.gmra.mxu0 %v4662
        %v5249 = vpop.f32.mrf.mxu0
        %v5250 = vadd.f32 0.0, %v5249
        %v5251 = vpop.f32.mrf.mxu0
        %v5252 = vadd.f32 0.0, %v5251
        %v5253 = vpop.f32.mrf.mxu0
        %v5254 = vadd.f32 0.0, %v5253
        %v5255 = vpop.f32.mrf.mxu0
        %v5256 = vadd.f32 0.0, %v5255
        %5257 = vmatprep.mubr.bf16.mxu0 %v4665
        %5258 = vmatmul.mubr.bf16.gmra.mxu0 %v4664
        %v5259 = vpop.f32.mrf.mxu0
        %v5260 = vadd.f32 0.0, %v5259
        %v5261 = vpop.f32.mrf.mxu0
        %v5262 = vadd.f32 0.0, %v5261
        %v5263 = vpop.f32.mrf.mxu0
        %v5264 = vadd.f32 0.0, %v5263
        %v5265 = vpop.f32.mrf.mxu0
        %v5266 = vadd.f32 0.0, %v5265
        %5267 = vmatprep.mubr.bf16.mxu0 %v4667
        %5268 = vmatmul.mubr.bf16.gmra.mxu0 %v4666
        %v5269 = vpop.f32.mrf.mxu0
        %v5270 = vadd.f32 0.0, %v5269
        %v5271 = vpop.f32.mrf.mxu0
        %v5272 = vadd.f32 0.0, %v5271
        %v5273 = vpop.f32.mrf.mxu0
        %v5274 = vadd.f32 0.0, %v5273
        %v5275 = vpop.f32.mrf.mxu0
        %v5276 = vadd.f32 0.0, %v5275
        %5277 = vdwg.mxu0
        %v5278 = vld [vmem:[%s746] sm:$0xff]
        %v5279 = vld [vmem:[%s746 + $0x8] sm:$0xff]
        %v5280 = vld [vmem:[%s746 + $0x10] sm:$0xff]
        %v5281 = vld [vmem:[%s746 + $0x18] sm:$0xff]
        %v5282 = vld [vmem:[%s746 + $0x20] sm:$0xff]
        %v5283 = vld [vmem:[%s746 + $0x28] sm:$0xff]
        %v5284 = vld [vmem:[%s746 + $0x30] sm:$0xff]
        %v5285 = vld [vmem:[%s746 + $0x38] sm:$0xff]
        %v5286 = vld [vmem:[%s746 + $0x40] sm:$0xff]
        %v5287 = vld [vmem:[%s746 + $0x48] sm:$0xff]
        %v5288 = vld [vmem:[%s746 + $0x50] sm:$0xff]
        %v5289 = vld [vmem:[%s746 + $0x58] sm:$0xff]
        %v5290 = vld [vmem:[%s746 + $0x60] sm:$0xff]
        %v5291 = vld [vmem:[%s746 + $0x68] sm:$0xff]
        %v5292 = vld [vmem:[%s746 + $0x70] sm:$0xff]
        %v5293 = vld [vmem:[%s746 + $0x78] sm:$0xff]
        %v5294 = vld [vmem:[%s746 + $0x80] sm:$0xff]
        %v5295 = vld [vmem:[%s746 + $0x88] sm:$0xff]
        %v5296 = vld [vmem:[%s746 + $0x90] sm:$0xff]
        %v5297 = vld [vmem:[%s746 + $0x98] sm:$0xff]
        %v5298 = vld [vmem:[%s746 + $0xa0] sm:$0xff]
        %v5299 = vld [vmem:[%s746 + $0xa8] sm:$0xff]
        %v5300 = vld [vmem:[%s746 + $0xb0] sm:$0xff]
        %v5301 = vld [vmem:[%s746 + $0xb8] sm:$0xff]
        %v5302 = vld [vmem:[%s746 + $0xc0] sm:$0xff]
        %v5303 = vld [vmem:[%s746 + $0xc8] sm:$0xff]
        %v5304 = vld [vmem:[%s746 + $0xd0] sm:$0xff]
        %v5305 = vld [vmem:[%s746 + $0xd8] sm:$0xff]
        %v5306 = vld [vmem:[%s746 + $0xe0] sm:$0xff]
        %v5307 = vld [vmem:[%s746 + $0xe8] sm:$0xff]
        %v5308 = vld [vmem:[%s746 + $0xf0] sm:$0xff]
        %v5309 = vld [vmem:[%s746 + $0xf8] sm:$0xff]
        %v5310 = vld [vmem:[%s746 + $0x100] sm:$0xff]
        %v5311 = vld [vmem:[%s746 + $0x108] sm:$0xff]
        %v5312 = vld [vmem:[%s746 + $0x110] sm:$0xff]
        %v5313 = vld [vmem:[%s746 + $0x118] sm:$0xff]
        %v5314 = vld [vmem:[%s746 + $0x120] sm:$0xff]
        %v5315 = vld [vmem:[%s746 + $0x128] sm:$0xff]
        %v5316 = vld [vmem:[%s746 + $0x130] sm:$0xff]
        %v5317 = vld [vmem:[%s746 + $0x138] sm:$0xff]
        %v5318 = vld [vmem:[%s746 + $0x140] sm:$0xff]
        %v5319 = vld [vmem:[%s746 + $0x148] sm:$0xff]
        %v5320 = vld [vmem:[%s746 + $0x150] sm:$0xff]
        %v5321 = vld [vmem:[%s746 + $0x158] sm:$0xff]
        %v5322 = vld [vmem:[%s746 + $0x160] sm:$0xff]
        %v5323 = vld [vmem:[%s746 + $0x168] sm:$0xff]
        %v5324 = vld [vmem:[%s746 + $0x170] sm:$0xff]
        %v5325 = vld [vmem:[%s746 + $0x178] sm:$0xff]
        %v5326 = vld [vmem:[%s746 + $0x180] sm:$0xff]
        %v5327 = vld [vmem:[%s746 + $0x188] sm:$0xff]
        %v5328 = vld [vmem:[%s746 + $0x190] sm:$0xff]
        %v5329 = vld [vmem:[%s746 + $0x198] sm:$0xff]
        %v5330 = vld [vmem:[%s746 + $0x1a0] sm:$0xff]
        %v5331 = vld [vmem:[%s746 + $0x1a8] sm:$0xff]
        %v5332 = vld [vmem:[%s746 + $0x1b0] sm:$0xff]
        %v5333 = vld [vmem:[%s746 + $0x1b8] sm:$0xff]
        %v5334 = vld [vmem:[%s746 + $0x1c0] sm:$0xff]
        %v5335 = vld [vmem:[%s746 + $0x1c8] sm:$0xff]
        %v5336 = vld [vmem:[%s746 + $0x1d0] sm:$0xff]
        %v5337 = vld [vmem:[%s746 + $0x1d8] sm:$0xff]
        %v5338 = vld [vmem:[%s746 + $0x1e0] sm:$0xff]
        %v5339 = vld [vmem:[%s746 + $0x1e8] sm:$0xff]
        %v5340 = vld [vmem:[%s746 + $0x1f0] sm:$0xff]
        %v5341 = vld [vmem:[%s746 + $0x1f8] sm:$0xff]
        %v5406 = vunpack.c.l.b16 %v5278
        %v5407 = vunpack.c.h.b16 %v5278
        %v5408 = vunpack.c.l.b16 %v5279
        %v5409 = vunpack.c.h.b16 %v5279
        %v5410 = vunpack.c.l.b16 %v5280
        %v5411 = vunpack.c.h.b16 %v5280
        %v5412 = vunpack.c.l.b16 %v5281
        %v5413 = vunpack.c.h.b16 %v5281
        %v5414 = vunpack.c.l.b16 %v5282
        %v5415 = vunpack.c.h.b16 %v5282
        %v5416 = vunpack.c.l.b16 %v5283
        %v5417 = vunpack.c.h.b16 %v5283
        %v5418 = vunpack.c.l.b16 %v5284
        %v5419 = vunpack.c.h.b16 %v5284
        %v5420 = vunpack.c.l.b16 %v5285
        %v5421 = vunpack.c.h.b16 %v5285
        %v5422 = vunpack.c.l.b16 %v5286
        %v5423 = vunpack.c.h.b16 %v5286
        %v5424 = vunpack.c.l.b16 %v5287
        %v5425 = vunpack.c.h.b16 %v5287
        %v5426 = vunpack.c.l.b16 %v5288
        %v5427 = vunpack.c.h.b16 %v5288
        %v5428 = vunpack.c.l.b16 %v5289
        %v5429 = vunpack.c.h.b16 %v5289
        %v5430 = vunpack.c.l.b16 %v5290
        %v5431 = vunpack.c.h.b16 %v5290
        %v5432 = vunpack.c.l.b16 %v5291
        %v5433 = vunpack.c.h.b16 %v5291
        %v5434 = vunpack.c.l.b16 %v5292
        %v5435 = vunpack.c.h.b16 %v5292
        %v5436 = vunpack.c.l.b16 %v5293
        %v5437 = vunpack.c.h.b16 %v5293
        %v5438 = vunpack.c.l.b16 %v5294
        %v5439 = vunpack.c.h.b16 %v5294
        %v5440 = vunpack.c.l.b16 %v5295
        %v5441 = vunpack.c.h.b16 %v5295
        %v5442 = vunpack.c.l.b16 %v5296
        %v5443 = vunpack.c.h.b16 %v5296
        %v5444 = vunpack.c.l.b16 %v5297
        %v5445 = vunpack.c.h.b16 %v5297
        %v5446 = vunpack.c.l.b16 %v5298
        %v5447 = vunpack.c.h.b16 %v5298
        %v5448 = vunpack.c.l.b16 %v5299
        %v5449 = vunpack.c.h.b16 %v5299
        %v5450 = vunpack.c.l.b16 %v5300
        %v5451 = vunpack.c.h.b16 %v5300
        %v5452 = vunpack.c.l.b16 %v5301
        %v5453 = vunpack.c.h.b16 %v5301
        %v5454 = vunpack.c.l.b16 %v5302
        %v5455 = vunpack.c.h.b16 %v5302
        %v5456 = vunpack.c.l.b16 %v5303
        %v5457 = vunpack.c.h.b16 %v5303
        %v5458 = vunpack.c.l.b16 %v5304
        %v5459 = vunpack.c.h.b16 %v5304
        %v5460 = vunpack.c.l.b16 %v5305
        %v5461 = vunpack.c.h.b16 %v5305
        %v5462 = vunpack.c.l.b16 %v5306
        %v5463 = vunpack.c.h.b16 %v5306
        %v5464 = vunpack.c.l.b16 %v5307
        %v5465 = vunpack.c.h.b16 %v5307
        %v5466 = vunpack.c.l.b16 %v5308
        %v5467 = vunpack.c.h.b16 %v5308
        %v5468 = vunpack.c.l.b16 %v5309
        %v5469 = vunpack.c.h.b16 %v5309
        %v5470 = vunpack.c.l.b16 %v5310
        %v5471 = vunpack.c.h.b16 %v5310
        %v5472 = vunpack.c.l.b16 %v5311
        %v5473 = vunpack.c.h.b16 %v5311
        %v5474 = vunpack.c.l.b16 %v5312
        %v5475 = vunpack.c.h.b16 %v5312
        %v5476 = vunpack.c.l.b16 %v5313
        %v5477 = vunpack.c.h.b16 %v5313
        %v5478 = vunpack.c.l.b16 %v5314
        %v5479 = vunpack.c.h.b16 %v5314
        %v5480 = vunpack.c.l.b16 %v5315
        %v5481 = vunpack.c.h.b16 %v5315
        %v5482 = vunpack.c.l.b16 %v5316
        %v5483 = vunpack.c.h.b16 %v5316
        %v5484 = vunpack.c.l.b16 %v5317
        %v5485 = vunpack.c.h.b16 %v5317
        %v5486 = vunpack.c.l.b16 %v5318
        %v5487 = vunpack.c.h.b16 %v5318
        %v5488 = vunpack.c.l.b16 %v5319
        %v5489 = vunpack.c.h.b16 %v5319
        %v5490 = vunpack.c.l.b16 %v5320
        %v5491 = vunpack.c.h.b16 %v5320
        %v5492 = vunpack.c.l.b16 %v5321
        %v5493 = vunpack.c.h.b16 %v5321
        %v5494 = vunpack.c.l.b16 %v5322
        %v5495 = vunpack.c.h.b16 %v5322
        %v5496 = vunpack.c.l.b16 %v5323
        %v5497 = vunpack.c.h.b16 %v5323
        %v5498 = vunpack.c.l.b16 %v5324
        %v5499 = vunpack.c.h.b16 %v5324
        %v5500 = vunpack.c.l.b16 %v5325
        %v5501 = vunpack.c.h.b16 %v5325
        %v5502 = vunpack.c.l.b16 %v5326
        %v5503 = vunpack.c.h.b16 %v5326
        %v5504 = vunpack.c.l.b16 %v5327
        %v5505 = vunpack.c.h.b16 %v5327
        %v5506 = vunpack.c.l.b16 %v5328
        %v5507 = vunpack.c.h.b16 %v5328
        %v5508 = vunpack.c.l.b16 %v5329
        %v5509 = vunpack.c.h.b16 %v5329
        %v5510 = vunpack.c.l.b16 %v5330
        %v5511 = vunpack.c.h.b16 %v5330
        %v5512 = vunpack.c.l.b16 %v5331
        %v5513 = vunpack.c.h.b16 %v5331
        %v5514 = vunpack.c.l.b16 %v5332
        %v5515 = vunpack.c.h.b16 %v5332
        %v5516 = vunpack.c.l.b16 %v5333
        %v5517 = vunpack.c.h.b16 %v5333
        %v5518 = vunpack.c.l.b16 %v5334
        %v5519 = vunpack.c.h.b16 %v5334
        %v5520 = vunpack.c.l.b16 %v5335
        %v5521 = vunpack.c.h.b16 %v5335
        %v5522 = vunpack.c.l.b16 %v5336
        %v5523 = vunpack.c.h.b16 %v5336
        %v5524 = vunpack.c.l.b16 %v5337
        %v5525 = vunpack.c.h.b16 %v5337
        %v5526 = vunpack.c.l.b16 %v5338
        %v5527 = vunpack.c.h.b16 %v5338
        %v5528 = vunpack.c.l.b16 %v5339
        %v5529 = vunpack.c.h.b16 %v5339
        %v5530 = vunpack.c.l.b16 %v5340
        %v5531 = vunpack.c.h.b16 %v5340
        %v5532 = vunpack.c.l.b16 %v5341
        %v5533 = vunpack.c.h.b16 %v5341
        %v5534 = vpack.c.b16 %v5410, %v5406
        %v5535 = vpack.c.b16 %v5411, %v5407
        %v5536 = vpack.c.b16 %v5412, %v5408
        %v5537 = vpack.c.b16 %v5413, %v5409
        %v5538 = vpack.c.b16 %v5418, %v5414
        %v5539 = vpack.c.b16 %v5419, %v5415
        %v5540 = vpack.c.b16 %v5420, %v5416
        %v5541 = vpack.c.b16 %v5421, %v5417
        %v5542 = vpack.c.b16 %v5426, %v5422
        %v5543 = vpack.c.b16 %v5427, %v5423
        %v5544 = vpack.c.b16 %v5428, %v5424
        %v5545 = vpack.c.b16 %v5429, %v5425
        %v5546 = vpack.c.b16 %v5434, %v5430
        %v5547 = vpack.c.b16 %v5435, %v5431
        %v5548 = vpack.c.b16 %v5436, %v5432
        %v5549 = vpack.c.b16 %v5437, %v5433
        %v5550 = vpack.c.b16 %v5442, %v5438
        %v5551 = vpack.c.b16 %v5443, %v5439
        %v5552 = vpack.c.b16 %v5444, %v5440
        %v5553 = vpack.c.b16 %v5445, %v5441
        %v5554 = vpack.c.b16 %v5450, %v5446
        %v5555 = vpack.c.b16 %v5451, %v5447
        %v5556 = vpack.c.b16 %v5452, %v5448
        %v5557 = vpack.c.b16 %v5453, %v5449
        %v5558 = vpack.c.b16 %v5458, %v5454
        %v5559 = vpack.c.b16 %v5459, %v5455
        %v5560 = vpack.c.b16 %v5460, %v5456
        %v5561 = vpack.c.b16 %v5461, %v5457
        %v5562 = vpack.c.b16 %v5466, %v5462
        %v5563 = vpack.c.b16 %v5467, %v5463
        %v5564 = vpack.c.b16 %v5468, %v5464
        %v5565 = vpack.c.b16 %v5469, %v5465
        %v5566 = vpack.c.b16 %v5474, %v5470
        %v5567 = vpack.c.b16 %v5475, %v5471
        %v5568 = vpack.c.b16 %v5476, %v5472
        %v5569 = vpack.c.b16 %v5477, %v5473
        %v5570 = vpack.c.b16 %v5482, %v5478
        %v5571 = vpack.c.b16 %v5483, %v5479
        %v5572 = vpack.c.b16 %v5484, %v5480
        %v5573 = vpack.c.b16 %v5485, %v5481
        %v5574 = vpack.c.b16 %v5490, %v5486
        %v5575 = vpack.c.b16 %v5491, %v5487
        %v5576 = vpack.c.b16 %v5492, %v5488
        %v5577 = vpack.c.b16 %v5493, %v5489
        %v5578 = vpack.c.b16 %v5498, %v5494
        %v5579 = vpack.c.b16 %v5499, %v5495
        %v5580 = vpack.c.b16 %v5500, %v5496
        %v5581 = vpack.c.b16 %v5501, %v5497
        %v5582 = vpack.c.b16 %v5506, %v5502
        %v5583 = vpack.c.b16 %v5507, %v5503
        %v5584 = vpack.c.b16 %v5508, %v5504
        %v5585 = vpack.c.b16 %v5509, %v5505
        %v5586 = vpack.c.b16 %v5514, %v5510
        %v5587 = vpack.c.b16 %v5515, %v5511
        %v5588 = vpack.c.b16 %v5516, %v5512
        %v5589 = vpack.c.b16 %v5517, %v5513
        %v5590 = vpack.c.b16 %v5522, %v5518
        %v5591 = vpack.c.b16 %v5523, %v5519
        %v5592 = vpack.c.b16 %v5524, %v5520
        %v5593 = vpack.c.b16 %v5525, %v5521
        %v5594 = vpack.c.b16 %v5530, %v5526
        %v5595 = vpack.c.b16 %v5531, %v5527
        %v5596 = vpack.c.b16 %v5532, %v5528
        %v5597 = vpack.c.b16 %v5533, %v5529
        %5662 = vmatprep.subr.bf16.mxu0 %v5563
        %5663 = vmatpush1.bf16.msra.mxu0 %v5562
        %5664 = vmatprep.subr.bf16.mxu0 %v5559
        %5665 = vmatpush1.bf16.msra.mxu0 %v5558
        %5666 = vmatprep.subr.bf16.mxu0 %v5555
        %5667 = vmatpush1.bf16.msra.mxu0 %v5554
        %5668 = vmatprep.subr.bf16.mxu0 %v5551
        %5669 = vmatpush1.bf16.msra.mxu0 %v5550
        %5670 = vmatprep.subr.bf16.mxu0 %v5547
        %5671 = vmatpush1.bf16.msra.mxu0 %v5546
        %5672 = vmatprep.subr.bf16.mxu0 %v5543
        %5673 = vmatpush1.bf16.msra.mxu0 %v5542
        %5674 = vmatprep.subr.bf16.mxu0 %v5539
        %5675 = vmatpush1.bf16.msra.mxu0 %v5538
        %5676 = vmatprep.subr.bf16.mxu0 %v5535
        %5677 = vmatpush1.bf16.msra.mxu0 %v5534
        %5678 = vmatprep.subr.bf16.mxu0 %v5595
        %5679 = vmatpush2.bf16.msra.mxu0 %v5594
        %5680 = vmatprep.subr.bf16.mxu0 %v5591
        %5681 = vmatpush2.bf16.msra.mxu0 %v5590
        %5682 = vmatprep.subr.bf16.mxu0 %v5587
        %5683 = vmatpush2.bf16.msra.mxu0 %v5586
        %5684 = vmatprep.subr.bf16.mxu0 %v5583
        %5685 = vmatpush2.bf16.msra.mxu0 %v5582
        %5686 = vmatprep.subr.bf16.mxu0 %v5579
        %5687 = vmatpush2.bf16.msra.mxu0 %v5578
        %5688 = vmatprep.subr.bf16.mxu0 %v5575
        %5689 = vmatpush2.bf16.msra.mxu0 %v5574
        %5690 = vmatprep.subr.bf16.mxu0 %v5571
        %5691 = vmatpush2.bf16.msra.mxu0 %v5570
        %5692 = vmatprep.subr.bf16.mxu0 %v5567
        %5693 = vmatpush2.bf16.msra.mxu0 %v5566
        %5694 = vmatprep.mubr.bf16.mxu0 %v4653
        %5695 = vmatmul.mubr.bf16.gmra.mxu0 %v4652
        %v5696 = vpop.f32.mrf.mxu0
        %v5697 = vadd.f32 0.0, %v5696
        %v5698 = vpop.f32.mrf.mxu0
        %v5699 = vadd.f32 0.0, %v5698
        %v5700 = vpop.f32.mrf.mxu0
        %v5701 = vadd.f32 0.0, %v5700
        %v5702 = vpop.f32.mrf.mxu0
        %v5703 = vadd.f32 0.0, %v5702
        %5704 = vmatprep.mubr.bf16.mxu0 %v4655
        %5705 = vmatmul.mubr.bf16.gmra.mxu0 %v4654
        %v5706 = vpop.f32.mrf.mxu0
        %v5707 = vadd.f32 0.0, %v5706
        %v5708 = vpop.f32.mrf.mxu0
        %v5709 = vadd.f32 0.0, %v5708
        %v5710 = vpop.f32.mrf.mxu0
        %v5711 = vadd.f32 0.0, %v5710
        %v5712 = vpop.f32.mrf.mxu0
        %v5713 = vadd.f32 0.0, %v5712
        %5714 = vmatprep.mubr.bf16.mxu0 %v4657
        %5715 = vmatmul.mubr.bf16.gmra.mxu0 %v4656
        %v5716 = vpop.f32.mrf.mxu0
        %v5717 = vadd.f32 0.0, %v5716
        %v5718 = vpop.f32.mrf.mxu0
        %v5719 = vadd.f32 0.0, %v5718
        %v5720 = vpop.f32.mrf.mxu0
        %v5721 = vadd.f32 0.0, %v5720
        %v5722 = vpop.f32.mrf.mxu0
        %v5723 = vadd.f32 0.0, %v5722
        %5724 = vmatprep.mubr.bf16.mxu0 %v4659
        %5725 = vmatmul.mubr.bf16.gmra.mxu0 %v4658
        %v5726 = vpop.f32.mrf.mxu0
        %v5727 = vadd.f32 0.0, %v5726
        %v5728 = vpop.f32.mrf.mxu0
        %v5729 = vadd.f32 0.0, %v5728
        %v5730 = vpop.f32.mrf.mxu0
        %v5731 = vadd.f32 0.0, %v5730
        %v5732 = vpop.f32.mrf.mxu0
        %v5733 = vadd.f32 0.0, %v5732
        %5734 = vmatprep.mubr.bf16.mxu0 %v4661
        %5735 = vmatmul.mubr.bf16.gmra.mxu0 %v4660
        %v5736 = vpop.f32.mrf.mxu0
        %v5737 = vadd.f32 0.0, %v5736
        %v5738 = vpop.f32.mrf.mxu0
        %v5739 = vadd.f32 0.0, %v5738
        %v5740 = vpop.f32.mrf.mxu0
        %v5741 = vadd.f32 0.0, %v5740
        %v5742 = vpop.f32.mrf.mxu0
        %v5743 = vadd.f32 0.0, %v5742
        %5744 = vmatprep.mubr.bf16.mxu0 %v4663
        %5745 = vmatmul.mubr.bf16.gmra.mxu0 %v4662
        %v5746 = vpop.f32.mrf.mxu0
        %v5747 = vadd.f32 0.0, %v5746
        %v5748 = vpop.f32.mrf.mxu0
        %v5749 = vadd.f32 0.0, %v5748
        %v5750 = vpop.f32.mrf.mxu0
        %v5751 = vadd.f32 0.0, %v5750
        %v5752 = vpop.f32.mrf.mxu0
        %v5753 = vadd.f32 0.0, %v5752
        %5754 = vmatprep.mubr.bf16.mxu0 %v4665
        %5755 = vmatmul.mubr.bf16.gmra.mxu0 %v4664
        %v5756 = vpop.f32.mrf.mxu0
        %v5757 = vadd.f32 0.0, %v5756
        %v5758 = vpop.f32.mrf.mxu0
        %v5759 = vadd.f32 0.0, %v5758
        %v5760 = vpop.f32.mrf.mxu0
        %v5761 = vadd.f32 0.0, %v5760
        %v5762 = vpop.f32.mrf.mxu0
        %v5763 = vadd.f32 0.0, %v5762
        %5764 = vmatprep.mubr.bf16.mxu0 %v4667
        %5765 = vmatmul.mubr.bf16.gmra.mxu0 %v4666
        %v5766 = vpop.f32.mrf.mxu0
        %v5767 = vadd.f32 0.0, %v5766
        %v5768 = vpop.f32.mrf.mxu0
        %v5769 = vadd.f32 0.0, %v5768
        %v5770 = vpop.f32.mrf.mxu0
        %v5771 = vadd.f32 0.0, %v5770
        %v5772 = vpop.f32.mrf.mxu0
        %v5773 = vadd.f32 0.0, %v5772
        %5774 = vdwg.mxu0
        %5775 = vmatprep.subr.bf16.mxu0 %v5565
        %5776 = vmatpush1.bf16.msra.mxu0 %v5564
        %5777 = vmatprep.subr.bf16.mxu0 %v5561
        %5778 = vmatpush1.bf16.msra.mxu0 %v5560
        %5779 = vmatprep.subr.bf16.mxu0 %v5557
        %5780 = vmatpush1.bf16.msra.mxu0 %v5556
        %5781 = vmatprep.subr.bf16.mxu0 %v5553
        %5782 = vmatpush1.bf16.msra.mxu0 %v5552
        %5783 = vmatprep.subr.bf16.mxu0 %v5549
        %5784 = vmatpush1.bf16.msra.mxu0 %v5548
        %5785 = vmatprep.subr.bf16.mxu0 %v5545
        %5786 = vmatpush1.bf16.msra.mxu0 %v5544
        %5787 = vmatprep.subr.bf16.mxu0 %v5541
        %5788 = vmatpush1.bf16.msra.mxu0 %v5540
        %5789 = vmatprep.subr.bf16.mxu0 %v5537
        %5790 = vmatpush1.bf16.msra.mxu0 %v5536
        %5791 = vmatprep.subr.bf16.mxu0 %v5597
        %5792 = vmatpush2.bf16.msra.mxu0 %v5596
        %5793 = vmatprep.subr.bf16.mxu0 %v5593
        %5794 = vmatpush2.bf16.msra.mxu0 %v5592
        %5795 = vmatprep.subr.bf16.mxu0 %v5589
        %5796 = vmatpush2.bf16.msra.mxu0 %v5588
        %5797 = vmatprep.subr.bf16.mxu0 %v5585
        %5798 = vmatpush2.bf16.msra.mxu0 %v5584
        %5799 = vmatprep.subr.bf16.mxu0 %v5581
        %5800 = vmatpush2.bf16.msra.mxu0 %v5580
        %5801 = vmatprep.subr.bf16.mxu0 %v5577
        %5802 = vmatpush2.bf16.msra.mxu0 %v5576
        %5803 = vmatprep.subr.bf16.mxu0 %v5573
        %5804 = vmatpush2.bf16.msra.mxu0 %v5572
        %5805 = vmatprep.subr.bf16.mxu0 %v5569
        %5806 = vmatpush2.bf16.msra.mxu0 %v5568
        %5807 = vmatprep.mubr.bf16.mxu0 %v4653
        %5808 = vmatmul.mubr.bf16.gmra.mxu0 %v4652
        %v5809 = vpop.f32.mrf.mxu0
        %v5810 = vadd.f32 0.0, %v5809
        %v5811 = vpop.f32.mrf.mxu0
        %v5812 = vadd.f32 0.0, %v5811
        %v5813 = vpop.f32.mrf.mxu0
        %v5814 = vadd.f32 0.0, %v5813
        %v5815 = vpop.f32.mrf.mxu0
        %v5816 = vadd.f32 0.0, %v5815
        %5817 = vmatprep.mubr.bf16.mxu0 %v4655
        %5818 = vmatmul.mubr.bf16.gmra.mxu0 %v4654
        %v5819 = vpop.f32.mrf.mxu0
        %v5820 = vadd.f32 0.0, %v5819
        %v5821 = vpop.f32.mrf.mxu0
        %v5822 = vadd.f32 0.0, %v5821
        %v5823 = vpop.f32.mrf.mxu0
        %v5824 = vadd.f32 0.0, %v5823
        %v5825 = vpop.f32.mrf.mxu0
        %v5826 = vadd.f32 0.0, %v5825
        %5827 = vmatprep.mubr.bf16.mxu0 %v4657
        %5828 = vmatmul.mubr.bf16.gmra.mxu0 %v4656
        %v5829 = vpop.f32.mrf.mxu0
        %v5830 = vadd.f32 0.0, %v5829
        %v5831 = vpop.f32.mrf.mxu0
        %v5832 = vadd.f32 0.0, %v5831
        %v5833 = vpop.f32.mrf.mxu0
        %v5834 = vadd.f32 0.0, %v5833
        %v5835 = vpop.f32.mrf.mxu0
        %v5836 = vadd.f32 0.0, %v5835
        %5837 = vmatprep.mubr.bf16.mxu0 %v4659
        %5838 = vmatmul.mubr.bf16.gmra.mxu0 %v4658
        %v5839 = vpop.f32.mrf.mxu0
        %v5840 = vadd.f32 0.0, %v5839
        %v5841 = vpop.f32.mrf.mxu0
        %v5842 = vadd.f32 0.0, %v5841
        %v5843 = vpop.f32.mrf.mxu0
        %v5844 = vadd.f32 0.0, %v5843
        %v5845 = vpop.f32.mrf.mxu0
        %v5846 = vadd.f32 0.0, %v5845
        %5847 = vmatprep.mubr.bf16.mxu0 %v4661
        %5848 = vmatmul.mubr.bf16.gmra.mxu0 %v4660
        %v5849 = vpop.f32.mrf.mxu0
        %v5850 = vadd.f32 0.0, %v5849
        %v5851 = vpop.f32.mrf.mxu0
        %v5852 = vadd.f32 0.0, %v5851
        %v5853 = vpop.f32.mrf.mxu0
        %v5854 = vadd.f32 0.0, %v5853
        %v5855 = vpop.f32.mrf.mxu0
        %v5856 = vadd.f32 0.0, %v5855
        %5857 = vmatprep.mubr.bf16.mxu0 %v4663
        %5858 = vmatmul.mubr.bf16.gmra.mxu0 %v4662
        %v5859 = vpop.f32.mrf.mxu0
        %v5860 = vadd.f32 0.0, %v5859
        %v5861 = vpop.f32.mrf.mxu0
        %v5862 = vadd.f32 0.0, %v5861
        %v5863 = vpop.f32.mrf.mxu0
        %v5864 = vadd.f32 0.0, %v5863
        %v5865 = vpop.f32.mrf.mxu0
        %v5866 = vadd.f32 0.0, %v5865
        %5867 = vmatprep.mubr.bf16.mxu0 %v4665
        %5868 = vmatmul.mubr.bf16.gmra.mxu0 %v4664
        %v5869 = vpop.f32.mrf.mxu0
        %v5870 = vadd.f32 0.0, %v5869
        %v5871 = vpop.f32.mrf.mxu0
        %v5872 = vadd.f32 0.0, %v5871
        %v5873 = vpop.f32.mrf.mxu0
        %v5874 = vadd.f32 0.0, %v5873
        %v5875 = vpop.f32.mrf.mxu0
        %v5876 = vadd.f32 0.0, %v5875
        %5877 = vmatprep.mubr.bf16.mxu0 %v4667
        %5878 = vmatmul.mubr.bf16.gmra.mxu0 %v4666
        %v5879 = vpop.f32.mrf.mxu0
        %v5880 = vadd.f32 0.0, %v5879
        %v5881 = vpop.f32.mrf.mxu0
        %v5882 = vadd.f32 0.0, %v5881
        %v5883 = vpop.f32.mrf.mxu0
        %v5884 = vadd.f32 0.0, %v5883
        %v5885 = vpop.f32.mrf.mxu0
        %v5886 = vadd.f32 0.0, %v5885
        %5887 = vdwg.mxu0
        %v5888 = vsub.f32 0.0, %v5087
        %v5889 = vsub.f32 0.0, %v5089
        %v5890 = vsub.f32 0.0, %v5200
        %v5891 = vsub.f32 0.0, %v5202
        %v5892 = vsub.f32 0.0, %v5091
        %v5893 = vsub.f32 0.0, %v5093
        %v5894 = vsub.f32 0.0, %v5204
        %v5895 = vsub.f32 0.0, %v5206
        %v5896 = vsub.f32 0.0, %v5097
        %v5897 = vsub.f32 0.0, %v5099
        %v5898 = vsub.f32 0.0, %v5210
        %v5899 = vsub.f32 0.0, %v5212
        %v5900 = vsub.f32 0.0, %v5101
        %v5901 = vsub.f32 0.0, %v5103
        %v5902 = vsub.f32 0.0, %v5214
        %v5903 = vsub.f32 0.0, %v5216
        %v5904 = vsub.f32 0.0, %v5107
        %v5905 = vsub.f32 0.0, %v5109
        %v5906 = vsub.f32 0.0, %v5220
        %v5907 = vsub.f32 0.0, %v5222
        %v5908 = vsub.f32 0.0, %v5111
        %v5909 = vsub.f32 0.0, %v5113
        %v5910 = vsub.f32 0.0, %v5224
        %v5911 = vsub.f32 0.0, %v5226
        %v5912 = vsub.f32 0.0, %v5117
        %v5913 = vsub.f32 0.0, %v5119
        %v5914 = vsub.f32 0.0, %v5230
        %v5915 = vsub.f32 0.0, %v5232
        %v5916 = vsub.f32 0.0, %v5121
        %v5917 = vsub.f32 0.0, %v5123
        %v5918 = vsub.f32 0.0, %v5234
        %v5919 = vsub.f32 0.0, %v5236
        %v5920 = vsub.f32 0.0, %v5127
        %v5921 = vsub.f32 0.0, %v5129
        %v5922 = vsub.f32 0.0, %v5240
        %v5923 = vsub.f32 0.0, %v5242
        %v5924 = vsub.f32 0.0, %v5131
        %v5925 = vsub.f32 0.0, %v5133
        %v5926 = vsub.f32 0.0, %v5244
        %v5927 = vsub.f32 0.0, %v5246
        %v5928 = vsub.f32 0.0, %v5137
        %v5929 = vsub.f32 0.0, %v5139
        %v5930 = vsub.f32 0.0, %v5250
        %v5931 = vsub.f32 0.0, %v5252
        %v5932 = vsub.f32 0.0, %v5141
        %v5933 = vsub.f32 0.0, %v5143
        %v5934 = vsub.f32 0.0, %v5254
        %v5935 = vsub.f32 0.0, %v5256
        %v5936 = vsub.f32 0.0, %v5147
        %v5937 = vsub.f32 0.0, %v5149
        %v5938 = vsub.f32 0.0, %v5260
        %v5939 = vsub.f32 0.0, %v5262
        %v5940 = vsub.f32 0.0, %v5151
        %v5941 = vsub.f32 0.0, %v5153
        %v5942 = vsub.f32 0.0, %v5264
        %v5943 = vsub.f32 0.0, %v5266
        %v5944 = vsub.f32 0.0, %v5157
        %v5945 = vsub.f32 0.0, %v5159
        %v5946 = vsub.f32 0.0, %v5270
        %v5947 = vsub.f32 0.0, %v5272
        %v5948 = vsub.f32 0.0, %v5161
        %v5949 = vsub.f32 0.0, %v5163
        %v5950 = vsub.f32 0.0, %v5274
        %v5951 = vsub.f32 0.0, %v5276
        %v5952 = vmul.f32 %v5888, 1.442695
        %v5953 = vpow.pop %v5952
        %v5954 = vmul.f32 %v5889, 1.442695
        %v5955 = vpow.pop %v5954
        %v5956 = vmul.f32 %v5890, 1.442695
        %v5957 = vpow.pop %v5956
        %v5958 = vmul.f32 %v5891, 1.442695
        %v5959 = vpow.pop %v5958
        %v5960 = vmul.f32 %v5892, 1.442695
        %v5961 = vpow.pop %v5960
        %v5962 = vmul.f32 %v5893, 1.442695
        %v5963 = vpow.pop %v5962
        %v5964 = vmul.f32 %v5894, 1.442695
        %v5965 = vpow.pop %v5964
        %v5966 = vmul.f32 %v5895, 1.442695
        %v5967 = vpow.pop %v5966
        %v5968 = vmul.f32 %v5896, 1.442695
        %v5969 = vpow.pop %v5968
        %v5970 = vmul.f32 %v5897, 1.442695
        %v5971 = vpow.pop %v5970
        %v5972 = vmul.f32 %v5898, 1.442695
        %v5973 = vpow.pop %v5972
        %v5974 = vmul.f32 %v5899, 1.442695
        %v5975 = vpow.pop %v5974
        %v5976 = vmul.f32 %v5900, 1.442695
        %v5977 = vpow.pop %v5976
        %v5978 = vmul.f32 %v5901, 1.442695
        %v5979 = vpow.pop %v5978
        %v5980 = vmul.f32 %v5902, 1.442695
        %v5981 = vpow.pop %v5980
        %v5982 = vmul.f32 %v5903, 1.442695
        %v5983 = vpow.pop %v5982
        %v5984 = vmul.f32 %v5904, 1.442695
        %v5985 = vpow.pop %v5984
        %v5986 = vmul.f32 %v5905, 1.442695
        %v5987 = vpow.pop %v5986
        %v5988 = vmul.f32 %v5906, 1.442695
        %v5989 = vpow.pop %v5988
        %v5990 = vmul.f32 %v5907, 1.442695
        %v5991 = vpow.pop %v5990
        %v5992 = vmul.f32 %v5908, 1.442695
        %v5993 = vpow.pop %v5992
        %v5994 = vmul.f32 %v5909, 1.442695
        %v5995 = vpow.pop %v5994
        %v5996 = vmul.f32 %v5910, 1.442695
        %v5997 = vpow.pop %v5996
        %v5998 = vmul.f32 %v5911, 1.442695
        %v5999 = vpow.pop %v5998
        %v6000 = vmul.f32 %v5912, 1.442695
        %v6001 = vpow.pop %v6000
        %v6002 = vmul.f32 %v5913, 1.442695
        %v6003 = vpow.pop %v6002
        %v6004 = vmul.f32 %v5914, 1.442695
        %v6005 = vpow.pop %v6004
        %v6006 = vmul.f32 %v5915, 1.442695
        %v6007 = vpow.pop %v6006
        %v6008 = vmul.f32 %v5916, 1.442695
        %v6009 = vpow.pop %v6008
        %v6010 = vmul.f32 %v5917, 1.442695
        %v6011 = vpow.pop %v6010
        %v6012 = vmul.f32 %v5918, 1.442695
        %v6013 = vpow.pop %v6012
        %v6014 = vmul.f32 %v5919, 1.442695
        %v6015 = vpow.pop %v6014
        %v6016 = vmul.f32 %v5920, 1.442695
        %v6017 = vpow.pop %v6016
        %v6018 = vmul.f32 %v5921, 1.442695
        %v6019 = vpow.pop %v6018
        %v6020 = vmul.f32 %v5922, 1.442695
        %v6021 = vpow.pop %v6020
        %v6022 = vmul.f32 %v5923, 1.442695
        %v6023 = vpow.pop %v6022
        %v6024 = vmul.f32 %v5924, 1.442695
        %v6025 = vpow.pop %v6024
        %v6026 = vmul.f32 %v5925, 1.442695
        %v6027 = vpow.pop %v6026
        %v6028 = vmul.f32 %v5926, 1.442695
        %v6029 = vpow.pop %v6028
        %v6030 = vmul.f32 %v5927, 1.442695
        %v6031 = vpow.pop %v6030
        %v6032 = vmul.f32 %v5928, 1.442695
        %v6033 = vpow.pop %v6032
        %v6034 = vmul.f32 %v5929, 1.442695
        %v6035 = vpow.pop %v6034
        %v6036 = vmul.f32 %v5930, 1.442695
        %v6037 = vpow.pop %v6036
        %v6038 = vmul.f32 %v5931, 1.442695
        %v6039 = vpow.pop %v6038
        %v6040 = vmul.f32 %v5932, 1.442695
        %v6041 = vpow.pop %v6040
        %v6042 = vmul.f32 %v5933, 1.442695
        %v6043 = vpow.pop %v6042
        %v6044 = vmul.f32 %v5934, 1.442695
        %v6045 = vpow.pop %v6044
        %v6046 = vmul.f32 %v5935, 1.442695
        %v6047 = vpow.pop %v6046
        %v6048 = vmul.f32 %v5936, 1.442695
        %v6049 = vpow.pop %v6048
        %v6050 = vmul.f32 %v5937, 1.442695
        %v6051 = vpow.pop %v6050
        %v6052 = vmul.f32 %v5938, 1.442695
        %v6053 = vpow.pop %v6052
        %v6054 = vmul.f32 %v5939, 1.442695
        %v6055 = vpow.pop %v6054
        %v6056 = vmul.f32 %v5940, 1.442695
        %v6057 = vpow.pop %v6056
        %v6058 = vmul.f32 %v5941, 1.442695
        %v6059 = vpow.pop %v6058
        %v6060 = vmul.f32 %v5942, 1.442695
        %v6061 = vpow.pop %v6060
        %v6062 = vmul.f32 %v5943, 1.442695
        %v6063 = vpow.pop %v6062
        %v6064 = vmul.f32 %v5944, 1.442695
        %v6065 = vpow.pop %v6064
        %v6066 = vmul.f32 %v5945, 1.442695
        %v6067 = vpow.pop %v6066
        %v6068 = vmul.f32 %v5946, 1.442695
        %v6069 = vpow.pop %v6068
        %v6070 = vmul.f32 %v5947, 1.442695
        %v6071 = vpow.pop %v6070
        %v6072 = vmul.f32 %v5948, 1.442695
        %v6073 = vpow.pop %v6072
        %v6074 = vmul.f32 %v5949, 1.442695
        %v6075 = vpow.pop %v6074
        %v6076 = vmul.f32 %v5950, 1.442695
        %v6077 = vpow.pop %v6076
        %v6078 = vmul.f32 %v5951, 1.442695
        %v6079 = vpow.pop %v6078
        %v6080 = vadd.f32 %v5953, 1.0
        %v6081 = vadd.f32 %v5955, 1.0
        %v6082 = vadd.f32 %v5957, 1.0
        %v6083 = vadd.f32 %v5959, 1.0
        %v6084 = vadd.f32 %v5961, 1.0
        %v6085 = vadd.f32 %v5963, 1.0
        %v6086 = vadd.f32 %v5965, 1.0
        %v6087 = vadd.f32 %v5967, 1.0
        %v6088 = vadd.f32 %v5969, 1.0
        %v6089 = vadd.f32 %v5971, 1.0
        %v6090 = vadd.f32 %v5973, 1.0
        %v6091 = vadd.f32 %v5975, 1.0
        %v6092 = vadd.f32 %v5977, 1.0
        %v6093 = vadd.f32 %v5979, 1.0
        %v6094 = vadd.f32 %v5981, 1.0
        %v6095 = vadd.f32 %v5983, 1.0
        %v6096 = vadd.f32 %v5985, 1.0
        %v6097 = vadd.f32 %v5987, 1.0
        %v6098 = vadd.f32 %v5989, 1.0
        %v6099 = vadd.f32 %v5991, 1.0
        %v6100 = vadd.f32 %v5993, 1.0
        %v6101 = vadd.f32 %v5995, 1.0
        %v6102 = vadd.f32 %v5997, 1.0
        %v6103 = vadd.f32 %v5999, 1.0
        %v6104 = vadd.f32 %v6001, 1.0
        %v6105 = vadd.f32 %v6003, 1.0
        %v6106 = vadd.f32 %v6005, 1.0
        %v6107 = vadd.f32 %v6007, 1.0
        %v6108 = vadd.f32 %v6009, 1.0
        %v6109 = vadd.f32 %v6011, 1.0
        %v6110 = vadd.f32 %v6013, 1.0
        %v6111 = vadd.f32 %v6015, 1.0
        %v6112 = vadd.f32 %v6017, 1.0
        %v6113 = vadd.f32 %v6019, 1.0
        %v6114 = vadd.f32 %v6021, 1.0
        %v6115 = vadd.f32 %v6023, 1.0
        %v6116 = vadd.f32 %v6025, 1.0
        %v6117 = vadd.f32 %v6027, 1.0
        %v6118 = vadd.f32 %v6029, 1.0
        %v6119 = vadd.f32 %v6031, 1.0
        %v6120 = vadd.f32 %v6033, 1.0
        %v6121 = vadd.f32 %v6035, 1.0
        %v6122 = vadd.f32 %v6037, 1.0
        %v6123 = vadd.f32 %v6039, 1.0
        %v6124 = vadd.f32 %v6041, 1.0
        %v6125 = vadd.f32 %v6043, 1.0
        %v6126 = vadd.f32 %v6045, 1.0
        %v6127 = vadd.f32 %v6047, 1.0
        %v6128 = vadd.f32 %v6049, 1.0
        %v6129 = vadd.f32 %v6051, 1.0
        %v6130 = vadd.f32 %v6053, 1.0
        %v6131 = vadd.f32 %v6055, 1.0
        %v6132 = vadd.f32 %v6057, 1.0
        %v6133 = vadd.f32 %v6059, 1.0
        %v6134 = vadd.f32 %v6061, 1.0
        %v6135 = vadd.f32 %v6063, 1.0
        %v6136 = vadd.f32 %v6065, 1.0
        %v6137 = vadd.f32 %v6067, 1.0
        %v6138 = vadd.f32 %v6069, 1.0
        %v6139 = vadd.f32 %v6071, 1.0
        %v6140 = vadd.f32 %v6073, 1.0
        %v6141 = vadd.f32 %v6075, 1.0
        %v6142 = vadd.f32 %v6077, 1.0
        %v6143 = vadd.f32 %v6079, 1.0
        %v6144 = vrcp.pop %v6080
        %v6145 = vrcp.pop %v6081
        %v6146 = vrcp.pop %v6082
        %v6147 = vrcp.pop %v6083
        %v6148 = vrcp.pop %v6084
        %v6149 = vrcp.pop %v6085
        %v6150 = vrcp.pop %v6086
        %v6151 = vrcp.pop %v6087
        %v6152 = vrcp.pop %v6088
        %v6153 = vrcp.pop %v6089
        %v6154 = vrcp.pop %v6090
        %v6155 = vrcp.pop %v6091
        %v6156 = vrcp.pop %v6092
        %v6157 = vrcp.pop %v6093
        %v6158 = vrcp.pop %v6094
        %v6159 = vrcp.pop %v6095
        %v6160 = vrcp.pop %v6096
        %v6161 = vrcp.pop %v6097
        %v6162 = vrcp.pop %v6098
        %v6163 = vrcp.pop %v6099
        %v6164 = vrcp.pop %v6100
        %v6165 = vrcp.pop %v6101
        %v6166 = vrcp.pop %v6102
        %v6167 = vrcp.pop %v6103
        %v6168 = vrcp.pop %v6104
        %v6169 = vrcp.pop %v6105
        %v6170 = vrcp.pop %v6106
        %v6171 = vrcp.pop %v6107
        %v6172 = vrcp.pop %v6108
        %v6173 = vrcp.pop %v6109
        %v6174 = vrcp.pop %v6110
        %v6175 = vrcp.pop %v6111
        %v6176 = vrcp.pop %v6112
        %v6177 = vrcp.pop %v6113
        %v6178 = vrcp.pop %v6114
        %v6179 = vrcp.pop %v6115
        %v6180 = vrcp.pop %v6116
        %v6181 = vrcp.pop %v6117
        %v6182 = vrcp.pop %v6118
        %v6183 = vrcp.pop %v6119
        %v6184 = vrcp.pop %v6120
        %v6185 = vrcp.pop %v6121
        %v6186 = vrcp.pop %v6122
        %v6187 = vrcp.pop %v6123
        %v6188 = vrcp.pop %v6124
        %v6189 = vrcp.pop %v6125
        %v6190 = vrcp.pop %v6126
        %v6191 = vrcp.pop %v6127
        %v6192 = vrcp.pop %v6128
        %v6193 = vrcp.pop %v6129
        %v6194 = vrcp.pop %v6130
        %v6195 = vrcp.pop %v6131
        %v6196 = vrcp.pop %v6132
        %v6197 = vrcp.pop %v6133
        %v6198 = vrcp.pop %v6134
        %v6199 = vrcp.pop %v6135
        %v6200 = vrcp.pop %v6136
        %v6201 = vrcp.pop %v6137
        %v6202 = vrcp.pop %v6138
        %v6203 = vrcp.pop %v6139
        %v6204 = vrcp.pop %v6140
        %v6205 = vrcp.pop %v6141
        %v6206 = vrcp.pop %v6142
        %v6207 = vrcp.pop %v6143
        %v6208 = vmul.f32 %v5087, %v6144
        %v6209 = vmul.f32 %v5089, %v6145
        %v6210 = vmul.f32 %v5200, %v6146
        %v6211 = vmul.f32 %v5202, %v6147
        %v6212 = vmul.f32 %v5091, %v6148
        %v6213 = vmul.f32 %v5093, %v6149
        %v6214 = vmul.f32 %v5204, %v6150
        %v6215 = vmul.f32 %v5206, %v6151
        %v6216 = vmul.f32 %v5097, %v6152
        %v6217 = vmul.f32 %v5099, %v6153
        %v6218 = vmul.f32 %v5210, %v6154
        %v6219 = vmul.f32 %v5212, %v6155
        %v6220 = vmul.f32 %v5101, %v6156
        %v6221 = vmul.f32 %v5103, %v6157
        %v6222 = vmul.f32 %v5214, %v6158
        %v6223 = vmul.f32 %v5216, %v6159
        %v6224 = vmul.f32 %v5107, %v6160
        %v6225 = vmul.f32 %v5109, %v6161
        %v6226 = vmul.f32 %v5220, %v6162
        %v6227 = vmul.f32 %v5222, %v6163
        %v6228 = vmul.f32 %v5111, %v6164
        %v6229 = vmul.f32 %v5113, %v6165
        %v6230 = vmul.f32 %v5224, %v6166
        %v6231 = vmul.f32 %v5226, %v6167
        %v6232 = vmul.f32 %v5117, %v6168
        %v6233 = vmul.f32 %v5119, %v6169
        %v6234 = vmul.f32 %v5230, %v6170
        %v6235 = vmul.f32 %v5232, %v6171
        %v6236 = vmul.f32 %v5121, %v6172
        %v6237 = vmul.f32 %v5123, %v6173
        %v6238 = vmul.f32 %v5234, %v6174
        %v6239 = vmul.f32 %v5236, %v6175
        %v6240 = vmul.f32 %v5127, %v6176
        %v6241 = vmul.f32 %v5129, %v6177
        %v6242 = vmul.f32 %v5240, %v6178
        %v6243 = vmul.f32 %v5242, %v6179
        %v6244 = vmul.f32 %v5131, %v6180
        %v6245 = vmul.f32 %v5133, %v6181
        %v6246 = vmul.f32 %v5244, %v6182
        %v6247 = vmul.f32 %v5246, %v6183
        %v6248 = vmul.f32 %v5137, %v6184
        %v6249 = vmul.f32 %v5139, %v6185
        %v6250 = vmul.f32 %v5250, %v6186
        %v6251 = vmul.f32 %v5252, %v6187
        %v6252 = vmul.f32 %v5141, %v6188
        %v6253 = vmul.f32 %v5143, %v6189
        %v6254 = vmul.f32 %v5254, %v6190
        %v6255 = vmul.f32 %v5256, %v6191
        %v6256 = vmul.f32 %v5147, %v6192
        %v6257 = vmul.f32 %v5149, %v6193
        %v6258 = vmul.f32 %v5260, %v6194
        %v6259 = vmul.f32 %v5262, %v6195
        %v6260 = vmul.f32 %v5151, %v6196
        %v6261 = vmul.f32 %v5153, %v6197
        %v6262 = vmul.f32 %v5264, %v6198
        %v6263 = vmul.f32 %v5266, %v6199
        %v6264 = vmul.f32 %v5157, %v6200
        %v6265 = vmul.f32 %v5159, %v6201
        %v6266 = vmul.f32 %v5270, %v6202
        %v6267 = vmul.f32 %v5272, %v6203
        %v6268 = vmul.f32 %v5161, %v6204
        %v6269 = vmul.f32 %v5163, %v6205
        %v6270 = vmul.f32 %v5274, %v6206
        %v6271 = vmul.f32 %v5276, %v6207
        %v6272 = vmul.f32 %v6208, %v5697
        %v6273 = vmul.f32 %v6209, %v5699
        %v6274 = vmul.f32 %v6210, %v5810
        %v6275 = vmul.f32 %v6211, %v5812
        %v6276 = vmul.f32 %v6212, %v5701
        %v6277 = vmul.f32 %v6213, %v5703
        %v6278 = vmul.f32 %v6214, %v5814
        %v6279 = vmul.f32 %v6215, %v5816
        %v6280 = vmul.f32 %v6216, %v5707
        %v6281 = vmul.f32 %v6217, %v5709
        %v6282 = vmul.f32 %v6218, %v5820
        %v6283 = vmul.f32 %v6219, %v5822
        %v6284 = vmul.f32 %v6220, %v5711
        %v6285 = vmul.f32 %v6221, %v5713
        %v6286 = vmul.f32 %v6222, %v5824
        %v6287 = vmul.f32 %v6223, %v5826
        %v6288 = vmul.f32 %v6224, %v5717
        %v6289 = vmul.f32 %v6225, %v5719
        %v6290 = vmul.f32 %v6226, %v5830
        %v6291 = vmul.f32 %v6227, %v5832
        %v6292 = vmul.f32 %v6228, %v5721
        %v6293 = vmul.f32 %v6229, %v5723
        %v6294 = vmul.f32 %v6230, %v5834
        %v6295 = vmul.f32 %v6231, %v5836
        %v6296 = vmul.f32 %v6232, %v5727
        %v6297 = vmul.f32 %v6233, %v5729
        %v6298 = vmul.f32 %v6234, %v5840
        %v6299 = vmul.f32 %v6235, %v5842
        %v6300 = vmul.f32 %v6236, %v5731
        %v6301 = vmul.f32 %v6237, %v5733
        %v6302 = vmul.f32 %v6238, %v5844
        %v6303 = vmul.f32 %v6239, %v5846
        %v6304 = vmul.f32 %v6240, %v5737
        %v6305 = vmul.f32 %v6241, %v5739
        %v6306 = vmul.f32 %v6242, %v5850
        %v6307 = vmul.f32 %v6243, %v5852
        %v6308 = vmul.f32 %v6244, %v5741
        %v6309 = vmul.f32 %v6245, %v5743
        %v6310 = vmul.f32 %v6246, %v5854
        %v6311 = vmul.f32 %v6247, %v5856
        %v6312 = vmul.f32 %v6248, %v5747
        %v6313 = vmul.f32 %v6249, %v5749
        %v6314 = vmul.f32 %v6250, %v5860
        %v6315 = vmul.f32 %v6251, %v5862
        %v6316 = vmul.f32 %v6252, %v5751
        %v6317 = vmul.f32 %v6253, %v5753
        %v6318 = vmul.f32 %v6254, %v5864
        %v6319 = vmul.f32 %v6255, %v5866
        %v6320 = vmul.f32 %v6256, %v5757
        %v6321 = vmul.f32 %v6257, %v5759
        %v6322 = vmul.f32 %v6258, %v5870
        %v6323 = vmul.f32 %v6259, %v5872
        %v6324 = vmul.f32 %v6260, %v5761
        %v6325 = vmul.f32 %v6261, %v5763
        %v6326 = vmul.f32 %v6262, %v5874
        %v6327 = vmul.f32 %v6263, %v5876
        %v6328 = vmul.f32 %v6264, %v5767
        %v6329 = vmul.f32 %v6265, %v5769
        %v6330 = vmul.f32 %v6266, %v5880
        %v6331 = vmul.f32 %v6267, %v5882
        %v6332 = vmul.f32 %v6268, %v5771
        %v6333 = vmul.f32 %v6269, %v5773
        %v6334 = vmul.f32 %v6270, %v5884
        %v6335 = vmul.f32 %v6271, %v5886
        %v6336 = vpack.c.bf16 %v6276, %v6272
        %v6337 = vpack.c.bf16 %v6277, %v6273
        %v6338 = vpack.c.bf16 %v6278, %v6274
        %v6339 = vpack.c.bf16 %v6279, %v6275
        %v6340 = vpack.c.bf16 %v6284, %v6280
        %v6341 = vpack.c.bf16 %v6285, %v6281
        %v6342 = vpack.c.bf16 %v6286, %v6282
        %v6343 = vpack.c.bf16 %v6287, %v6283
        %v6344 = vpack.c.bf16 %v6292, %v6288
        %v6345 = vpack.c.bf16 %v6293, %v6289
        %v6346 = vpack.c.bf16 %v6294, %v6290
        %v6347 = vpack.c.bf16 %v6295, %v6291
        %v6348 = vpack.c.bf16 %v6300, %v6296
        %v6349 = vpack.c.bf16 %v6301, %v6297
        %v6350 = vpack.c.bf16 %v6302, %v6298
        %v6351 = vpack.c.bf16 %v6303, %v6299
        %v6352 = vpack.c.bf16 %v6308, %v6304
        %v6353 = vpack.c.bf16 %v6309, %v6305
        %v6354 = vpack.c.bf16 %v6310, %v6306
        %v6355 = vpack.c.bf16 %v6311, %v6307
        %v6356 = vpack.c.bf16 %v6316, %v6312
        %v6357 = vpack.c.bf16 %v6317, %v6313
        %v6358 = vpack.c.bf16 %v6318, %v6314
        %v6359 = vpack.c.bf16 %v6319, %v6315
        %v6360 = vpack.c.bf16 %v6324, %v6320
        %v6361 = vpack.c.bf16 %v6325, %v6321
        %v6362 = vpack.c.bf16 %v6326, %v6322
        %v6363 = vpack.c.bf16 %v6327, %v6323
        %v6364 = vpack.c.bf16 %v6332, %v6328
        %v6365 = vpack.c.bf16 %v6333, %v6329
        %v6366 = vpack.c.bf16 %v6334, %v6330
        %v6367 = vpack.c.bf16 %v6335, %v6331
        %v6368 = vld [vmem:[%s655] sm:$0xff]
        %v6369 = vld [vmem:[%s655 + $0x8] sm:$0xff]
        %v6370 = vld [vmem:[%s655 + $0x10] sm:$0xff]
        %v6371 = vld [vmem:[%s655 + $0x18] sm:$0xff]
        %v6372 = vld [vmem:[%s655 + $0x20] sm:$0xff]
        %v6373 = vld [vmem:[%s655 + $0x28] sm:$0xff]
        %v6374 = vld [vmem:[%s655 + $0x30] sm:$0xff]
        %v6375 = vld [vmem:[%s655 + $0x38] sm:$0xff]
        %v6376 = vld [vmem:[%s655 + $0x40] sm:$0xff]
        %v6377 = vld [vmem:[%s655 + $0x48] sm:$0xff]
        %v6378 = vld [vmem:[%s655 + $0x50] sm:$0xff]
        %v6379 = vld [vmem:[%s655 + $0x58] sm:$0xff]
        %v6380 = vld [vmem:[%s655 + $0x60] sm:$0xff]
        %v6381 = vld [vmem:[%s655 + $0x68] sm:$0xff]
        %v6382 = vld [vmem:[%s655 + $0x70] sm:$0xff]
        %v6383 = vld [vmem:[%s655 + $0x78] sm:$0xff]
        %v6384 = vld [vmem:[%s655 + $0x80] sm:$0xff]
        %v6385 = vld [vmem:[%s655 + $0x88] sm:$0xff]
        %v6386 = vld [vmem:[%s655 + $0x90] sm:$0xff]
        %v6387 = vld [vmem:[%s655 + $0x98] sm:$0xff]
        %v6388 = vld [vmem:[%s655 + $0xa0] sm:$0xff]
        %v6389 = vld [vmem:[%s655 + $0xa8] sm:$0xff]
        %v6390 = vld [vmem:[%s655 + $0xb0] sm:$0xff]
        %v6391 = vld [vmem:[%s655 + $0xb8] sm:$0xff]
        %v6392 = vld [vmem:[%s655 + $0xc0] sm:$0xff]
        %v6393 = vld [vmem:[%s655 + $0xc8] sm:$0xff]
        %v6394 = vld [vmem:[%s655 + $0xd0] sm:$0xff]
        %v6395 = vld [vmem:[%s655 + $0xd8] sm:$0xff]
        %v6396 = vld [vmem:[%s655 + $0xe0] sm:$0xff]
        %v6397 = vld [vmem:[%s655 + $0xe8] sm:$0xff]
        %v6398 = vld [vmem:[%s655 + $0xf0] sm:$0xff]
        %v6399 = vld [vmem:[%s655 + $0xf8] sm:$0xff]
        %v6400 = vld [vmem:[%s655 + $0x100] sm:$0xff]
        %v6401 = vld [vmem:[%s655 + $0x108] sm:$0xff]
        %v6402 = vld [vmem:[%s655 + $0x110] sm:$0xff]
        %v6403 = vld [vmem:[%s655 + $0x118] sm:$0xff]
        %v6404 = vld [vmem:[%s655 + $0x120] sm:$0xff]
        %v6405 = vld [vmem:[%s655 + $0x128] sm:$0xff]
        %v6406 = vld [vmem:[%s655 + $0x130] sm:$0xff]
        %v6407 = vld [vmem:[%s655 + $0x138] sm:$0xff]
        %v6408 = vld [vmem:[%s655 + $0x140] sm:$0xff]
        %v6409 = vld [vmem:[%s655 + $0x148] sm:$0xff]
        %v6410 = vld [vmem:[%s655 + $0x150] sm:$0xff]
        %v6411 = vld [vmem:[%s655 + $0x158] sm:$0xff]
        %v6412 = vld [vmem:[%s655 + $0x160] sm:$0xff]
        %v6413 = vld [vmem:[%s655 + $0x168] sm:$0xff]
        %v6414 = vld [vmem:[%s655 + $0x170] sm:$0xff]
        %v6415 = vld [vmem:[%s655 + $0x178] sm:$0xff]
        %v6416 = vld [vmem:[%s655 + $0x180] sm:$0xff]
        %v6417 = vld [vmem:[%s655 + $0x188] sm:$0xff]
        %v6418 = vld [vmem:[%s655 + $0x190] sm:$0xff]
        %v6419 = vld [vmem:[%s655 + $0x198] sm:$0xff]
        %v6420 = vld [vmem:[%s655 + $0x1a0] sm:$0xff]
        %v6421 = vld [vmem:[%s655 + $0x1a8] sm:$0xff]
        %v6422 = vld [vmem:[%s655 + $0x1b0] sm:$0xff]
        %v6423 = vld [vmem:[%s655 + $0x1b8] sm:$0xff]
        %v6424 = vld [vmem:[%s655 + $0x1c0] sm:$0xff]
        %v6425 = vld [vmem:[%s655 + $0x1c8] sm:$0xff]
        %v6426 = vld [vmem:[%s655 + $0x1d0] sm:$0xff]
        %v6427 = vld [vmem:[%s655 + $0x1d8] sm:$0xff]
        %v6428 = vld [vmem:[%s655 + $0x1e0] sm:$0xff]
        %v6429 = vld [vmem:[%s655 + $0x1e8] sm:$0xff]
        %v6430 = vld [vmem:[%s655 + $0x1f0] sm:$0xff]
        %v6431 = vld [vmem:[%s655 + $0x1f8] sm:$0xff]
        %v6496 = vunpack.c.l.b16 %v6368
        %v6497 = vunpack.c.h.b16 %v6368
        %v6498 = vunpack.c.l.b16 %v6369
        %v6499 = vunpack.c.h.b16 %v6369
        %v6500 = vunpack.c.l.b16 %v6370
        %v6501 = vunpack.c.h.b16 %v6370
        %v6502 = vunpack.c.l.b16 %v6371
        %v6503 = vunpack.c.h.b16 %v6371
        %v6504 = vunpack.c.l.b16 %v6372
        %v6505 = vunpack.c.h.b16 %v6372
        %v6506 = vunpack.c.l.b16 %v6373
        %v6507 = vunpack.c.h.b16 %v6373
        %v6508 = vunpack.c.l.b16 %v6374
        %v6509 = vunpack.c.h.b16 %v6374
        %v6510 = vunpack.c.l.b16 %v6375
        %v6511 = vunpack.c.h.b16 %v6375
        %v6512 = vunpack.c.l.b16 %v6376
        %v6513 = vunpack.c.h.b16 %v6376
        %v6514 = vunpack.c.l.b16 %v6377
        %v6515 = vunpack.c.h.b16 %v6377
        %v6516 = vunpack.c.l.b16 %v6378
        %v6517 = vunpack.c.h.b16 %v6378
        %v6518 = vunpack.c.l.b16 %v6379
        %v6519 = vunpack.c.h.b16 %v6379
        %v6520 = vunpack.c.l.b16 %v6380
        %v6521 = vunpack.c.h.b16 %v6380
        %v6522 = vunpack.c.l.b16 %v6381
        %v6523 = vunpack.c.h.b16 %v6381
        %v6524 = vunpack.c.l.b16 %v6382
        %v6525 = vunpack.c.h.b16 %v6382
        %v6526 = vunpack.c.l.b16 %v6383
        %v6527 = vunpack.c.h.b16 %v6383
        %v6528 = vunpack.c.l.b16 %v6384
        %v6529 = vunpack.c.h.b16 %v6384
        %v6530 = vunpack.c.l.b16 %v6385
        %v6531 = vunpack.c.h.b16 %v6385
        %v6532 = vunpack.c.l.b16 %v6386
        %v6533 = vunpack.c.h.b16 %v6386
        %v6534 = vunpack.c.l.b16 %v6387
        %v6535 = vunpack.c.h.b16 %v6387
        %v6536 = vunpack.c.l.b16 %v6388
        %v6537 = vunpack.c.h.b16 %v6388
        %v6538 = vunpack.c.l.b16 %v6389
        %v6539 = vunpack.c.h.b16 %v6389
        %v6540 = vunpack.c.l.b16 %v6390
        %v6541 = vunpack.c.h.b16 %v6390
        %v6542 = vunpack.c.l.b16 %v6391
        %v6543 = vunpack.c.h.b16 %v6391
        %v6544 = vunpack.c.l.b16 %v6392
        %v6545 = vunpack.c.h.b16 %v6392
        %v6546 = vunpack.c.l.b16 %v6393
        %v6547 = vunpack.c.h.b16 %v6393
        %v6548 = vunpack.c.l.b16 %v6394
        %v6549 = vunpack.c.h.b16 %v6394
        %v6550 = vunpack.c.l.b16 %v6395
        %v6551 = vunpack.c.h.b16 %v6395
        %v6552 = vunpack.c.l.b16 %v6396
        %v6553 = vunpack.c.h.b16 %v6396
        %v6554 = vunpack.c.l.b16 %v6397
        %v6555 = vunpack.c.h.b16 %v6397
        %v6556 = vunpack.c.l.b16 %v6398
        %v6557 = vunpack.c.h.b16 %v6398
        %v6558 = vunpack.c.l.b16 %v6399
        %v6559 = vunpack.c.h.b16 %v6399
        %v6560 = vunpack.c.l.b16 %v6400
        %v6561 = vunpack.c.h.b16 %v6400
        %v6562 = vunpack.c.l.b16 %v6401
        %v6563 = vunpack.c.h.b16 %v6401
        %v6564 = vunpack.c.l.b16 %v6402
        %v6565 = vunpack.c.h.b16 %v6402
        %v6566 = vunpack.c.l.b16 %v6403
        %v6567 = vunpack.c.h.b16 %v6403
        %v6568 = vunpack.c.l.b16 %v6404
        %v6569 = vunpack.c.h.b16 %v6404
        %v6570 = vunpack.c.l.b16 %v6405
        %v6571 = vunpack.c.h.b16 %v6405
        %v6572 = vunpack.c.l.b16 %v6406
        %v6573 = vunpack.c.h.b16 %v6406
        %v6574 = vunpack.c.l.b16 %v6407
        %v6575 = vunpack.c.h.b16 %v6407
        %v6576 = vunpack.c.l.b16 %v6408
        %v6577 = vunpack.c.h.b16 %v6408
        %v6578 = vunpack.c.l.b16 %v6409
        %v6579 = vunpack.c.h.b16 %v6409
        %v6580 = vunpack.c.l.b16 %v6410
        %v6581 = vunpack.c.h.b16 %v6410
        %v6582 = vunpack.c.l.b16 %v6411
        %v6583 = vunpack.c.h.b16 %v6411
        %v6584 = vunpack.c.l.b16 %v6412
        %v6585 = vunpack.c.h.b16 %v6412
        %v6586 = vunpack.c.l.b16 %v6413
        %v6587 = vunpack.c.h.b16 %v6413
        %v6588 = vunpack.c.l.b16 %v6414
        %v6589 = vunpack.c.h.b16 %v6414
        %v6590 = vunpack.c.l.b16 %v6415
        %v6591 = vunpack.c.h.b16 %v6415
        %v6592 = vunpack.c.l.b16 %v6416
        %v6593 = vunpack.c.h.b16 %v6416
        %v6594 = vunpack.c.l.b16 %v6417
        %v6595 = vunpack.c.h.b16 %v6417
        %v6596 = vunpack.c.l.b16 %v6418
        %v6597 = vunpack.c.h.b16 %v6418
        %v6598 = vunpack.c.l.b16 %v6419
        %v6599 = vunpack.c.h.b16 %v6419
        %v6600 = vunpack.c.l.b16 %v6420
        %v6601 = vunpack.c.h.b16 %v6420
        %v6602 = vunpack.c.l.b16 %v6421
        %v6603 = vunpack.c.h.b16 %v6421
        %v6604 = vunpack.c.l.b16 %v6422
        %v6605 = vunpack.c.h.b16 %v6422
        %v6606 = vunpack.c.l.b16 %v6423
        %v6607 = vunpack.c.h.b16 %v6423
        %v6608 = vunpack.c.l.b16 %v6424
        %v6609 = vunpack.c.h.b16 %v6424
        %v6610 = vunpack.c.l.b16 %v6425
        %v6611 = vunpack.c.h.b16 %v6425
        %v6612 = vunpack.c.l.b16 %v6426
        %v6613 = vunpack.c.h.b16 %v6426
        %v6614 = vunpack.c.l.b16 %v6427
        %v6615 = vunpack.c.h.b16 %v6427
        %v6616 = vunpack.c.l.b16 %v6428
        %v6617 = vunpack.c.h.b16 %v6428
        %v6618 = vunpack.c.l.b16 %v6429
        %v6619 = vunpack.c.h.b16 %v6429
        %v6620 = vunpack.c.l.b16 %v6430
        %v6621 = vunpack.c.h.b16 %v6430
        %v6622 = vunpack.c.l.b16 %v6431
        %v6623 = vunpack.c.h.b16 %v6431
        %v6624 = vpack.c.b16 %v6498, %v6496
        %v6625 = vpack.c.b16 %v6499, %v6497
        %v6626 = vpack.c.b16 %v6502, %v6500
        %v6627 = vpack.c.b16 %v6503, %v6501
        %v6628 = vpack.c.b16 %v6506, %v6504
        %v6629 = vpack.c.b16 %v6507, %v6505
        %v6630 = vpack.c.b16 %v6510, %v6508
        %v6631 = vpack.c.b16 %v6511, %v6509
        %v6632 = vpack.c.b16 %v6514, %v6512
        %v6633 = vpack.c.b16 %v6515, %v6513
        %v6634 = vpack.c.b16 %v6518, %v6516
        %v6635 = vpack.c.b16 %v6519, %v6517
        %v6636 = vpack.c.b16 %v6522, %v6520
        %v6637 = vpack.c.b16 %v6523, %v6521
        %v6638 = vpack.c.b16 %v6526, %v6524
        %v6639 = vpack.c.b16 %v6527, %v6525
        %v6640 = vpack.c.b16 %v6530, %v6528
        %v6641 = vpack.c.b16 %v6531, %v6529
        %v6642 = vpack.c.b16 %v6534, %v6532
        %v6643 = vpack.c.b16 %v6535, %v6533
        %v6644 = vpack.c.b16 %v6538, %v6536
        %v6645 = vpack.c.b16 %v6539, %v6537
        %v6646 = vpack.c.b16 %v6542, %v6540
        %v6647 = vpack.c.b16 %v6543, %v6541
        %v6648 = vpack.c.b16 %v6546, %v6544
        %v6649 = vpack.c.b16 %v6547, %v6545
        %v6650 = vpack.c.b16 %v6550, %v6548
        %v6651 = vpack.c.b16 %v6551, %v6549
        %v6652 = vpack.c.b16 %v6554, %v6552
        %v6653 = vpack.c.b16 %v6555, %v6553
        %v6654 = vpack.c.b16 %v6558, %v6556
        %v6655 = vpack.c.b16 %v6559, %v6557
        %v6656 = vpack.c.b16 %v6562, %v6560
        %v6657 = vpack.c.b16 %v6563, %v6561
        %v6658 = vpack.c.b16 %v6566, %v6564
        %v6659 = vpack.c.b16 %v6567, %v6565
        %v6660 = vpack.c.b16 %v6570, %v6568
        %v6661 = vpack.c.b16 %v6571, %v6569
        %v6662 = vpack.c.b16 %v6574, %v6572
        %v6663 = vpack.c.b16 %v6575, %v6573
        %v6664 = vpack.c.b16 %v6578, %v6576
        %v6665 = vpack.c.b16 %v6579, %v6577
        %v6666 = vpack.c.b16 %v6582, %v6580
        %v6667 = vpack.c.b16 %v6583, %v6581
        %v6668 = vpack.c.b16 %v6586, %v6584
        %v6669 = vpack.c.b16 %v6587, %v6585
        %v6670 = vpack.c.b16 %v6590, %v6588
        %v6671 = vpack.c.b16 %v6591, %v6589
        %v6672 = vpack.c.b16 %v6594, %v6592
        %v6673 = vpack.c.b16 %v6595, %v6593
        %v6674 = vpack.c.b16 %v6598, %v6596
        %v6675 = vpack.c.b16 %v6599, %v6597
        %v6676 = vpack.c.b16 %v6602, %v6600
        %v6677 = vpack.c.b16 %v6603, %v6601
        %v6678 = vpack.c.b16 %v6606, %v6604
        %v6679 = vpack.c.b16 %v6607, %v6605
        %v6680 = vpack.c.b16 %v6610, %v6608
        %v6681 = vpack.c.b16 %v6611, %v6609
        %v6682 = vpack.c.b16 %v6614, %v6612
        %v6683 = vpack.c.b16 %v6615, %v6613
        %v6684 = vpack.c.b16 %v6618, %v6616
        %v6685 = vpack.c.b16 %v6619, %v6617
        %v6686 = vpack.c.b16 %v6622, %v6620
        %v6687 = vpack.c.b16 %v6623, %v6621
        %6752 = vmatprep.subr.bf16.mxu0 %v6639
        %6753 = vmatpush1.bf16.msra.mxu0 %v6638
        %6754 = vmatprep.subr.bf16.mxu0 %v6637
        %6755 = vmatpush1.bf16.msra.mxu0 %v6636
        %6756 = vmatprep.subr.bf16.mxu0 %v6635
        %6757 = vmatpush1.bf16.msra.mxu0 %v6634
        %6758 = vmatprep.subr.bf16.mxu0 %v6633
        %6759 = vmatpush1.bf16.msra.mxu0 %v6632
        %6760 = vmatprep.subr.bf16.mxu0 %v6631
        %6761 = vmatpush1.bf16.msra.mxu0 %v6630
        %6762 = vmatprep.subr.bf16.mxu0 %v6629
        %6763 = vmatpush1.bf16.msra.mxu0 %v6628
        %6764 = vmatprep.subr.bf16.mxu0 %v6627
        %6765 = vmatpush1.bf16.msra.mxu0 %v6626
        %6766 = vmatprep.subr.bf16.mxu0 %v6625
        %6767 = vmatpush1.bf16.msra.mxu0 %v6624
        %6768 = vmatprep.subr.bf16.mxu0 %v6655
        %6769 = vmatpush2.bf16.msra.mxu0 %v6654
        %6770 = vmatprep.subr.bf16.mxu0 %v6653
        %6771 = vmatpush2.bf16.msra.mxu0 %v6652
        %6772 = vmatprep.subr.bf16.mxu0 %v6651
        %6773 = vmatpush2.bf16.msra.mxu0 %v6650
        %6774 = vmatprep.subr.bf16.mxu0 %v6649
        %6775 = vmatpush2.bf16.msra.mxu0 %v6648
        %6776 = vmatprep.subr.bf16.mxu0 %v6647
        %6777 = vmatpush2.bf16.msra.mxu0 %v6646
        %6778 = vmatprep.subr.bf16.mxu0 %v6645
        %6779 = vmatpush2.bf16.msra.mxu0 %v6644
        %6780 = vmatprep.subr.bf16.mxu0 %v6643
        %6781 = vmatpush2.bf16.msra.mxu0 %v6642
        %6782 = vmatprep.subr.bf16.mxu0 %v6641
        %6783 = vmatpush2.bf16.msra.mxu0 %v6640
        %6784 = vmatprep.mubr.bf16.mxu0 %v6337
        %6785 = vmatmul.mubr.bf16.gmra.mxu0 %v6336
        %v6786 = vpop.f32.mrf.mxu0
        %v6787 = vadd.f32 0.0, %v6786
        %v6788 = vpop.f32.mrf.mxu0
        %v6789 = vadd.f32 0.0, %v6788
        %v6790 = vpop.f32.mrf.mxu0
        %v6791 = vadd.f32 0.0, %v6790
        %v6792 = vpop.f32.mrf.mxu0
        %v6793 = vadd.f32 0.0, %v6792
        %6794 = vmatprep.mubr.bf16.mxu0 %v6341
        %6795 = vmatmul.mubr.bf16.gmra.mxu0 %v6340
        %v6796 = vpop.f32.mrf.mxu0
        %v6797 = vadd.f32 0.0, %v6796
        %v6798 = vpop.f32.mrf.mxu0
        %v6799 = vadd.f32 0.0, %v6798
        %v6800 = vpop.f32.mrf.mxu0
        %v6801 = vadd.f32 0.0, %v6800
        %v6802 = vpop.f32.mrf.mxu0
        %v6803 = vadd.f32 0.0, %v6802
        %6804 = vmatprep.mubr.bf16.mxu0 %v6345
        %6805 = vmatmul.mubr.bf16.gmra.mxu0 %v6344
        %v6806 = vpop.f32.mrf.mxu0
        %v6807 = vadd.f32 0.0, %v6806
        %v6808 = vpop.f32.mrf.mxu0
        %v6809 = vadd.f32 0.0, %v6808
        %v6810 = vpop.f32.mrf.mxu0
        %v6811 = vadd.f32 0.0, %v6810
        %v6812 = vpop.f32.mrf.mxu0
        %v6813 = vadd.f32 0.0, %v6812
        %6814 = vmatprep.mubr.bf16.mxu0 %v6349
        %6815 = vmatmul.mubr.bf16.gmra.mxu0 %v6348
        %v6816 = vpop.f32.mrf.mxu0
        %v6817 = vadd.f32 0.0, %v6816
        %v6818 = vpop.f32.mrf.mxu0
        %v6819 = vadd.f32 0.0, %v6818
        %v6820 = vpop.f32.mrf.mxu0
        %v6821 = vadd.f32 0.0, %v6820
        %v6822 = vpop.f32.mrf.mxu0
        %v6823 = vadd.f32 0.0, %v6822
        %6824 = vmatprep.mubr.bf16.mxu0 %v6353
        %6825 = vmatmul.mubr.bf16.gmra.mxu0 %v6352
        %v6826 = vpop.f32.mrf.mxu0
        %v6827 = vadd.f32 0.0, %v6826
        %v6828 = vpop.f32.mrf.mxu0
        %v6829 = vadd.f32 0.0, %v6828
        %v6830 = vpop.f32.mrf.mxu0
        %v6831 = vadd.f32 0.0, %v6830
        %v6832 = vpop.f32.mrf.mxu0
        %v6833 = vadd.f32 0.0, %v6832
        %6834 = vmatprep.mubr.bf16.mxu0 %v6357
        %6835 = vmatmul.mubr.bf16.gmra.mxu0 %v6356
        %v6836 = vpop.f32.mrf.mxu0
        %v6837 = vadd.f32 0.0, %v6836
        %v6838 = vpop.f32.mrf.mxu0
        %v6839 = vadd.f32 0.0, %v6838
        %v6840 = vpop.f32.mrf.mxu0
        %v6841 = vadd.f32 0.0, %v6840
        %v6842 = vpop.f32.mrf.mxu0
        %v6843 = vadd.f32 0.0, %v6842
        %6844 = vmatprep.mubr.bf16.mxu0 %v6361
        %6845 = vmatmul.mubr.bf16.gmra.mxu0 %v6360
        %v6846 = vpop.f32.mrf.mxu0
        %v6847 = vadd.f32 0.0, %v6846
        %v6848 = vpop.f32.mrf.mxu0
        %v6849 = vadd.f32 0.0, %v6848
        %v6850 = vpop.f32.mrf.mxu0
        %v6851 = vadd.f32 0.0, %v6850
        %v6852 = vpop.f32.mrf.mxu0
        %v6853 = vadd.f32 0.0, %v6852
        %6854 = vmatprep.mubr.bf16.mxu0 %v6365
        %6855 = vmatmul.mubr.bf16.gmra.mxu0 %v6364
        %v6856 = vpop.f32.mrf.mxu0
        %v6857 = vadd.f32 0.0, %v6856
        %v6858 = vpop.f32.mrf.mxu0
        %v6859 = vadd.f32 0.0, %v6858
        %v6860 = vpop.f32.mrf.mxu0
        %v6861 = vadd.f32 0.0, %v6860
        %v6862 = vpop.f32.mrf.mxu0
        %v6863 = vadd.f32 0.0, %v6862
        %6864 = vdwg.mxu0
        %6865 = vmatprep.subr.bf16.mxu0 %v6671
        %6866 = vmatpush1.bf16.msra.mxu0 %v6670
        %6867 = vmatprep.subr.bf16.mxu0 %v6669
        %6868 = vmatpush1.bf16.msra.mxu0 %v6668
        %6869 = vmatprep.subr.bf16.mxu0 %v6667
        %6870 = vmatpush1.bf16.msra.mxu0 %v6666
        %6871 = vmatprep.subr.bf16.mxu0 %v6665
        %6872 = vmatpush1.bf16.msra.mxu0 %v6664
        %6873 = vmatprep.subr.bf16.mxu0 %v6663
        %6874 = vmatpush1.bf16.msra.mxu0 %v6662
        %6875 = vmatprep.subr.bf16.mxu0 %v6661
        %6876 = vmatpush1.bf16.msra.mxu0 %v6660
        %6877 = vmatprep.subr.bf16.mxu0 %v6659
        %6878 = vmatpush1.bf16.msra.mxu0 %v6658
        %6879 = vmatprep.subr.bf16.mxu0 %v6657
        %6880 = vmatpush1.bf16.msra.mxu0 %v6656
        %6881 = vmatprep.subr.bf16.mxu0 %v6687
        %6882 = vmatpush2.bf16.msra.mxu0 %v6686
        %6883 = vmatprep.subr.bf16.mxu0 %v6685
        %6884 = vmatpush2.bf16.msra.mxu0 %v6684
        %6885 = vmatprep.subr.bf16.mxu0 %v6683
        %6886 = vmatpush2.bf16.msra.mxu0 %v6682
        %6887 = vmatprep.subr.bf16.mxu0 %v6681
        %6888 = vmatpush2.bf16.msra.mxu0 %v6680
        %6889 = vmatprep.subr.bf16.mxu0 %v6679
        %6890 = vmatpush2.bf16.msra.mxu0 %v6678
        %6891 = vmatprep.subr.bf16.mxu0 %v6677
        %6892 = vmatpush2.bf16.msra.mxu0 %v6676
        %6893 = vmatprep.subr.bf16.mxu0 %v6675
        %6894 = vmatpush2.bf16.msra.mxu0 %v6674
        %6895 = vmatprep.subr.bf16.mxu0 %v6673
        %6896 = vmatpush2.bf16.msra.mxu0 %v6672
        %6897 = vmatprep.mubr.bf16.mxu0 %v6339
        %6898 = vmatmul.mubr.bf16.gmra.mxu0 %v6338
        %v6899 = vpop.f32.mrf.mxu0
        %v6900 = vadd.f32 %v6787, %v6899
        %v6901 = vpop.f32.mrf.mxu0
        %v6902 = vadd.f32 %v6789, %v6901
        %v6903 = vpop.f32.mrf.mxu0
        %v6904 = vadd.f32 %v6791, %v6903
        %v6905 = vpop.f32.mrf.mxu0
        %v6906 = vadd.f32 %v6793, %v6905
        %6907 = vmatprep.mubr.bf16.mxu0 %v6343
        %6908 = vmatmul.mubr.bf16.gmra.mxu0 %v6342
        %v6909 = vpop.f32.mrf.mxu0
        %v6910 = vadd.f32 %v6797, %v6909
        %v6911 = vpop.f32.mrf.mxu0
        %v6912 = vadd.f32 %v6799, %v6911
        %v6913 = vpop.f32.mrf.mxu0
        %v6914 = vadd.f32 %v6801, %v6913
        %v6915 = vpop.f32.mrf.mxu0
        %v6916 = vadd.f32 %v6803, %v6915
        %6917 = vmatprep.mubr.bf16.mxu0 %v6347
        %6918 = vmatmul.mubr.bf16.gmra.mxu0 %v6346
        %v6919 = vpop.f32.mrf.mxu0
        %v6920 = vadd.f32 %v6807, %v6919
        %v6921 = vpop.f32.mrf.mxu0
        %v6922 = vadd.f32 %v6809, %v6921
        %v6923 = vpop.f32.mrf.mxu0
        %v6924 = vadd.f32 %v6811, %v6923
        %v6925 = vpop.f32.mrf.mxu0
        %v6926 = vadd.f32 %v6813, %v6925
        %6927 = vmatprep.mubr.bf16.mxu0 %v6351
        %6928 = vmatmul.mubr.bf16.gmra.mxu0 %v6350
        %v6929 = vpop.f32.mrf.mxu0
        %v6930 = vadd.f32 %v6817, %v6929
        %v6931 = vpop.f32.mrf.mxu0
        %v6932 = vadd.f32 %v6819, %v6931
        %v6933 = vpop.f32.mrf.mxu0
        %v6934 = vadd.f32 %v6821, %v6933
        %v6935 = vpop.f32.mrf.mxu0
        %v6936 = vadd.f32 %v6823, %v6935
        %6937 = vmatprep.mubr.bf16.mxu0 %v6355
        %6938 = vmatmul.mubr.bf16.gmra.mxu0 %v6354
        %v6939 = vpop.f32.mrf.mxu0
        %v6940 = vadd.f32 %v6827, %v6939
        %v6941 = vpop.f32.mrf.mxu0
        %v6942 = vadd.f32 %v6829, %v6941
        %v6943 = vpop.f32.mrf.mxu0
        %v6944 = vadd.f32 %v6831, %v6943
        %v6945 = vpop.f32.mrf.mxu0
        %v6946 = vadd.f32 %v6833, %v6945
        %6947 = vmatprep.mubr.bf16.mxu0 %v6359
        %6948 = vmatmul.mubr.bf16.gmra.mxu0 %v6358
        %v6949 = vpop.f32.mrf.mxu0
        %v6950 = vadd.f32 %v6837, %v6949
        %v6951 = vpop.f32.mrf.mxu0
        %v6952 = vadd.f32 %v6839, %v6951
        %v6953 = vpop.f32.mrf.mxu0
        %v6954 = vadd.f32 %v6841, %v6953
        %v6955 = vpop.f32.mrf.mxu0
        %v6956 = vadd.f32 %v6843, %v6955
        %6957 = vmatprep.mubr.bf16.mxu0 %v6363
        %6958 = vmatmul.mubr.bf16.gmra.mxu0 %v6362
        %v6959 = vpop.f32.mrf.mxu0
        %v6960 = vadd.f32 %v6847, %v6959
        %v6961 = vpop.f32.mrf.mxu0
        %v6962 = vadd.f32 %v6849, %v6961
        %v6963 = vpop.f32.mrf.mxu0
        %v6964 = vadd.f32 %v6851, %v6963
        %v6965 = vpop.f32.mrf.mxu0
        %v6966 = vadd.f32 %v6853, %v6965
        %6967 = vmatprep.mubr.bf16.mxu0 %v6367
        %6968 = vmatmul.mubr.bf16.gmra.mxu0 %v6366
        %v6969 = vpop.f32.mrf.mxu0
        %v6970 = vadd.f32 %v6857, %v6969
        %v6971 = vpop.f32.mrf.mxu0
        %v6972 = vadd.f32 %v6859, %v6971
        %v6973 = vpop.f32.mrf.mxu0
        %v6974 = vadd.f32 %v6861, %v6973
        %v6975 = vpop.f32.mrf.mxu0
        %v6976 = vadd.f32 %v6863, %v6975
        %6977 = vdwg.mxu0
        %v6978 = vadd.f32 %v4416, %v6900
        %v6979 = vadd.f32 %v4417, %v6902
        %v6980 = vadd.f32 %v4418, %v6904
        %v6981 = vadd.f32 %v4419, %v6906
        %v6982 = vadd.f32 %v4420, %v6910
        %v6983 = vadd.f32 %v4421, %v6912
        %v6984 = vadd.f32 %v4422, %v6914
        %v6985 = vadd.f32 %v4423, %v6916
        %v6986 = vadd.f32 %v4424, %v6920
        %v6987 = vadd.f32 %v4425, %v6922
        %v6988 = vadd.f32 %v4426, %v6924
        %v6989 = vadd.f32 %v4427, %v6926
        %v6990 = vadd.f32 %v4428, %v6930
        %v6991 = vadd.f32 %v4429, %v6932
        %v6992 = vadd.f32 %v4430, %v6934
        %v6993 = vadd.f32 %v4431, %v6936
        %v6994 = vadd.f32 %v4432, %v6940
        %v6995 = vadd.f32 %v4433, %v6942
        %v6996 = vadd.f32 %v4434, %v6944
        %v6997 = vadd.f32 %v4435, %v6946
        %v6998 = vadd.f32 %v4436, %v6950
        %v6999 = vadd.f32 %v4437, %v6952
        %v7000 = vadd.f32 %v4438, %v6954
        %v7001 = vadd.f32 %v4439, %v6956
        %v7002 = vadd.f32 %v4440, %v6960
        %v7003 = vadd.f32 %v4441, %v6962
        %v7004 = vadd.f32 %v4442, %v6964
        %v7005 = vadd.f32 %v4443, %v6966
        %v7006 = vadd.f32 %v4444, %v6970
        %v7007 = vadd.f32 %v4445, %v6972
        %v7008 = vadd.f32 %v4446, %v6974
        %v7009 = vadd.f32 %v4447, %v6976
        %7010 = vst [vmem:[#allocation11] sm:$0xff] %v6978
        %7011 = vst [vmem:[#allocation11 + $0x8] sm:$0xff] %v6979
        %7012 = vst [vmem:[#allocation11 + $0x10] sm:$0xff] %v6980
        %7013 = vst [vmem:[#allocation11 + $0x18] sm:$0xff] %v6981
        %7014 = vst [vmem:[#allocation11 + $0x20] sm:$0xff] %v6982
        %7015 = vst [vmem:[#allocation11 + $0x28] sm:$0xff] %v6983
        %7016 = vst [vmem:[#allocation11 + $0x30] sm:$0xff] %v6984
        %7017 = vst [vmem:[#allocation11 + $0x38] sm:$0xff] %v6985
        %7018 = vst [vmem:[#allocation11 + $0x40] sm:$0xff] %v6986
        %7019 = vst [vmem:[#allocation11 + $0x48] sm:$0xff] %v6987
        %7020 = vst [vmem:[#allocation11 + $0x50] sm:$0xff] %v6988
        %7021 = vst [vmem:[#allocation11 + $0x58] sm:$0xff] %v6989
        %7022 = vst [vmem:[#allocation11 + $0x60] sm:$0xff] %v6990
        %7023 = vst [vmem:[#allocation11 + $0x68] sm:$0xff] %v6991
        %7024 = vst [vmem:[#allocation11 + $0x70] sm:$0xff] %v6992
        %7025 = vst [vmem:[#allocation11 + $0x78] sm:$0xff] %v6993
        %7026 = vst [vmem:[#allocation11 + $0x80] sm:$0xff] %v6994
        %7027 = vst [vmem:[#allocation11 + $0x88] sm:$0xff] %v6995
        %7028 = vst [vmem:[#allocation11 + $0x90] sm:$0xff] %v6996
        %7029 = vst [vmem:[#allocation11 + $0x98] sm:$0xff] %v6997
        %7030 = vst [vmem:[#allocation11 + $0xa0] sm:$0xff] %v6998
        %7031 = vst [vmem:[#allocation11 + $0xa8] sm:$0xff] %v6999
        %7032 = vst [vmem:[#allocation11 + $0xb0] sm:$0xff] %v7000
        %7033 = vst [vmem:[#allocation11 + $0xb8] sm:$0xff] %v7001
        %7034 = vst [vmem:[#allocation11 + $0xc0] sm:$0xff] %v7002
        %7035 = vst [vmem:[#allocation11 + $0xc8] sm:$0xff] %v7003
        %7036 = vst [vmem:[#allocation11 + $0xd0] sm:$0xff] %v7004
        %7037 = vst [vmem:[#allocation11 + $0xd8] sm:$0xff] %v7005
        %7038 = vst [vmem:[#allocation11 + $0xe0] sm:$0xff] %v7006
        %7039 = vst [vmem:[#allocation11 + $0xe8] sm:$0xff] %v7007
        %7040 = vst [vmem:[#allocation11 + $0xf0] sm:$0xff] %v7008
        %7041 = vst [vmem:[#allocation11 + $0xf8] sm:$0xff] %v7009
        %p7042 = scmp.eq.s32.totalorder %s39, 1
        // Predicated region
        $region105: #{llama2_forward.1} parent=79 // pred_check
          %p7043 = pneg %p7042
        $region106: #{llama2_forward.1} parent=79 // pred_check_branch
          %7045 = sbr.rel (%p7043) target = $region108
        $region107: #{llama2_forward.1} parent=79 // pred_region
          %v7046 = vld [vmem:[%s13] sm:$0x3]
          %v7047 = vmul.f32 %v6978, %v6978
          %v7048 = vmul.f32 %v6979, %v6979
          %v7049 = vmul.f32 %v6980, %v6980
          %v7050 = vmul.f32 %v6981, %v6981
          %v7051 = vmul.f32 %v6982, %v6982
          %v7052 = vmul.f32 %v6983, %v6983
          %v7053 = vmul.f32 %v6984, %v6984
          %v7054 = vmul.f32 %v6985, %v6985
          %v7055 = vmul.f32 %v6986, %v6986
          %v7056 = vmul.f32 %v6987, %v6987
          %v7057 = vmul.f32 %v6988, %v6988
          %v7058 = vmul.f32 %v6989, %v6989
          %v7059 = vmul.f32 %v6990, %v6990
          %v7060 = vmul.f32 %v6991, %v6991
          %v7061 = vmul.f32 %v6992, %v6992
          %v7062 = vmul.f32 %v6993, %v6993
          %v7063 = vmul.f32 %v6994, %v6994
          %v7064 = vmul.f32 %v6995, %v6995
          %v7065 = vmul.f32 %v6996, %v6996
          %v7066 = vmul.f32 %v6997, %v6997
          %v7067 = vmul.f32 %v6998, %v6998
          %v7068 = vmul.f32 %v6999, %v6999
          %v7069 = vmul.f32 %v7000, %v7000
          %v7070 = vmul.f32 %v7001, %v7001
          %v7071 = vmul.f32 %v7002, %v7002
          %v7072 = vmul.f32 %v7003, %v7003
          %v7073 = vmul.f32 %v7004, %v7004
          %v7074 = vmul.f32 %v7005, %v7005
          %v7075 = vmul.f32 %v7006, %v7006
          %v7076 = vmul.f32 %v7007, %v7007
          %v7077 = vmul.f32 %v7008, %v7008
          %v7078 = vmul.f32 %v7009, %v7009
          %v7079 = vadd.f32 %v7047, %v7048
          %7080 = vadd.xlane.f32.xlu0 %v7079
          %v7081 = vpop.xlane.xlu0 %7080
          %v7082 = vadd.f32 %v7049, %v7050
          %7083 = vadd.xlane.f32.xlu0 %v7082
          %v7084 = vpop.xlane.xlu0 %7083
          %v7085 = vadd.f32 %v7051, %v7052
          %7086 = vadd.xlane.f32.xlu0 %v7085
          %v7087 = vpop.xlane.xlu0 %7086
          %v7088 = vadd.f32 %v7053, %v7054
          %7089 = vadd.xlane.f32.xlu0 %v7088
          %v7090 = vpop.xlane.xlu0 %7089
          %v7091 = vadd.f32 %v7055, %v7056
          %7092 = vadd.xlane.f32.xlu0 %v7091
          %v7093 = vpop.xlane.xlu0 %7092
          %v7094 = vadd.f32 %v7057, %v7058
          %7095 = vadd.xlane.f32.xlu0 %v7094
          %v7096 = vpop.xlane.xlu0 %7095
          %v7097 = vadd.f32 %v7059, %v7060
          %7098 = vadd.xlane.f32.xlu0 %v7097
          %v7099 = vpop.xlane.xlu0 %7098
          %v7100 = vadd.f32 %v7061, %v7062
          %7101 = vadd.xlane.f32.xlu0 %v7100
          %v7102 = vpop.xlane.xlu0 %7101
          %v7103 = vadd.f32 %v7063, %v7064
          %7104 = vadd.xlane.f32.xlu0 %v7103
          %v7105 = vpop.xlane.xlu0 %7104
          %v7106 = vadd.f32 %v7065, %v7066
          %7107 = vadd.xlane.f32.xlu0 %v7106
          %v7108 = vpop.xlane.xlu0 %7107
          %v7109 = vadd.f32 %v7067, %v7068
          %7110 = vadd.xlane.f32.xlu0 %v7109
          %v7111 = vpop.xlane.xlu0 %7110
          %v7112 = vadd.f32 %v7069, %v7070
          %7113 = vadd.xlane.f32.xlu0 %v7112
          %v7114 = vpop.xlane.xlu0 %7113
          %v7115 = vadd.f32 %v7071, %v7072
          %7116 = vadd.xlane.f32.xlu0 %v7115
          %v7117 = vpop.xlane.xlu0 %7116
          %v7118 = vadd.f32 %v7073, %v7074
          %7119 = vadd.xlane.f32.xlu0 %v7118
          %v7120 = vpop.xlane.xlu0 %7119
          %v7121 = vadd.f32 %v7075, %v7076
          %7122 = vadd.xlane.f32.xlu0 %v7121
          %v7123 = vpop.xlane.xlu0 %7122
          %v7124 = vadd.f32 %v7077, %v7078
          %7125 = vadd.xlane.f32.xlu0 %v7124
          %v7126 = vpop.xlane.xlu0 %7125
          %v7127 = vmul.f32 %v7081, %v941
          %v7128 = vmul.f32 %v7084, %v941
          %v7129 = vmul.f32 %v7087, %v941
          %v7130 = vmul.f32 %v7090, %v941
          %v7131 = vmul.f32 %v7093, %v941
          %v7132 = vmul.f32 %v7096, %v941
          %v7133 = vmul.f32 %v7099, %v941
          %v7134 = vmul.f32 %v7102, %v941
          %v7135 = vmul.f32 %v7105, %v941
          %v7136 = vmul.f32 %v7108, %v941
          %v7137 = vmul.f32 %v7111, %v941
          %v7138 = vmul.f32 %v7114, %v941
          %v7139 = vmul.f32 %v7117, %v941
          %v7140 = vmul.f32 %v7120, %v941
          %v7141 = vmul.f32 %v7123, %v941
          %v7142 = vmul.f32 %v7126, %v941
          %v7143 = vadd.f32 %v7127, 1e-05
          %v7144 = vadd.f32 %v7128, 1e-05
          %v7145 = vadd.f32 %v7129, 1e-05
          %v7146 = vadd.f32 %v7130, 1e-05
          %v7147 = vadd.f32 %v7131, 1e-05
          %v7148 = vadd.f32 %v7132, 1e-05
          %v7149 = vadd.f32 %v7133, 1e-05
          %v7150 = vadd.f32 %v7134, 1e-05
          %v7151 = vadd.f32 %v7135, 1e-05
          %v7152 = vadd.f32 %v7136, 1e-05
          %v7153 = vadd.f32 %v7137, 1e-05
          %v7154 = vadd.f32 %v7138, 1e-05
          %v7155 = vadd.f32 %v7139, 1e-05
          %v7156 = vadd.f32 %v7140, 1e-05
          %v7157 = vadd.f32 %v7141, 1e-05
          %v7158 = vadd.f32 %v7142, 1e-05
          %v7159 = vrsqrt.pop %v7143
          %v7160 = vrsqrt.pop %v7144
          %v7161 = vrsqrt.pop %v7145
          %v7162 = vrsqrt.pop %v7146
          %v7163 = vrsqrt.pop %v7147
          %v7164 = vrsqrt.pop %v7148
          %v7165 = vrsqrt.pop %v7149
          %v7166 = vrsqrt.pop %v7150
          %v7167 = vrsqrt.pop %v7151
          %v7168 = vrsqrt.pop %v7152
          %v7169 = vrsqrt.pop %v7153
          %v7170 = vrsqrt.pop %v7154
          %v7171 = vrsqrt.pop %v7155
          %v7172 = vrsqrt.pop %v7156
          %v7173 = vrsqrt.pop %v7157
          %v7174 = vrsqrt.pop %v7158
          %v7175 = vmul.f32 %v6978, %v7159
          %v7176 = vmul.f32 %v6979, %v7159
          %v7177 = vmul.f32 %v6980, %v7160
          %v7178 = vmul.f32 %v6981, %v7160
          %v7179 = vmul.f32 %v6982, %v7161
          %v7180 = vmul.f32 %v6983, %v7161
          %v7181 = vmul.f32 %v6984, %v7162
          %v7182 = vmul.f32 %v6985, %v7162
          %v7183 = vmul.f32 %v6986, %v7163
          %v7184 = vmul.f32 %v6987, %v7163
          %v7185 = vmul.f32 %v6988, %v7164
          %v7186 = vmul.f32 %v6989, %v7164
          %v7187 = vmul.f32 %v6990, %v7165
          %v7188 = vmul.f32 %v6991, %v7165
          %v7189 = vmul.f32 %v6992, %v7166
          %v7190 = vmul.f32 %v6993, %v7166
          %v7191 = vmul.f32 %v6994, %v7167
          %v7192 = vmul.f32 %v6995, %v7167
          %v7193 = vmul.f32 %v6996, %v7168
          %v7194 = vmul.f32 %v6997, %v7168
          %v7195 = vmul.f32 %v6998, %v7169
          %v7196 = vmul.f32 %v6999, %v7169
          %v7197 = vmul.f32 %v7000, %v7170
          %v7198 = vmul.f32 %v7001, %v7170
          %v7199 = vmul.f32 %v7002, %v7171
          %v7200 = vmul.f32 %v7003, %v7171
          %v7201 = vmul.f32 %v7004, %v7172
          %v7202 = vmul.f32 %v7005, %v7172
          %v7203 = vmul.f32 %v7006, %v7173
          %v7204 = vmul.f32 %v7007, %v7173
          %v7205 = vmul.f32 %v7008, %v7174
          %v7206 = vmul.f32 %v7009, %v7174
          %v7208 = vlaneseq
          %v7209 = vshrl.u32 %v7208, 7
          %v7210 = vsub.s32 0, %v7209
          %v7211 = vrot.slane %v7046, %v7210
          %v7212 = vlaneseq
          %v7213 = vshrl.u32 %v7212, 7
          %v7214 = vsub.s32 1, %v7213
          %v7215 = vrot.slane %v7046, %v7214
          %v7218 = vmul.f32 %v7175, %v7211
          %v7219 = vmul.f32 %v7176, %v7215
          %v7220 = vmul.f32 %v7177, %v7211
          %v7221 = vmul.f32 %v7178, %v7215
          %v7222 = vmul.f32 %v7179, %v7211
          %v7223 = vmul.f32 %v7180, %v7215
          %v7224 = vmul.f32 %v7181, %v7211
          %v7225 = vmul.f32 %v7182, %v7215
          %v7226 = vmul.f32 %v7183, %v7211
          %v7227 = vmul.f32 %v7184, %v7215
          %v7228 = vmul.f32 %v7185, %v7211
          %v7229 = vmul.f32 %v7186, %v7215
          %v7230 = vmul.f32 %v7187, %v7211
          %v7231 = vmul.f32 %v7188, %v7215
          %v7232 = vmul.f32 %v7189, %v7211
          %v7233 = vmul.f32 %v7190, %v7215
          %v7234 = vmul.f32 %v7191, %v7211
          %v7235 = vmul.f32 %v7192, %v7215
          %v7236 = vmul.f32 %v7193, %v7211
          %v7237 = vmul.f32 %v7194, %v7215
          %v7238 = vmul.f32 %v7195, %v7211
          %v7239 = vmul.f32 %v7196, %v7215
          %v7240 = vmul.f32 %v7197, %v7211
          %v7241 = vmul.f32 %v7198, %v7215
          %v7242 = vmul.f32 %v7199, %v7211
          %v7243 = vmul.f32 %v7200, %v7215
          %v7244 = vmul.f32 %v7201, %v7211
          %v7245 = vmul.f32 %v7202, %v7215
          %v7246 = vmul.f32 %v7203, %v7211
          %v7247 = vmul.f32 %v7204, %v7215
          %v7248 = vmul.f32 %v7205, %v7211
          %v7249 = vmul.f32 %v7206, %v7215
          %v7250 = vpack.c.bf16 %v7220, %v7218
          %v7251 = vpack.c.bf16 %v7221, %v7219
          %v7252 = vpack.c.bf16 %v7224, %v7222
          %v7253 = vpack.c.bf16 %v7225, %v7223
          %v7254 = vpack.c.bf16 %v7228, %v7226
          %v7255 = vpack.c.bf16 %v7229, %v7227
          %v7256 = vpack.c.bf16 %v7232, %v7230
          %v7257 = vpack.c.bf16 %v7233, %v7231
          %v7258 = vpack.c.bf16 %v7236, %v7234
          %v7259 = vpack.c.bf16 %v7237, %v7235
          %v7260 = vpack.c.bf16 %v7240, %v7238
          %v7261 = vpack.c.bf16 %v7241, %v7239
          %v7262 = vpack.c.bf16 %v7244, %v7242
          %v7263 = vpack.c.bf16 %v7245, %v7243
          %v7264 = vpack.c.bf16 %v7248, %v7246
          %v7265 = vpack.c.bf16 %v7249, %v7247
          %v7266 = vld [vmem:[%s14] sm:$0xff]
          %v7267 = vld [vmem:[%s14 + $0x8] sm:$0xff]
          %v7268 = vld [vmem:[%s14 + $0x10] sm:$0xff]
          %v7269 = vld [vmem:[%s14 + $0x18] sm:$0xff]
          %v7270 = vld [vmem:[%s14 + $0x20] sm:$0xff]
          %v7271 = vld [vmem:[%s14 + $0x28] sm:$0xff]
          %v7272 = vld [vmem:[%s14 + $0x30] sm:$0xff]
          %v7273 = vld [vmem:[%s14 + $0x38] sm:$0xff]
          %v7274 = vld [vmem:[%s14 + $0x40] sm:$0xff]
          %v7275 = vld [vmem:[%s14 + $0x48] sm:$0xff]
          %v7276 = vld [vmem:[%s14 + $0x50] sm:$0xff]
          %v7277 = vld [vmem:[%s14 + $0x58] sm:$0xff]
          %v7278 = vld [vmem:[%s14 + $0x60] sm:$0xff]
          %v7279 = vld [vmem:[%s14 + $0x68] sm:$0xff]
          %v7280 = vld [vmem:[%s14 + $0x70] sm:$0xff]
          %v7281 = vld [vmem:[%s14 + $0x78] sm:$0xff]
          %v7282 = vld [vmem:[%s14 + $0x80] sm:$0xff]
          %v7283 = vld [vmem:[%s14 + $0x88] sm:$0xff]
          %v7284 = vld [vmem:[%s14 + $0x90] sm:$0xff]
          %v7285 = vld [vmem:[%s14 + $0x98] sm:$0xff]
          %v7286 = vld [vmem:[%s14 + $0xa0] sm:$0xff]
          %v7287 = vld [vmem:[%s14 + $0xa8] sm:$0xff]
          %v7288 = vld [vmem:[%s14 + $0xb0] sm:$0xff]
          %v7289 = vld [vmem:[%s14 + $0xb8] sm:$0xff]
          %v7290 = vld [vmem:[%s14 + $0xc0] sm:$0xff]
          %v7291 = vld [vmem:[%s14 + $0xc8] sm:$0xff]
          %v7292 = vld [vmem:[%s14 + $0xd0] sm:$0xff]
          %v7293 = vld [vmem:[%s14 + $0xd8] sm:$0xff]
          %v7294 = vld [vmem:[%s14 + $0xe0] sm:$0xff]
          %v7295 = vld [vmem:[%s14 + $0xe8] sm:$0xff]
          %v7296 = vld [vmem:[%s14 + $0xf0] sm:$0xff]
          %v7297 = vld [vmem:[%s14 + $0xf8] sm:$0xff]
          %v7330 = vunpack.c.l.b16 %v7266
          %v7331 = vunpack.c.h.b16 %v7266
          %v7332 = vunpack.c.l.b16 %v7267
          %v7333 = vunpack.c.h.b16 %v7267
          %v7334 = vunpack.c.l.b16 %v7268
          %v7335 = vunpack.c.h.b16 %v7268
          %v7336 = vunpack.c.l.b16 %v7269
          %v7337 = vunpack.c.h.b16 %v7269
          %v7338 = vunpack.c.l.b16 %v7270
          %v7339 = vunpack.c.h.b16 %v7270
          %v7340 = vunpack.c.l.b16 %v7271
          %v7341 = vunpack.c.h.b16 %v7271
          %v7342 = vunpack.c.l.b16 %v7272
          %v7343 = vunpack.c.h.b16 %v7272
          %v7344 = vunpack.c.l.b16 %v7273
          %v7345 = vunpack.c.h.b16 %v7273
          %v7346 = vunpack.c.l.b16 %v7274
          %v7347 = vunpack.c.h.b16 %v7274
          %v7348 = vunpack.c.l.b16 %v7275
          %v7349 = vunpack.c.h.b16 %v7275
          %v7350 = vunpack.c.l.b16 %v7276
          %v7351 = vunpack.c.h.b16 %v7276
          %v7352 = vunpack.c.l.b16 %v7277
          %v7353 = vunpack.c.h.b16 %v7277
          %v7354 = vunpack.c.l.b16 %v7278
          %v7355 = vunpack.c.h.b16 %v7278
          %v7356 = vunpack.c.l.b16 %v7279
          %v7357 = vunpack.c.h.b16 %v7279
          %v7358 = vunpack.c.l.b16 %v7280
          %v7359 = vunpack.c.h.b16 %v7280
          %v7360 = vunpack.c.l.b16 %v7281
          %v7361 = vunpack.c.h.b16 %v7281
          %v7362 = vunpack.c.l.b16 %v7282
          %v7363 = vunpack.c.h.b16 %v7282
          %v7364 = vunpack.c.l.b16 %v7283
          %v7365 = vunpack.c.h.b16 %v7283
          %v7366 = vunpack.c.l.b16 %v7284
          %v7367 = vunpack.c.h.b16 %v7284
          %v7368 = vunpack.c.l.b16 %v7285
          %v7369 = vunpack.c.h.b16 %v7285
          %v7370 = vunpack.c.l.b16 %v7286
          %v7371 = vunpack.c.h.b16 %v7286
          %v7372 = vunpack.c.l.b16 %v7287
          %v7373 = vunpack.c.h.b16 %v7287
          %v7374 = vunpack.c.l.b16 %v7288
          %v7375 = vunpack.c.h.b16 %v7288
          %v7376 = vunpack.c.l.b16 %v7289
          %v7377 = vunpack.c.h.b16 %v7289
          %v7378 = vunpack.c.l.b16 %v7290
          %v7379 = vunpack.c.h.b16 %v7290
          %v7380 = vunpack.c.l.b16 %v7291
          %v7381 = vunpack.c.h.b16 %v7291
          %v7382 = vunpack.c.l.b16 %v7292
          %v7383 = vunpack.c.h.b16 %v7292
          %v7384 = vunpack.c.l.b16 %v7293
          %v7385 = vunpack.c.h.b16 %v7293
          %v7386 = vunpack.c.l.b16 %v7294
          %v7387 = vunpack.c.h.b16 %v7294
          %v7388 = vunpack.c.l.b16 %v7295
          %v7389 = vunpack.c.h.b16 %v7295
          %v7390 = vunpack.c.l.b16 %v7296
          %v7391 = vunpack.c.h.b16 %v7296
          %v7392 = vunpack.c.l.b16 %v7297
          %v7393 = vunpack.c.h.b16 %v7297
          %v7394 = vpack.c.b16 %v7332, %v7330
          %v7395 = vpack.c.b16 %v7333, %v7331
          %v7396 = vpack.c.b16 %v7336, %v7334
          %v7397 = vpack.c.b16 %v7337, %v7335
          %v7398 = vpack.c.b16 %v7340, %v7338
          %v7399 = vpack.c.b16 %v7341, %v7339
          %v7400 = vpack.c.b16 %v7344, %v7342
          %v7401 = vpack.c.b16 %v7345, %v7343
          %v7402 = vpack.c.b16 %v7348, %v7346
          %v7403 = vpack.c.b16 %v7349, %v7347
          %v7404 = vpack.c.b16 %v7352, %v7350
          %v7405 = vpack.c.b16 %v7353, %v7351
          %v7406 = vpack.c.b16 %v7356, %v7354
          %v7407 = vpack.c.b16 %v7357, %v7355
          %v7408 = vpack.c.b16 %v7360, %v7358
          %v7409 = vpack.c.b16 %v7361, %v7359
          %v7410 = vpack.c.b16 %v7364, %v7362
          %v7411 = vpack.c.b16 %v7365, %v7363
          %v7412 = vpack.c.b16 %v7368, %v7366
          %v7413 = vpack.c.b16 %v7369, %v7367
          %v7414 = vpack.c.b16 %v7372, %v7370
          %v7415 = vpack.c.b16 %v7373, %v7371
          %v7416 = vpack.c.b16 %v7376, %v7374
          %v7417 = vpack.c.b16 %v7377, %v7375
          %v7418 = vpack.c.b16 %v7380, %v7378
          %v7419 = vpack.c.b16 %v7381, %v7379
          %v7420 = vpack.c.b16 %v7384, %v7382
          %v7421 = vpack.c.b16 %v7385, %v7383
          %v7422 = vpack.c.b16 %v7388, %v7386
          %v7423 = vpack.c.b16 %v7389, %v7387
          %v7424 = vpack.c.b16 %v7392, %v7390
          %v7425 = vpack.c.b16 %v7393, %v7391
          %7458 = vmatprep.subr.bf16.mxu0 %v7409
          %7459 = vmatpush1.bf16.msra.mxu0 %v7408
          %7460 = vmatprep.subr.bf16.mxu0 %v7407
          %7461 = vmatpush1.bf16.msra.mxu0 %v7406
          %7462 = vmatprep.subr.bf16.mxu0 %v7405
          %7463 = vmatpush1.bf16.msra.mxu0 %v7404
          %7464 = vmatprep.subr.bf16.mxu0 %v7403
          %7465 = vmatpush1.bf16.msra.mxu0 %v7402
          %7466 = vmatprep.subr.bf16.mxu0 %v7401
          %7467 = vmatpush1.bf16.msra.mxu0 %v7400
          %7468 = vmatprep.subr.bf16.mxu0 %v7399
          %7469 = vmatpush1.bf16.msra.mxu0 %v7398
          %7470 = vmatprep.subr.bf16.mxu0 %v7397
          %7471 = vmatpush1.bf16.msra.mxu0 %v7396
          %7472 = vmatprep.subr.bf16.mxu0 %v7395
          %7473 = vmatpush1.bf16.msra.mxu0 %v7394
          %7474 = vmatprep.subr.bf16.mxu0 %v7425
          %7475 = vmatpush2.bf16.msra.mxu0 %v7424
          %7476 = vmatprep.subr.bf16.mxu0 %v7423
          %7477 = vmatpush2.bf16.msra.mxu0 %v7422
          %7478 = vmatprep.subr.bf16.mxu0 %v7421
          %7479 = vmatpush2.bf16.msra.mxu0 %v7420
          %7480 = vmatprep.subr.bf16.mxu0 %v7419
          %7481 = vmatpush2.bf16.msra.mxu0 %v7418
          %7482 = vmatprep.subr.bf16.mxu0 %v7417
          %7483 = vmatpush2.bf16.msra.mxu0 %v7416
          %7484 = vmatprep.subr.bf16.mxu0 %v7415
          %7485 = vmatpush2.bf16.msra.mxu0 %v7414
          %7486 = vmatprep.subr.bf16.mxu0 %v7413
          %7487 = vmatpush2.bf16.msra.mxu0 %v7412
          %7488 = vmatprep.subr.bf16.mxu0 %v7411
          %7489 = vmatpush2.bf16.msra.mxu0 %v7410
          %7490 = vmatprep.mubr.bf16.mxu0 %v7251
          %7491 = vmatmul.mubr.bf16.gmra.mxu0 %v7250
          %v7492 = vpop.f32.mrf.mxu0
          %v7493 = vadd.f32 0.0, %v7492
          %v7494 = vpop.f32.mrf.mxu0
          %v7495 = vadd.f32 0.0, %v7494
          %v7496 = vpop.f32.mrf.mxu0
          %v7497 = vadd.f32 0.0, %v7496
          %v7498 = vpop.f32.mrf.mxu0
          %v7499 = vadd.f32 0.0, %v7498
          %7500 = vmatprep.mubr.bf16.mxu0 %v7253
          %7501 = vmatmul.mubr.bf16.gmra.mxu0 %v7252
          %v7502 = vpop.f32.mrf.mxu0
          %v7503 = vadd.f32 0.0, %v7502
          %v7504 = vpop.f32.mrf.mxu0
          %v7505 = vadd.f32 0.0, %v7504
          %v7506 = vpop.f32.mrf.mxu0
          %v7507 = vadd.f32 0.0, %v7506
          %v7508 = vpop.f32.mrf.mxu0
          %v7509 = vadd.f32 0.0, %v7508
          %7510 = vmatprep.mubr.bf16.mxu0 %v7255
          %7511 = vmatmul.mubr.bf16.gmra.mxu0 %v7254
          %v7512 = vpop.f32.mrf.mxu0
          %v7513 = vadd.f32 0.0, %v7512
          %v7514 = vpop.f32.mrf.mxu0
          %v7515 = vadd.f32 0.0, %v7514
          %v7516 = vpop.f32.mrf.mxu0
          %v7517 = vadd.f32 0.0, %v7516
          %v7518 = vpop.f32.mrf.mxu0
          %v7519 = vadd.f32 0.0, %v7518
          %7520 = vmatprep.mubr.bf16.mxu0 %v7257
          %7521 = vmatmul.mubr.bf16.gmra.mxu0 %v7256
          %v7522 = vpop.f32.mrf.mxu0
          %v7523 = vadd.f32 0.0, %v7522
          %v7524 = vpop.f32.mrf.mxu0
          %v7525 = vadd.f32 0.0, %v7524
          %v7526 = vpop.f32.mrf.mxu0
          %v7527 = vadd.f32 0.0, %v7526
          %v7528 = vpop.f32.mrf.mxu0
          %v7529 = vadd.f32 0.0, %v7528
          %7530 = vmatprep.mubr.bf16.mxu0 %v7259
          %7531 = vmatmul.mubr.bf16.gmra.mxu0 %v7258
          %v7532 = vpop.f32.mrf.mxu0
          %v7533 = vadd.f32 0.0, %v7532
          %v7534 = vpop.f32.mrf.mxu0
          %v7535 = vadd.f32 0.0, %v7534
          %v7536 = vpop.f32.mrf.mxu0
          %v7537 = vadd.f32 0.0, %v7536
          %v7538 = vpop.f32.mrf.mxu0
          %v7539 = vadd.f32 0.0, %v7538
          %7540 = vmatprep.mubr.bf16.mxu0 %v7261
          %7541 = vmatmul.mubr.bf16.gmra.mxu0 %v7260
          %v7542 = vpop.f32.mrf.mxu0
          %v7543 = vadd.f32 0.0, %v7542
          %v7544 = vpop.f32.mrf.mxu0
          %v7545 = vadd.f32 0.0, %v7544
          %v7546 = vpop.f32.mrf.mxu0
          %v7547 = vadd.f32 0.0, %v7546
          %v7548 = vpop.f32.mrf.mxu0
          %v7549 = vadd.f32 0.0, %v7548
          %7550 = vmatprep.mubr.bf16.mxu0 %v7263
          %7551 = vmatmul.mubr.bf16.gmra.mxu0 %v7262
          %v7552 = vpop.f32.mrf.mxu0
          %v7553 = vadd.f32 0.0, %v7552
          %v7554 = vpop.f32.mrf.mxu0
          %v7555 = vadd.f32 0.0, %v7554
          %v7556 = vpop.f32.mrf.mxu0
          %v7557 = vadd.f32 0.0, %v7556
          %v7558 = vpop.f32.mrf.mxu0
          %v7559 = vadd.f32 0.0, %v7558
          %7560 = vmatprep.mubr.bf16.mxu0 %v7265
          %7561 = vmatmul.mubr.bf16.gmra.mxu0 %v7264
          %v7562 = vpop.f32.mrf.mxu0
          %v7563 = vadd.f32 0.0, %v7562
          %v7564 = vpop.f32.mrf.mxu0
          %v7565 = vadd.f32 0.0, %v7564
          %v7566 = vpop.f32.mrf.mxu0
          %v7567 = vadd.f32 0.0, %v7566
          %v7568 = vpop.f32.mrf.mxu0
          %v7569 = vadd.f32 0.0, %v7568
          %7570 = vdwg.mxu0
          %7571 = vst [vmem:[#allocation12] sm:$0xff] %v7493
          %7572 = vst [vmem:[#allocation12 + $0x8] sm:$0xff] %v7495
          %7573 = vst [vmem:[#allocation12 + $0x10] sm:$0xff] %v7497
          %7574 = vst [vmem:[#allocation12 + $0x18] sm:$0xff] %v7499
          %7575 = vst [vmem:[#allocation12 + $0x20] sm:$0xff] %v7503
          %7576 = vst [vmem:[#allocation12 + $0x28] sm:$0xff] %v7505
          %7577 = vst [vmem:[#allocation12 + $0x30] sm:$0xff] %v7507
          %7578 = vst [vmem:[#allocation12 + $0x38] sm:$0xff] %v7509
          %7579 = vst [vmem:[#allocation12 + $0x40] sm:$0xff] %v7513
          %7580 = vst [vmem:[#allocation12 + $0x48] sm:$0xff] %v7515
          %7581 = vst [vmem:[#allocation12 + $0x50] sm:$0xff] %v7517
          %7582 = vst [vmem:[#allocation12 + $0x58] sm:$0xff] %v7519
          %7583 = vst [vmem:[#allocation12 + $0x60] sm:$0xff] %v7523
          %7584 = vst [vmem:[#allocation12 + $0x68] sm:$0xff] %v7525
          %7585 = vst [vmem:[#allocation12 + $0x70] sm:$0xff] %v7527
          %7586 = vst [vmem:[#allocation12 + $0x78] sm:$0xff] %v7529
          %7587 = vst [vmem:[#allocation12 + $0x80] sm:$0xff] %v7533
          %7588 = vst [vmem:[#allocation12 + $0x88] sm:$0xff] %v7535
          %7589 = vst [vmem:[#allocation12 + $0x90] sm:$0xff] %v7537
          %7590 = vst [vmem:[#allocation12 + $0x98] sm:$0xff] %v7539
          %7591 = vst [vmem:[#allocation12 + $0xa0] sm:$0xff] %v7543
          %7592 = vst [vmem:[#allocation12 + $0xa8] sm:$0xff] %v7545
          %7593 = vst [vmem:[#allocation12 + $0xb0] sm:$0xff] %v7547
          %7594 = vst [vmem:[#allocation12 + $0xb8] sm:$0xff] %v7549
          %7595 = vst [vmem:[#allocation12 + $0xc0] sm:$0xff] %v7553
          %7596 = vst [vmem:[#allocation12 + $0xc8] sm:$0xff] %v7555
          %7597 = vst [vmem:[#allocation12 + $0xd0] sm:$0xff] %v7557
          %7598 = vst [vmem:[#allocation12 + $0xd8] sm:$0xff] %v7559
          %7599 = vst [vmem:[#allocation12 + $0xe0] sm:$0xff] %v7563
          %7600 = vst [vmem:[#allocation12 + $0xe8] sm:$0xff] %v7565
          %7601 = vst [vmem:[#allocation12 + $0xf0] sm:$0xff] %v7567
          %7602 = vst [vmem:[#allocation12 + $0xf8] sm:$0xff] %v7569
        $region108: #{llama2_forward.1} parent=79 // pred_fallthru
          _
        // Predicated region
        $region109: #{llama2_forward.1} parent=79 // pred_check
          %p7603 = pneg %p412
        $region110: #{llama2_forward.1} parent=79 // pred_check_branch
          %7605 = sbr.rel (%p7603) target = $region112
        $region111: #{llama2_forward.1} parent=79 // pred_region
          %s7607 = ssub.s32 4096, 4096
          %7608 = vsyncadd [#allocation4], %s7607
          %s7609 = sshll.u32 [#allocation11], 4
          %s7610 = int_to_ptr.vmem [resolvable:$true] %s7609
          %7615 = dma.vmem_to_hbm [thread:$0]  %s7610, 4096, %s15, [#allocation4], 256, 256, 16
        $region112: #{llama2_forward.1} parent=79 // pred_fallthru
          _
        // Predicated region
        $region113: #{llama2_forward.1} parent=79 // pred_check
          %p7616 = pneg %p433
        $region114: #{llama2_forward.1} parent=79 // pred_check_branch
          %7618 = sbr.rel (%p7616) target = $region116
        $region115: #{llama2_forward.1} parent=79 // pred_region
          %s7620 = ssub.s32 4096, 4096
          %7621 = vsyncadd [#allocation13], %s7620
          %s7622 = sshll.u32 [#allocation12], 4
          %s7623 = int_to_ptr.vmem [resolvable:$true] %s7622
          %7628 = dma.vmem_to_hbm [thread:$0]  %s7623, 4096, %s16, [#allocation13], 256, 256, 16
        $region116: #{llama2_forward.1} parent=79 // pred_fallthru
          _
        // Predicated region
        $region117: #{llama2_forward.1} parent=79 // pred_check
          %p7629 = pneg %p412
        $region118: #{llama2_forward.1} parent=79 // pred_check_branch
          %7631 = sbr.rel (%p7629) target = $region120
        $region119: #{llama2_forward.1} parent=79 // pred_region
          %7632 = dma.done [#allocation4], 4096
        $region120: #{llama2_forward.1} parent=79 // pred_fallthru
          _
        // Predicated region
        $region121: #{llama2_forward.1} parent=79 // pred_check
          %p7633 = pneg %p433
        $region122: #{llama2_forward.1} parent=79 // pred_check_branch
          %7635 = sbr.rel (%p7633) target = $region124
        $region123: #{llama2_forward.1} parent=79 // pred_region
          %7636 = dma.done [#allocation13], 4096
        $region124: #{llama2_forward.1} parent=79 // pred_fallthru
          _
      $region80: #{llama2_forward.1} parent=5 // pred_fallthru
        _
      %p7637 = scmp.le.s32.totalorder 2, %s34
      // Predicated region
      $region125: #{llama2_forward.1} parent=5 // pred_check
        %p7638 = pneg %p7637
      $region126: #{llama2_forward.1} parent=5 // pred_check_branch
        %7640 = sbr.rel (%p7638) target = $region128
      $region127: #{llama2_forward.1} parent=5 // pred_region
        %s7641 = ssub.s32 %s34, 2
      $region128: #{llama2_forward.1} parent=5 // pred_fallthru
        _
    $region6: #{llama2_forward.1} parent=1 // loop_footer
      %s38 = sadd.s32 1, %s34
    $region7: #{llama2_forward.1} parent=1 // loop_footer_branch
      %33 = sbr.rel target = $region3
    $region8: #{llama2_forward.1} parent=1 // loop_exit
      _
    %7642 = vsyncpa [#allocation3], 1
    %s7643 = scalar_lea.sflag [#allocation3], 1
    %7644 = vsyncpa %s7643, 1
    %7645 = vsyncpa [#allocation6], 1
    %s7646 = scalar_lea.sflag [#allocation6], 1
    %7647 = vsyncpa %s7646, 1
    %7648 = vsyncpa [#allocation9], 1
    %s7649 = scalar_lea.sflag [#allocation9], 1
    %7650 = vsyncpa %s7649, 1
    %7651 = vsyncpa [#allocation4], 1
    %s7652 = scalar_lea.sflag [#allocation4], 1
    %7653 = vsyncpa %s7652, 1
    %7654 = vsyncpa [#allocation13], 1

</llo_original>
